<compile_context>
chip_gen: v7x
topology: tpu7x:2x2x1
jax: 0.10.0
libtpu: 0.0.40
codegen_flags: <defaults>
</compile_context>

<pallas_src>
import numpy as np
import jax
import jax.numpy as jnp
from jax import lax
from jax.experimental import pallas as pl
from jax.experimental.pallas import tpu as pltpu


# ----------------------------------------------------------------------------
# Fused kernel: AvgPool(5,3) + Conv1x1 + BN(folded) + ReLU + fc1(int8 w) + ReLU
#               + (Dropout eval = identity) + fc2 (lane-padded)
# ----------------------------------------------------------------------------
def aux_head_kernel(x_ref, p_ref, wc_ref, bc_ref, w1q_ref, w1s_ref, b1_ref,
                    w2_ref, b2_ref, out_ref):
    N = x_ref.shape[0]
    S = p_ref.shape[0]            # 16 pooled spatial positions (4x4)
    OUT_C = wc_ref.shape[1]       # 128 conv output channels
    H1 = b1_ref.shape[1]          # 1024 fc1 hidden units

    # ---- Stage 1: pool -> 1x1 conv (+ folded BN) -> ReLU, per sample ----------
    # Both matmuls are tiny; operands stay lane-dense (HW / OUT_C in lanes).
    fs = []
    for n in range(N):
        # pooled^T: (S, HW) x (C, HW)^T -> (S, C)    (NT matmul, K = HW in lanes)
        pn_t = lax.dot_general(p_ref[...], x_ref[n],
                               (((1,), (1,)), ((), ())),
                               preferred_element_type=jnp.float32)       # (S, C)
        # conv: (S, C) @ (C, OUT_C) -> (S, OUT_C)    (128 lane-dense output)
        f = jnp.dot(pn_t, wc_ref[...],
                    preferred_element_type=jnp.float32) + bc_ref[...]    # (S, OUT_C)
        fs.append(jnp.maximum(f, 0.0)[None])                             # (1, S, OUT_C)
    F = jnp.concatenate(fs, axis=0)                                      # (N, S, OUT_C) f32

    # ---- Stage 2: fc1 as S slabs of K = OUT_C (int8 weights -> bf16 dequant) ---
    h1 = jnp.zeros((N, H1), jnp.float32)
    for s in range(S):
        w_slab = w1q_ref[s].astype(jnp.bfloat16)                         # (OUT_C, H1)
        lhs = F[:, s, :].astype(jnp.bfloat16)                            # (N, OUT_C)
        h1 = h1 + jnp.dot(lhs, w_slab, preferred_element_type=jnp.float32)
    # per-output-channel dequant scale + bias + ReLU (f32 epilogue)
    h1 = jnp.maximum(h1 * w1s_ref[...] + b1_ref[...], 0.0)               # (N, H1)
    # Dropout(p=0.7) is identity in eval mode.

    # ---- Stage 3: fc2, 128-lane padded output (sliced outside the kernel) -----
    out_ref[...] = jnp.dot(h1.astype(jnp.bfloat16), w2_ref[...],
                           preferred_element_type=jnp.float32) + b2_ref[...]


def aux_classifier_forward(x_nchw, kp, num_classes):
    """x_nchw: (N, C, H, W) float32; kp: prepared (kernel-ready) params."""
    N, C, H, W = x_nchw.shape
    HW = H * W
    x3d = x_nchw.reshape(N, C, HW)      # pure reshape of NCHW — no transpose

    S = kp["P"].shape[0]
    OUT_C = kp["wc_eff"].shape[1]
    H1 = kp["b1"].shape[1]
    NC_PAD = kp["w2"].shape[1]

    out_pad = pl.pallas_call(
        aux_head_kernel,
        out_shape=jax.ShapeDtypeStruct((N, NC_PAD), jnp.float32),
        grid=(1,),
        in_specs=[
            pl.BlockSpec((N, C, HW), lambda i: (0, 0, 0)),
            pl.BlockSpec((S, HW), lambda i: (0, 0)),
            pl.BlockSpec((C, OUT_C), lambda i: (0, 0)),
            pl.BlockSpec((1, OUT_C), lambda i: (0, 0)),
            pl.BlockSpec((S, OUT_C, H1), lambda i: (0, 0, 0)),
            pl.BlockSpec((1, H1), lambda i: (0, 0)),
            pl.BlockSpec((1, H1), lambda i: (0, 0)),
            pl.BlockSpec((H1, NC_PAD), lambda i: (0, 0)),
            pl.BlockSpec((1, NC_PAD), lambda i: (0, 0)),
        ],
        out_specs=pl.BlockSpec((N, NC_PAD), lambda i: (0, 0)),
        compiler_params=pltpu.CompilerParams(
            dimension_semantics=("arbitrary",),
            vmem_limit_bytes=16 * 1024 * 1024),
    )(x3d, kp["P"], kp["wc_eff"], kp["bc_eff"], kp["w1_q"], kp["w1_scale"],
      kp["b1"], kp["w2"], kp["b2"])
    return out_pad[:, :num_classes]


# ----------------------------------------------------------------------------
# One-time parameter preparation (offline):
#   - fold BN (eval) into the 1x1-conv weight/bias,
#   - regroup fc1 rows from torch channel-major (c*16+s) to spatial-major
#     (S, OUT_C, H1) so fc1 decomposes into K=128 slabs (no in-kernel flatten),
#   - quantize fc1 weight to int8 with per-output-channel scales,
#   - cast fc2 weight to bf16 and pad fc2 weight/bias to 128 output lanes.
# ----------------------------------------------------------------------------
def prepare_params(params, eps=1e-5):
    scale = params["gamma"] / jnp.sqrt(params["var"] + eps)      # (128,)
    shift = params["beta"] - params["mean"] * scale              # (128,)
    wc_eff = params["wc"] * scale[None, :]                       # (C, 128)
    bc_eff = params["bc"] * scale + shift                        # (128,)

    out_c = params["wc"].shape[1]          # 128
    spatial = params["P"].shape[0]         # 16
    hidden = params["w1"].shape[1]         # 1024
    nc = params["w2"].shape[1]             # num_classes

    # torch flat index = c*spatial + s  ->  w1_3d[s, c, :] = w1[c*spatial + s, :]
    w1_3d = jnp.transpose(params["w1"].reshape(out_c, spatial, hidden),
                          (1, 0, 2))                             # (S, OUT_C, H1)
    amax = jnp.max(jnp.abs(w1_3d), axis=(0, 1))                  # (H1,)
    w1_scale = jnp.maximum(amax, 1e-8) / 127.0                   # (H1,)
    w1_q = jnp.clip(jnp.round(w1_3d / w1_scale), -127.0, 127.0).astype(jnp.int8)

    nc_pad = int(np.ceil(nc / 128) * 128)
    w2_pad = jnp.zeros((hidden, nc_pad), jnp.bfloat16)
    w2_pad = w2_pad.at[:, :nc].set(params["w2"].astype(jnp.bfloat16))
    b2_pad = jnp.zeros((1, nc_pad), jnp.float32).at[0, :nc].set(params["b2"])

    return {
        "P": params["P"],                         # (S, HW) f32
        "wc_eff": wc_eff,                         # (C, 128) f32
        "bc_eff": bc_eff.reshape(1, -1),          # (1, 128) f32
        "w1_q": w1_q,                             # (S, 128, H1) int8
        "w1_scale": w1_scale.reshape(1, -1),      # (1, H1) f32
        "b1": params["b1"].reshape(1, -1),        # (1, H1) f32
        "w2": w2_pad,                             # (H1, NC_PAD) bf16
        "b2": b2_pad,                             # (1, NC_PAD) f32
    }


# ----------------------------------------------------------------------------
# Pure-JAX reference (f32 end-to-end, original parameterisation)
# ----------------------------------------------------------------------------
def reference(x_nchw, params):
    eps = 1e-5
    pooled = lax.reduce_window(
        x_nchw, 0.0, lax.add,
        window_dimensions=(1, 1, 5, 5), window_strides=(1, 1, 3, 3),
        padding="VALID") / 25.0                                    # (N,C,4,4)
    y = jnp.einsum("nchw,co->nohw", pooled, params["wc"]) \
        + params["bc"][None, :, None, None]
    scale = params["gamma"] / jnp.sqrt(params["var"] + eps)
    shift = params["beta"] - params["mean"] * scale
    y = jnp.maximum(y * scale[None, :, None, None]
                    + shift[None, :, None, None], 0.0)
    flat = y.reshape(y.shape[0], -1)                               # (N, 2048)
    h = jnp.maximum(flat @ params["w1"] + params["b1"], 0.0)
    return h @ params["w2"] + params["b2"]


def build_pool_matrix(H, W, out_hw=4, k=5, s=3):
    P = np.zeros((out_hw * out_hw, H * W), np.float32)
    for oh in range(out_hw):
        for ow in range(out_hw):
            row = oh * out_hw + ow
            for kh in range(k):
                for kw in range(k):
                    P[row, (oh * s + kh) * W + (ow * s + kw)] = 1.0 / (k * k)
    return jnp.asarray(P)


if __name__ == "__main__":
    # avgpool(k=5, s=3) must yield 4x4 for fc1(128*4*4) -> H = W = 16 works
    # (floor((16-5)/3)+1 = 4); HW = 256 is also lane-aligned.
    N, C_IN, H, W = 2, 4, 16, 16
    NUM_CLASSES = 10
    OUT_C = 128
    FLAT = OUT_C * 4 * 4          # 2048
    HIDDEN = 1024

    key = jax.random.PRNGKey(0)
    kx, kwc, kbc, kg, kb, km, kv, kw1, kb1, kw2, kb2 = jax.random.split(key, 11)

    x = jax.random.normal(kx, (N, C_IN, H, W), jnp.float32)

    params = {
        "P": build_pool_matrix(H, W),
        # Conv2d(C_IN, 128, 1) weight stored as (C_IN, 128).
        "wc": 0.1 * jax.random.normal(kwc, (C_IN, OUT_C), jnp.float32),
        "bc": 0.1 * jax.random.normal(kbc, (OUT_C,), jnp.float32),
        # BatchNorm2d(128) params + running stats (eval mode).
        "gamma": 1.0 + 0.1 * jax.random.normal(kg, (OUT_C,), jnp.float32),
        "beta": 0.1 * jax.random.normal(kb, (OUT_C,), jnp.float32),
        "mean": 0.1 * jax.random.normal(km, (OUT_C,), jnp.float32),
        "var": jnp.abs(jax.random.normal(kv, (OUT_C,), jnp.float32)) + 0.5,
        # Linear(2048, 1024), Linear(1024, num_classes): stored as (in, out).
        "w1": 0.02 * jax.random.normal(kw1, (FLAT, HIDDEN), jnp.float32),
        "b1": 0.02 * jax.random.normal(kb1, (HIDDEN,), jnp.float32),
        "w2": 0.02 * jax.random.normal(kw2, (HIDDEN, NUM_CLASSES), jnp.float32),
        "b2": 0.02 * jax.random.normal(kb2, (NUM_CLASSES,), jnp.float32),
    }

    kparams = jax.tree_util.tree_map(jax.block_until_ready, prepare_params(params))

    fwd = jax.jit(aux_classifier_forward, static_argnums=2)
    out = jax.block_until_ready(fwd(x, kparams, NUM_CLASSES))
    ref = jax.block_until_ready(reference(x, params))

    assert out.shape == (N, NUM_CLASSES)
    np.testing.assert_allclose(np.asarray(out), np.asarray(ref),
                               rtol=2e-2, atol=2e-2)
    print("KERNEL_OK")
</pallas_src>

<mosaic_0001>
module attributes {stable_mosaic.version = 11 : i64} {
  func.func @aux_head_kernel(%arg0: i32, %arg1: memref<2x4x256xf32, #tpu.memory_space<vmem>>, %arg2: memref<16x256xf32, #tpu.memory_space<vmem>>, %arg3: memref<4x128xf32, #tpu.memory_space<vmem>>, %arg4: memref<1x128xf32, #tpu.memory_space<vmem>>, %arg5: memref<16x128x1024xi8, #tpu.memory_space<vmem>>, %arg6: memref<1x1024xf32, #tpu.memory_space<vmem>>, %arg7: memref<1x1024xf32, #tpu.memory_space<vmem>>, %arg8: memref<1024x128xbf16, #tpu.memory_space<vmem>>, %arg9: memref<1x128xf32, #tpu.memory_space<vmem>>, %arg10: memref<2x128xf32, #tpu.memory_space<vmem>>) attributes {dimension_semantics = [#tpu.dimension_semantics<arbitrary>], iteration_bounds = array<i64: 1>, scalar_prefetch = 0 : i64, scratch_operands = 0 : i64, tpu.core_type = #tpu.core_type<tc>, window_params = [{pipeline_mode = #tpu.pipeline_mode<synchronous>, transform_indices = @transform_0, window_bounds = array<i64: 2, 4, 256>}, {pipeline_mode = #tpu.pipeline_mode<synchronous>, transform_indices = @transform_1, window_bounds = array<i64: 16, 256>}, {pipeline_mode = #tpu.pipeline_mode<synchronous>, transform_indices = @transform_2, window_bounds = array<i64: 4, 128>}, {pipeline_mode = #tpu.pipeline_mode<synchronous>, transform_indices = @transform_3, window_bounds = array<i64: 1, 128>}, {pipeline_mode = #tpu.pipeline_mode<synchronous>, transform_indices = @transform_4, window_bounds = array<i64: 16, 128, 1024>}, {pipeline_mode = #tpu.pipeline_mode<synchronous>, transform_indices = @transform_5, window_bounds = array<i64: 1, 1024>}, {pipeline_mode = #tpu.pipeline_mode<synchronous>, transform_indices = @transform_6, window_bounds = array<i64: 1, 1024>}, {pipeline_mode = #tpu.pipeline_mode<synchronous>, transform_indices = @transform_7, window_bounds = array<i64: 1024, 128>}, {pipeline_mode = #tpu.pipeline_mode<synchronous>, transform_indices = @transform_8, window_bounds = array<i64: 1, 128>}, {pipeline_mode = #tpu.pipeline_mode<synchronous>, transform_indices = @transform_9, window_bounds = array<i64: 2, 128>}]} {
    %c0 = arith.constant 0 : index
    %c0_0 = arith.constant 0 : index
    %0 = vector.load %arg2[%c0, %c0_0] : memref<16x256xf32, #tpu.memory_space<vmem>>, vector<16x256xf32>
    %c0_1 = arith.constant 0 : index
    %c0_2 = arith.constant 0 : index
    %c0_3 = arith.constant 0 : index
    %1 = vector.load %arg1[%c0_1, %c0_2, %c0_3] : memref<2x4x256xf32, #tpu.memory_space<vmem>>, vector<1x4x256xf32>
    %2 = vector.shape_cast %1 : vector<1x4x256xf32> to vector<4x256xf32>
    %cst = arith.constant dense<0.000000e+00> : vector<16x4xf32>
    %3 = tpu.matmul %0, %2, %cst {dimension_numbers = #tpu.dot_dimension_numbers<[1], [1], [0], [0], [0, 0, 1, 0], [], []>} : vector<16x256xf32>, vector<4x256xf32>, vector<16x4xf32> -> vector<16x4xf32>
    %c0_4 = arith.constant 0 : index
    %c0_5 = arith.constant 0 : index
    %4 = vector.load %arg3[%c0_4, %c0_5] : memref<4x128xf32, #tpu.memory_space<vmem>>, vector<4x128xf32>
    %cst_6 = arith.constant dense<0.000000e+00> : vector<16x128xf32>
    %5 = tpu.matmul %3, %4, %cst_6 {dimension_numbers = #tpu.dot_dimension_numbers<[1], [0], [0], [1], [0, 0, 1, 1], [], []>} : vector<16x4xf32>, vector<4x128xf32>, vector<16x128xf32> -> vector<16x128xf32>
    %c0_7 = arith.constant 0 : index
    %c0_8 = arith.constant 0 : index
    %6 = vector.load %arg4[%c0_7, %c0_8] : memref<1x128xf32, #tpu.memory_space<vmem>>, vector<1x128xf32>
    %7 = vector.broadcast %6 : vector<1x128xf32> to vector<16x128xf32>
    %8 = arith.addf %5, %7 : vector<16x128xf32>
    %cst_9 = arith.constant 0.000000e+00 : f32
    %9 = vector.broadcast %cst_9 : f32 to vector<16x128xf32>
    %10 = arith.maximumf %8, %9 : vector<16x128xf32>
    %11 = vector.shape_cast %10 : vector<16x128xf32> to vector<1x16x128xf32>
    %c0_10 = arith.constant 0 : index
    %c0_11 = arith.constant 0 : index
    %12 = vector.load %arg2[%c0_10, %c0_11] : memref<16x256xf32, #tpu.memory_space<vmem>>, vector<16x256xf32>
    %c1 = arith.constant 1 : index
    %c0_12 = arith.constant 0 : index
    %c0_13 = arith.constant 0 : index
    %13 = vector.load %arg1[%c1, %c0_12, %c0_13] : memref<2x4x256xf32, #tpu.memory_space<vmem>>, vector<1x4x256xf32>
    %14 = vector.shape_cast %13 : vector<1x4x256xf32> to vector<4x256xf32>
    %cst_14 = arith.constant dense<0.000000e+00> : vector<16x4xf32>
    %15 = tpu.matmul %12, %14, %cst_14 {dimension_numbers = #tpu.dot_dimension_numbers<[1], [1], [0], [0], [0, 0, 1, 0], [], []>} : vector<16x256xf32>, vector<4x256xf32>, vector<16x4xf32> -> vector<16x4xf32>
    %c0_15 = arith.constant 0 : index
    %c0_16 = arith.constant 0 : index
    %16 = vector.load %arg3[%c0_15, %c0_16] : memref<4x128xf32, #tpu.memory_space<vmem>>, vector<4x128xf32>
    %cst_17 = arith.constant dense<0.000000e+00> : vector<16x128xf32>
    %17 = tpu.matmul %15, %16, %cst_17 {dimension_numbers = #tpu.dot_dimension_numbers<[1], [0], [0], [1], [0, 0, 1, 1], [], []>} : vector<16x4xf32>, vector<4x128xf32>, vector<16x128xf32> -> vector<16x128xf32>
    %c0_18 = arith.constant 0 : index
    %c0_19 = arith.constant 0 : index
    %18 = vector.load %arg4[%c0_18, %c0_19] : memref<1x128xf32, #tpu.memory_space<vmem>>, vector<1x128xf32>
    %19 = vector.broadcast %18 : vector<1x128xf32> to vector<16x128xf32>
    %20 = arith.addf %17, %19 : vector<16x128xf32>
    %cst_20 = arith.constant 0.000000e+00 : f32
    %21 = vector.broadcast %cst_20 : f32 to vector<16x128xf32>
    %22 = arith.maximumf %20, %21 : vector<16x128xf32>
    %23 = vector.shape_cast %22 : vector<16x128xf32> to vector<1x16x128xf32>
    %24 = tpu.concatenate %11, %23 in 0 : vector<1x16x128xf32>, vector<1x16x128xf32> -> vector<2x16x128xf32>
    %cst_21 = arith.constant 0.000000e+00 : f32
    %25 = vector.broadcast %cst_21 : f32 to vector<2x1024xf32>
    %c0_22 = arith.constant 0 : index
    %c0_23 = arith.constant 0 : index
    %c0_24 = arith.constant 0 : index
    %26 = vector.load %arg5[%c0_22, %c0_23, %c0_24] : memref<16x128x1024xi8, #tpu.memory_space<vmem>>, vector<1x128x1024xi8>
    %27 = vector.shape_cast %26 : vector<1x128x1024xi8> to vector<128x1024xi8>
    %28 = arith.sitofp %27 : vector<128x1024xi8> to vector<128x1024xbf16>
    %29 = vector.extract_strided_slice %24 {offsets = [0, 0, 0], sizes = [2, 1, 128], strides = [1, 1, 1]} : vector<2x16x128xf32> to vector<2x1x128xf32>
    %30 = vector.shape_cast %29 : vector<2x1x128xf32> to vector<2x128xf32>
    %31 = arith.truncf %30 : vector<2x128xf32> to vector<2x128xbf16>
    %cst_25 = arith.constant dense<0.000000e+00> : vector<2x1024xf32>
    %32 = tpu.matmul %31, %28, %cst_25 {dimension_numbers = #tpu.dot_dimension_numbers<[1], [0], [0], [1], [0, 0, 1, 1], [], []>} : vector<2x128xbf16>, vector<128x1024xbf16>, vector<2x1024xf32> -> vector<2x1024xf32>
    %33 = arith.addf %25, %32 : vector<2x1024xf32>
    %c1_26 = arith.constant 1 : index
    %c0_27 = arith.constant 0 : index
    %c0_28 = arith.constant 0 : index
    %34 = vector.load %arg5[%c1_26, %c0_27, %c0_28] : memref<16x128x1024xi8, #tpu.memory_space<vmem>>, vector<1x128x1024xi8>
    %35 = vector.shape_cast %34 : vector<1x128x1024xi8> to vector<128x1024xi8>
    %36 = arith.sitofp %35 : vector<128x1024xi8> to vector<128x1024xbf16>
    %37 = vector.extract_strided_slice %24 {offsets = [0, 1, 0], sizes = [2, 1, 128], strides = [1, 1, 1]} : vector<2x16x128xf32> to vector<2x1x128xf32>
    %38 = vector.shape_cast %37 : vector<2x1x128xf32> to vector<2x128xf32>
    %39 = arith.truncf %38 : vector<2x128xf32> to vector<2x128xbf16>
    %cst_29 = arith.constant dense<0.000000e+00> : vector<2x1024xf32>
    %40 = tpu.matmul %39, %36, %cst_29 {dimension_numbers = #tpu.dot_dimension_numbers<[1], [0], [0], [1], [0, 0, 1, 1], [], []>} : vector<2x128xbf16>, vector<128x1024xbf16>, vector<2x1024xf32> -> vector<2x1024xf32>
    %41 = arith.addf %33, %40 : vector<2x1024xf32>
    %c2 = arith.constant 2 : index
    %c0_30 = arith.constant 0 : index
    %c0_31 = arith.constant 0 : index
    %42 = vector.load %arg5[%c2, %c0_30, %c0_31] : memref<16x128x1024xi8, #tpu.memory_space<vmem>>, vector<1x128x1024xi8>
    %43 = vector.shape_cast %42 : vector<1x128x1024xi8> to vector<128x1024xi8>
    %44 = arith.sitofp %43 : vector<128x1024xi8> to vector<128x1024xbf16>
    %45 = vector.extract_strided_slice %24 {offsets = [0, 2, 0], sizes = [2, 1, 128], strides = [1, 1, 1]} : vector<2x16x128xf32> to vector<2x1x128xf32>
    %46 = vector.shape_cast %45 : vector<2x1x128xf32> to vector<2x128xf32>
    %47 = arith.truncf %46 : vector<2x128xf32> to vector<2x128xbf16>
    %cst_32 = arith.constant dense<0.000000e+00> : vector<2x1024xf32>
    %48 = tpu.matmul %47, %44, %cst_32 {dimension_numbers = #tpu.dot_dimension_numbers<[1], [0], [0], [1], [0, 0, 1, 1], [], []>} : vector<2x128xbf16>, vector<128x1024xbf16>, vector<2x1024xf32> -> vector<2x1024xf32>
    %49 = arith.addf %41, %48 : vector<2x1024xf32>
    %c3 = arith.constant 3 : index
    %c0_33 = arith.constant 0 : index
    %c0_34 = arith.constant 0 : index
    %50 = vector.load %arg5[%c3, %c0_33, %c0_34] : memref<16x128x1024xi8, #tpu.memory_space<vmem>>, vector<1x128x1024xi8>
    %51 = vector.shape_cast %50 : vector<1x128x1024xi8> to vector<128x1024xi8>
    %52 = arith.sitofp %51 : vector<128x1024xi8> to vector<128x1024xbf16>
    %53 = vector.extract_strided_slice %24 {offsets = [0, 3, 0], sizes = [2, 1, 128], strides = [1, 1, 1]} : vector<2x16x128xf32> to vector<2x1x128xf32>
    %54 = vector.shape_cast %53 : vector<2x1x128xf32> to vector<2x128xf32>
    %55 = arith.truncf %54 : vector<2x128xf32> to vector<2x128xbf16>
    %cst_35 = arith.constant dense<0.000000e+00> : vector<2x1024xf32>
    %56 = tpu.matmul %55, %52, %cst_35 {dimension_numbers = #tpu.dot_dimension_numbers<[1], [0], [0], [1], [0, 0, 1, 1], [], []>} : vector<2x128xbf16>, vector<128x1024xbf16>, vector<2x1024xf32> -> vector<2x1024xf32>
    %57 = arith.addf %49, %56 : vector<2x1024xf32>
    %c4 = arith.constant 4 : index
    %c0_36 = arith.constant 0 : index
    %c0_37 = arith.constant 0 : index
    %58 = vector.load %arg5[%c4, %c0_36, %c0_37] : memref<16x128x1024xi8, #tpu.memory_space<vmem>>, vector<1x128x1024xi8>
    %59 = vector.shape_cast %58 : vector<1x128x1024xi8> to vector<128x1024xi8>
    %60 = arith.sitofp %59 : vector<128x1024xi8> to vector<128x1024xbf16>
    %61 = vector.extract_strided_slice %24 {offsets = [0, 4, 0], sizes = [2, 1, 128], strides = [1, 1, 1]} : vector<2x16x128xf32> to vector<2x1x128xf32>
    %62 = vector.shape_cast %61 : vector<2x1x128xf32> to vector<2x128xf32>
    %63 = arith.truncf %62 : vector<2x128xf32> to vector<2x128xbf16>
    %cst_38 = arith.constant dense<0.000000e+00> : vector<2x1024xf32>
    %64 = tpu.matmul %63, %60, %cst_38 {dimension_numbers = #tpu.dot_dimension_numbers<[1], [0], [0], [1], [0, 0, 1, 1], [], []>} : vector<2x128xbf16>, vector<128x1024xbf16>, vector<2x1024xf32> -> vector<2x1024xf32>
    %65 = arith.addf %57, %64 : vector<2x1024xf32>
    %c5 = arith.constant 5 : index
    %c0_39 = arith.constant 0 : index
    %c0_40 = arith.constant 0 : index
    %66 = vector.load %arg5[%c5, %c0_39, %c0_40] : memref<16x128x1024xi8, #tpu.memory_space<vmem>>, vector<1x128x1024xi8>
    %67 = vector.shape_cast %66 : vector<1x128x1024xi8> to vector<128x1024xi8>
    %68 = arith.sitofp %67 : vector<128x1024xi8> to vector<128x1024xbf16>
    %69 = vector.extract_strided_slice %24 {offsets = [0, 5, 0], sizes = [2, 1, 128], strides = [1, 1, 1]} : vector<2x16x128xf32> to vector<2x1x128xf32>
    %70 = vector.shape_cast %69 : vector<2x1x128xf32> to vector<2x128xf32>
    %71 = arith.truncf %70 : vector<2x128xf32> to vector<2x128xbf16>
    %cst_41 = arith.constant dense<0.000000e+00> : vector<2x1024xf32>
    %72 = tpu.matmul %71, %68, %cst_41 {dimension_numbers = #tpu.dot_dimension_numbers<[1], [0], [0], [1], [0, 0, 1, 1], [], []>} : vector<2x128xbf16>, vector<128x1024xbf16>, vector<2x1024xf32> -> vector<2x1024xf32>
    %73 = arith.addf %65, %72 : vector<2x1024xf32>
    %c6 = arith.constant 6 : index
    %c0_42 = arith.constant 0 : index
    %c0_43 = arith.constant 0 : index
    %74 = vector.load %arg5[%c6, %c0_42, %c0_43] : memref<16x128x1024xi8, #tpu.memory_space<vmem>>, vector<1x128x1024xi8>
    %75 = vector.shape_cast %74 : vector<1x128x1024xi8> to vector<128x1024xi8>
    %76 = arith.sitofp %75 : vector<128x1024xi8> to vector<128x1024xbf16>
    %77 = vector.extract_strided_slice %24 {offsets = [0, 6, 0], sizes = [2, 1, 128], strides = [1, 1, 1]} : vector<2x16x128xf32> to vector<2x1x128xf32>
    %78 = vector.shape_cast %77 : vector<2x1x128xf32> to vector<2x128xf32>
    %79 = arith.truncf %78 : vector<2x128xf32> to vector<2x128xbf16>
    %cst_44 = arith.constant dense<0.000000e+00> : vector<2x1024xf32>
    %80 = tpu.matmul %79, %76, %cst_44 {dimension_numbers = #tpu.dot_dimension_numbers<[1], [0], [0], [1], [0, 0, 1, 1], [], []>} : vector<2x128xbf16>, vector<128x1024xbf16>, vector<2x1024xf32> -> vector<2x1024xf32>
    %81 = arith.addf %73, %80 : vector<2x1024xf32>
    %c7 = arith.constant 7 : index
    %c0_45 = arith.constant 0 : index
    %c0_46 = arith.constant 0 : index
    %82 = vector.load %arg5[%c7, %c0_45, %c0_46] : memref<16x128x1024xi8, #tpu.memory_space<vmem>>, vector<1x128x1024xi8>
    %83 = vector.shape_cast %82 : vector<1x128x1024xi8> to vector<128x1024xi8>
    %84 = arith.sitofp %83 : vector<128x1024xi8> to vector<128x1024xbf16>
    %85 = vector.extract_strided_slice %24 {offsets = [0, 7, 0], sizes = [2, 1, 128], strides = [1, 1, 1]} : vector<2x16x128xf32> to vector<2x1x128xf32>
    %86 = vector.shape_cast %85 : vector<2x1x128xf32> to vector<2x128xf32>
    %87 = arith.truncf %86 : vector<2x128xf32> to vector<2x128xbf16>
    %cst_47 = arith.constant dense<0.000000e+00> : vector<2x1024xf32>
    %88 = tpu.matmul %87, %84, %cst_47 {dimension_numbers = #tpu.dot_dimension_numbers<[1], [0], [0], [1], [0, 0, 1, 1], [], []>} : vector<2x128xbf16>, vector<128x1024xbf16>, vector<2x1024xf32> -> vector<2x1024xf32>
    %89 = arith.addf %81, %88 : vector<2x1024xf32>
    %c8 = arith.constant 8 : index
    %c0_48 = arith.constant 0 : index
    %c0_49 = arith.constant 0 : index
    %90 = vector.load %arg5[%c8, %c0_48, %c0_49] : memref<16x128x1024xi8, #tpu.memory_space<vmem>>, vector<1x128x1024xi8>
    %91 = vector.shape_cast %90 : vector<1x128x1024xi8> to vector<128x1024xi8>
    %92 = arith.sitofp %91 : vector<128x1024xi8> to vector<128x1024xbf16>
    %93 = vector.extract_strided_slice %24 {offsets = [0, 8, 0], sizes = [2, 1, 128], strides = [1, 1, 1]} : vector<2x16x128xf32> to vector<2x1x128xf32>
    %94 = vector.shape_cast %93 : vector<2x1x128xf32> to vector<2x128xf32>
    %95 = arith.truncf %94 : vector<2x128xf32> to vector<2x128xbf16>
    %cst_50 = arith.constant dense<0.000000e+00> : vector<2x1024xf32>
    %96 = tpu.matmul %95, %92, %cst_50 {dimension_numbers = #tpu.dot_dimension_numbers<[1], [0], [0], [1], [0, 0, 1, 1], [], []>} : vector<2x128xbf16>, vector<128x1024xbf16>, vector<2x1024xf32> -> vector<2x1024xf32>
    %97 = arith.addf %89, %96 : vector<2x1024xf32>
    %c9 = arith.constant 9 : index
    %c0_51 = arith.constant 0 : index
    %c0_52 = arith.constant 0 : index
    %98 = vector.load %arg5[%c9, %c0_51, %c0_52] : memref<16x128x1024xi8, #tpu.memory_space<vmem>>, vector<1x128x1024xi8>
    %99 = vector.shape_cast %98 : vector<1x128x1024xi8> to vector<128x1024xi8>
    %100 = arith.sitofp %99 : vector<128x1024xi8> to vector<128x1024xbf16>
    %101 = vector.extract_strided_slice %24 {offsets = [0, 9, 0], sizes = [2, 1, 128], strides = [1, 1, 1]} : vector<2x16x128xf32> to vector<2x1x128xf32>
    %102 = vector.shape_cast %101 : vector<2x1x128xf32> to vector<2x128xf32>
    %103 = arith.truncf %102 : vector<2x128xf32> to vector<2x128xbf16>
    %cst_53 = arith.constant dense<0.000000e+00> : vector<2x1024xf32>
    %104 = tpu.matmul %103, %100, %cst_53 {dimension_numbers = #tpu.dot_dimension_numbers<[1], [0], [0], [1], [0, 0, 1, 1], [], []>} : vector<2x128xbf16>, vector<128x1024xbf16>, vector<2x1024xf32> -> vector<2x1024xf32>
    %105 = arith.addf %97, %104 : vector<2x1024xf32>
    %c10 = arith.constant 10 : index
    %c0_54 = arith.constant 0 : index
    %c0_55 = arith.constant 0 : index
    %106 = vector.load %arg5[%c10, %c0_54, %c0_55] : memref<16x128x1024xi8, #tpu.memory_space<vmem>>, vector<1x128x1024xi8>
    %107 = vector.shape_cast %106 : vector<1x128x1024xi8> to vector<128x1024xi8>
    %108 = arith.sitofp %107 : vector<128x1024xi8> to vector<128x1024xbf16>
    %109 = vector.extract_strided_slice %24 {offsets = [0, 10, 0], sizes = [2, 1, 128], strides = [1, 1, 1]} : vector<2x16x128xf32> to vector<2x1x128xf32>
    %110 = vector.shape_cast %109 : vector<2x1x128xf32> to vector<2x128xf32>
    %111 = arith.truncf %110 : vector<2x128xf32> to vector<2x128xbf16>
    %cst_56 = arith.constant dense<0.000000e+00> : vector<2x1024xf32>
    %112 = tpu.matmul %111, %108, %cst_56 {dimension_numbers = #tpu.dot_dimension_numbers<[1], [0], [0], [1], [0, 0, 1, 1], [], []>} : vector<2x128xbf16>, vector<128x1024xbf16>, vector<2x1024xf32> -> vector<2x1024xf32>
    %113 = arith.addf %105, %112 : vector<2x1024xf32>
    %c11 = arith.constant 11 : index
    %c0_57 = arith.constant 0 : index
    %c0_58 = arith.constant 0 : index
    %114 = vector.load %arg5[%c11, %c0_57, %c0_58] : memref<16x128x1024xi8, #tpu.memory_space<vmem>>, vector<1x128x1024xi8>
    %115 = vector.shape_cast %114 : vector<1x128x1024xi8> to vector<128x1024xi8>
    %116 = arith.sitofp %115 : vector<128x1024xi8> to vector<128x1024xbf16>
    %117 = vector.extract_strided_slice %24 {offsets = [0, 11, 0], sizes = [2, 1, 128], strides = [1, 1, 1]} : vector<2x16x128xf32> to vector<2x1x128xf32>
    %118 = vector.shape_cast %117 : vector<2x1x128xf32> to vector<2x128xf32>
    %119 = arith.truncf %118 : vector<2x128xf32> to vector<2x128xbf16>
    %cst_59 = arith.constant dense<0.000000e+00> : vector<2x1024xf32>
    %120 = tpu.matmul %119, %116, %cst_59 {dimension_numbers = #tpu.dot_dimension_numbers<[1], [0], [0], [1], [0, 0, 1, 1], [], []>} : vector<2x128xbf16>, vector<128x1024xbf16>, vector<2x1024xf32> -> vector<2x1024xf32>
    %121 = arith.addf %113, %120 : vector<2x1024xf32>
    %c12 = arith.constant 12 : index
    %c0_60 = arith.constant 0 : index
    %c0_61 = arith.constant 0 : index
    %122 = vector.load %arg5[%c12, %c0_60, %c0_61] : memref<16x128x1024xi8, #tpu.memory_space<vmem>>, vector<1x128x1024xi8>
    %123 = vector.shape_cast %122 : vector<1x128x1024xi8> to vector<128x1024xi8>
    %124 = arith.sitofp %123 : vector<128x1024xi8> to vector<128x1024xbf16>
    %125 = vector.extract_strided_slice %24 {offsets = [0, 12, 0], sizes = [2, 1, 128], strides = [1, 1, 1]} : vector<2x16x128xf32> to vector<2x1x128xf32>
    %126 = vector.shape_cast %125 : vector<2x1x128xf32> to vector<2x128xf32>
    %127 = arith.truncf %126 : vector<2x128xf32> to vector<2x128xbf16>
    %cst_62 = arith.constant dense<0.000000e+00> : vector<2x1024xf32>
    %128 = tpu.matmul %127, %124, %cst_62 {dimension_numbers = #tpu.dot_dimension_numbers<[1], [0], [0], [1], [0, 0, 1, 1], [], []>} : vector<2x128xbf16>, vector<128x1024xbf16>, vector<2x1024xf32> -> vector<2x1024xf32>
    %129 = arith.addf %121, %128 : vector<2x1024xf32>
    %c13 = arith.constant 13 : index
    %c0_63 = arith.constant 0 : index
    %c0_64 = arith.constant 0 : index
    %130 = vector.load %arg5[%c13, %c0_63, %c0_64] : memref<16x128x1024xi8, #tpu.memory_space<vmem>>, vector<1x128x1024xi8>
    %131 = vector.shape_cast %130 : vector<1x128x1024xi8> to vector<128x1024xi8>
    %132 = arith.sitofp %131 : vector<128x1024xi8> to vector<128x1024xbf16>
    %133 = vector.extract_strided_slice %24 {offsets = [0, 13, 0], sizes = [2, 1, 128], strides = [1, 1, 1]} : vector<2x16x128xf32> to vector<2x1x128xf32>
    %134 = vector.shape_cast %133 : vector<2x1x128xf32> to vector<2x128xf32>
    %135 = arith.truncf %134 : vector<2x128xf32> to vector<2x128xbf16>
    %cst_65 = arith.constant dense<0.000000e+00> : vector<2x1024xf32>
    %136 = tpu.matmul %135, %132, %cst_65 {dimension_numbers = #tpu.dot_dimension_numbers<[1], [0], [0], [1], [0, 0, 1, 1], [], []>} : vector<2x128xbf16>, vector<128x1024xbf16>, vector<2x1024xf32> -> vector<2x1024xf32>
    %137 = arith.addf %129, %136 : vector<2x1024xf32>
    %c14 = arith.constant 14 : index
    %c0_66 = arith.constant 0 : index
    %c0_67 = arith.constant 0 : index
    %138 = vector.load %arg5[%c14, %c0_66, %c0_67] : memref<16x128x1024xi8, #tpu.memory_space<vmem>>, vector<1x128x1024xi8>
    %139 = vector.shape_cast %138 : vector<1x128x1024xi8> to vector<128x1024xi8>
    %140 = arith.sitofp %139 : vector<128x1024xi8> to vector<128x1024xbf16>
    %141 = vector.extract_strided_slice %24 {offsets = [0, 14, 0], sizes = [2, 1, 128], strides = [1, 1, 1]} : vector<2x16x128xf32> to vector<2x1x128xf32>
    %142 = vector.shape_cast %141 : vector<2x1x128xf32> to vector<2x128xf32>
    %143 = arith.truncf %142 : vector<2x128xf32> to vector<2x128xbf16>
    %cst_68 = arith.constant dense<0.000000e+00> : vector<2x1024xf32>
    %144 = tpu.matmul %143, %140, %cst_68 {dimension_numbers = #tpu.dot_dimension_numbers<[1], [0], [0], [1], [0, 0, 1, 1], [], []>} : vector<2x128xbf16>, vector<128x1024xbf16>, vector<2x1024xf32> -> vector<2x1024xf32>
    %145 = arith.addf %137, %144 : vector<2x1024xf32>
    %c15 = arith.constant 15 : index
    %c0_69 = arith.constant 0 : index
    %c0_70 = arith.constant 0 : index
    %146 = vector.load %arg5[%c15, %c0_69, %c0_70] : memref<16x128x1024xi8, #tpu.memory_space<vmem>>, vector<1x128x1024xi8>
    %147 = vector.shape_cast %146 : vector<1x128x1024xi8> to vector<128x1024xi8>
    %148 = arith.sitofp %147 : vector<128x1024xi8> to vector<128x1024xbf16>
    %149 = vector.extract_strided_slice %24 {offsets = [0, 15, 0], sizes = [2, 1, 128], strides = [1, 1, 1]} : vector<2x16x128xf32> to vector<2x1x128xf32>
    %150 = vector.shape_cast %149 : vector<2x1x128xf32> to vector<2x128xf32>
    %151 = arith.truncf %150 : vector<2x128xf32> to vector<2x128xbf16>
    %cst_71 = arith.constant dense<0.000000e+00> : vector<2x1024xf32>
    %152 = tpu.matmul %151, %148, %cst_71 {dimension_numbers = #tpu.dot_dimension_numbers<[1], [0], [0], [1], [0, 0, 1, 1], [], []>} : vector<2x128xbf16>, vector<128x1024xbf16>, vector<2x1024xf32> -> vector<2x1024xf32>
    %153 = arith.addf %145, %152 : vector<2x1024xf32>
    %c0_72 = arith.constant 0 : index
    %c0_73 = arith.constant 0 : index
    %154 = vector.load %arg6[%c0_72, %c0_73] : memref<1x1024xf32, #tpu.memory_space<vmem>>, vector<1x1024xf32>
    %155 = vector.broadcast %154 : vector<1x1024xf32> to vector<2x1024xf32>
    %156 = arith.mulf %153, %155 : vector<2x1024xf32>
    %c0_74 = arith.constant 0 : index
    %c0_75 = arith.constant 0 : index
    %157 = vector.load %arg7[%c0_74, %c0_75] : memref<1x1024xf32, #tpu.memory_space<vmem>>, vector<1x1024xf32>
    %158 = vector.broadcast %157 : vector<1x1024xf32> to vector<2x1024xf32>
    %159 = arith.addf %156, %158 : vector<2x1024xf32>
    %cst_76 = arith.constant 0.000000e+00 : f32
    %160 = vector.broadcast %cst_76 : f32 to vector<2x1024xf32>
    %161 = arith.maximumf %159, %160 : vector<2x1024xf32>
    %162 = arith.truncf %161 : vector<2x1024xf32> to vector<2x1024xbf16>
    %c0_77 = arith.constant 0 : index
    %c0_78 = arith.constant 0 : index
    %163 = vector.load %arg8[%c0_77, %c0_78] : memref<1024x128xbf16, #tpu.memory_space<vmem>>, vector<1024x128xbf16>
    %cst_79 = arith.constant dense<0.000000e+00> : vector<2x128xf32>
    %164 = tpu.matmul %162, %163, %cst_79 {dimension_numbers = #tpu.dot_dimension_numbers<[1], [0], [0], [1], [0, 0, 1, 1], [], []>} : vector<2x1024xbf16>, vector<1024x128xbf16>, vector<2x128xf32> -> vector<2x128xf32>
    %c0_80 = arith.constant 0 : index
    %c0_81 = arith.constant 0 : index
    %165 = vector.load %arg9[%c0_80, %c0_81] : memref<1x128xf32, #tpu.memory_space<vmem>>, vector<1x128xf32>
    %166 = vector.broadcast %165 : vector<1x128xf32> to vector<2x128xf32>
    %167 = arith.addf %164, %166 : vector<2x128xf32>
    %c0_82 = arith.constant 0 : index
    %c0_83 = arith.constant 0 : index
    %168 = vector.load %arg10[%c0_82, %c0_83] : memref<2x128xf32, #tpu.memory_space<vmem>>, vector<2x128xf32>
    tpu.vector_store %arg10[%c0_82, %c0_83], %167 {strides = array<i32>} : memref<2x128xf32, #tpu.memory_space<vmem>>, vector<2x128xf32>,
    return
  }
  func.func @transform_0(%arg0: i32) -> (i32, i32, i32) {
    %c0_i32 = arith.constant 0 : i32
    %c0_i32_0 = arith.constant 0 : i32
    %c0_i32_1 = arith.constant 0 : i32
    %c0_i32_2 = arith.constant 0 : i32
    return %c0_i32, %c0_i32_0, %c0_i32_1 : i32, i32, i32
  }
  func.func @transform_1(%arg0: i32) -> (i32, i32) {
    %c0_i32 = arith.constant 0 : i32
    %c0_i32_0 = arith.constant 0 : i32
    %c0_i32_1 = arith.constant 0 : i32
    return %c0_i32, %c0_i32_0 : i32, i32
  }
  func.func @transform_2(%arg0: i32) -> (i32, i32) {
    %c0_i32 = arith.constant 0 : i32
    %c0_i32_0 = arith.constant 0 : i32
    %c0_i32_1 = arith.constant 0 : i32
    return %c0_i32, %c0_i32_0 : i32, i32
  }
  func.func @transform_3(%arg0: i32) -> (i32, i32) {
    %c0_i32 = arith.constant 0 : i32
    %c0_i32_0 = arith.constant 0 : i32
    %c0_i32_1 = arith.constant 0 : i32
    return %c0_i32, %c0_i32_0 : i32, i32
  }
  func.func @transform_4(%arg0: i32) -> (i32, i32, i32) {
    %c0_i32 = arith.constant 0 : i32
    %c0_i32_0 = arith.constant 0 : i32
    %c0_i32_1 = arith.constant 0 : i32
    %c0_i32_2 = arith.constant 0 : i32
    return %c0_i32, %c0_i32_0, %c0_i32_1 : i32, i32, i32
  }
  func.func @transform_5(%arg0: i32) -> (i32, i32) {
    %c0_i32 = arith.constant 0 : i32
    %c0_i32_0 = arith.constant 0 : i32
    %c0_i32_1 = arith.constant 0 : i32
    return %c0_i32, %c0_i32_0 : i32, i32
  }
  func.func @transform_6(%arg0: i32) -> (i32, i32) {
    %c0_i32 = arith.constant 0 : i32
    %c0_i32_0 = arith.constant 0 : i32
    %c0_i32_1 = arith.constant 0 : i32
    return %c0_i32, %c0_i32_0 : i32, i32
  }
  func.func @transform_7(%arg0: i32) -> (i32, i32) {
    %c0_i32 = arith.constant 0 : i32
    %c0_i32_0 = arith.constant 0 : i32
    %c0_i32_1 = arith.constant 0 : i32
    return %c0_i32, %c0_i32_0 : i32, i32
  }
  func.func @transform_8(%arg0: i32) -> (i32, i32) {
    %c0_i32 = arith.constant 0 : i32
    %c0_i32_0 = arith.constant 0 : i32
    %c0_i32_1 = arith.constant 0 : i32
    return %c0_i32, %c0_i32_0 : i32, i32
  }
  func.func @transform_9(%arg0: i32) -> (i32, i32) {
    %c0_i32 = arith.constant 0 : i32
    %c0_i32_0 = arith.constant 0 : i32
    %c0_i32_1 = arith.constant 0 : i32
    return %c0_i32, %c0_i32_0 : i32, i32
  }
}

</mosaic_0001>

<llo_original>
// kernel: aux_classifier_forward.1
$region0: #{aux_classifier_forward.1}
  #allocation0 [shape = 'u32[]', space=smem, size = 0x4, offset = 0x4, fixed_abs, tag = 'smem constant byte address 0x4 - core index']
  #allocation1 [shape = 'u32[144,128]{1,0:T(1,128)}', space=vmem, size = 0x12000, scoped, tag = 'internal scratch']
  %s0 = inlined_call_operand.vmem [shape: f32[2,4,256], index: 0, kind: input, shape index: {}]
  %s1 = inlined_call_operand.hbm [shape: f32[16,256], index: 1, kind: input, shape index: {}]
  %s2 = inlined_call_operand.hbm [shape: f32[4,128], index: 2, kind: input, shape index: {}]
  %s3 = inlined_call_operand.hbm [shape: f32[1,128], index: 3, kind: input, shape index: {}]
  %s4 = inlined_call_operand.hbm [shape: s8[16,128,1024], index: 4, kind: input, shape index: {}]
  %s5 = inlined_call_operand.hbm [shape: f32[1,1024], index: 5, kind: input, shape index: {}]
  %s6 = inlined_call_operand.hbm [shape: f32[1,1024], index: 6, kind: input, shape index: {}]
  %s7 = inlined_call_operand.hbm [shape: bf16[1024,128], index: 7, kind: input, shape index: {}]
  %s8 = inlined_call_operand.hbm [shape: f32[1,128], index: 8, kind: input, shape index: {}]
  %s9 = inlined_call_operand.hbm [shape: f32[2,128], index: 9, kind: output, shape index: {}]
  %s10 = sld [smem:[#allocation0]]
  $region78: #{aux_classifier_forward.1} parent=0
    _
  %s12 = ssub.s32 1, %s10
  %s13 = scalar_select 0, %s12, %s10
  $region1: #{aux_classifier_forward.1} parent=0
    #allocation2 [shape = 'u8[16384]{0}', space=vmem, size = 0x4000, scoped, tag = 'input window, operand 1, single buffered']
    #allocation3 [shape = 's32[1]{0}', space=sflag, size = 0x4, scoped, tag = 'scoped memory for aux_classifier_forward.1']
    #allocation4 [shape = 's32[1]{0}', space=sflag, size = 0x4, scoped, tag = 'scoped memory for aux_classifier_forward.1']
    #allocation5 [shape = 'u8[2048]{0}', space=vmem, size = 0x800, scoped, tag = 'input window, operand 2, single buffered']
    #allocation6 [shape = 's32[1]{0}', space=sflag, size = 0x4, scoped, tag = 'scoped memory for aux_classifier_forward.1']
    #allocation7 [shape = 'u8[512]{0}', space=vmem, size = 0x400, scoped, tag = 'input window, operand 3, single buffered']
    #allocation8 [shape = 'u8[2097152]{0}', space=vmem, size = 0x200000, scoped, tag = 'input window, operand 4, single buffered']
    #allocation9 [shape = 's32[1]{0}', space=sflag, size = 0x4, scoped, tag = 'scoped memory for aux_classifier_forward.1']
    #allocation10 [shape = 'u8[4096]{0}', space=vmem, size = 0x1000, scoped, tag = 'input window, operand 5, single buffered']
    #allocation11 [shape = 'u8[4096]{0}', space=vmem, size = 0x1000, scoped, tag = 'input window, operand 6, single buffered']
    #allocation12 [shape = 's32[1]{0}', space=sflag, size = 0x4, scoped, tag = 'scoped memory for aux_classifier_forward.1']
    #allocation13 [shape = 'u8[262144]{0}', space=vmem, size = 0x40000, scoped, tag = 'input window, operand 7, single buffered']
    #allocation14 [shape = 'u8[512]{0}', space=vmem, size = 0x400, scoped, tag = 'input window, operand 8, single buffered']
    #allocation15 [shape = 's32[1]{0}', space=sflag, size = 0x4, scoped, tag = 'scoped memory for aux_classifier_forward.1']
    #allocation16 [shape = 'u8[1024]{0}', space=vmem, size = 0x400, scoped, tag = 'output window, operand 0, single buffered']
    %14 = vsyncpa [#allocation3], 0
    %15 = vsyncpa [#allocation6], 0
    %16 = vsyncpa [#allocation9], 0
    %17 = vsyncpa [#allocation12], 0
    %18 = vsyncpa [#allocation15], 0
    %19 = vsyncpa [#allocation4], 0
    // Predicated region
    $region2: #{aux_classifier_forward.1} parent=1 // pred_check
      _
    $region3: #{aux_classifier_forward.1} parent=1 // pred_check_branch
      %21 = sbr.rel (0) target = $region5
    $region4: #{aux_classifier_forward.1} parent=1 // pred_region
      _
    $region5: #{aux_classifier_forward.1} parent=1 // pred_fallthru
      _
    // Predicated region
    $region6: #{aux_classifier_forward.1} parent=1 // pred_check
      _
    $region7: #{aux_classifier_forward.1} parent=1 // pred_check_branch
      %23 = sbr.rel (0) target = $region9
    $region8: #{aux_classifier_forward.1} parent=1 // pred_region
      %s25 = ssub.s32 512, 512
      %26 = vsyncadd [#allocation3], %s25
      %s27 = sshll.u32 [#allocation2], 4
      %s28 = int_to_ptr.vmem [resolvable:$true] %s27
      %33 = dma.hbm_to_vmem [thread:$0]  %s1, 512, %s28, [#allocation3], 256, 256, 16
    $region9: #{aux_classifier_forward.1} parent=1 // pred_fallthru
      _
    // Predicated region
    $region10: #{aux_classifier_forward.1} parent=1 // pred_check
      _
    $region11: #{aux_classifier_forward.1} parent=1 // pred_check_branch
      %35 = sbr.rel (0) target = $region13
    $region12: #{aux_classifier_forward.1} parent=1 // pred_region
      %s37 = ssub.s32 64, 64
      %38 = vsyncadd [#allocation6], %s37
      %s40 = sshll.u32 [#allocation5], 4
      %s41 = int_to_ptr.vmem [resolvable:$true] %s40
      %43 = dma.hbm_to_vmem [thread:$0]  %s2, 64, %s41, [#allocation6]
    $region13: #{aux_classifier_forward.1} parent=1 // pred_fallthru
      _
    // Predicated region
    $region14: #{aux_classifier_forward.1} parent=1 // pred_check
      _
    $region15: #{aux_classifier_forward.1} parent=1 // pred_check_branch
      %45 = sbr.rel (0) target = $region17
    $region16: #{aux_classifier_forward.1} parent=1 // pred_region
      %s47 = ssub.s32 16, 16
      %48 = vsyncadd [#allocation6], %s47
      %s50 = sshll.u32 [#allocation7], 4
      %s51 = int_to_ptr.vmem [resolvable:$true] %s50
      %53 = dma.hbm_to_vmem [thread:$0]  %s3, 16, %s51, [#allocation6]
    $region17: #{aux_classifier_forward.1} parent=1 // pred_fallthru
      _
    // Predicated region
    $region18: #{aux_classifier_forward.1} parent=1 // pred_check
      _
    $region19: #{aux_classifier_forward.1} parent=1 // pred_check_branch
      %55 = sbr.rel (0) target = $region21
    $region20: #{aux_classifier_forward.1} parent=1 // pred_region
      %s57 = ssub.s32 65536, 65536
      %58 = vsyncadd [#allocation9], %s57
      %s59 = sshll.u32 [#allocation8], 4
      %s60 = int_to_ptr.vmem [resolvable:$true] %s59
      %65 = dma.hbm_to_vmem [thread:$0]  %s4, 65536, %s60, [#allocation9], 1024, 1024, 64
    $region21: #{aux_classifier_forward.1} parent=1 // pred_fallthru
      _
    // Predicated region
    $region22: #{aux_classifier_forward.1} parent=1 // pred_check
      _
    $region23: #{aux_classifier_forward.1} parent=1 // pred_check_branch
      %67 = sbr.rel (0) target = $region25
    $region24: #{aux_classifier_forward.1} parent=1 // pred_region
      %s69 = ssub.s32 128, 128
      %70 = vsyncadd [#allocation9], %s69
      %s72 = sshll.u32 [#allocation10], 4
      %s73 = int_to_ptr.vmem [resolvable:$true] %s72
      %75 = dma.hbm_to_vmem [thread:$0]  %s5, 128, %s73, [#allocation9]
    $region25: #{aux_classifier_forward.1} parent=1 // pred_fallthru
      _
    // Predicated region
    $region26: #{aux_classifier_forward.1} parent=1 // pred_check
      _
    $region27: #{aux_classifier_forward.1} parent=1 // pred_check_branch
      %77 = sbr.rel (0) target = $region29
    $region28: #{aux_classifier_forward.1} parent=1 // pred_region
      %s79 = ssub.s32 128, 128
      %80 = vsyncadd [#allocation12], %s79
      %s82 = sshll.u32 [#allocation11], 4
      %s83 = int_to_ptr.vmem [resolvable:$true] %s82
      %85 = dma.hbm_to_vmem [thread:$0]  %s6, 128, %s83, [#allocation12]
    $region29: #{aux_classifier_forward.1} parent=1 // pred_fallthru
      _
    // Predicated region
    $region30: #{aux_classifier_forward.1} parent=1 // pred_check
      _
    $region31: #{aux_classifier_forward.1} parent=1 // pred_check_branch
      %87 = sbr.rel (0) target = $region33
    $region32: #{aux_classifier_forward.1} parent=1 // pred_region
      %s89 = ssub.s32 8192, 8192
      %90 = vsyncadd [#allocation12], %s89
      %s91 = sshll.u32 [#allocation13], 4
      %s92 = int_to_ptr.vmem [resolvable:$true] %s91
      %97 = dma.hbm_to_vmem [thread:$0]  %s7, 8192, %s92, [#allocation12], 64, 64, 4
    $region33: #{aux_classifier_forward.1} parent=1 // pred_fallthru
      _
    // Predicated region
    $region34: #{aux_classifier_forward.1} parent=1 // pred_check
      _
    $region35: #{aux_classifier_forward.1} parent=1 // pred_check_branch
      %99 = sbr.rel (0) target = $region37
    $region36: #{aux_classifier_forward.1} parent=1 // pred_region
      %s101 = ssub.s32 16, 16
      %102 = vsyncadd [#allocation15], %s101
      %s104 = sshll.u32 [#allocation14], 4
      %s105 = int_to_ptr.vmem [resolvable:$true] %s104
      %107 = dma.hbm_to_vmem [thread:$0]  %s8, 16, %s105, [#allocation15]
    $region37: #{aux_classifier_forward.1} parent=1 // pred_fallthru
      _
    // Predicated region
    $region38: #{aux_classifier_forward.1} parent=1 // pred_check
      _
    $region39: #{aux_classifier_forward.1} parent=1 // pred_check_branch
      %109 = sbr.rel (0) target = $region41
    $region40: #{aux_classifier_forward.1} parent=1 // pred_region
      %110 = dma.done [#allocation3], 512
    $region41: #{aux_classifier_forward.1} parent=1 // pred_fallthru
      _
    // Predicated region
    $region42: #{aux_classifier_forward.1} parent=1 // pred_check
      _
    $region43: #{aux_classifier_forward.1} parent=1 // pred_check_branch
      %112 = sbr.rel (0) target = $region45
    $region44: #{aux_classifier_forward.1} parent=1 // pred_region
      %113 = dma.done [#allocation6], 64
    $region45: #{aux_classifier_forward.1} parent=1 // pred_fallthru
      _
    // Predicated region
    $region46: #{aux_classifier_forward.1} parent=1 // pred_check
      _
    $region47: #{aux_classifier_forward.1} parent=1 // pred_check_branch
      %115 = sbr.rel (0) target = $region49
    $region48: #{aux_classifier_forward.1} parent=1 // pred_region
      %116 = dma.done [#allocation6], 16
    $region49: #{aux_classifier_forward.1} parent=1 // pred_fallthru
      _
    // Predicated region
    $region50: #{aux_classifier_forward.1} parent=1 // pred_check
      _
    $region51: #{aux_classifier_forward.1} parent=1 // pred_check_branch
      %118 = sbr.rel (0) target = $region53
    $region52: #{aux_classifier_forward.1} parent=1 // pred_region
      %119 = dma.done [#allocation9], 65536
    $region53: #{aux_classifier_forward.1} parent=1 // pred_fallthru
      _
    // Predicated region
    $region54: #{aux_classifier_forward.1} parent=1 // pred_check
      _
    $region55: #{aux_classifier_forward.1} parent=1 // pred_check_branch
      %121 = sbr.rel (0) target = $region57
    $region56: #{aux_classifier_forward.1} parent=1 // pred_region
      %122 = dma.done [#allocation9], 128
    $region57: #{aux_classifier_forward.1} parent=1 // pred_fallthru
      _
    // Predicated region
    $region58: #{aux_classifier_forward.1} parent=1 // pred_check
      _
    $region59: #{aux_classifier_forward.1} parent=1 // pred_check_branch
      %124 = sbr.rel (0) target = $region61
    $region60: #{aux_classifier_forward.1} parent=1 // pred_region
      %125 = dma.done [#allocation12], 128
    $region61: #{aux_classifier_forward.1} parent=1 // pred_fallthru
      _
    // Predicated region
    $region62: #{aux_classifier_forward.1} parent=1 // pred_check
      _
    $region63: #{aux_classifier_forward.1} parent=1 // pred_check_branch
      %127 = sbr.rel (0) target = $region65
    $region64: #{aux_classifier_forward.1} parent=1 // pred_region
      %128 = dma.done [#allocation12], 8192
    $region65: #{aux_classifier_forward.1} parent=1 // pred_fallthru
      _
    // Predicated region
    $region66: #{aux_classifier_forward.1} parent=1 // pred_check
      _
    $region67: #{aux_classifier_forward.1} parent=1 // pred_check_branch
      %130 = sbr.rel (0) target = $region69
    $region68: #{aux_classifier_forward.1} parent=1 // pred_region
      %131 = dma.done [#allocation15], 16
    $region69: #{aux_classifier_forward.1} parent=1 // pred_fallthru
      _
    %v133 = vld [vmem:[#allocation2] sm:$0xff]
    %v134 = vld [vmem:[#allocation2 + $0x8] sm:$0xff]
    %v135 = vld [vmem:[#allocation2 + $0x10] sm:$0xff]
    %v136 = vld [vmem:[#allocation2 + $0x18] sm:$0xff]
    %v137 = vld [vmem:[%s0] sm:$0xff]
    %v139 = vcombine.high %v137, %v137
    %141 = vmatprep.subr.mxu0 %v139
    %142 = vmatpush1.xpose.msra.mxu0 %v137
    %143 = vmatprep.subr.mxu0 0.0
    %144 = vmatpush1.xpose.msra.mxu0 0.0
    %145 = vmatprep.subr.mxu0 0.0
    %146 = vmatpush1.xpose.msra.mxu0 0.0
    %147 = vmatprep.subr.mxu0 0.0
    %148 = vmatpush1.xpose.msra.mxu0 0.0
    %149 = vmatprep.subr.mxu0 0.0
    %150 = vmatpush1.xpose.msra.mxu0 0.0
    %151 = vmatprep.subr.mxu0 0.0
    %152 = vmatpush1.xpose.msra.mxu0 0.0
    %153 = vmatprep.subr.mxu0 0.0
    %154 = vmatpush1.xpose.msra.mxu0 0.0
    %155 = vmatprep.subr.mxu0 0.0
    %156 = vmatpush1.xpose.msra.mxu0 0.0
    %157 = vmatprep.subr.mxu0 0.0
    %158 = vmatpush1.xpose.msra.mxu0 0.0
    %159 = vmatprep.subr.mxu0 0.0
    %160 = vmatpush1.xpose.msra.mxu0 0.0
    %161 = vmatprep.subr.mxu0 0.0
    %162 = vmatpush1.xpose.msra.mxu0 0.0
    %163 = vmatprep.subr.mxu0 0.0
    %164 = vmatpush1.xpose.msra.mxu0 0.0
    %165 = vmatprep.subr.mxu0 0.0
    %166 = vmatpush1.xpose.msra.mxu0 0.0
    %167 = vmatprep.subr.mxu0 0.0
    %168 = vmatpush1.xpose.msra.mxu0 0.0
    %169 = vmatprep.subr.mxu0 0.0
    %170 = vmatpush1.xpose.msra.mxu0 0.0
    %171 = vmatprep.subr.mxu0 0.0
    %172 = vmatpush1.xpose.msra.mxu0 0.0
    %173 = vmatprep.subr.mxu0 0.0
    %174 = vmatpush1.xpose.msra.mxu0 0.0
    %175 = vmatprep.subr.mxu0 0.0
    %176 = vmatpush1.xpose.msra.mxu0 0.0
    %177 = vmatprep.subr.mxu0 0.0
    %178 = vmatpush1.xpose.msra.mxu0 0.0
    %179 = vmatprep.subr.mxu0 0.0
    %180 = vmatpush1.xpose.msra.mxu0 0.0
    %181 = vmatprep.subr.mxu0 0.0
    %182 = vmatpush1.xpose.msra.mxu0 0.0
    %183 = vmatprep.subr.mxu0 0.0
    %184 = vmatpush1.xpose.msra.mxu0 0.0
    %185 = vmatprep.subr.mxu0 0.0
    %186 = vmatpush1.xpose.msra.mxu0 0.0
    %187 = vmatprep.subr.mxu0 0.0
    %188 = vmatpush1.xpose.msra.mxu0 0.0
    %189 = vmatprep.subr.mxu0 0.0
    %190 = vmatpush1.xpose.msra.mxu0 0.0
    %191 = vmatprep.subr.mxu0 0.0
    %192 = vmatpush1.xpose.msra.mxu0 0.0
    %193 = vmatprep.subr.mxu0 0.0
    %194 = vmatpush1.xpose.msra.mxu0 0.0
    %195 = vmatprep.subr.mxu0 0.0
    %196 = vmatpush1.xpose.msra.mxu0 0.0
    %197 = vmatprep.subr.mxu0 0.0
    %198 = vmatpush1.xpose.msra.mxu0 0.0
    %199 = vmatprep.subr.mxu0 0.0
    %200 = vmatpush1.xpose.msra.mxu0 0.0
    %201 = vmatprep.subr.mxu0 0.0
    %202 = vmatpush1.xpose.msra.mxu0 0.0
    %203 = vmatprep.subr.mxu0 0.0
    %204 = vmatpush1.xpose.msra.mxu0 0.0
    %205 = vmatprep.mubr.f32.mxu0 %v134
    %206 = vmatmul.mubr.f32.gmra.mrb[0].mxu0 %v133
    %v207 = vpop.f32.mrb[0].mxu0
    %v208 = vadd.f32 0.0, %v207
    %v209 = vpop.f32.mrb[0].mxu0
    %210 = vmatprep.mubr.f32.mxu0 %v136
    %211 = vmatmul.mubr.f32.gmra.mrb[0].mxu0 %v135
    %v212 = vpop.f32.mrb[0].mxu0
    %v213 = vadd.f32 0.0, %v212
    %v214 = vpop.f32.mrb[0].mxu0
    %215 = vdwg.mxu0
    %v216 = vld [vmem:[#allocation5] sm:$0xf]
    %v217 = vld [vmem:[#allocation7] sm:$0x1]
    %v219 = vlaneseq
    %v220 = vshrl.u32 %v219, 7
    %v221 = vsub.s32 0, %v220
    %v222 = vrot.slane %v217, %v221
    %vm224 = vcmask 31744
    %v226 = vsel %vm224, %v208, 0
    %v229 = vsel %vm224, %v213, 0
    %vm231 = vcmask 1043456
    %v233 = vsel %vm231, %v216, 0
    %235 = vmatprep.subr.mxu0 0.0
    %236 = vmatpush1.msra.mxu0 %v233
    %237 = vmatprep.subr.mxu0 0.0
    %238 = vmatpush1.msra.mxu0 0.0
    %239 = vmatprep.subr.mxu0 0.0
    %240 = vmatpush1.msra.mxu0 0.0
    %241 = vmatprep.subr.mxu0 0.0
    %242 = vmatpush1.msra.mxu0 0.0
    %243 = vmatprep.subr.mxu0 0.0
    %244 = vmatpush1.msra.mxu0 0.0
    %245 = vmatprep.subr.mxu0 0.0
    %246 = vmatpush1.msra.mxu0 0.0
    %247 = vmatprep.subr.mxu0 0.0
    %248 = vmatpush1.msra.mxu0 0.0
    %249 = vmatprep.subr.mxu0 0.0
    %250 = vmatpush1.msra.mxu0 0.0
    %251 = vmatprep.subr.mxu0 0.0
    %252 = vmatpush1.msra.mxu0 0.0
    %253 = vmatprep.subr.mxu0 0.0
    %254 = vmatpush1.msra.mxu0 0.0
    %255 = vmatprep.subr.mxu0 0.0
    %256 = vmatpush1.msra.mxu0 0.0
    %257 = vmatprep.subr.mxu0 0.0
    %258 = vmatpush1.msra.mxu0 0.0
    %259 = vmatprep.subr.mxu0 0.0
    %260 = vmatpush1.msra.mxu0 0.0
    %261 = vmatprep.subr.mxu0 0.0
    %262 = vmatpush1.msra.mxu0 0.0
    %263 = vmatprep.subr.mxu0 0.0
    %264 = vmatpush1.msra.mxu0 0.0
    %265 = vmatprep.subr.mxu0 0.0
    %266 = vmatpush1.msra.mxu0 0.0
    %267 = vmatprep.subr.mxu0 0.0
    %268 = vmatpush1.msra.mxu0 0.0
    %269 = vmatprep.subr.mxu0 0.0
    %270 = vmatpush1.msra.mxu0 0.0
    %271 = vmatprep.subr.mxu0 0.0
    %272 = vmatpush1.msra.mxu0 0.0
    %273 = vmatprep.subr.mxu0 0.0
    %274 = vmatpush1.msra.mxu0 0.0
    %275 = vmatprep.subr.mxu0 0.0
    %276 = vmatpush1.msra.mxu0 0.0
    %277 = vmatprep.subr.mxu0 0.0
    %278 = vmatpush1.msra.mxu0 0.0
    %279 = vmatprep.subr.mxu0 0.0
    %280 = vmatpush1.msra.mxu0 0.0
    %281 = vmatprep.subr.mxu0 0.0
    %282 = vmatpush1.msra.mxu0 0.0
    %283 = vmatprep.subr.mxu0 0.0
    %284 = vmatpush1.msra.mxu0 0.0
    %285 = vmatprep.subr.mxu0 0.0
    %286 = vmatpush1.msra.mxu0 0.0
    %287 = vmatprep.subr.mxu0 0.0
    %288 = vmatpush1.msra.mxu0 0.0
    %289 = vmatprep.subr.mxu0 0.0
    %290 = vmatpush1.msra.mxu0 0.0
    %291 = vmatprep.subr.mxu0 0.0
    %292 = vmatpush1.msra.mxu0 0.0
    %293 = vmatprep.subr.mxu0 0.0
    %294 = vmatpush1.msra.mxu0 0.0
    %295 = vmatprep.subr.mxu0 0.0
    %296 = vmatpush1.msra.mxu0 0.0
    %297 = vmatprep.subr.mxu0 0.0
    %298 = vmatpush1.msra.mxu0 0.0
    %299 = vmatprep.mubr.f32.mxu0 0.0
    %300 = vmatmul.mubr.f32.gmra.mrb[0].mxu0 %v226
    %v301 = vpop.f32.mrb[0].mxu0
    %v302 = vadd.f32 %v222, %v301
    %v303 = vpop.f32.mrb[0].mxu0
    %304 = vmatprep.mubr.f32.mxu0 0.0
    %305 = vmatmul.mubr.f32.gmra.mrb[0].mxu0 %v229
    %v306 = vpop.f32.mrb[0].mxu0
    %v307 = vadd.f32 %v222, %v306
    %v308 = vpop.f32.mrb[0].mxu0
    %309 = vdwg.mxu0
    %v310 = vmax.f32 %v302, 0.0
    %v311 = vmax.f32 %v307, 0.0
    %s312 = scalar_lea.vmem %s0, 8
    %v313 = vld [vmem:[%s312] sm:$0xff]
    %v315 = vcombine.high %v313, %v313
    %317 = vmatprep.subr.mxu0 %v315
    %318 = vmatpush1.xpose.msra.mxu0 %v313
    %319 = vmatprep.subr.mxu0 0.0
    %320 = vmatpush1.xpose.msra.mxu0 0.0
    %321 = vmatprep.subr.mxu0 0.0
    %322 = vmatpush1.xpose.msra.mxu0 0.0
    %323 = vmatprep.subr.mxu0 0.0
    %324 = vmatpush1.xpose.msra.mxu0 0.0
    %325 = vmatprep.subr.mxu0 0.0
    %326 = vmatpush1.xpose.msra.mxu0 0.0
    %327 = vmatprep.subr.mxu0 0.0
    %328 = vmatpush1.xpose.msra.mxu0 0.0
    %329 = vmatprep.subr.mxu0 0.0
    %330 = vmatpush1.xpose.msra.mxu0 0.0
    %331 = vmatprep.subr.mxu0 0.0
    %332 = vmatpush1.xpose.msra.mxu0 0.0
    %333 = vmatprep.subr.mxu0 0.0
    %334 = vmatpush1.xpose.msra.mxu0 0.0
    %335 = vmatprep.subr.mxu0 0.0
    %336 = vmatpush1.xpose.msra.mxu0 0.0
    %337 = vmatprep.subr.mxu0 0.0
    %338 = vmatpush1.xpose.msra.mxu0 0.0
    %339 = vmatprep.subr.mxu0 0.0
    %340 = vmatpush1.xpose.msra.mxu0 0.0
    %341 = vmatprep.subr.mxu0 0.0
    %342 = vmatpush1.xpose.msra.mxu0 0.0
    %343 = vmatprep.subr.mxu0 0.0
    %344 = vmatpush1.xpose.msra.mxu0 0.0
    %345 = vmatprep.subr.mxu0 0.0
    %346 = vmatpush1.xpose.msra.mxu0 0.0
    %347 = vmatprep.subr.mxu0 0.0
    %348 = vmatpush1.xpose.msra.mxu0 0.0
    %349 = vmatprep.subr.mxu0 0.0
    %350 = vmatpush1.xpose.msra.mxu0 0.0
    %351 = vmatprep.subr.mxu0 0.0
    %352 = vmatpush1.xpose.msra.mxu0 0.0
    %353 = vmatprep.subr.mxu0 0.0
    %354 = vmatpush1.xpose.msra.mxu0 0.0
    %355 = vmatprep.subr.mxu0 0.0
    %356 = vmatpush1.xpose.msra.mxu0 0.0
    %357 = vmatprep.subr.mxu0 0.0
    %358 = vmatpush1.xpose.msra.mxu0 0.0
    %359 = vmatprep.subr.mxu0 0.0
    %360 = vmatpush1.xpose.msra.mxu0 0.0
    %361 = vmatprep.subr.mxu0 0.0
    %362 = vmatpush1.xpose.msra.mxu0 0.0
    %363 = vmatprep.subr.mxu0 0.0
    %364 = vmatpush1.xpose.msra.mxu0 0.0
    %365 = vmatprep.subr.mxu0 0.0
    %366 = vmatpush1.xpose.msra.mxu0 0.0
    %367 = vmatprep.subr.mxu0 0.0
    %368 = vmatpush1.xpose.msra.mxu0 0.0
    %369 = vmatprep.subr.mxu0 0.0
    %370 = vmatpush1.xpose.msra.mxu0 0.0
    %371 = vmatprep.subr.mxu0 0.0
    %372 = vmatpush1.xpose.msra.mxu0 0.0
    %373 = vmatprep.subr.mxu0 0.0
    %374 = vmatpush1.xpose.msra.mxu0 0.0
    %375 = vmatprep.subr.mxu0 0.0
    %376 = vmatpush1.xpose.msra.mxu0 0.0
    %377 = vmatprep.subr.mxu0 0.0
    %378 = vmatpush1.xpose.msra.mxu0 0.0
    %379 = vmatprep.subr.mxu0 0.0
    %380 = vmatpush1.xpose.msra.mxu0 0.0
    %381 = vmatprep.mubr.f32.mxu0 %v134
    %382 = vmatmul.mubr.f32.gmra.mrb[0].mxu0 %v133
    %v383 = vpop.f32.mrb[0].mxu0
    %v384 = vadd.f32 0.0, %v383
    %v385 = vpop.f32.mrb[0].mxu0
    %386 = vmatprep.mubr.f32.mxu0 %v136
    %387 = vmatmul.mubr.f32.gmra.mrb[0].mxu0 %v135
    %v388 = vpop.f32.mrb[0].mxu0
    %v389 = vadd.f32 0.0, %v388
    %v390 = vpop.f32.mrb[0].mxu0
    %391 = vdwg.mxu0
    %v393 = vsel %vm224, %v384, 0
    %v396 = vsel %vm224, %v389, 0
    %398 = vmatprep.subr.mxu0 0.0
    %399 = vmatpush1.msra.mxu0 %v233
    %400 = vmatprep.subr.mxu0 0.0
    %401 = vmatpush1.msra.mxu0 0.0
    %402 = vmatprep.subr.mxu0 0.0
    %403 = vmatpush1.msra.mxu0 0.0
    %404 = vmatprep.subr.mxu0 0.0
    %405 = vmatpush1.msra.mxu0 0.0
    %406 = vmatprep.subr.mxu0 0.0
    %407 = vmatpush1.msra.mxu0 0.0
    %408 = vmatprep.subr.mxu0 0.0
    %409 = vmatpush1.msra.mxu0 0.0
    %410 = vmatprep.subr.mxu0 0.0
    %411 = vmatpush1.msra.mxu0 0.0
    %412 = vmatprep.subr.mxu0 0.0
    %413 = vmatpush1.msra.mxu0 0.0
    %414 = vmatprep.subr.mxu0 0.0
    %415 = vmatpush1.msra.mxu0 0.0
    %416 = vmatprep.subr.mxu0 0.0
    %417 = vmatpush1.msra.mxu0 0.0
    %418 = vmatprep.subr.mxu0 0.0
    %419 = vmatpush1.msra.mxu0 0.0
    %420 = vmatprep.subr.mxu0 0.0
    %421 = vmatpush1.msra.mxu0 0.0
    %422 = vmatprep.subr.mxu0 0.0
    %423 = vmatpush1.msra.mxu0 0.0
    %424 = vmatprep.subr.mxu0 0.0
    %425 = vmatpush1.msra.mxu0 0.0
    %426 = vmatprep.subr.mxu0 0.0
    %427 = vmatpush1.msra.mxu0 0.0
    %428 = vmatprep.subr.mxu0 0.0
    %429 = vmatpush1.msra.mxu0 0.0
    %430 = vmatprep.subr.mxu0 0.0
    %431 = vmatpush1.msra.mxu0 0.0
    %432 = vmatprep.subr.mxu0 0.0
    %433 = vmatpush1.msra.mxu0 0.0
    %434 = vmatprep.subr.mxu0 0.0
    %435 = vmatpush1.msra.mxu0 0.0
    %436 = vmatprep.subr.mxu0 0.0
    %437 = vmatpush1.msra.mxu0 0.0
    %438 = vmatprep.subr.mxu0 0.0
    %439 = vmatpush1.msra.mxu0 0.0
    %440 = vmatprep.subr.mxu0 0.0
    %441 = vmatpush1.msra.mxu0 0.0
    %442 = vmatprep.subr.mxu0 0.0
    %443 = vmatpush1.msra.mxu0 0.0
    %444 = vmatprep.subr.mxu0 0.0
    %445 = vmatpush1.msra.mxu0 0.0
    %446 = vmatprep.subr.mxu0 0.0
    %447 = vmatpush1.msra.mxu0 0.0
    %448 = vmatprep.subr.mxu0 0.0
    %449 = vmatpush1.msra.mxu0 0.0
    %450 = vmatprep.subr.mxu0 0.0
    %451 = vmatpush1.msra.mxu0 0.0
    %452 = vmatprep.subr.mxu0 0.0
    %453 = vmatpush1.msra.mxu0 0.0
    %454 = vmatprep.subr.mxu0 0.0
    %455 = vmatpush1.msra.mxu0 0.0
    %456 = vmatprep.subr.mxu0 0.0
    %457 = vmatpush1.msra.mxu0 0.0
    %458 = vmatprep.subr.mxu0 0.0
    %459 = vmatpush1.msra.mxu0 0.0
    %460 = vmatprep.subr.mxu0 0.0
    %461 = vmatpush1.msra.mxu0 0.0
    %462 = vmatprep.mubr.f32.mxu0 0.0
    %463 = vmatmul.mubr.f32.gmra.mrb[0].mxu0 %v393
    %v464 = vpop.f32.mrb[0].mxu0
    %v465 = vadd.f32 %v222, %v464
    %v466 = vpop.f32.mrb[0].mxu0
    %467 = vmatprep.mubr.f32.mxu0 0.0
    %468 = vmatmul.mubr.f32.gmra.mrb[0].mxu0 %v396
    %v469 = vpop.f32.mrb[0].mxu0
    %v470 = vadd.f32 %v222, %v469
    %v471 = vpop.f32.mrb[0].mxu0
    %472 = vdwg.mxu0
    %v473 = vmax.f32 %v465, 0.0
    %v474 = vmax.f32 %v470, 0.0
    %v475 = vld [vmem:[#allocation8] sm:$0xff]
    %v476 = vld [vmem:[#allocation8 + $0x8] sm:$0xff]
    %v477 = vld [vmem:[#allocation8 + $0x10] sm:$0xff]
    %v478 = vld [vmem:[#allocation8 + $0x18] sm:$0xff]
    %v479 = vld [vmem:[#allocation8 + $0x20] sm:$0xff]
    %v480 = vld [vmem:[#allocation8 + $0x28] sm:$0xff]
    %v481 = vld [vmem:[#allocation8 + $0x30] sm:$0xff]
    %v482 = vld [vmem:[#allocation8 + $0x38] sm:$0xff]
    %v483 = vld [vmem:[#allocation8 + $0x40] sm:$0xff]
    %v484 = vld [vmem:[#allocation8 + $0x48] sm:$0xff]
    %v485 = vld [vmem:[#allocation8 + $0x50] sm:$0xff]
    %v486 = vld [vmem:[#allocation8 + $0x58] sm:$0xff]
    %v487 = vld [vmem:[#allocation8 + $0x60] sm:$0xff]
    %v488 = vld [vmem:[#allocation8 + $0x68] sm:$0xff]
    %v489 = vld [vmem:[#allocation8 + $0x70] sm:$0xff]
    %v490 = vld [vmem:[#allocation8 + $0x78] sm:$0xff]
    %v491 = vld [vmem:[#allocation8 + $0x80] sm:$0xff]
    %v492 = vld [vmem:[#allocation8 + $0x88] sm:$0xff]
    %v493 = vld [vmem:[#allocation8 + $0x90] sm:$0xff]
    %v494 = vld [vmem:[#allocation8 + $0x98] sm:$0xff]
    %v495 = vld [vmem:[#allocation8 + $0xa0] sm:$0xff]
    %v496 = vld [vmem:[#allocation8 + $0xa8] sm:$0xff]
    %v497 = vld [vmem:[#allocation8 + $0xb0] sm:$0xff]
    %v498 = vld [vmem:[#allocation8 + $0xb8] sm:$0xff]
    %v499 = vld [vmem:[#allocation8 + $0xc0] sm:$0xff]
    %v500 = vld [vmem:[#allocation8 + $0xc8] sm:$0xff]
    %v501 = vld [vmem:[#allocation8 + $0xd0] sm:$0xff]
    %v502 = vld [vmem:[#allocation8 + $0xd8] sm:$0xff]
    %v503 = vld [vmem:[#allocation8 + $0xe0] sm:$0xff]
    %v504 = vld [vmem:[#allocation8 + $0xe8] sm:$0xff]
    %v505 = vld [vmem:[#allocation8 + $0xf0] sm:$0xff]
    %v506 = vld [vmem:[#allocation8 + $0xf8] sm:$0xff]
    %v507 = vunpack.c.l.s8.bf16 %v475
    %v508 = vunpack.c.l.s8.bf16 %v476
    %v509 = vunpack.c.l.s8.bf16 %v477
    %v510 = vunpack.c.l.s8.bf16 %v478
    %v511 = vunpack.c.l.s8.bf16 %v479
    %v512 = vunpack.c.l.s8.bf16 %v480
    %v513 = vunpack.c.l.s8.bf16 %v481
    %v514 = vunpack.c.l.s8.bf16 %v482
    %v515 = vunpack.c.h.s8.bf16 %v475
    %v516 = vunpack.c.h.s8.bf16 %v476
    %v517 = vunpack.c.h.s8.bf16 %v477
    %v518 = vunpack.c.h.s8.bf16 %v478
    %v519 = vunpack.c.h.s8.bf16 %v479
    %v520 = vunpack.c.h.s8.bf16 %v480
    %v521 = vunpack.c.h.s8.bf16 %v481
    %v522 = vunpack.c.h.s8.bf16 %v482
    %v523 = vunpack.c.l.s8.bf16 %v483
    %v524 = vunpack.c.l.s8.bf16 %v484
    %v525 = vunpack.c.l.s8.bf16 %v485
    %v526 = vunpack.c.l.s8.bf16 %v486
    %v527 = vunpack.c.l.s8.bf16 %v487
    %v528 = vunpack.c.l.s8.bf16 %v488
    %v529 = vunpack.c.l.s8.bf16 %v489
    %v530 = vunpack.c.l.s8.bf16 %v490
    %v531 = vunpack.c.h.s8.bf16 %v483
    %v532 = vunpack.c.h.s8.bf16 %v484
    %v533 = vunpack.c.h.s8.bf16 %v485
    %v534 = vunpack.c.h.s8.bf16 %v486
    %v535 = vunpack.c.h.s8.bf16 %v487
    %v536 = vunpack.c.h.s8.bf16 %v488
    %v537 = vunpack.c.h.s8.bf16 %v489
    %v538 = vunpack.c.h.s8.bf16 %v490
    %v539 = vunpack.c.l.s8.bf16 %v491
    %v540 = vunpack.c.l.s8.bf16 %v492
    %v541 = vunpack.c.l.s8.bf16 %v493
    %v542 = vunpack.c.l.s8.bf16 %v494
    %v543 = vunpack.c.l.s8.bf16 %v495
    %v544 = vunpack.c.l.s8.bf16 %v496
    %v545 = vunpack.c.l.s8.bf16 %v497
    %v546 = vunpack.c.l.s8.bf16 %v498
    %v547 = vunpack.c.h.s8.bf16 %v491
    %v548 = vunpack.c.h.s8.bf16 %v492
    %v549 = vunpack.c.h.s8.bf16 %v493
    %v550 = vunpack.c.h.s8.bf16 %v494
    %v551 = vunpack.c.h.s8.bf16 %v495
    %v552 = vunpack.c.h.s8.bf16 %v496
    %v553 = vunpack.c.h.s8.bf16 %v497
    %v554 = vunpack.c.h.s8.bf16 %v498
    %v555 = vunpack.c.l.s8.bf16 %v499
    %v556 = vunpack.c.l.s8.bf16 %v500
    %v557 = vunpack.c.l.s8.bf16 %v501
    %v558 = vunpack.c.l.s8.bf16 %v502
    %v559 = vunpack.c.l.s8.bf16 %v503
    %v560 = vunpack.c.l.s8.bf16 %v504
    %v561 = vunpack.c.l.s8.bf16 %v505
    %v562 = vunpack.c.l.s8.bf16 %v506
    %v563 = vunpack.c.h.s8.bf16 %v499
    %v564 = vunpack.c.h.s8.bf16 %v500
    %v565 = vunpack.c.h.s8.bf16 %v501
    %v566 = vunpack.c.h.s8.bf16 %v502
    %v567 = vunpack.c.h.s8.bf16 %v503
    %v568 = vunpack.c.h.s8.bf16 %v504
    %v569 = vunpack.c.h.s8.bf16 %v505
    %v570 = vunpack.c.h.s8.bf16 %v506
    %v571 = vpack.c.bf16 %v310, %v310
    %v572 = vpack.c.bf16 %v473, %v473
    %s573 = scalar_lea.vmem [#allocation8], 256
    %v574 = vld [vmem:[%s573] sm:$0xff]
    %v575 = vld [vmem:[%s573 + $0x8] sm:$0xff]
    %v576 = vld [vmem:[%s573 + $0x10] sm:$0xff]
    %v577 = vld [vmem:[%s573 + $0x18] sm:$0xff]
    %v578 = vld [vmem:[%s573 + $0x20] sm:$0xff]
    %v579 = vld [vmem:[%s573 + $0x28] sm:$0xff]
    %v580 = vld [vmem:[%s573 + $0x30] sm:$0xff]
    %v581 = vld [vmem:[%s573 + $0x38] sm:$0xff]
    %v582 = vld [vmem:[%s573 + $0x40] sm:$0xff]
    %v583 = vld [vmem:[%s573 + $0x48] sm:$0xff]
    %v584 = vld [vmem:[%s573 + $0x50] sm:$0xff]
    %v585 = vld [vmem:[%s573 + $0x58] sm:$0xff]
    %v586 = vld [vmem:[%s573 + $0x60] sm:$0xff]
    %v587 = vld [vmem:[%s573 + $0x68] sm:$0xff]
    %v588 = vld [vmem:[%s573 + $0x70] sm:$0xff]
    %v589 = vld [vmem:[%s573 + $0x78] sm:$0xff]
    %v590 = vld [vmem:[%s573 + $0x80] sm:$0xff]
    %v591 = vld [vmem:[%s573 + $0x88] sm:$0xff]
    %v592 = vld [vmem:[%s573 + $0x90] sm:$0xff]
    %v593 = vld [vmem:[%s573 + $0x98] sm:$0xff]
    %v594 = vld [vmem:[%s573 + $0xa0] sm:$0xff]
    %v595 = vld [vmem:[%s573 + $0xa8] sm:$0xff]
    %v596 = vld [vmem:[%s573 + $0xb0] sm:$0xff]
    %v597 = vld [vmem:[%s573 + $0xb8] sm:$0xff]
    %v598 = vld [vmem:[%s573 + $0xc0] sm:$0xff]
    %v599 = vld [vmem:[%s573 + $0xc8] sm:$0xff]
    %v600 = vld [vmem:[%s573 + $0xd0] sm:$0xff]
    %v601 = vld [vmem:[%s573 + $0xd8] sm:$0xff]
    %v602 = vld [vmem:[%s573 + $0xe0] sm:$0xff]
    %v603 = vld [vmem:[%s573 + $0xe8] sm:$0xff]
    %v604 = vld [vmem:[%s573 + $0xf0] sm:$0xff]
    %v605 = vld [vmem:[%s573 + $0xf8] sm:$0xff]
    %v606 = vunpack.c.l.s8.bf16 %v574
    %v607 = vunpack.c.l.s8.bf16 %v575
    %v608 = vunpack.c.l.s8.bf16 %v576
    %v609 = vunpack.c.l.s8.bf16 %v577
    %v610 = vunpack.c.l.s8.bf16 %v578
    %v611 = vunpack.c.l.s8.bf16 %v579
    %v612 = vunpack.c.l.s8.bf16 %v580
    %v613 = vunpack.c.l.s8.bf16 %v581
    %v614 = vunpack.c.h.s8.bf16 %v574
    %v615 = vunpack.c.h.s8.bf16 %v575
    %v616 = vunpack.c.h.s8.bf16 %v576
    %v617 = vunpack.c.h.s8.bf16 %v577
    %v618 = vunpack.c.h.s8.bf16 %v578
    %v619 = vunpack.c.h.s8.bf16 %v579
    %v620 = vunpack.c.h.s8.bf16 %v580
    %v621 = vunpack.c.h.s8.bf16 %v581
    %v622 = vunpack.c.l.s8.bf16 %v582
    %v623 = vunpack.c.l.s8.bf16 %v583
    %v624 = vunpack.c.l.s8.bf16 %v584
    %v625 = vunpack.c.l.s8.bf16 %v585
    %v626 = vunpack.c.l.s8.bf16 %v586
    %v627 = vunpack.c.l.s8.bf16 %v587
    %v628 = vunpack.c.l.s8.bf16 %v588
    %v629 = vunpack.c.l.s8.bf16 %v589
    %v630 = vunpack.c.h.s8.bf16 %v582
    %v631 = vunpack.c.h.s8.bf16 %v583
    %v632 = vunpack.c.h.s8.bf16 %v584
    %v633 = vunpack.c.h.s8.bf16 %v585
    %v634 = vunpack.c.h.s8.bf16 %v586
    %v635 = vunpack.c.h.s8.bf16 %v587
    %v636 = vunpack.c.h.s8.bf16 %v588
    %v637 = vunpack.c.h.s8.bf16 %v589
    %v638 = vunpack.c.l.s8.bf16 %v590
    %v639 = vunpack.c.l.s8.bf16 %v591
    %v640 = vunpack.c.l.s8.bf16 %v592
    %v641 = vunpack.c.l.s8.bf16 %v593
    %v642 = vunpack.c.l.s8.bf16 %v594
    %v643 = vunpack.c.l.s8.bf16 %v595
    %v644 = vunpack.c.l.s8.bf16 %v596
    %v645 = vunpack.c.l.s8.bf16 %v597
    %v646 = vunpack.c.h.s8.bf16 %v590
    %v647 = vunpack.c.h.s8.bf16 %v591
    %v648 = vunpack.c.h.s8.bf16 %v592
    %v649 = vunpack.c.h.s8.bf16 %v593
    %v650 = vunpack.c.h.s8.bf16 %v594
    %v651 = vunpack.c.h.s8.bf16 %v595
    %v652 = vunpack.c.h.s8.bf16 %v596
    %v653 = vunpack.c.h.s8.bf16 %v597
    %v654 = vunpack.c.l.s8.bf16 %v598
    %v655 = vunpack.c.l.s8.bf16 %v599
    %v656 = vunpack.c.l.s8.bf16 %v600
    %v657 = vunpack.c.l.s8.bf16 %v601
    %v658 = vunpack.c.l.s8.bf16 %v602
    %v659 = vunpack.c.l.s8.bf16 %v603
    %v660 = vunpack.c.l.s8.bf16 %v604
    %v661 = vunpack.c.l.s8.bf16 %v605
    %v662 = vunpack.c.h.s8.bf16 %v598
    %v663 = vunpack.c.h.s8.bf16 %v599
    %v664 = vunpack.c.h.s8.bf16 %v600
    %v665 = vunpack.c.h.s8.bf16 %v601
    %v666 = vunpack.c.h.s8.bf16 %v602
    %v667 = vunpack.c.h.s8.bf16 %v603
    %v668 = vunpack.c.h.s8.bf16 %v604
    %v669 = vunpack.c.h.s8.bf16 %v605
    %v672 = vunpack.c.l.b16 %v571
    %v673 = vunpack.c.l.b16 %v572
    %v674 = vrot.slane %v672, 1
    %vm675 = vcmask 1041409
    %v676 = vsel %vm675, %v673, %v674
    %v677 = vpack.c.b16 %v676, %v676
    %679 = vmatprep.subr.bf16.mxu0 %v607
    %680 = vmatpush1.bf16.msra.mxu0 %v606
    %681 = vmatprep.subr.bf16.mxu0 %v615
    %682 = vmatpush1.bf16.msra.mxu0 %v614
    %683 = vmatprep.subr.bf16.mxu0 %v623
    %684 = vmatpush1.bf16.msra.mxu0 %v622
    %685 = vmatprep.subr.bf16.mxu0 %v631
    %686 = vmatpush1.bf16.msra.mxu0 %v630
    %687 = vmatprep.subr.bf16.mxu0 %v639
    %688 = vmatpush1.bf16.msra.mxu0 %v638
    %689 = vmatprep.subr.bf16.mxu0 %v647
    %690 = vmatpush1.bf16.msra.mxu0 %v646
    %691 = vmatprep.subr.bf16.mxu0 %v655
    %692 = vmatpush1.bf16.msra.mxu0 %v654
    %693 = vmatprep.subr.bf16.mxu0 %v663
    %694 = vmatpush1.bf16.msra.mxu0 %v662
    %695 = vmatprep.subr.bf16.mxu0 0
    %696 = vmatpush1.bf16.msra.mxu0 0
    %697 = vmatprep.subr.bf16.mxu0 0
    %698 = vmatpush1.bf16.msra.mxu0 0
    %699 = vmatprep.subr.bf16.mxu0 0
    %700 = vmatpush1.bf16.msra.mxu0 0
    %701 = vmatprep.subr.bf16.mxu0 0
    %702 = vmatpush1.bf16.msra.mxu0 0
    %703 = vmatprep.subr.bf16.mxu0 0
    %704 = vmatpush1.bf16.msra.mxu0 0
    %705 = vmatprep.subr.bf16.mxu0 0
    %706 = vmatpush1.bf16.msra.mxu0 0
    %707 = vmatprep.subr.bf16.mxu0 0
    %708 = vmatpush1.bf16.msra.mxu0 0
    %709 = vmatprep.subr.bf16.mxu0 0
    %710 = vmatpush1.bf16.msra.mxu0 0
    %711 = vmatprep.mubr.bf16.mxu0 0
    %712 = vmatmul.mubr.bf16.gmra.mrb[0].mxu0 %v677
    %v713 = vpop.f32.mrb[0].mxu0
    %v714 = vadd.f32 0.0, %v713
    %v715 = vpop.f32.mrb[0].mxu0
    %v716 = vadd.f32 0.0, %v715
    %v717 = vpop.f32.mrb[0].mxu0
    %v718 = vpop.f32.mrb[0].mxu0
    %719 = vdwg.mxu0
    %720 = vmatprep.subr.bf16.mxu0 %v609
    %721 = vmatpush1.bf16.msra.mxu0 %v608
    %722 = vmatprep.subr.bf16.mxu0 %v617
    %723 = vmatpush1.bf16.msra.mxu0 %v616
    %724 = vmatprep.subr.bf16.mxu0 %v625
    %725 = vmatpush1.bf16.msra.mxu0 %v624
    %726 = vmatprep.subr.bf16.mxu0 %v633
    %727 = vmatpush1.bf16.msra.mxu0 %v632
    %728 = vmatprep.subr.bf16.mxu0 %v641
    %729 = vmatpush1.bf16.msra.mxu0 %v640
    %730 = vmatprep.subr.bf16.mxu0 %v649
    %731 = vmatpush1.bf16.msra.mxu0 %v648
    %732 = vmatprep.subr.bf16.mxu0 %v657
    %733 = vmatpush1.bf16.msra.mxu0 %v656
    %734 = vmatprep.subr.bf16.mxu0 %v665
    %735 = vmatpush1.bf16.msra.mxu0 %v664
    %736 = vmatprep.subr.bf16.mxu0 0
    %737 = vmatpush1.bf16.msra.mxu0 0
    %738 = vmatprep.subr.bf16.mxu0 0
    %739 = vmatpush1.bf16.msra.mxu0 0
    %740 = vmatprep.subr.bf16.mxu0 0
    %741 = vmatpush1.bf16.msra.mxu0 0
    %742 = vmatprep.subr.bf16.mxu0 0
    %743 = vmatpush1.bf16.msra.mxu0 0
    %744 = vmatprep.subr.bf16.mxu0 0
    %745 = vmatpush1.bf16.msra.mxu0 0
    %746 = vmatprep.subr.bf16.mxu0 0
    %747 = vmatpush1.bf16.msra.mxu0 0
    %748 = vmatprep.subr.bf16.mxu0 0
    %749 = vmatpush1.bf16.msra.mxu0 0
    %750 = vmatprep.subr.bf16.mxu0 0
    %751 = vmatpush1.bf16.msra.mxu0 0
    %752 = vmatprep.mubr.bf16.mxu0 0
    %753 = vmatmul.mubr.bf16.gmra.mrb[0].mxu0 %v677
    %v754 = vpop.f32.mrb[0].mxu0
    %v755 = vadd.f32 0.0, %v754
    %v756 = vpop.f32.mrb[0].mxu0
    %v757 = vadd.f32 0.0, %v756
    %v758 = vpop.f32.mrb[0].mxu0
    %v759 = vpop.f32.mrb[0].mxu0
    %760 = vdwg.mxu0
    %761 = vmatprep.subr.bf16.mxu0 %v611
    %762 = vmatpush1.bf16.msra.mxu0 %v610
    %763 = vmatprep.subr.bf16.mxu0 %v619
    %764 = vmatpush1.bf16.msra.mxu0 %v618
    %765 = vmatprep.subr.bf16.mxu0 %v627
    %766 = vmatpush1.bf16.msra.mxu0 %v626
    %767 = vmatprep.subr.bf16.mxu0 %v635
    %768 = vmatpush1.bf16.msra.mxu0 %v634
    %769 = vmatprep.subr.bf16.mxu0 %v643
    %770 = vmatpush1.bf16.msra.mxu0 %v642
    %771 = vmatprep.subr.bf16.mxu0 %v651
    %772 = vmatpush1.bf16.msra.mxu0 %v650
    %773 = vmatprep.subr.bf16.mxu0 %v659
    %774 = vmatpush1.bf16.msra.mxu0 %v658
    %775 = vmatprep.subr.bf16.mxu0 %v667
    %776 = vmatpush1.bf16.msra.mxu0 %v666
    %777 = vmatprep.subr.bf16.mxu0 0
    %778 = vmatpush1.bf16.msra.mxu0 0
    %779 = vmatprep.subr.bf16.mxu0 0
    %780 = vmatpush1.bf16.msra.mxu0 0
    %781 = vmatprep.subr.bf16.mxu0 0
    %782 = vmatpush1.bf16.msra.mxu0 0
    %783 = vmatprep.subr.bf16.mxu0 0
    %784 = vmatpush1.bf16.msra.mxu0 0
    %785 = vmatprep.subr.bf16.mxu0 0
    %786 = vmatpush1.bf16.msra.mxu0 0
    %787 = vmatprep.subr.bf16.mxu0 0
    %788 = vmatpush1.bf16.msra.mxu0 0
    %789 = vmatprep.subr.bf16.mxu0 0
    %790 = vmatpush1.bf16.msra.mxu0 0
    %791 = vmatprep.subr.bf16.mxu0 0
    %792 = vmatpush1.bf16.msra.mxu0 0
    %793 = vmatprep.mubr.bf16.mxu0 0
    %794 = vmatmul.mubr.bf16.gmra.mrb[0].mxu0 %v677
    %v795 = vpop.f32.mrb[0].mxu0
    %v796 = vadd.f32 0.0, %v795
    %v797 = vpop.f32.mrb[0].mxu0
    %v798 = vadd.f32 0.0, %v797
    %v799 = vpop.f32.mrb[0].mxu0
    %v800 = vpop.f32.mrb[0].mxu0
    %801 = vdwg.mxu0
    %802 = vmatprep.subr.bf16.mxu0 %v613
    %803 = vmatpush1.bf16.msra.mxu0 %v612
    %804 = vmatprep.subr.bf16.mxu0 %v621
    %805 = vmatpush1.bf16.msra.mxu0 %v620
    %806 = vmatprep.subr.bf16.mxu0 %v629
    %807 = vmatpush1.bf16.msra.mxu0 %v628
    %808 = vmatprep.subr.bf16.mxu0 %v637
    %809 = vmatpush1.bf16.msra.mxu0 %v636
    %810 = vmatprep.subr.bf16.mxu0 %v645
    %811 = vmatpush1.bf16.msra.mxu0 %v644
    %812 = vmatprep.subr.bf16.mxu0 %v653
    %813 = vmatpush1.bf16.msra.mxu0 %v652
    %814 = vmatprep.subr.bf16.mxu0 %v661
    %815 = vmatpush1.bf16.msra.mxu0 %v660
    %816 = vmatprep.subr.bf16.mxu0 %v669
    %817 = vmatpush1.bf16.msra.mxu0 %v668
    %818 = vmatprep.subr.bf16.mxu0 0
    %819 = vmatpush1.bf16.msra.mxu0 0
    %820 = vmatprep.subr.bf16.mxu0 0
    %821 = vmatpush1.bf16.msra.mxu0 0
    %822 = vmatprep.subr.bf16.mxu0 0
    %823 = vmatpush1.bf16.msra.mxu0 0
    %824 = vmatprep.subr.bf16.mxu0 0
    %825 = vmatpush1.bf16.msra.mxu0 0
    %826 = vmatprep.subr.bf16.mxu0 0
    %827 = vmatpush1.bf16.msra.mxu0 0
    %828 = vmatprep.subr.bf16.mxu0 0
    %829 = vmatpush1.bf16.msra.mxu0 0
    %830 = vmatprep.subr.bf16.mxu0 0
    %831 = vmatpush1.bf16.msra.mxu0 0
    %832 = vmatprep.subr.bf16.mxu0 0
    %833 = vmatpush1.bf16.msra.mxu0 0
    %834 = vmatprep.mubr.bf16.mxu0 0
    %835 = vmatmul.mubr.bf16.gmra.mrb[0].mxu0 %v677
    %v836 = vpop.f32.mrb[0].mxu0
    %v837 = vadd.f32 0.0, %v836
    %v838 = vpop.f32.mrb[0].mxu0
    %v839 = vadd.f32 0.0, %v838
    %v840 = vpop.f32.mrb[0].mxu0
    %v841 = vpop.f32.mrb[0].mxu0
    %842 = vdwg.mxu0
    %v843 = vrot.slane %v673, 7
    %v844 = vsel %vm675, %v843, %v672
    %v845 = vpack.c.b16 %v844, %v844
    %847 = vmatprep.subr.bf16.mxu0 %v508
    %848 = vmatpush1.bf16.msra.mxu0 %v507
    %849 = vmatprep.subr.bf16.mxu0 %v516
    %850 = vmatpush1.bf16.msra.mxu0 %v515
    %851 = vmatprep.subr.bf16.mxu0 %v524
    %852 = vmatpush1.bf16.msra.mxu0 %v523
    %853 = vmatprep.subr.bf16.mxu0 %v532
    %854 = vmatpush1.bf16.msra.mxu0 %v531
    %855 = vmatprep.subr.bf16.mxu0 %v540
    %856 = vmatpush1.bf16.msra.mxu0 %v539
    %857 = vmatprep.subr.bf16.mxu0 %v548
    %858 = vmatpush1.bf16.msra.mxu0 %v547
    %859 = vmatprep.subr.bf16.mxu0 %v556
    %860 = vmatpush1.bf16.msra.mxu0 %v555
    %861 = vmatprep.subr.bf16.mxu0 %v564
    %862 = vmatpush1.bf16.msra.mxu0 %v563
    %863 = vmatprep.subr.bf16.mxu0 0
    %864 = vmatpush1.bf16.msra.mxu0 0
    %865 = vmatprep.subr.bf16.mxu0 0
    %866 = vmatpush1.bf16.msra.mxu0 0
    %867 = vmatprep.subr.bf16.mxu0 0
    %868 = vmatpush1.bf16.msra.mxu0 0
    %869 = vmatprep.subr.bf16.mxu0 0
    %870 = vmatpush1.bf16.msra.mxu0 0
    %871 = vmatprep.subr.bf16.mxu0 0
    %872 = vmatpush1.bf16.msra.mxu0 0
    %873 = vmatprep.subr.bf16.mxu0 0
    %874 = vmatpush1.bf16.msra.mxu0 0
    %875 = vmatprep.subr.bf16.mxu0 0
    %876 = vmatpush1.bf16.msra.mxu0 0
    %877 = vmatprep.subr.bf16.mxu0 0
    %878 = vmatpush1.bf16.msra.mxu0 0
    %879 = vmatprep.mubr.bf16.mxu0 0
    %880 = vmatmul.mubr.bf16.gmra.mrb[0].mxu0 %v845
    %v881 = vpop.f32.mrb[0].mxu0
    %v882 = vadd.f32 %v714, %v881
    %v883 = vpop.f32.mrb[0].mxu0
    %v884 = vadd.f32 %v716, %v883
    %v885 = vpop.f32.mrb[0].mxu0
    %v886 = vpop.f32.mrb[0].mxu0
    %887 = vdwg.mxu0
    %888 = vmatprep.subr.bf16.mxu0 %v510
    %889 = vmatpush1.bf16.msra.mxu0 %v509
    %890 = vmatprep.subr.bf16.mxu0 %v518
    %891 = vmatpush1.bf16.msra.mxu0 %v517
    %892 = vmatprep.subr.bf16.mxu0 %v526
    %893 = vmatpush1.bf16.msra.mxu0 %v525
    %894 = vmatprep.subr.bf16.mxu0 %v534
    %895 = vmatpush1.bf16.msra.mxu0 %v533
    %896 = vmatprep.subr.bf16.mxu0 %v542
    %897 = vmatpush1.bf16.msra.mxu0 %v541
    %898 = vmatprep.subr.bf16.mxu0 %v550
    %899 = vmatpush1.bf16.msra.mxu0 %v549
    %900 = vmatprep.subr.bf16.mxu0 %v558
    %901 = vmatpush1.bf16.msra.mxu0 %v557
    %902 = vmatprep.subr.bf16.mxu0 %v566
    %903 = vmatpush1.bf16.msra.mxu0 %v565
    %904 = vmatprep.subr.bf16.mxu0 0
    %905 = vmatpush1.bf16.msra.mxu0 0
    %906 = vmatprep.subr.bf16.mxu0 0
    %907 = vmatpush1.bf16.msra.mxu0 0
    %908 = vmatprep.subr.bf16.mxu0 0
    %909 = vmatpush1.bf16.msra.mxu0 0
    %910 = vmatprep.subr.bf16.mxu0 0
    %911 = vmatpush1.bf16.msra.mxu0 0
    %912 = vmatprep.subr.bf16.mxu0 0
    %913 = vmatpush1.bf16.msra.mxu0 0
    %914 = vmatprep.subr.bf16.mxu0 0
    %915 = vmatpush1.bf16.msra.mxu0 0
    %916 = vmatprep.subr.bf16.mxu0 0
    %917 = vmatpush1.bf16.msra.mxu0 0
    %918 = vmatprep.subr.bf16.mxu0 0
    %919 = vmatpush1.bf16.msra.mxu0 0
    %920 = vmatprep.mubr.bf16.mxu0 0
    %921 = vmatmul.mubr.bf16.gmra.mrb[0].mxu0 %v845
    %v922 = vpop.f32.mrb[0].mxu0
    %v923 = vadd.f32 %v755, %v922
    %v924 = vpop.f32.mrb[0].mxu0
    %v925 = vadd.f32 %v757, %v924
    %v926 = vpop.f32.mrb[0].mxu0
    %v927 = vpop.f32.mrb[0].mxu0
    %928 = vdwg.mxu0
    %929 = vmatprep.subr.bf16.mxu0 %v512
    %930 = vmatpush1.bf16.msra.mxu0 %v511
    %931 = vmatprep.subr.bf16.mxu0 %v520
    %932 = vmatpush1.bf16.msra.mxu0 %v519
    %933 = vmatprep.subr.bf16.mxu0 %v528
    %934 = vmatpush1.bf16.msra.mxu0 %v527
    %935 = vmatprep.subr.bf16.mxu0 %v536
    %936 = vmatpush1.bf16.msra.mxu0 %v535
    %937 = vmatprep.subr.bf16.mxu0 %v544
    %938 = vmatpush1.bf16.msra.mxu0 %v543
    %939 = vmatprep.subr.bf16.mxu0 %v552
    %940 = vmatpush1.bf16.msra.mxu0 %v551
    %941 = vmatprep.subr.bf16.mxu0 %v560
    %942 = vmatpush1.bf16.msra.mxu0 %v559
    %943 = vmatprep.subr.bf16.mxu0 %v568
    %944 = vmatpush1.bf16.msra.mxu0 %v567
    %945 = vmatprep.subr.bf16.mxu0 0
    %946 = vmatpush1.bf16.msra.mxu0 0
    %947 = vmatprep.subr.bf16.mxu0 0
    %948 = vmatpush1.bf16.msra.mxu0 0
    %949 = vmatprep.subr.bf16.mxu0 0
    %950 = vmatpush1.bf16.msra.mxu0 0
    %951 = vmatprep.subr.bf16.mxu0 0
    %952 = vmatpush1.bf16.msra.mxu0 0
    %953 = vmatprep.subr.bf16.mxu0 0
    %954 = vmatpush1.bf16.msra.mxu0 0
    %955 = vmatprep.subr.bf16.mxu0 0
    %956 = vmatpush1.bf16.msra.mxu0 0
    %957 = vmatprep.subr.bf16.mxu0 0
    %958 = vmatpush1.bf16.msra.mxu0 0
    %959 = vmatprep.subr.bf16.mxu0 0
    %960 = vmatpush1.bf16.msra.mxu0 0
    %961 = vmatprep.mubr.bf16.mxu0 0
    %962 = vmatmul.mubr.bf16.gmra.mrb[0].mxu0 %v845
    %v963 = vpop.f32.mrb[0].mxu0
    %v964 = vadd.f32 %v796, %v963
    %v965 = vpop.f32.mrb[0].mxu0
    %v966 = vadd.f32 %v798, %v965
    %v967 = vpop.f32.mrb[0].mxu0
    %v968 = vpop.f32.mrb[0].mxu0
    %969 = vdwg.mxu0
    %970 = vmatprep.subr.bf16.mxu0 %v514
    %971 = vmatpush1.bf16.msra.mxu0 %v513
    %972 = vmatprep.subr.bf16.mxu0 %v522
    %973 = vmatpush1.bf16.msra.mxu0 %v521
    %974 = vmatprep.subr.bf16.mxu0 %v530
    %975 = vmatpush1.bf16.msra.mxu0 %v529
    %976 = vmatprep.subr.bf16.mxu0 %v538
    %977 = vmatpush1.bf16.msra.mxu0 %v537
    %978 = vmatprep.subr.bf16.mxu0 %v546
    %979 = vmatpush1.bf16.msra.mxu0 %v545
    %980 = vmatprep.subr.bf16.mxu0 %v554
    %981 = vmatpush1.bf16.msra.mxu0 %v553
    %982 = vmatprep.subr.bf16.mxu0 %v562
    %983 = vmatpush1.bf16.msra.mxu0 %v561
    %984 = vmatprep.subr.bf16.mxu0 %v570
    %985 = vmatpush1.bf16.msra.mxu0 %v569
    %986 = vmatprep.subr.bf16.mxu0 0
    %987 = vmatpush1.bf16.msra.mxu0 0
    %988 = vmatprep.subr.bf16.mxu0 0
    %989 = vmatpush1.bf16.msra.mxu0 0
    %990 = vmatprep.subr.bf16.mxu0 0
    %991 = vmatpush1.bf16.msra.mxu0 0
    %992 = vmatprep.subr.bf16.mxu0 0
    %993 = vmatpush1.bf16.msra.mxu0 0
    %994 = vmatprep.subr.bf16.mxu0 0
    %995 = vmatpush1.bf16.msra.mxu0 0
    %996 = vmatprep.subr.bf16.mxu0 0
    %997 = vmatpush1.bf16.msra.mxu0 0
    %998 = vmatprep.subr.bf16.mxu0 0
    %999 = vmatpush1.bf16.msra.mxu0 0
    %1000 = vmatprep.subr.bf16.mxu0 0
    %1001 = vmatpush1.bf16.msra.mxu0 0
    %1002 = vmatprep.mubr.bf16.mxu0 0
    %1003 = vmatmul.mubr.bf16.gmra.mrb[0].mxu0 %v845
    %v1004 = vpop.f32.mrb[0].mxu0
    %v1005 = vadd.f32 %v837, %v1004
    %v1006 = vpop.f32.mrb[0].mxu0
    %v1007 = vadd.f32 %v839, %v1006
    %v1008 = vpop.f32.mrb[0].mxu0
    %v1009 = vpop.f32.mrb[0].mxu0
    %1010 = vdwg.mxu0
    %s1011 = scalar_lea.vmem [#allocation8], 512
    %v1012 = vld [vmem:[%s1011] sm:$0xff]
    %v1013 = vld [vmem:[%s1011 + $0x8] sm:$0xff]
    %v1014 = vld [vmem:[%s1011 + $0x10] sm:$0xff]
    %v1015 = vld [vmem:[%s1011 + $0x18] sm:$0xff]
    %v1016 = vld [vmem:[%s1011 + $0x20] sm:$0xff]
    %v1017 = vld [vmem:[%s1011 + $0x28] sm:$0xff]
    %v1018 = vld [vmem:[%s1011 + $0x30] sm:$0xff]
    %v1019 = vld [vmem:[%s1011 + $0x38] sm:$0xff]
    %v1020 = vld [vmem:[%s1011 + $0x40] sm:$0xff]
    %v1021 = vld [vmem:[%s1011 + $0x48] sm:$0xff]
    %v1022 = vld [vmem:[%s1011 + $0x50] sm:$0xff]
    %v1023 = vld [vmem:[%s1011 + $0x58] sm:$0xff]
    %v1024 = vld [vmem:[%s1011 + $0x60] sm:$0xff]
    %v1025 = vld [vmem:[%s1011 + $0x68] sm:$0xff]
    %v1026 = vld [vmem:[%s1011 + $0x70] sm:$0xff]
    %v1027 = vld [vmem:[%s1011 + $0x78] sm:$0xff]
    %v1028 = vld [vmem:[%s1011 + $0x80] sm:$0xff]
    %v1029 = vld [vmem:[%s1011 + $0x88] sm:$0xff]
    %v1030 = vld [vmem:[%s1011 + $0x90] sm:$0xff]
    %v1031 = vld [vmem:[%s1011 + $0x98] sm:$0xff]
    %v1032 = vld [vmem:[%s1011 + $0xa0] sm:$0xff]
    %v1033 = vld [vmem:[%s1011 + $0xa8] sm:$0xff]
    %v1034 = vld [vmem:[%s1011 + $0xb0] sm:$0xff]
    %v1035 = vld [vmem:[%s1011 + $0xb8] sm:$0xff]
    %v1036 = vld [vmem:[%s1011 + $0xc0] sm:$0xff]
    %v1037 = vld [vmem:[%s1011 + $0xc8] sm:$0xff]
    %v1038 = vld [vmem:[%s1011 + $0xd0] sm:$0xff]
    %v1039 = vld [vmem:[%s1011 + $0xd8] sm:$0xff]
    %v1040 = vld [vmem:[%s1011 + $0xe0] sm:$0xff]
    %v1041 = vld [vmem:[%s1011 + $0xe8] sm:$0xff]
    %v1042 = vld [vmem:[%s1011 + $0xf0] sm:$0xff]
    %v1043 = vld [vmem:[%s1011 + $0xf8] sm:$0xff]
    %v1044 = vunpack.c.l.s8.bf16 %v1012
    %v1045 = vunpack.c.l.s8.bf16 %v1013
    %v1046 = vunpack.c.l.s8.bf16 %v1014
    %v1047 = vunpack.c.l.s8.bf16 %v1015
    %v1048 = vunpack.c.l.s8.bf16 %v1016
    %v1049 = vunpack.c.l.s8.bf16 %v1017
    %v1050 = vunpack.c.l.s8.bf16 %v1018
    %v1051 = vunpack.c.l.s8.bf16 %v1019
    %v1052 = vunpack.c.h.s8.bf16 %v1012
    %v1053 = vunpack.c.h.s8.bf16 %v1013
    %v1054 = vunpack.c.h.s8.bf16 %v1014
    %v1055 = vunpack.c.h.s8.bf16 %v1015
    %v1056 = vunpack.c.h.s8.bf16 %v1016
    %v1057 = vunpack.c.h.s8.bf16 %v1017
    %v1058 = vunpack.c.h.s8.bf16 %v1018
    %v1059 = vunpack.c.h.s8.bf16 %v1019
    %v1060 = vunpack.c.l.s8.bf16 %v1020
    %v1061 = vunpack.c.l.s8.bf16 %v1021
    %v1062 = vunpack.c.l.s8.bf16 %v1022
    %v1063 = vunpack.c.l.s8.bf16 %v1023
    %v1064 = vunpack.c.l.s8.bf16 %v1024
    %v1065 = vunpack.c.l.s8.bf16 %v1025
    %v1066 = vunpack.c.l.s8.bf16 %v1026
    %v1067 = vunpack.c.l.s8.bf16 %v1027
    %v1068 = vunpack.c.h.s8.bf16 %v1020
    %v1069 = vunpack.c.h.s8.bf16 %v1021
    %v1070 = vunpack.c.h.s8.bf16 %v1022
    %v1071 = vunpack.c.h.s8.bf16 %v1023
    %v1072 = vunpack.c.h.s8.bf16 %v1024
    %v1073 = vunpack.c.h.s8.bf16 %v1025
    %v1074 = vunpack.c.h.s8.bf16 %v1026
    %v1075 = vunpack.c.h.s8.bf16 %v1027
    %v1076 = vunpack.c.l.s8.bf16 %v1028
    %v1077 = vunpack.c.l.s8.bf16 %v1029
    %v1078 = vunpack.c.l.s8.bf16 %v1030
    %v1079 = vunpack.c.l.s8.bf16 %v1031
    %v1080 = vunpack.c.l.s8.bf16 %v1032
    %v1081 = vunpack.c.l.s8.bf16 %v1033
    %v1082 = vunpack.c.l.s8.bf16 %v1034
    %v1083 = vunpack.c.l.s8.bf16 %v1035
    %v1084 = vunpack.c.h.s8.bf16 %v1028
    %v1085 = vunpack.c.h.s8.bf16 %v1029
    %v1086 = vunpack.c.h.s8.bf16 %v1030
    %v1087 = vunpack.c.h.s8.bf16 %v1031
    %v1088 = vunpack.c.h.s8.bf16 %v1032
    %v1089 = vunpack.c.h.s8.bf16 %v1033
    %v1090 = vunpack.c.h.s8.bf16 %v1034
    %v1091 = vunpack.c.h.s8.bf16 %v1035
    %v1092 = vunpack.c.l.s8.bf16 %v1036
    %v1093 = vunpack.c.l.s8.bf16 %v1037
    %v1094 = vunpack.c.l.s8.bf16 %v1038
    %v1095 = vunpack.c.l.s8.bf16 %v1039
    %v1096 = vunpack.c.l.s8.bf16 %v1040
    %v1097 = vunpack.c.l.s8.bf16 %v1041
    %v1098 = vunpack.c.l.s8.bf16 %v1042
    %v1099 = vunpack.c.l.s8.bf16 %v1043
    %v1100 = vunpack.c.h.s8.bf16 %v1036
    %v1101 = vunpack.c.h.s8.bf16 %v1037
    %v1102 = vunpack.c.h.s8.bf16 %v1038
    %v1103 = vunpack.c.h.s8.bf16 %v1039
    %v1104 = vunpack.c.h.s8.bf16 %v1040
    %v1105 = vunpack.c.h.s8.bf16 %v1041
    %v1106 = vunpack.c.h.s8.bf16 %v1042
    %v1107 = vunpack.c.h.s8.bf16 %v1043
    %v1108 = vrot.slane %v672, 2
    %v1109 = vrot.slane %v673, 1
    %v1110 = vsel %vm675, %v1109, %v1108
    %v1111 = vpack.c.b16 %v1110, %v1110
    %1113 = vmatprep.subr.bf16.mxu0 %v1045
    %1114 = vmatpush1.bf16.msra.mxu0 %v1044
    %1115 = vmatprep.subr.bf16.mxu0 %v1053
    %1116 = vmatpush1.bf16.msra.mxu0 %v1052
    %1117 = vmatprep.subr.bf16.mxu0 %v1061
    %1118 = vmatpush1.bf16.msra.mxu0 %v1060
    %1119 = vmatprep.subr.bf16.mxu0 %v1069
    %1120 = vmatpush1.bf16.msra.mxu0 %v1068
    %1121 = vmatprep.subr.bf16.mxu0 %v1077
    %1122 = vmatpush1.bf16.msra.mxu0 %v1076
    %1123 = vmatprep.subr.bf16.mxu0 %v1085
    %1124 = vmatpush1.bf16.msra.mxu0 %v1084
    %1125 = vmatprep.subr.bf16.mxu0 %v1093
    %1126 = vmatpush1.bf16.msra.mxu0 %v1092
    %1127 = vmatprep.subr.bf16.mxu0 %v1101
    %1128 = vmatpush1.bf16.msra.mxu0 %v1100
    %1129 = vmatprep.subr.bf16.mxu0 0
    %1130 = vmatpush1.bf16.msra.mxu0 0
    %1131 = vmatprep.subr.bf16.mxu0 0
    %1132 = vmatpush1.bf16.msra.mxu0 0
    %1133 = vmatprep.subr.bf16.mxu0 0
    %1134 = vmatpush1.bf16.msra.mxu0 0
    %1135 = vmatprep.subr.bf16.mxu0 0
    %1136 = vmatpush1.bf16.msra.mxu0 0
    %1137 = vmatprep.subr.bf16.mxu0 0
    %1138 = vmatpush1.bf16.msra.mxu0 0
    %1139 = vmatprep.subr.bf16.mxu0 0
    %1140 = vmatpush1.bf16.msra.mxu0 0
    %1141 = vmatprep.subr.bf16.mxu0 0
    %1142 = vmatpush1.bf16.msra.mxu0 0
    %1143 = vmatprep.subr.bf16.mxu0 0
    %1144 = vmatpush1.bf16.msra.mxu0 0
    %1145 = vmatprep.mubr.bf16.mxu0 0
    %1146 = vmatmul.mubr.bf16.gmra.mrb[0].mxu0 %v1111
    %v1147 = vpop.f32.mrb[0].mxu0
    %v1148 = vadd.f32 0.0, %v1147
    %v1149 = vpop.f32.mrb[0].mxu0
    %v1150 = vadd.f32 0.0, %v1149
    %v1151 = vpop.f32.mrb[0].mxu0
    %v1152 = vpop.f32.mrb[0].mxu0
    %1153 = vdwg.mxu0
    %1154 = vmatprep.subr.bf16.mxu0 %v1047
    %1155 = vmatpush1.bf16.msra.mxu0 %v1046
    %1156 = vmatprep.subr.bf16.mxu0 %v1055
    %1157 = vmatpush1.bf16.msra.mxu0 %v1054
    %1158 = vmatprep.subr.bf16.mxu0 %v1063
    %1159 = vmatpush1.bf16.msra.mxu0 %v1062
    %1160 = vmatprep.subr.bf16.mxu0 %v1071
    %1161 = vmatpush1.bf16.msra.mxu0 %v1070
    %1162 = vmatprep.subr.bf16.mxu0 %v1079
    %1163 = vmatpush1.bf16.msra.mxu0 %v1078
    %1164 = vmatprep.subr.bf16.mxu0 %v1087
    %1165 = vmatpush1.bf16.msra.mxu0 %v1086
    %1166 = vmatprep.subr.bf16.mxu0 %v1095
    %1167 = vmatpush1.bf16.msra.mxu0 %v1094
    %1168 = vmatprep.subr.bf16.mxu0 %v1103
    %1169 = vmatpush1.bf16.msra.mxu0 %v1102
    %1170 = vmatprep.subr.bf16.mxu0 0
    %1171 = vmatpush1.bf16.msra.mxu0 0
    %1172 = vmatprep.subr.bf16.mxu0 0
    %1173 = vmatpush1.bf16.msra.mxu0 0
    %1174 = vmatprep.subr.bf16.mxu0 0
    %1175 = vmatpush1.bf16.msra.mxu0 0
    %1176 = vmatprep.subr.bf16.mxu0 0
    %1177 = vmatpush1.bf16.msra.mxu0 0
    %1178 = vmatprep.subr.bf16.mxu0 0
    %1179 = vmatpush1.bf16.msra.mxu0 0
    %1180 = vmatprep.subr.bf16.mxu0 0
    %1181 = vmatpush1.bf16.msra.mxu0 0
    %1182 = vmatprep.subr.bf16.mxu0 0
    %1183 = vmatpush1.bf16.msra.mxu0 0
    %1184 = vmatprep.subr.bf16.mxu0 0
    %1185 = vmatpush1.bf16.msra.mxu0 0
    %1186 = vmatprep.mubr.bf16.mxu0 0
    %1187 = vmatmul.mubr.bf16.gmra.mrb[0].mxu0 %v1111
    %v1188 = vpop.f32.mrb[0].mxu0
    %v1189 = vadd.f32 0.0, %v1188
    %v1190 = vpop.f32.mrb[0].mxu0
    %v1191 = vadd.f32 0.0, %v1190
    %v1192 = vpop.f32.mrb[0].mxu0
    %v1193 = vpop.f32.mrb[0].mxu0
    %1194 = vdwg.mxu0
    %1195 = vmatprep.subr.bf16.mxu0 %v1049
    %1196 = vmatpush1.bf16.msra.mxu0 %v1048
    %1197 = vmatprep.subr.bf16.mxu0 %v1057
    %1198 = vmatpush1.bf16.msra.mxu0 %v1056
    %1199 = vmatprep.subr.bf16.mxu0 %v1065
    %1200 = vmatpush1.bf16.msra.mxu0 %v1064
    %1201 = vmatprep.subr.bf16.mxu0 %v1073
    %1202 = vmatpush1.bf16.msra.mxu0 %v1072
    %1203 = vmatprep.subr.bf16.mxu0 %v1081
    %1204 = vmatpush1.bf16.msra.mxu0 %v1080
    %1205 = vmatprep.subr.bf16.mxu0 %v1089
    %1206 = vmatpush1.bf16.msra.mxu0 %v1088
    %1207 = vmatprep.subr.bf16.mxu0 %v1097
    %1208 = vmatpush1.bf16.msra.mxu0 %v1096
    %1209 = vmatprep.subr.bf16.mxu0 %v1105
    %1210 = vmatpush1.bf16.msra.mxu0 %v1104
    %1211 = vmatprep.subr.bf16.mxu0 0
    %1212 = vmatpush1.bf16.msra.mxu0 0
    %1213 = vmatprep.subr.bf16.mxu0 0
    %1214 = vmatpush1.bf16.msra.mxu0 0
    %1215 = vmatprep.subr.bf16.mxu0 0
    %1216 = vmatpush1.bf16.msra.mxu0 0
    %1217 = vmatprep.subr.bf16.mxu0 0
    %1218 = vmatpush1.bf16.msra.mxu0 0
    %1219 = vmatprep.subr.bf16.mxu0 0
    %1220 = vmatpush1.bf16.msra.mxu0 0
    %1221 = vmatprep.subr.bf16.mxu0 0
    %1222 = vmatpush1.bf16.msra.mxu0 0
    %1223 = vmatprep.subr.bf16.mxu0 0
    %1224 = vmatpush1.bf16.msra.mxu0 0
    %1225 = vmatprep.subr.bf16.mxu0 0
    %1226 = vmatpush1.bf16.msra.mxu0 0
    %1227 = vmatprep.mubr.bf16.mxu0 0
    %1228 = vmatmul.mubr.bf16.gmra.mrb[0].mxu0 %v1111
    %v1229 = vpop.f32.mrb[0].mxu0
    %v1230 = vadd.f32 0.0, %v1229
    %v1231 = vpop.f32.mrb[0].mxu0
    %v1232 = vadd.f32 0.0, %v1231
    %v1233 = vpop.f32.mrb[0].mxu0
    %v1234 = vpop.f32.mrb[0].mxu0
    %1235 = vdwg.mxu0
    %1236 = vmatprep.subr.bf16.mxu0 %v1051
    %1237 = vmatpush1.bf16.msra.mxu0 %v1050
    %1238 = vmatprep.subr.bf16.mxu0 %v1059
    %1239 = vmatpush1.bf16.msra.mxu0 %v1058
    %1240 = vmatprep.subr.bf16.mxu0 %v1067
    %1241 = vmatpush1.bf16.msra.mxu0 %v1066
    %1242 = vmatprep.subr.bf16.mxu0 %v1075
    %1243 = vmatpush1.bf16.msra.mxu0 %v1074
    %1244 = vmatprep.subr.bf16.mxu0 %v1083
    %1245 = vmatpush1.bf16.msra.mxu0 %v1082
    %1246 = vmatprep.subr.bf16.mxu0 %v1091
    %1247 = vmatpush1.bf16.msra.mxu0 %v1090
    %1248 = vmatprep.subr.bf16.mxu0 %v1099
    %1249 = vmatpush1.bf16.msra.mxu0 %v1098
    %1250 = vmatprep.subr.bf16.mxu0 %v1107
    %1251 = vmatpush1.bf16.msra.mxu0 %v1106
    %1252 = vmatprep.subr.bf16.mxu0 0
    %1253 = vmatpush1.bf16.msra.mxu0 0
    %1254 = vmatprep.subr.bf16.mxu0 0
    %1255 = vmatpush1.bf16.msra.mxu0 0
    %1256 = vmatprep.subr.bf16.mxu0 0
    %1257 = vmatpush1.bf16.msra.mxu0 0
    %1258 = vmatprep.subr.bf16.mxu0 0
    %1259 = vmatpush1.bf16.msra.mxu0 0
    %1260 = vmatprep.subr.bf16.mxu0 0
    %1261 = vmatpush1.bf16.msra.mxu0 0
    %1262 = vmatprep.subr.bf16.mxu0 0
    %1263 = vmatpush1.bf16.msra.mxu0 0
    %1264 = vmatprep.subr.bf16.mxu0 0
    %1265 = vmatpush1.bf16.msra.mxu0 0
    %1266 = vmatprep.subr.bf16.mxu0 0
    %1267 = vmatpush1.bf16.msra.mxu0 0
    %1268 = vmatprep.mubr.bf16.mxu0 0
    %1269 = vmatmul.mubr.bf16.gmra.mrb[0].mxu0 %v1111
    %v1270 = vpop.f32.mrb[0].mxu0
    %v1271 = vadd.f32 0.0, %v1270
    %v1272 = vpop.f32.mrb[0].mxu0
    %v1273 = vadd.f32 0.0, %v1272
    %v1274 = vpop.f32.mrb[0].mxu0
    %v1275 = vpop.f32.mrb[0].mxu0
    %1276 = vdwg.mxu0
    %v1277 = vadd.f32 %v882, %v1148
    %v1278 = vadd.f32 %v884, %v1150
    %v1279 = vadd.f32 %v923, %v1189
    %v1280 = vadd.f32 %v925, %v1191
    %v1281 = vadd.f32 %v964, %v1230
    %v1282 = vadd.f32 %v966, %v1232
    %v1283 = vadd.f32 %v1005, %v1271
    %v1284 = vadd.f32 %v1007, %v1273
    %s1285 = scalar_lea.vmem [#allocation8], 768
    %v1286 = vld [vmem:[%s1285] sm:$0xff]
    %v1287 = vld [vmem:[%s1285 + $0x8] sm:$0xff]
    %v1288 = vld [vmem:[%s1285 + $0x10] sm:$0xff]
    %v1289 = vld [vmem:[%s1285 + $0x18] sm:$0xff]
    %v1290 = vld [vmem:[%s1285 + $0x20] sm:$0xff]
    %v1291 = vld [vmem:[%s1285 + $0x28] sm:$0xff]
    %v1292 = vld [vmem:[%s1285 + $0x30] sm:$0xff]
    %v1293 = vld [vmem:[%s1285 + $0x38] sm:$0xff]
    %v1294 = vld [vmem:[%s1285 + $0x40] sm:$0xff]
    %v1295 = vld [vmem:[%s1285 + $0x48] sm:$0xff]
    %v1296 = vld [vmem:[%s1285 + $0x50] sm:$0xff]
    %v1297 = vld [vmem:[%s1285 + $0x58] sm:$0xff]
    %v1298 = vld [vmem:[%s1285 + $0x60] sm:$0xff]
    %v1299 = vld [vmem:[%s1285 + $0x68] sm:$0xff]
    %v1300 = vld [vmem:[%s1285 + $0x70] sm:$0xff]
    %v1301 = vld [vmem:[%s1285 + $0x78] sm:$0xff]
    %v1302 = vld [vmem:[%s1285 + $0x80] sm:$0xff]
    %v1303 = vld [vmem:[%s1285 + $0x88] sm:$0xff]
    %v1304 = vld [vmem:[%s1285 + $0x90] sm:$0xff]
    %v1305 = vld [vmem:[%s1285 + $0x98] sm:$0xff]
    %v1306 = vld [vmem:[%s1285 + $0xa0] sm:$0xff]
    %v1307 = vld [vmem:[%s1285 + $0xa8] sm:$0xff]
    %v1308 = vld [vmem:[%s1285 + $0xb0] sm:$0xff]
    %v1309 = vld [vmem:[%s1285 + $0xb8] sm:$0xff]
    %v1310 = vld [vmem:[%s1285 + $0xc0] sm:$0xff]
    %v1311 = vld [vmem:[%s1285 + $0xc8] sm:$0xff]
    %v1312 = vld [vmem:[%s1285 + $0xd0] sm:$0xff]
    %v1313 = vld [vmem:[%s1285 + $0xd8] sm:$0xff]
    %v1314 = vld [vmem:[%s1285 + $0xe0] sm:$0xff]
    %v1315 = vld [vmem:[%s1285 + $0xe8] sm:$0xff]
    %v1316 = vld [vmem:[%s1285 + $0xf0] sm:$0xff]
    %v1317 = vld [vmem:[%s1285 + $0xf8] sm:$0xff]
    %v1318 = vunpack.c.l.s8.bf16 %v1286
    %v1319 = vunpack.c.l.s8.bf16 %v1287
    %v1320 = vunpack.c.l.s8.bf16 %v1288
    %v1321 = vunpack.c.l.s8.bf16 %v1289
    %v1322 = vunpack.c.l.s8.bf16 %v1290
    %v1323 = vunpack.c.l.s8.bf16 %v1291
    %v1324 = vunpack.c.l.s8.bf16 %v1292
    %v1325 = vunpack.c.l.s8.bf16 %v1293
    %v1326 = vunpack.c.h.s8.bf16 %v1286
    %v1327 = vunpack.c.h.s8.bf16 %v1287
    %v1328 = vunpack.c.h.s8.bf16 %v1288
    %v1329 = vunpack.c.h.s8.bf16 %v1289
    %v1330 = vunpack.c.h.s8.bf16 %v1290
    %v1331 = vunpack.c.h.s8.bf16 %v1291
    %v1332 = vunpack.c.h.s8.bf16 %v1292
    %v1333 = vunpack.c.h.s8.bf16 %v1293
    %v1334 = vunpack.c.l.s8.bf16 %v1294
    %v1335 = vunpack.c.l.s8.bf16 %v1295
    %v1336 = vunpack.c.l.s8.bf16 %v1296
    %v1337 = vunpack.c.l.s8.bf16 %v1297
    %v1338 = vunpack.c.l.s8.bf16 %v1298
    %v1339 = vunpack.c.l.s8.bf16 %v1299
    %v1340 = vunpack.c.l.s8.bf16 %v1300
    %v1341 = vunpack.c.l.s8.bf16 %v1301
    %v1342 = vunpack.c.h.s8.bf16 %v1294
    %v1343 = vunpack.c.h.s8.bf16 %v1295
    %v1344 = vunpack.c.h.s8.bf16 %v1296
    %v1345 = vunpack.c.h.s8.bf16 %v1297
    %v1346 = vunpack.c.h.s8.bf16 %v1298
    %v1347 = vunpack.c.h.s8.bf16 %v1299
    %v1348 = vunpack.c.h.s8.bf16 %v1300
    %v1349 = vunpack.c.h.s8.bf16 %v1301
    %v1350 = vunpack.c.l.s8.bf16 %v1302
    %v1351 = vunpack.c.l.s8.bf16 %v1303
    %v1352 = vunpack.c.l.s8.bf16 %v1304
    %v1353 = vunpack.c.l.s8.bf16 %v1305
    %v1354 = vunpack.c.l.s8.bf16 %v1306
    %v1355 = vunpack.c.l.s8.bf16 %v1307
    %v1356 = vunpack.c.l.s8.bf16 %v1308
    %v1357 = vunpack.c.l.s8.bf16 %v1309
    %v1358 = vunpack.c.h.s8.bf16 %v1302
    %v1359 = vunpack.c.h.s8.bf16 %v1303
    %v1360 = vunpack.c.h.s8.bf16 %v1304
    %v1361 = vunpack.c.h.s8.bf16 %v1305
    %v1362 = vunpack.c.h.s8.bf16 %v1306
    %v1363 = vunpack.c.h.s8.bf16 %v1307
    %v1364 = vunpack.c.h.s8.bf16 %v1308
    %v1365 = vunpack.c.h.s8.bf16 %v1309
    %v1366 = vunpack.c.l.s8.bf16 %v1310
    %v1367 = vunpack.c.l.s8.bf16 %v1311
    %v1368 = vunpack.c.l.s8.bf16 %v1312
    %v1369 = vunpack.c.l.s8.bf16 %v1313
    %v1370 = vunpack.c.l.s8.bf16 %v1314
    %v1371 = vunpack.c.l.s8.bf16 %v1315
    %v1372 = vunpack.c.l.s8.bf16 %v1316
    %v1373 = vunpack.c.l.s8.bf16 %v1317
    %v1374 = vunpack.c.h.s8.bf16 %v1310
    %v1375 = vunpack.c.h.s8.bf16 %v1311
    %v1376 = vunpack.c.h.s8.bf16 %v1312
    %v1377 = vunpack.c.h.s8.bf16 %v1313
    %v1378 = vunpack.c.h.s8.bf16 %v1314
    %v1379 = vunpack.c.h.s8.bf16 %v1315
    %v1380 = vunpack.c.h.s8.bf16 %v1316
    %v1381 = vunpack.c.h.s8.bf16 %v1317
    %v1382 = vrot.slane %v672, 3
    %v1383 = vrot.slane %v673, 2
    %v1384 = vsel %vm675, %v1383, %v1382
    %v1385 = vpack.c.b16 %v1384, %v1384
    %1387 = vmatprep.subr.bf16.mxu0 %v1319
    %1388 = vmatpush1.bf16.msra.mxu0 %v1318
    %1389 = vmatprep.subr.bf16.mxu0 %v1327
    %1390 = vmatpush1.bf16.msra.mxu0 %v1326
    %1391 = vmatprep.subr.bf16.mxu0 %v1335
    %1392 = vmatpush1.bf16.msra.mxu0 %v1334
    %1393 = vmatprep.subr.bf16.mxu0 %v1343
    %1394 = vmatpush1.bf16.msra.mxu0 %v1342
    %1395 = vmatprep.subr.bf16.mxu0 %v1351
    %1396 = vmatpush1.bf16.msra.mxu0 %v1350
    %1397 = vmatprep.subr.bf16.mxu0 %v1359
    %1398 = vmatpush1.bf16.msra.mxu0 %v1358
    %1399 = vmatprep.subr.bf16.mxu0 %v1367
    %1400 = vmatpush1.bf16.msra.mxu0 %v1366
    %1401 = vmatprep.subr.bf16.mxu0 %v1375
    %1402 = vmatpush1.bf16.msra.mxu0 %v1374
    %1403 = vmatprep.subr.bf16.mxu0 0
    %1404 = vmatpush1.bf16.msra.mxu0 0
    %1405 = vmatprep.subr.bf16.mxu0 0
    %1406 = vmatpush1.bf16.msra.mxu0 0
    %1407 = vmatprep.subr.bf16.mxu0 0
    %1408 = vmatpush1.bf16.msra.mxu0 0
    %1409 = vmatprep.subr.bf16.mxu0 0
    %1410 = vmatpush1.bf16.msra.mxu0 0
    %1411 = vmatprep.subr.bf16.mxu0 0
    %1412 = vmatpush1.bf16.msra.mxu0 0
    %1413 = vmatprep.subr.bf16.mxu0 0
    %1414 = vmatpush1.bf16.msra.mxu0 0
    %1415 = vmatprep.subr.bf16.mxu0 0
    %1416 = vmatpush1.bf16.msra.mxu0 0
    %1417 = vmatprep.subr.bf16.mxu0 0
    %1418 = vmatpush1.bf16.msra.mxu0 0
    %1419 = vmatprep.mubr.bf16.mxu0 0
    %1420 = vmatmul.mubr.bf16.gmra.mrb[0].mxu0 %v1385
    %v1421 = vpop.f32.mrb[0].mxu0
    %v1422 = vadd.f32 0.0, %v1421
    %v1423 = vpop.f32.mrb[0].mxu0
    %v1424 = vadd.f32 0.0, %v1423
    %v1425 = vpop.f32.mrb[0].mxu0
    %v1426 = vpop.f32.mrb[0].mxu0
    %1427 = vdwg.mxu0
    %1428 = vmatprep.subr.bf16.mxu0 %v1321
    %1429 = vmatpush1.bf16.msra.mxu0 %v1320
    %1430 = vmatprep.subr.bf16.mxu0 %v1329
    %1431 = vmatpush1.bf16.msra.mxu0 %v1328
    %1432 = vmatprep.subr.bf16.mxu0 %v1337
    %1433 = vmatpush1.bf16.msra.mxu0 %v1336
    %1434 = vmatprep.subr.bf16.mxu0 %v1345
    %1435 = vmatpush1.bf16.msra.mxu0 %v1344
    %1436 = vmatprep.subr.bf16.mxu0 %v1353
    %1437 = vmatpush1.bf16.msra.mxu0 %v1352
    %1438 = vmatprep.subr.bf16.mxu0 %v1361
    %1439 = vmatpush1.bf16.msra.mxu0 %v1360
    %1440 = vmatprep.subr.bf16.mxu0 %v1369
    %1441 = vmatpush1.bf16.msra.mxu0 %v1368
    %1442 = vmatprep.subr.bf16.mxu0 %v1377
    %1443 = vmatpush1.bf16.msra.mxu0 %v1376
    %1444 = vmatprep.subr.bf16.mxu0 0
    %1445 = vmatpush1.bf16.msra.mxu0 0
    %1446 = vmatprep.subr.bf16.mxu0 0
    %1447 = vmatpush1.bf16.msra.mxu0 0
    %1448 = vmatprep.subr.bf16.mxu0 0
    %1449 = vmatpush1.bf16.msra.mxu0 0
    %1450 = vmatprep.subr.bf16.mxu0 0
    %1451 = vmatpush1.bf16.msra.mxu0 0
    %1452 = vmatprep.subr.bf16.mxu0 0
    %1453 = vmatpush1.bf16.msra.mxu0 0
    %1454 = vmatprep.subr.bf16.mxu0 0
    %1455 = vmatpush1.bf16.msra.mxu0 0
    %1456 = vmatprep.subr.bf16.mxu0 0
    %1457 = vmatpush1.bf16.msra.mxu0 0
    %1458 = vmatprep.subr.bf16.mxu0 0
    %1459 = vmatpush1.bf16.msra.mxu0 0
    %1460 = vmatprep.mubr.bf16.mxu0 0
    %1461 = vmatmul.mubr.bf16.gmra.mrb[0].mxu0 %v1385
    %v1462 = vpop.f32.mrb[0].mxu0
    %v1463 = vadd.f32 0.0, %v1462
    %v1464 = vpop.f32.mrb[0].mxu0
    %v1465 = vadd.f32 0.0, %v1464
    %v1466 = vpop.f32.mrb[0].mxu0
    %v1467 = vpop.f32.mrb[0].mxu0
    %1468 = vdwg.mxu0
    %1469 = vmatprep.subr.bf16.mxu0 %v1323
    %1470 = vmatpush1.bf16.msra.mxu0 %v1322
    %1471 = vmatprep.subr.bf16.mxu0 %v1331
    %1472 = vmatpush1.bf16.msra.mxu0 %v1330
    %1473 = vmatprep.subr.bf16.mxu0 %v1339
    %1474 = vmatpush1.bf16.msra.mxu0 %v1338
    %1475 = vmatprep.subr.bf16.mxu0 %v1347
    %1476 = vmatpush1.bf16.msra.mxu0 %v1346
    %1477 = vmatprep.subr.bf16.mxu0 %v1355
    %1478 = vmatpush1.bf16.msra.mxu0 %v1354
    %1479 = vmatprep.subr.bf16.mxu0 %v1363
    %1480 = vmatpush1.bf16.msra.mxu0 %v1362
    %1481 = vmatprep.subr.bf16.mxu0 %v1371
    %1482 = vmatpush1.bf16.msra.mxu0 %v1370
    %1483 = vmatprep.subr.bf16.mxu0 %v1379
    %1484 = vmatpush1.bf16.msra.mxu0 %v1378
    %1485 = vmatprep.subr.bf16.mxu0 0
    %1486 = vmatpush1.bf16.msra.mxu0 0
    %1487 = vmatprep.subr.bf16.mxu0 0
    %1488 = vmatpush1.bf16.msra.mxu0 0
    %1489 = vmatprep.subr.bf16.mxu0 0
    %1490 = vmatpush1.bf16.msra.mxu0 0
    %1491 = vmatprep.subr.bf16.mxu0 0
    %1492 = vmatpush1.bf16.msra.mxu0 0
    %1493 = vmatprep.subr.bf16.mxu0 0
    %1494 = vmatpush1.bf16.msra.mxu0 0
    %1495 = vmatprep.subr.bf16.mxu0 0
    %1496 = vmatpush1.bf16.msra.mxu0 0
    %1497 = vmatprep.subr.bf16.mxu0 0
    %1498 = vmatpush1.bf16.msra.mxu0 0
    %1499 = vmatprep.subr.bf16.mxu0 0
    %1500 = vmatpush1.bf16.msra.mxu0 0
    %1501 = vmatprep.mubr.bf16.mxu0 0
    %1502 = vmatmul.mubr.bf16.gmra.mrb[0].mxu0 %v1385
    %v1503 = vpop.f32.mrb[0].mxu0
    %v1504 = vadd.f32 0.0, %v1503
    %v1505 = vpop.f32.mrb[0].mxu0
    %v1506 = vadd.f32 0.0, %v1505
    %v1507 = vpop.f32.mrb[0].mxu0
    %v1508 = vpop.f32.mrb[0].mxu0
    %1509 = vdwg.mxu0
    %1510 = vmatprep.subr.bf16.mxu0 %v1325
    %1511 = vmatpush1.bf16.msra.mxu0 %v1324
    %1512 = vmatprep.subr.bf16.mxu0 %v1333
    %1513 = vmatpush1.bf16.msra.mxu0 %v1332
    %1514 = vmatprep.subr.bf16.mxu0 %v1341
    %1515 = vmatpush1.bf16.msra.mxu0 %v1340
    %1516 = vmatprep.subr.bf16.mxu0 %v1349
    %1517 = vmatpush1.bf16.msra.mxu0 %v1348
    %1518 = vmatprep.subr.bf16.mxu0 %v1357
    %1519 = vmatpush1.bf16.msra.mxu0 %v1356
    %1520 = vmatprep.subr.bf16.mxu0 %v1365
    %1521 = vmatpush1.bf16.msra.mxu0 %v1364
    %1522 = vmatprep.subr.bf16.mxu0 %v1373
    %1523 = vmatpush1.bf16.msra.mxu0 %v1372
    %1524 = vmatprep.subr.bf16.mxu0 %v1381
    %1525 = vmatpush1.bf16.msra.mxu0 %v1380
    %1526 = vmatprep.subr.bf16.mxu0 0
    %1527 = vmatpush1.bf16.msra.mxu0 0
    %1528 = vmatprep.subr.bf16.mxu0 0
    %1529 = vmatpush1.bf16.msra.mxu0 0
    %1530 = vmatprep.subr.bf16.mxu0 0
    %1531 = vmatpush1.bf16.msra.mxu0 0
    %1532 = vmatprep.subr.bf16.mxu0 0
    %1533 = vmatpush1.bf16.msra.mxu0 0
    %1534 = vmatprep.subr.bf16.mxu0 0
    %1535 = vmatpush1.bf16.msra.mxu0 0
    %1536 = vmatprep.subr.bf16.mxu0 0
    %1537 = vmatpush1.bf16.msra.mxu0 0
    %1538 = vmatprep.subr.bf16.mxu0 0
    %1539 = vmatpush1.bf16.msra.mxu0 0
    %1540 = vmatprep.subr.bf16.mxu0 0
    %1541 = vmatpush1.bf16.msra.mxu0 0
    %1542 = vmatprep.mubr.bf16.mxu0 0
    %1543 = vmatmul.mubr.bf16.gmra.mrb[0].mxu0 %v1385
    %v1544 = vpop.f32.mrb[0].mxu0
    %v1545 = vadd.f32 0.0, %v1544
    %v1546 = vpop.f32.mrb[0].mxu0
    %v1547 = vadd.f32 0.0, %v1546
    %v1548 = vpop.f32.mrb[0].mxu0
    %v1549 = vpop.f32.mrb[0].mxu0
    %1550 = vdwg.mxu0
    %v1551 = vadd.f32 %v1277, %v1422
    %v1552 = vadd.f32 %v1278, %v1424
    %v1553 = vadd.f32 %v1279, %v1463
    %v1554 = vadd.f32 %v1280, %v1465
    %v1555 = vadd.f32 %v1281, %v1504
    %v1556 = vadd.f32 %v1282, %v1506
    %v1557 = vadd.f32 %v1283, %v1545
    %v1558 = vadd.f32 %v1284, %v1547
    %s1559 = scalar_lea.vmem [#allocation8], 1024
    %v1560 = vld [vmem:[%s1559] sm:$0xff]
    %v1561 = vld [vmem:[%s1559 + $0x8] sm:$0xff]
    %v1562 = vld [vmem:[%s1559 + $0x10] sm:$0xff]
    %v1563 = vld [vmem:[%s1559 + $0x18] sm:$0xff]
    %v1564 = vld [vmem:[%s1559 + $0x20] sm:$0xff]
    %v1565 = vld [vmem:[%s1559 + $0x28] sm:$0xff]
    %v1566 = vld [vmem:[%s1559 + $0x30] sm:$0xff]
    %v1567 = vld [vmem:[%s1559 + $0x38] sm:$0xff]
    %v1568 = vld [vmem:[%s1559 + $0x40] sm:$0xff]
    %v1569 = vld [vmem:[%s1559 + $0x48] sm:$0xff]
    %v1570 = vld [vmem:[%s1559 + $0x50] sm:$0xff]
    %v1571 = vld [vmem:[%s1559 + $0x58] sm:$0xff]
    %v1572 = vld [vmem:[%s1559 + $0x60] sm:$0xff]
    %v1573 = vld [vmem:[%s1559 + $0x68] sm:$0xff]
    %v1574 = vld [vmem:[%s1559 + $0x70] sm:$0xff]
    %v1575 = vld [vmem:[%s1559 + $0x78] sm:$0xff]
    %v1576 = vld [vmem:[%s1559 + $0x80] sm:$0xff]
    %v1577 = vld [vmem:[%s1559 + $0x88] sm:$0xff]
    %v1578 = vld [vmem:[%s1559 + $0x90] sm:$0xff]
    %v1579 = vld [vmem:[%s1559 + $0x98] sm:$0xff]
    %v1580 = vld [vmem:[%s1559 + $0xa0] sm:$0xff]
    %v1581 = vld [vmem:[%s1559 + $0xa8] sm:$0xff]
    %v1582 = vld [vmem:[%s1559 + $0xb0] sm:$0xff]
    %v1583 = vld [vmem:[%s1559 + $0xb8] sm:$0xff]
    %v1584 = vld [vmem:[%s1559 + $0xc0] sm:$0xff]
    %v1585 = vld [vmem:[%s1559 + $0xc8] sm:$0xff]
    %v1586 = vld [vmem:[%s1559 + $0xd0] sm:$0xff]
    %v1587 = vld [vmem:[%s1559 + $0xd8] sm:$0xff]
    %v1588 = vld [vmem:[%s1559 + $0xe0] sm:$0xff]
    %v1589 = vld [vmem:[%s1559 + $0xe8] sm:$0xff]
    %v1590 = vld [vmem:[%s1559 + $0xf0] sm:$0xff]
    %v1591 = vld [vmem:[%s1559 + $0xf8] sm:$0xff]
    %v1592 = vunpack.c.l.s8.bf16 %v1560
    %v1593 = vunpack.c.l.s8.bf16 %v1561
    %v1594 = vunpack.c.l.s8.bf16 %v1562
    %v1595 = vunpack.c.l.s8.bf16 %v1563
    %v1596 = vunpack.c.l.s8.bf16 %v1564
    %v1597 = vunpack.c.l.s8.bf16 %v1565
    %v1598 = vunpack.c.l.s8.bf16 %v1566
    %v1599 = vunpack.c.l.s8.bf16 %v1567
    %v1600 = vunpack.c.h.s8.bf16 %v1560
    %v1601 = vunpack.c.h.s8.bf16 %v1561
    %v1602 = vunpack.c.h.s8.bf16 %v1562
    %v1603 = vunpack.c.h.s8.bf16 %v1563
    %v1604 = vunpack.c.h.s8.bf16 %v1564
    %v1605 = vunpack.c.h.s8.bf16 %v1565
    %v1606 = vunpack.c.h.s8.bf16 %v1566
    %v1607 = vunpack.c.h.s8.bf16 %v1567
    %v1608 = vunpack.c.l.s8.bf16 %v1568
    %v1609 = vunpack.c.l.s8.bf16 %v1569
    %v1610 = vunpack.c.l.s8.bf16 %v1570
    %v1611 = vunpack.c.l.s8.bf16 %v1571
    %v1612 = vunpack.c.l.s8.bf16 %v1572
    %v1613 = vunpack.c.l.s8.bf16 %v1573
    %v1614 = vunpack.c.l.s8.bf16 %v1574
    %v1615 = vunpack.c.l.s8.bf16 %v1575
    %v1616 = vunpack.c.h.s8.bf16 %v1568
    %v1617 = vunpack.c.h.s8.bf16 %v1569
    %v1618 = vunpack.c.h.s8.bf16 %v1570
    %v1619 = vunpack.c.h.s8.bf16 %v1571
    %v1620 = vunpack.c.h.s8.bf16 %v1572
    %v1621 = vunpack.c.h.s8.bf16 %v1573
    %v1622 = vunpack.c.h.s8.bf16 %v1574
    %v1623 = vunpack.c.h.s8.bf16 %v1575
    %v1624 = vunpack.c.l.s8.bf16 %v1576
    %v1625 = vunpack.c.l.s8.bf16 %v1577
    %v1626 = vunpack.c.l.s8.bf16 %v1578
    %v1627 = vunpack.c.l.s8.bf16 %v1579
    %v1628 = vunpack.c.l.s8.bf16 %v1580
    %v1629 = vunpack.c.l.s8.bf16 %v1581
    %v1630 = vunpack.c.l.s8.bf16 %v1582
    %v1631 = vunpack.c.l.s8.bf16 %v1583
    %v1632 = vunpack.c.h.s8.bf16 %v1576
    %v1633 = vunpack.c.h.s8.bf16 %v1577
    %v1634 = vunpack.c.h.s8.bf16 %v1578
    %v1635 = vunpack.c.h.s8.bf16 %v1579
    %v1636 = vunpack.c.h.s8.bf16 %v1580
    %v1637 = vunpack.c.h.s8.bf16 %v1581
    %v1638 = vunpack.c.h.s8.bf16 %v1582
    %v1639 = vunpack.c.h.s8.bf16 %v1583
    %v1640 = vunpack.c.l.s8.bf16 %v1584
    %v1641 = vunpack.c.l.s8.bf16 %v1585
    %v1642 = vunpack.c.l.s8.bf16 %v1586
    %v1643 = vunpack.c.l.s8.bf16 %v1587
    %v1644 = vunpack.c.l.s8.bf16 %v1588
    %v1645 = vunpack.c.l.s8.bf16 %v1589
    %v1646 = vunpack.c.l.s8.bf16 %v1590
    %v1647 = vunpack.c.l.s8.bf16 %v1591
    %v1648 = vunpack.c.h.s8.bf16 %v1584
    %v1649 = vunpack.c.h.s8.bf16 %v1585
    %v1650 = vunpack.c.h.s8.bf16 %v1586
    %v1651 = vunpack.c.h.s8.bf16 %v1587
    %v1652 = vunpack.c.h.s8.bf16 %v1588
    %v1653 = vunpack.c.h.s8.bf16 %v1589
    %v1654 = vunpack.c.h.s8.bf16 %v1590
    %v1655 = vunpack.c.h.s8.bf16 %v1591
    %v1656 = vrot.slane %v672, 4
    %v1657 = vrot.slane %v673, 3
    %v1658 = vsel %vm675, %v1657, %v1656
    %v1659 = vpack.c.b16 %v1658, %v1658
    %1661 = vmatprep.subr.bf16.mxu0 %v1593
    %1662 = vmatpush1.bf16.msra.mxu0 %v1592
    %1663 = vmatprep.subr.bf16.mxu0 %v1601
    %1664 = vmatpush1.bf16.msra.mxu0 %v1600
    %1665 = vmatprep.subr.bf16.mxu0 %v1609
    %1666 = vmatpush1.bf16.msra.mxu0 %v1608
    %1667 = vmatprep.subr.bf16.mxu0 %v1617
    %1668 = vmatpush1.bf16.msra.mxu0 %v1616
    %1669 = vmatprep.subr.bf16.mxu0 %v1625
    %1670 = vmatpush1.bf16.msra.mxu0 %v1624
    %1671 = vmatprep.subr.bf16.mxu0 %v1633
    %1672 = vmatpush1.bf16.msra.mxu0 %v1632
    %1673 = vmatprep.subr.bf16.mxu0 %v1641
    %1674 = vmatpush1.bf16.msra.mxu0 %v1640
    %1675 = vmatprep.subr.bf16.mxu0 %v1649
    %1676 = vmatpush1.bf16.msra.mxu0 %v1648
    %1677 = vmatprep.subr.bf16.mxu0 0
    %1678 = vmatpush1.bf16.msra.mxu0 0
    %1679 = vmatprep.subr.bf16.mxu0 0
    %1680 = vmatpush1.bf16.msra.mxu0 0
    %1681 = vmatprep.subr.bf16.mxu0 0
    %1682 = vmatpush1.bf16.msra.mxu0 0
    %1683 = vmatprep.subr.bf16.mxu0 0
    %1684 = vmatpush1.bf16.msra.mxu0 0
    %1685 = vmatprep.subr.bf16.mxu0 0
    %1686 = vmatpush1.bf16.msra.mxu0 0
    %1687 = vmatprep.subr.bf16.mxu0 0
    %1688 = vmatpush1.bf16.msra.mxu0 0
    %1689 = vmatprep.subr.bf16.mxu0 0
    %1690 = vmatpush1.bf16.msra.mxu0 0
    %1691 = vmatprep.subr.bf16.mxu0 0
    %1692 = vmatpush1.bf16.msra.mxu0 0
    %1693 = vmatprep.mubr.bf16.mxu0 0
    %1694 = vmatmul.mubr.bf16.gmra.mrb[0].mxu0 %v1659
    %v1695 = vpop.f32.mrb[0].mxu0
    %v1696 = vadd.f32 0.0, %v1695
    %v1697 = vpop.f32.mrb[0].mxu0
    %v1698 = vadd.f32 0.0, %v1697
    %v1699 = vpop.f32.mrb[0].mxu0
    %v1700 = vpop.f32.mrb[0].mxu0
    %1701 = vdwg.mxu0
    %1702 = vmatprep.subr.bf16.mxu0 %v1595
    %1703 = vmatpush1.bf16.msra.mxu0 %v1594
    %1704 = vmatprep.subr.bf16.mxu0 %v1603
    %1705 = vmatpush1.bf16.msra.mxu0 %v1602
    %1706 = vmatprep.subr.bf16.mxu0 %v1611
    %1707 = vmatpush1.bf16.msra.mxu0 %v1610
    %1708 = vmatprep.subr.bf16.mxu0 %v1619
    %1709 = vmatpush1.bf16.msra.mxu0 %v1618
    %1710 = vmatprep.subr.bf16.mxu0 %v1627
    %1711 = vmatpush1.bf16.msra.mxu0 %v1626
    %1712 = vmatprep.subr.bf16.mxu0 %v1635
    %1713 = vmatpush1.bf16.msra.mxu0 %v1634
    %1714 = vmatprep.subr.bf16.mxu0 %v1643
    %1715 = vmatpush1.bf16.msra.mxu0 %v1642
    %1716 = vmatprep.subr.bf16.mxu0 %v1651
    %1717 = vmatpush1.bf16.msra.mxu0 %v1650
    %1718 = vmatprep.subr.bf16.mxu0 0
    %1719 = vmatpush1.bf16.msra.mxu0 0
    %1720 = vmatprep.subr.bf16.mxu0 0
    %1721 = vmatpush1.bf16.msra.mxu0 0
    %1722 = vmatprep.subr.bf16.mxu0 0
    %1723 = vmatpush1.bf16.msra.mxu0 0
    %1724 = vmatprep.subr.bf16.mxu0 0
    %1725 = vmatpush1.bf16.msra.mxu0 0
    %1726 = vmatprep.subr.bf16.mxu0 0
    %1727 = vmatpush1.bf16.msra.mxu0 0
    %1728 = vmatprep.subr.bf16.mxu0 0
    %1729 = vmatpush1.bf16.msra.mxu0 0
    %1730 = vmatprep.subr.bf16.mxu0 0
    %1731 = vmatpush1.bf16.msra.mxu0 0
    %1732 = vmatprep.subr.bf16.mxu0 0
    %1733 = vmatpush1.bf16.msra.mxu0 0
    %1734 = vmatprep.mubr.bf16.mxu0 0
    %1735 = vmatmul.mubr.bf16.gmra.mrb[0].mxu0 %v1659
    %v1736 = vpop.f32.mrb[0].mxu0
    %v1737 = vadd.f32 0.0, %v1736
    %v1738 = vpop.f32.mrb[0].mxu0
    %v1739 = vadd.f32 0.0, %v1738
    %v1740 = vpop.f32.mrb[0].mxu0
    %v1741 = vpop.f32.mrb[0].mxu0
    %1742 = vdwg.mxu0
    %1743 = vmatprep.subr.bf16.mxu0 %v1597
    %1744 = vmatpush1.bf16.msra.mxu0 %v1596
    %1745 = vmatprep.subr.bf16.mxu0 %v1605
    %1746 = vmatpush1.bf16.msra.mxu0 %v1604
    %1747 = vmatprep.subr.bf16.mxu0 %v1613
    %1748 = vmatpush1.bf16.msra.mxu0 %v1612
    %1749 = vmatprep.subr.bf16.mxu0 %v1621
    %1750 = vmatpush1.bf16.msra.mxu0 %v1620
    %1751 = vmatprep.subr.bf16.mxu0 %v1629
    %1752 = vmatpush1.bf16.msra.mxu0 %v1628
    %1753 = vmatprep.subr.bf16.mxu0 %v1637
    %1754 = vmatpush1.bf16.msra.mxu0 %v1636
    %1755 = vmatprep.subr.bf16.mxu0 %v1645
    %1756 = vmatpush1.bf16.msra.mxu0 %v1644
    %1757 = vmatprep.subr.bf16.mxu0 %v1653
    %1758 = vmatpush1.bf16.msra.mxu0 %v1652
    %1759 = vmatprep.subr.bf16.mxu0 0
    %1760 = vmatpush1.bf16.msra.mxu0 0
    %1761 = vmatprep.subr.bf16.mxu0 0
    %1762 = vmatpush1.bf16.msra.mxu0 0
    %1763 = vmatprep.subr.bf16.mxu0 0
    %1764 = vmatpush1.bf16.msra.mxu0 0
    %1765 = vmatprep.subr.bf16.mxu0 0
    %1766 = vmatpush1.bf16.msra.mxu0 0
    %1767 = vmatprep.subr.bf16.mxu0 0
    %1768 = vmatpush1.bf16.msra.mxu0 0
    %1769 = vmatprep.subr.bf16.mxu0 0
    %1770 = vmatpush1.bf16.msra.mxu0 0
    %1771 = vmatprep.subr.bf16.mxu0 0
    %1772 = vmatpush1.bf16.msra.mxu0 0
    %1773 = vmatprep.subr.bf16.mxu0 0
    %1774 = vmatpush1.bf16.msra.mxu0 0
    %1775 = vmatprep.mubr.bf16.mxu0 0
    %1776 = vmatmul.mubr.bf16.gmra.mrb[0].mxu0 %v1659
    %v1777 = vpop.f32.mrb[0].mxu0
    %v1778 = vadd.f32 0.0, %v1777
    %v1779 = vpop.f32.mrb[0].mxu0
    %v1780 = vadd.f32 0.0, %v1779
    %v1781 = vpop.f32.mrb[0].mxu0
    %v1782 = vpop.f32.mrb[0].mxu0
    %1783 = vdwg.mxu0
    %1784 = vmatprep.subr.bf16.mxu0 %v1599
    %1785 = vmatpush1.bf16.msra.mxu0 %v1598
    %1786 = vmatprep.subr.bf16.mxu0 %v1607
    %1787 = vmatpush1.bf16.msra.mxu0 %v1606
    %1788 = vmatprep.subr.bf16.mxu0 %v1615
    %1789 = vmatpush1.bf16.msra.mxu0 %v1614
    %1790 = vmatprep.subr.bf16.mxu0 %v1623
    %1791 = vmatpush1.bf16.msra.mxu0 %v1622
    %1792 = vmatprep.subr.bf16.mxu0 %v1631
    %1793 = vmatpush1.bf16.msra.mxu0 %v1630
    %1794 = vmatprep.subr.bf16.mxu0 %v1639
    %1795 = vmatpush1.bf16.msra.mxu0 %v1638
    %1796 = vmatprep.subr.bf16.mxu0 %v1647
    %1797 = vmatpush1.bf16.msra.mxu0 %v1646
    %1798 = vmatprep.subr.bf16.mxu0 %v1655
    %1799 = vmatpush1.bf16.msra.mxu0 %v1654
    %1800 = vmatprep.subr.bf16.mxu0 0
    %1801 = vmatpush1.bf16.msra.mxu0 0
    %1802 = vmatprep.subr.bf16.mxu0 0
    %1803 = vmatpush1.bf16.msra.mxu0 0
    %1804 = vmatprep.subr.bf16.mxu0 0
    %1805 = vmatpush1.bf16.msra.mxu0 0
    %1806 = vmatprep.subr.bf16.mxu0 0
    %1807 = vmatpush1.bf16.msra.mxu0 0
    %1808 = vmatprep.subr.bf16.mxu0 0
    %1809 = vmatpush1.bf16.msra.mxu0 0
    %1810 = vmatprep.subr.bf16.mxu0 0
    %1811 = vmatpush1.bf16.msra.mxu0 0
    %1812 = vmatprep.subr.bf16.mxu0 0
    %1813 = vmatpush1.bf16.msra.mxu0 0
    %1814 = vmatprep.subr.bf16.mxu0 0
    %1815 = vmatpush1.bf16.msra.mxu0 0
    %1816 = vmatprep.mubr.bf16.mxu0 0
    %1817 = vmatmul.mubr.bf16.gmra.mrb[0].mxu0 %v1659
    %v1818 = vpop.f32.mrb[0].mxu0
    %v1819 = vadd.f32 0.0, %v1818
    %v1820 = vpop.f32.mrb[0].mxu0
    %v1821 = vadd.f32 0.0, %v1820
    %v1822 = vpop.f32.mrb[0].mxu0
    %v1823 = vpop.f32.mrb[0].mxu0
    %1824 = vdwg.mxu0
    %v1825 = vadd.f32 %v1551, %v1696
    %v1826 = vadd.f32 %v1552, %v1698
    %v1827 = vadd.f32 %v1553, %v1737
    %v1828 = vadd.f32 %v1554, %v1739
    %v1829 = vadd.f32 %v1555, %v1778
    %v1830 = vadd.f32 %v1556, %v1780
    %v1831 = vadd.f32 %v1557, %v1819
    %v1832 = vadd.f32 %v1558, %v1821
    %s1833 = scalar_lea.vmem [#allocation8], 1280
    %v1834 = vld [vmem:[%s1833] sm:$0xff]
    %v1835 = vld [vmem:[%s1833 + $0x8] sm:$0xff]
    %v1836 = vld [vmem:[%s1833 + $0x10] sm:$0xff]
    %v1837 = vld [vmem:[%s1833 + $0x18] sm:$0xff]
    %v1838 = vld [vmem:[%s1833 + $0x20] sm:$0xff]
    %v1839 = vld [vmem:[%s1833 + $0x28] sm:$0xff]
    %v1840 = vld [vmem:[%s1833 + $0x30] sm:$0xff]
    %v1841 = vld [vmem:[%s1833 + $0x38] sm:$0xff]
    %v1842 = vld [vmem:[%s1833 + $0x40] sm:$0xff]
    %v1843 = vld [vmem:[%s1833 + $0x48] sm:$0xff]
    %v1844 = vld [vmem:[%s1833 + $0x50] sm:$0xff]
    %v1845 = vld [vmem:[%s1833 + $0x58] sm:$0xff]
    %v1846 = vld [vmem:[%s1833 + $0x60] sm:$0xff]
    %v1847 = vld [vmem:[%s1833 + $0x68] sm:$0xff]
    %v1848 = vld [vmem:[%s1833 + $0x70] sm:$0xff]
    %v1849 = vld [vmem:[%s1833 + $0x78] sm:$0xff]
    %v1850 = vld [vmem:[%s1833 + $0x80] sm:$0xff]
    %v1851 = vld [vmem:[%s1833 + $0x88] sm:$0xff]
    %v1852 = vld [vmem:[%s1833 + $0x90] sm:$0xff]
    %v1853 = vld [vmem:[%s1833 + $0x98] sm:$0xff]
    %v1854 = vld [vmem:[%s1833 + $0xa0] sm:$0xff]
    %v1855 = vld [vmem:[%s1833 + $0xa8] sm:$0xff]
    %v1856 = vld [vmem:[%s1833 + $0xb0] sm:$0xff]
    %v1857 = vld [vmem:[%s1833 + $0xb8] sm:$0xff]
    %v1858 = vld [vmem:[%s1833 + $0xc0] sm:$0xff]
    %v1859 = vld [vmem:[%s1833 + $0xc8] sm:$0xff]
    %v1860 = vld [vmem:[%s1833 + $0xd0] sm:$0xff]
    %v1861 = vld [vmem:[%s1833 + $0xd8] sm:$0xff]
    %v1862 = vld [vmem:[%s1833 + $0xe0] sm:$0xff]
    %v1863 = vld [vmem:[%s1833 + $0xe8] sm:$0xff]
    %v1864 = vld [vmem:[%s1833 + $0xf0] sm:$0xff]
    %v1865 = vld [vmem:[%s1833 + $0xf8] sm:$0xff]
    %v1866 = vunpack.c.l.s8.bf16 %v1834
    %v1867 = vunpack.c.l.s8.bf16 %v1835
    %v1868 = vunpack.c.l.s8.bf16 %v1836
    %v1869 = vunpack.c.l.s8.bf16 %v1837
    %v1870 = vunpack.c.l.s8.bf16 %v1838
    %v1871 = vunpack.c.l.s8.bf16 %v1839
    %v1872 = vunpack.c.l.s8.bf16 %v1840
    %v1873 = vunpack.c.l.s8.bf16 %v1841
    %v1874 = vunpack.c.h.s8.bf16 %v1834
    %v1875 = vunpack.c.h.s8.bf16 %v1835
    %v1876 = vunpack.c.h.s8.bf16 %v1836
    %v1877 = vunpack.c.h.s8.bf16 %v1837
    %v1878 = vunpack.c.h.s8.bf16 %v1838
    %v1879 = vunpack.c.h.s8.bf16 %v1839
    %v1880 = vunpack.c.h.s8.bf16 %v1840
    %v1881 = vunpack.c.h.s8.bf16 %v1841
    %v1882 = vunpack.c.l.s8.bf16 %v1842
    %v1883 = vunpack.c.l.s8.bf16 %v1843
    %v1884 = vunpack.c.l.s8.bf16 %v1844
    %v1885 = vunpack.c.l.s8.bf16 %v1845
    %v1886 = vunpack.c.l.s8.bf16 %v1846
    %v1887 = vunpack.c.l.s8.bf16 %v1847
    %v1888 = vunpack.c.l.s8.bf16 %v1848
    %v1889 = vunpack.c.l.s8.bf16 %v1849
    %v1890 = vunpack.c.h.s8.bf16 %v1842
    %v1891 = vunpack.c.h.s8.bf16 %v1843
    %v1892 = vunpack.c.h.s8.bf16 %v1844
    %v1893 = vunpack.c.h.s8.bf16 %v1845
    %v1894 = vunpack.c.h.s8.bf16 %v1846
    %v1895 = vunpack.c.h.s8.bf16 %v1847
    %v1896 = vunpack.c.h.s8.bf16 %v1848
    %v1897 = vunpack.c.h.s8.bf16 %v1849
    %v1898 = vunpack.c.l.s8.bf16 %v1850
    %v1899 = vunpack.c.l.s8.bf16 %v1851
    %v1900 = vunpack.c.l.s8.bf16 %v1852
    %v1901 = vunpack.c.l.s8.bf16 %v1853
    %v1902 = vunpack.c.l.s8.bf16 %v1854
    %v1903 = vunpack.c.l.s8.bf16 %v1855
    %v1904 = vunpack.c.l.s8.bf16 %v1856
    %v1905 = vunpack.c.l.s8.bf16 %v1857
    %v1906 = vunpack.c.h.s8.bf16 %v1850
    %v1907 = vunpack.c.h.s8.bf16 %v1851
    %v1908 = vunpack.c.h.s8.bf16 %v1852
    %v1909 = vunpack.c.h.s8.bf16 %v1853
    %v1910 = vunpack.c.h.s8.bf16 %v1854
    %v1911 = vunpack.c.h.s8.bf16 %v1855
    %v1912 = vunpack.c.h.s8.bf16 %v1856
    %v1913 = vunpack.c.h.s8.bf16 %v1857
    %v1914 = vunpack.c.l.s8.bf16 %v1858
    %v1915 = vunpack.c.l.s8.bf16 %v1859
    %v1916 = vunpack.c.l.s8.bf16 %v1860
    %v1917 = vunpack.c.l.s8.bf16 %v1861
    %v1918 = vunpack.c.l.s8.bf16 %v1862
    %v1919 = vunpack.c.l.s8.bf16 %v1863
    %v1920 = vunpack.c.l.s8.bf16 %v1864
    %v1921 = vunpack.c.l.s8.bf16 %v1865
    %v1922 = vunpack.c.h.s8.bf16 %v1858
    %v1923 = vunpack.c.h.s8.bf16 %v1859
    %v1924 = vunpack.c.h.s8.bf16 %v1860
    %v1925 = vunpack.c.h.s8.bf16 %v1861
    %v1926 = vunpack.c.h.s8.bf16 %v1862
    %v1927 = vunpack.c.h.s8.bf16 %v1863
    %v1928 = vunpack.c.h.s8.bf16 %v1864
    %v1929 = vunpack.c.h.s8.bf16 %v1865
    %v1930 = vrot.slane %v672, 5
    %v1931 = vrot.slane %v673, 4
    %v1932 = vsel %vm675, %v1931, %v1930
    %v1933 = vpack.c.b16 %v1932, %v1932
    %1935 = vmatprep.subr.bf16.mxu0 %v1867
    %1936 = vmatpush1.bf16.msra.mxu0 %v1866
    %1937 = vmatprep.subr.bf16.mxu0 %v1875
    %1938 = vmatpush1.bf16.msra.mxu0 %v1874
    %1939 = vmatprep.subr.bf16.mxu0 %v1883
    %1940 = vmatpush1.bf16.msra.mxu0 %v1882
    %1941 = vmatprep.subr.bf16.mxu0 %v1891
    %1942 = vmatpush1.bf16.msra.mxu0 %v1890
    %1943 = vmatprep.subr.bf16.mxu0 %v1899
    %1944 = vmatpush1.bf16.msra.mxu0 %v1898
    %1945 = vmatprep.subr.bf16.mxu0 %v1907
    %1946 = vmatpush1.bf16.msra.mxu0 %v1906
    %1947 = vmatprep.subr.bf16.mxu0 %v1915
    %1948 = vmatpush1.bf16.msra.mxu0 %v1914
    %1949 = vmatprep.subr.bf16.mxu0 %v1923
    %1950 = vmatpush1.bf16.msra.mxu0 %v1922
    %1951 = vmatprep.subr.bf16.mxu0 0
    %1952 = vmatpush1.bf16.msra.mxu0 0
    %1953 = vmatprep.subr.bf16.mxu0 0
    %1954 = vmatpush1.bf16.msra.mxu0 0
    %1955 = vmatprep.subr.bf16.mxu0 0
    %1956 = vmatpush1.bf16.msra.mxu0 0
    %1957 = vmatprep.subr.bf16.mxu0 0
    %1958 = vmatpush1.bf16.msra.mxu0 0
    %1959 = vmatprep.subr.bf16.mxu0 0
    %1960 = vmatpush1.bf16.msra.mxu0 0
    %1961 = vmatprep.subr.bf16.mxu0 0
    %1962 = vmatpush1.bf16.msra.mxu0 0
    %1963 = vmatprep.subr.bf16.mxu0 0
    %1964 = vmatpush1.bf16.msra.mxu0 0
    %1965 = vmatprep.subr.bf16.mxu0 0
    %1966 = vmatpush1.bf16.msra.mxu0 0
    %1967 = vmatprep.mubr.bf16.mxu0 0
    %1968 = vmatmul.mubr.bf16.gmra.mrb[0].mxu0 %v1933
    %v1969 = vpop.f32.mrb[0].mxu0
    %v1970 = vadd.f32 0.0, %v1969
    %v1971 = vpop.f32.mrb[0].mxu0
    %v1972 = vadd.f32 0.0, %v1971
    %v1973 = vpop.f32.mrb[0].mxu0
    %v1974 = vpop.f32.mrb[0].mxu0
    %1975 = vdwg.mxu0
    %1976 = vmatprep.subr.bf16.mxu0 %v1869
    %1977 = vmatpush1.bf16.msra.mxu0 %v1868
    %1978 = vmatprep.subr.bf16.mxu0 %v1877
    %1979 = vmatpush1.bf16.msra.mxu0 %v1876
    %1980 = vmatprep.subr.bf16.mxu0 %v1885
    %1981 = vmatpush1.bf16.msra.mxu0 %v1884
    %1982 = vmatprep.subr.bf16.mxu0 %v1893
    %1983 = vmatpush1.bf16.msra.mxu0 %v1892
    %1984 = vmatprep.subr.bf16.mxu0 %v1901
    %1985 = vmatpush1.bf16.msra.mxu0 %v1900
    %1986 = vmatprep.subr.bf16.mxu0 %v1909
    %1987 = vmatpush1.bf16.msra.mxu0 %v1908
    %1988 = vmatprep.subr.bf16.mxu0 %v1917
    %1989 = vmatpush1.bf16.msra.mxu0 %v1916
    %1990 = vmatprep.subr.bf16.mxu0 %v1925
    %1991 = vmatpush1.bf16.msra.mxu0 %v1924
    %1992 = vmatprep.subr.bf16.mxu0 0
    %1993 = vmatpush1.bf16.msra.mxu0 0
    %1994 = vmatprep.subr.bf16.mxu0 0
    %1995 = vmatpush1.bf16.msra.mxu0 0
    %1996 = vmatprep.subr.bf16.mxu0 0
    %1997 = vmatpush1.bf16.msra.mxu0 0
    %1998 = vmatprep.subr.bf16.mxu0 0
    %1999 = vmatpush1.bf16.msra.mxu0 0
    %2000 = vmatprep.subr.bf16.mxu0 0
    %2001 = vmatpush1.bf16.msra.mxu0 0
    %2002 = vmatprep.subr.bf16.mxu0 0
    %2003 = vmatpush1.bf16.msra.mxu0 0
    %2004 = vmatprep.subr.bf16.mxu0 0
    %2005 = vmatpush1.bf16.msra.mxu0 0
    %2006 = vmatprep.subr.bf16.mxu0 0
    %2007 = vmatpush1.bf16.msra.mxu0 0
    %2008 = vmatprep.mubr.bf16.mxu0 0
    %2009 = vmatmul.mubr.bf16.gmra.mrb[0].mxu0 %v1933
    %v2010 = vpop.f32.mrb[0].mxu0
    %v2011 = vadd.f32 0.0, %v2010
    %v2012 = vpop.f32.mrb[0].mxu0
    %v2013 = vadd.f32 0.0, %v2012
    %v2014 = vpop.f32.mrb[0].mxu0
    %v2015 = vpop.f32.mrb[0].mxu0
    %2016 = vdwg.mxu0
    %2017 = vmatprep.subr.bf16.mxu0 %v1871
    %2018 = vmatpush1.bf16.msra.mxu0 %v1870
    %2019 = vmatprep.subr.bf16.mxu0 %v1879
    %2020 = vmatpush1.bf16.msra.mxu0 %v1878
    %2021 = vmatprep.subr.bf16.mxu0 %v1887
    %2022 = vmatpush1.bf16.msra.mxu0 %v1886
    %2023 = vmatprep.subr.bf16.mxu0 %v1895
    %2024 = vmatpush1.bf16.msra.mxu0 %v1894
    %2025 = vmatprep.subr.bf16.mxu0 %v1903
    %2026 = vmatpush1.bf16.msra.mxu0 %v1902
    %2027 = vmatprep.subr.bf16.mxu0 %v1911
    %2028 = vmatpush1.bf16.msra.mxu0 %v1910
    %2029 = vmatprep.subr.bf16.mxu0 %v1919
    %2030 = vmatpush1.bf16.msra.mxu0 %v1918
    %2031 = vmatprep.subr.bf16.mxu0 %v1927
    %2032 = vmatpush1.bf16.msra.mxu0 %v1926
    %2033 = vmatprep.subr.bf16.mxu0 0
    %2034 = vmatpush1.bf16.msra.mxu0 0
    %2035 = vmatprep.subr.bf16.mxu0 0
    %2036 = vmatpush1.bf16.msra.mxu0 0
    %2037 = vmatprep.subr.bf16.mxu0 0
    %2038 = vmatpush1.bf16.msra.mxu0 0
    %2039 = vmatprep.subr.bf16.mxu0 0
    %2040 = vmatpush1.bf16.msra.mxu0 0
    %2041 = vmatprep.subr.bf16.mxu0 0
    %2042 = vmatpush1.bf16.msra.mxu0 0
    %2043 = vmatprep.subr.bf16.mxu0 0
    %2044 = vmatpush1.bf16.msra.mxu0 0
    %2045 = vmatprep.subr.bf16.mxu0 0
    %2046 = vmatpush1.bf16.msra.mxu0 0
    %2047 = vmatprep.subr.bf16.mxu0 0
    %2048 = vmatpush1.bf16.msra.mxu0 0
    %2049 = vmatprep.mubr.bf16.mxu0 0
    %2050 = vmatmul.mubr.bf16.gmra.mrb[0].mxu0 %v1933
    %v2051 = vpop.f32.mrb[0].mxu0
    %v2052 = vadd.f32 0.0, %v2051
    %v2053 = vpop.f32.mrb[0].mxu0
    %v2054 = vadd.f32 0.0, %v2053
    %v2055 = vpop.f32.mrb[0].mxu0
    %v2056 = vpop.f32.mrb[0].mxu0
    %2057 = vdwg.mxu0
    %2058 = vmatprep.subr.bf16.mxu0 %v1873
    %2059 = vmatpush1.bf16.msra.mxu0 %v1872
    %2060 = vmatprep.subr.bf16.mxu0 %v1881
    %2061 = vmatpush1.bf16.msra.mxu0 %v1880
    %2062 = vmatprep.subr.bf16.mxu0 %v1889
    %2063 = vmatpush1.bf16.msra.mxu0 %v1888
    %2064 = vmatprep.subr.bf16.mxu0 %v1897
    %2065 = vmatpush1.bf16.msra.mxu0 %v1896
    %2066 = vmatprep.subr.bf16.mxu0 %v1905
    %2067 = vmatpush1.bf16.msra.mxu0 %v1904
    %2068 = vmatprep.subr.bf16.mxu0 %v1913
    %2069 = vmatpush1.bf16.msra.mxu0 %v1912
    %2070 = vmatprep.subr.bf16.mxu0 %v1921
    %2071 = vmatpush1.bf16.msra.mxu0 %v1920
    %2072 = vmatprep.subr.bf16.mxu0 %v1929
    %2073 = vmatpush1.bf16.msra.mxu0 %v1928
    %2074 = vmatprep.subr.bf16.mxu0 0
    %2075 = vmatpush1.bf16.msra.mxu0 0
    %2076 = vmatprep.subr.bf16.mxu0 0
    %2077 = vmatpush1.bf16.msra.mxu0 0
    %2078 = vmatprep.subr.bf16.mxu0 0
    %2079 = vmatpush1.bf16.msra.mxu0 0
    %2080 = vmatprep.subr.bf16.mxu0 0
    %2081 = vmatpush1.bf16.msra.mxu0 0
    %2082 = vmatprep.subr.bf16.mxu0 0
    %2083 = vmatpush1.bf16.msra.mxu0 0
    %2084 = vmatprep.subr.bf16.mxu0 0
    %2085 = vmatpush1.bf16.msra.mxu0 0
    %2086 = vmatprep.subr.bf16.mxu0 0
    %2087 = vmatpush1.bf16.msra.mxu0 0
    %2088 = vmatprep.subr.bf16.mxu0 0
    %2089 = vmatpush1.bf16.msra.mxu0 0
    %2090 = vmatprep.mubr.bf16.mxu0 0
    %2091 = vmatmul.mubr.bf16.gmra.mrb[0].mxu0 %v1933
    %v2092 = vpop.f32.mrb[0].mxu0
    %v2093 = vadd.f32 0.0, %v2092
    %v2094 = vpop.f32.mrb[0].mxu0
    %v2095 = vadd.f32 0.0, %v2094
    %v2096 = vpop.f32.mrb[0].mxu0
    %v2097 = vpop.f32.mrb[0].mxu0
    %2098 = vdwg.mxu0
    %v2099 = vadd.f32 %v1825, %v1970
    %v2100 = vadd.f32 %v1826, %v1972
    %v2101 = vadd.f32 %v1827, %v2011
    %v2102 = vadd.f32 %v1828, %v2013
    %v2103 = vadd.f32 %v1829, %v2052
    %v2104 = vadd.f32 %v1830, %v2054
    %v2105 = vadd.f32 %v1831, %v2093
    %v2106 = vadd.f32 %v1832, %v2095
    %s2107 = scalar_lea.vmem [#allocation8], 1536
    %v2108 = vld [vmem:[%s2107] sm:$0xff]
    %v2109 = vld [vmem:[%s2107 + $0x8] sm:$0xff]
    %v2110 = vld [vmem:[%s2107 + $0x10] sm:$0xff]
    %v2111 = vld [vmem:[%s2107 + $0x18] sm:$0xff]
    %v2112 = vld [vmem:[%s2107 + $0x20] sm:$0xff]
    %v2113 = vld [vmem:[%s2107 + $0x28] sm:$0xff]
    %v2114 = vld [vmem:[%s2107 + $0x30] sm:$0xff]
    %v2115 = vld [vmem:[%s2107 + $0x38] sm:$0xff]
    %v2116 = vld [vmem:[%s2107 + $0x40] sm:$0xff]
    %v2117 = vld [vmem:[%s2107 + $0x48] sm:$0xff]
    %v2118 = vld [vmem:[%s2107 + $0x50] sm:$0xff]
    %v2119 = vld [vmem:[%s2107 + $0x58] sm:$0xff]
    %v2120 = vld [vmem:[%s2107 + $0x60] sm:$0xff]
    %v2121 = vld [vmem:[%s2107 + $0x68] sm:$0xff]
    %v2122 = vld [vmem:[%s2107 + $0x70] sm:$0xff]
    %v2123 = vld [vmem:[%s2107 + $0x78] sm:$0xff]
    %v2124 = vld [vmem:[%s2107 + $0x80] sm:$0xff]
    %v2125 = vld [vmem:[%s2107 + $0x88] sm:$0xff]
    %v2126 = vld [vmem:[%s2107 + $0x90] sm:$0xff]
    %v2127 = vld [vmem:[%s2107 + $0x98] sm:$0xff]
    %v2128 = vld [vmem:[%s2107 + $0xa0] sm:$0xff]
    %v2129 = vld [vmem:[%s2107 + $0xa8] sm:$0xff]
    %v2130 = vld [vmem:[%s2107 + $0xb0] sm:$0xff]
    %v2131 = vld [vmem:[%s2107 + $0xb8] sm:$0xff]
    %v2132 = vld [vmem:[%s2107 + $0xc0] sm:$0xff]
    %v2133 = vld [vmem:[%s2107 + $0xc8] sm:$0xff]
    %v2134 = vld [vmem:[%s2107 + $0xd0] sm:$0xff]
    %v2135 = vld [vmem:[%s2107 + $0xd8] sm:$0xff]
    %v2136 = vld [vmem:[%s2107 + $0xe0] sm:$0xff]
    %v2137 = vld [vmem:[%s2107 + $0xe8] sm:$0xff]
    %v2138 = vld [vmem:[%s2107 + $0xf0] sm:$0xff]
    %v2139 = vld [vmem:[%s2107 + $0xf8] sm:$0xff]
    %v2140 = vunpack.c.l.s8.bf16 %v2108
    %v2141 = vunpack.c.l.s8.bf16 %v2109
    %v2142 = vunpack.c.l.s8.bf16 %v2110
    %v2143 = vunpack.c.l.s8.bf16 %v2111
    %v2144 = vunpack.c.l.s8.bf16 %v2112
    %v2145 = vunpack.c.l.s8.bf16 %v2113
    %v2146 = vunpack.c.l.s8.bf16 %v2114
    %v2147 = vunpack.c.l.s8.bf16 %v2115
    %v2148 = vunpack.c.h.s8.bf16 %v2108
    %v2149 = vunpack.c.h.s8.bf16 %v2109
    %v2150 = vunpack.c.h.s8.bf16 %v2110
    %v2151 = vunpack.c.h.s8.bf16 %v2111
    %v2152 = vunpack.c.h.s8.bf16 %v2112
    %v2153 = vunpack.c.h.s8.bf16 %v2113
    %v2154 = vunpack.c.h.s8.bf16 %v2114
    %v2155 = vunpack.c.h.s8.bf16 %v2115
    %v2156 = vunpack.c.l.s8.bf16 %v2116
    %v2157 = vunpack.c.l.s8.bf16 %v2117
    %v2158 = vunpack.c.l.s8.bf16 %v2118
    %v2159 = vunpack.c.l.s8.bf16 %v2119
    %v2160 = vunpack.c.l.s8.bf16 %v2120
    %v2161 = vunpack.c.l.s8.bf16 %v2121
    %v2162 = vunpack.c.l.s8.bf16 %v2122
    %v2163 = vunpack.c.l.s8.bf16 %v2123
    %v2164 = vunpack.c.h.s8.bf16 %v2116
    %v2165 = vunpack.c.h.s8.bf16 %v2117
    %v2166 = vunpack.c.h.s8.bf16 %v2118
    %v2167 = vunpack.c.h.s8.bf16 %v2119
    %v2168 = vunpack.c.h.s8.bf16 %v2120
    %v2169 = vunpack.c.h.s8.bf16 %v2121
    %v2170 = vunpack.c.h.s8.bf16 %v2122
    %v2171 = vunpack.c.h.s8.bf16 %v2123
    %v2172 = vunpack.c.l.s8.bf16 %v2124
    %v2173 = vunpack.c.l.s8.bf16 %v2125
    %v2174 = vunpack.c.l.s8.bf16 %v2126
    %v2175 = vunpack.c.l.s8.bf16 %v2127
    %v2176 = vunpack.c.l.s8.bf16 %v2128
    %v2177 = vunpack.c.l.s8.bf16 %v2129
    %v2178 = vunpack.c.l.s8.bf16 %v2130
    %v2179 = vunpack.c.l.s8.bf16 %v2131
    %v2180 = vunpack.c.h.s8.bf16 %v2124
    %v2181 = vunpack.c.h.s8.bf16 %v2125
    %v2182 = vunpack.c.h.s8.bf16 %v2126
    %v2183 = vunpack.c.h.s8.bf16 %v2127
    %v2184 = vunpack.c.h.s8.bf16 %v2128
    %v2185 = vunpack.c.h.s8.bf16 %v2129
    %v2186 = vunpack.c.h.s8.bf16 %v2130
    %v2187 = vunpack.c.h.s8.bf16 %v2131
    %v2188 = vunpack.c.l.s8.bf16 %v2132
    %v2189 = vunpack.c.l.s8.bf16 %v2133
    %v2190 = vunpack.c.l.s8.bf16 %v2134
    %v2191 = vunpack.c.l.s8.bf16 %v2135
    %v2192 = vunpack.c.l.s8.bf16 %v2136
    %v2193 = vunpack.c.l.s8.bf16 %v2137
    %v2194 = vunpack.c.l.s8.bf16 %v2138
    %v2195 = vunpack.c.l.s8.bf16 %v2139
    %v2196 = vunpack.c.h.s8.bf16 %v2132
    %v2197 = vunpack.c.h.s8.bf16 %v2133
    %v2198 = vunpack.c.h.s8.bf16 %v2134
    %v2199 = vunpack.c.h.s8.bf16 %v2135
    %v2200 = vunpack.c.h.s8.bf16 %v2136
    %v2201 = vunpack.c.h.s8.bf16 %v2137
    %v2202 = vunpack.c.h.s8.bf16 %v2138
    %v2203 = vunpack.c.h.s8.bf16 %v2139
    %v2204 = vrot.slane %v672, 6
    %v2205 = vrot.slane %v673, 5
    %v2206 = vsel %vm675, %v2205, %v2204
    %v2207 = vpack.c.b16 %v2206, %v2206
    %2209 = vmatprep.subr.bf16.mxu0 %v2141
    %2210 = vmatpush1.bf16.msra.mxu0 %v2140
    %2211 = vmatprep.subr.bf16.mxu0 %v2149
    %2212 = vmatpush1.bf16.msra.mxu0 %v2148
    %2213 = vmatprep.subr.bf16.mxu0 %v2157
    %2214 = vmatpush1.bf16.msra.mxu0 %v2156
    %2215 = vmatprep.subr.bf16.mxu0 %v2165
    %2216 = vmatpush1.bf16.msra.mxu0 %v2164
    %2217 = vmatprep.subr.bf16.mxu0 %v2173
    %2218 = vmatpush1.bf16.msra.mxu0 %v2172
    %2219 = vmatprep.subr.bf16.mxu0 %v2181
    %2220 = vmatpush1.bf16.msra.mxu0 %v2180
    %2221 = vmatprep.subr.bf16.mxu0 %v2189
    %2222 = vmatpush1.bf16.msra.mxu0 %v2188
    %2223 = vmatprep.subr.bf16.mxu0 %v2197
    %2224 = vmatpush1.bf16.msra.mxu0 %v2196
    %2225 = vmatprep.subr.bf16.mxu0 0
    %2226 = vmatpush1.bf16.msra.mxu0 0
    %2227 = vmatprep.subr.bf16.mxu0 0
    %2228 = vmatpush1.bf16.msra.mxu0 0
    %2229 = vmatprep.subr.bf16.mxu0 0
    %2230 = vmatpush1.bf16.msra.mxu0 0
    %2231 = vmatprep.subr.bf16.mxu0 0
    %2232 = vmatpush1.bf16.msra.mxu0 0
    %2233 = vmatprep.subr.bf16.mxu0 0
    %2234 = vmatpush1.bf16.msra.mxu0 0
    %2235 = vmatprep.subr.bf16.mxu0 0
    %2236 = vmatpush1.bf16.msra.mxu0 0
    %2237 = vmatprep.subr.bf16.mxu0 0
    %2238 = vmatpush1.bf16.msra.mxu0 0
    %2239 = vmatprep.subr.bf16.mxu0 0
    %2240 = vmatpush1.bf16.msra.mxu0 0
    %2241 = vmatprep.mubr.bf16.mxu0 0
    %2242 = vmatmul.mubr.bf16.gmra.mrb[0].mxu0 %v2207
    %v2243 = vpop.f32.mrb[0].mxu0
    %v2244 = vadd.f32 0.0, %v2243
    %v2245 = vpop.f32.mrb[0].mxu0
    %v2246 = vadd.f32 0.0, %v2245
    %v2247 = vpop.f32.mrb[0].mxu0
    %v2248 = vpop.f32.mrb[0].mxu0
    %2249 = vdwg.mxu0
    %2250 = vmatprep.subr.bf16.mxu0 %v2143
    %2251 = vmatpush1.bf16.msra.mxu0 %v2142
    %2252 = vmatprep.subr.bf16.mxu0 %v2151
    %2253 = vmatpush1.bf16.msra.mxu0 %v2150
    %2254 = vmatprep.subr.bf16.mxu0 %v2159
    %2255 = vmatpush1.bf16.msra.mxu0 %v2158
    %2256 = vmatprep.subr.bf16.mxu0 %v2167
    %2257 = vmatpush1.bf16.msra.mxu0 %v2166
    %2258 = vmatprep.subr.bf16.mxu0 %v2175
    %2259 = vmatpush1.bf16.msra.mxu0 %v2174
    %2260 = vmatprep.subr.bf16.mxu0 %v2183
    %2261 = vmatpush1.bf16.msra.mxu0 %v2182
    %2262 = vmatprep.subr.bf16.mxu0 %v2191
    %2263 = vmatpush1.bf16.msra.mxu0 %v2190
    %2264 = vmatprep.subr.bf16.mxu0 %v2199
    %2265 = vmatpush1.bf16.msra.mxu0 %v2198
    %2266 = vmatprep.subr.bf16.mxu0 0
    %2267 = vmatpush1.bf16.msra.mxu0 0
    %2268 = vmatprep.subr.bf16.mxu0 0
    %2269 = vmatpush1.bf16.msra.mxu0 0
    %2270 = vmatprep.subr.bf16.mxu0 0
    %2271 = vmatpush1.bf16.msra.mxu0 0
    %2272 = vmatprep.subr.bf16.mxu0 0
    %2273 = vmatpush1.bf16.msra.mxu0 0
    %2274 = vmatprep.subr.bf16.mxu0 0
    %2275 = vmatpush1.bf16.msra.mxu0 0
    %2276 = vmatprep.subr.bf16.mxu0 0
    %2277 = vmatpush1.bf16.msra.mxu0 0
    %2278 = vmatprep.subr.bf16.mxu0 0
    %2279 = vmatpush1.bf16.msra.mxu0 0
    %2280 = vmatprep.subr.bf16.mxu0 0
    %2281 = vmatpush1.bf16.msra.mxu0 0
    %2282 = vmatprep.mubr.bf16.mxu0 0
    %2283 = vmatmul.mubr.bf16.gmra.mrb[0].mxu0 %v2207
    %v2284 = vpop.f32.mrb[0].mxu0
    %v2285 = vadd.f32 0.0, %v2284
    %v2286 = vpop.f32.mrb[0].mxu0
    %v2287 = vadd.f32 0.0, %v2286
    %v2288 = vpop.f32.mrb[0].mxu0
    %v2289 = vpop.f32.mrb[0].mxu0
    %2290 = vdwg.mxu0
    %2291 = vmatprep.subr.bf16.mxu0 %v2145
    %2292 = vmatpush1.bf16.msra.mxu0 %v2144
    %2293 = vmatprep.subr.bf16.mxu0 %v2153
    %2294 = vmatpush1.bf16.msra.mxu0 %v2152
    %2295 = vmatprep.subr.bf16.mxu0 %v2161
    %2296 = vmatpush1.bf16.msra.mxu0 %v2160
    %2297 = vmatprep.subr.bf16.mxu0 %v2169
    %2298 = vmatpush1.bf16.msra.mxu0 %v2168
    %2299 = vmatprep.subr.bf16.mxu0 %v2177
    %2300 = vmatpush1.bf16.msra.mxu0 %v2176
    %2301 = vmatprep.subr.bf16.mxu0 %v2185
    %2302 = vmatpush1.bf16.msra.mxu0 %v2184
    %2303 = vmatprep.subr.bf16.mxu0 %v2193
    %2304 = vmatpush1.bf16.msra.mxu0 %v2192
    %2305 = vmatprep.subr.bf16.mxu0 %v2201
    %2306 = vmatpush1.bf16.msra.mxu0 %v2200
    %2307 = vmatprep.subr.bf16.mxu0 0
    %2308 = vmatpush1.bf16.msra.mxu0 0
    %2309 = vmatprep.subr.bf16.mxu0 0
    %2310 = vmatpush1.bf16.msra.mxu0 0
    %2311 = vmatprep.subr.bf16.mxu0 0
    %2312 = vmatpush1.bf16.msra.mxu0 0
    %2313 = vmatprep.subr.bf16.mxu0 0
    %2314 = vmatpush1.bf16.msra.mxu0 0
    %2315 = vmatprep.subr.bf16.mxu0 0
    %2316 = vmatpush1.bf16.msra.mxu0 0
    %2317 = vmatprep.subr.bf16.mxu0 0
    %2318 = vmatpush1.bf16.msra.mxu0 0
    %2319 = vmatprep.subr.bf16.mxu0 0
    %2320 = vmatpush1.bf16.msra.mxu0 0
    %2321 = vmatprep.subr.bf16.mxu0 0
    %2322 = vmatpush1.bf16.msra.mxu0 0
    %2323 = vmatprep.mubr.bf16.mxu0 0
    %2324 = vmatmul.mubr.bf16.gmra.mrb[0].mxu0 %v2207
    %v2325 = vpop.f32.mrb[0].mxu0
    %v2326 = vadd.f32 0.0, %v2325
    %v2327 = vpop.f32.mrb[0].mxu0
    %v2328 = vadd.f32 0.0, %v2327
    %v2329 = vpop.f32.mrb[0].mxu0
    %v2330 = vpop.f32.mrb[0].mxu0
    %2331 = vdwg.mxu0
    %2332 = vmatprep.subr.bf16.mxu0 %v2147
    %2333 = vmatpush1.bf16.msra.mxu0 %v2146
    %2334 = vmatprep.subr.bf16.mxu0 %v2155
    %2335 = vmatpush1.bf16.msra.mxu0 %v2154
    %2336 = vmatprep.subr.bf16.mxu0 %v2163
    %2337 = vmatpush1.bf16.msra.mxu0 %v2162
    %2338 = vmatprep.subr.bf16.mxu0 %v2171
    %2339 = vmatpush1.bf16.msra.mxu0 %v2170
    %2340 = vmatprep.subr.bf16.mxu0 %v2179
    %2341 = vmatpush1.bf16.msra.mxu0 %v2178
    %2342 = vmatprep.subr.bf16.mxu0 %v2187
    %2343 = vmatpush1.bf16.msra.mxu0 %v2186
    %2344 = vmatprep.subr.bf16.mxu0 %v2195
    %2345 = vmatpush1.bf16.msra.mxu0 %v2194
    %2346 = vmatprep.subr.bf16.mxu0 %v2203
    %2347 = vmatpush1.bf16.msra.mxu0 %v2202
    %2348 = vmatprep.subr.bf16.mxu0 0
    %2349 = vmatpush1.bf16.msra.mxu0 0
    %2350 = vmatprep.subr.bf16.mxu0 0
    %2351 = vmatpush1.bf16.msra.mxu0 0
    %2352 = vmatprep.subr.bf16.mxu0 0
    %2353 = vmatpush1.bf16.msra.mxu0 0
    %2354 = vmatprep.subr.bf16.mxu0 0
    %2355 = vmatpush1.bf16.msra.mxu0 0
    %2356 = vmatprep.subr.bf16.mxu0 0
    %2357 = vmatpush1.bf16.msra.mxu0 0
    %2358 = vmatprep.subr.bf16.mxu0 0
    %2359 = vmatpush1.bf16.msra.mxu0 0
    %2360 = vmatprep.subr.bf16.mxu0 0
    %2361 = vmatpush1.bf16.msra.mxu0 0
    %2362 = vmatprep.subr.bf16.mxu0 0
    %2363 = vmatpush1.bf16.msra.mxu0 0
    %2364 = vmatprep.mubr.bf16.mxu0 0
    %2365 = vmatmul.mubr.bf16.gmra.mrb[0].mxu0 %v2207
    %v2366 = vpop.f32.mrb[0].mxu0
    %v2367 = vadd.f32 0.0, %v2366
    %v2368 = vpop.f32.mrb[0].mxu0
    %v2369 = vadd.f32 0.0, %v2368
    %v2370 = vpop.f32.mrb[0].mxu0
    %v2371 = vpop.f32.mrb[0].mxu0
    %2372 = vdwg.mxu0
    %v2373 = vadd.f32 %v2099, %v2244
    %v2374 = vadd.f32 %v2100, %v2246
    %v2375 = vadd.f32 %v2101, %v2285
    %v2376 = vadd.f32 %v2102, %v2287
    %v2377 = vadd.f32 %v2103, %v2326
    %v2378 = vadd.f32 %v2104, %v2328
    %v2379 = vadd.f32 %v2105, %v2367
    %v2380 = vadd.f32 %v2106, %v2369
    %s2381 = scalar_lea.vmem [#allocation8], 1792
    %v2382 = vld [vmem:[%s2381] sm:$0xff]
    %v2383 = vld [vmem:[%s2381 + $0x8] sm:$0xff]
    %v2384 = vld [vmem:[%s2381 + $0x10] sm:$0xff]
    %v2385 = vld [vmem:[%s2381 + $0x18] sm:$0xff]
    %v2386 = vld [vmem:[%s2381 + $0x20] sm:$0xff]
    %v2387 = vld [vmem:[%s2381 + $0x28] sm:$0xff]
    %v2388 = vld [vmem:[%s2381 + $0x30] sm:$0xff]
    %v2389 = vld [vmem:[%s2381 + $0x38] sm:$0xff]
    %v2390 = vld [vmem:[%s2381 + $0x40] sm:$0xff]
    %v2391 = vld [vmem:[%s2381 + $0x48] sm:$0xff]
    %v2392 = vld [vmem:[%s2381 + $0x50] sm:$0xff]
    %v2393 = vld [vmem:[%s2381 + $0x58] sm:$0xff]
    %v2394 = vld [vmem:[%s2381 + $0x60] sm:$0xff]
    %v2395 = vld [vmem:[%s2381 + $0x68] sm:$0xff]
    %v2396 = vld [vmem:[%s2381 + $0x70] sm:$0xff]
    %v2397 = vld [vmem:[%s2381 + $0x78] sm:$0xff]
    %v2398 = vld [vmem:[%s2381 + $0x80] sm:$0xff]
    %v2399 = vld [vmem:[%s2381 + $0x88] sm:$0xff]
    %v2400 = vld [vmem:[%s2381 + $0x90] sm:$0xff]
    %v2401 = vld [vmem:[%s2381 + $0x98] sm:$0xff]
    %v2402 = vld [vmem:[%s2381 + $0xa0] sm:$0xff]
    %v2403 = vld [vmem:[%s2381 + $0xa8] sm:$0xff]
    %v2404 = vld [vmem:[%s2381 + $0xb0] sm:$0xff]
    %v2405 = vld [vmem:[%s2381 + $0xb8] sm:$0xff]
    %v2406 = vld [vmem:[%s2381 + $0xc0] sm:$0xff]
    %v2407 = vld [vmem:[%s2381 + $0xc8] sm:$0xff]
    %v2408 = vld [vmem:[%s2381 + $0xd0] sm:$0xff]
    %v2409 = vld [vmem:[%s2381 + $0xd8] sm:$0xff]
    %v2410 = vld [vmem:[%s2381 + $0xe0] sm:$0xff]
    %v2411 = vld [vmem:[%s2381 + $0xe8] sm:$0xff]
    %v2412 = vld [vmem:[%s2381 + $0xf0] sm:$0xff]
    %v2413 = vld [vmem:[%s2381 + $0xf8] sm:$0xff]
    %v2414 = vunpack.c.l.s8.bf16 %v2382
    %v2415 = vunpack.c.l.s8.bf16 %v2383
    %v2416 = vunpack.c.l.s8.bf16 %v2384
    %v2417 = vunpack.c.l.s8.bf16 %v2385
    %v2418 = vunpack.c.l.s8.bf16 %v2386
    %v2419 = vunpack.c.l.s8.bf16 %v2387
    %v2420 = vunpack.c.l.s8.bf16 %v2388
    %v2421 = vunpack.c.l.s8.bf16 %v2389
    %v2422 = vunpack.c.h.s8.bf16 %v2382
    %v2423 = vunpack.c.h.s8.bf16 %v2383
    %v2424 = vunpack.c.h.s8.bf16 %v2384
    %v2425 = vunpack.c.h.s8.bf16 %v2385
    %v2426 = vunpack.c.h.s8.bf16 %v2386
    %v2427 = vunpack.c.h.s8.bf16 %v2387
    %v2428 = vunpack.c.h.s8.bf16 %v2388
    %v2429 = vunpack.c.h.s8.bf16 %v2389
    %v2430 = vunpack.c.l.s8.bf16 %v2390
    %v2431 = vunpack.c.l.s8.bf16 %v2391
    %v2432 = vunpack.c.l.s8.bf16 %v2392
    %v2433 = vunpack.c.l.s8.bf16 %v2393
    %v2434 = vunpack.c.l.s8.bf16 %v2394
    %v2435 = vunpack.c.l.s8.bf16 %v2395
    %v2436 = vunpack.c.l.s8.bf16 %v2396
    %v2437 = vunpack.c.l.s8.bf16 %v2397
    %v2438 = vunpack.c.h.s8.bf16 %v2390
    %v2439 = vunpack.c.h.s8.bf16 %v2391
    %v2440 = vunpack.c.h.s8.bf16 %v2392
    %v2441 = vunpack.c.h.s8.bf16 %v2393
    %v2442 = vunpack.c.h.s8.bf16 %v2394
    %v2443 = vunpack.c.h.s8.bf16 %v2395
    %v2444 = vunpack.c.h.s8.bf16 %v2396
    %v2445 = vunpack.c.h.s8.bf16 %v2397
    %v2446 = vunpack.c.l.s8.bf16 %v2398
    %v2447 = vunpack.c.l.s8.bf16 %v2399
    %v2448 = vunpack.c.l.s8.bf16 %v2400
    %v2449 = vunpack.c.l.s8.bf16 %v2401
    %v2450 = vunpack.c.l.s8.bf16 %v2402
    %v2451 = vunpack.c.l.s8.bf16 %v2403
    %v2452 = vunpack.c.l.s8.bf16 %v2404
    %v2453 = vunpack.c.l.s8.bf16 %v2405
    %v2454 = vunpack.c.h.s8.bf16 %v2398
    %v2455 = vunpack.c.h.s8.bf16 %v2399
    %v2456 = vunpack.c.h.s8.bf16 %v2400
    %v2457 = vunpack.c.h.s8.bf16 %v2401
    %v2458 = vunpack.c.h.s8.bf16 %v2402
    %v2459 = vunpack.c.h.s8.bf16 %v2403
    %v2460 = vunpack.c.h.s8.bf16 %v2404
    %v2461 = vunpack.c.h.s8.bf16 %v2405
    %v2462 = vunpack.c.l.s8.bf16 %v2406
    %v2463 = vunpack.c.l.s8.bf16 %v2407
    %v2464 = vunpack.c.l.s8.bf16 %v2408
    %v2465 = vunpack.c.l.s8.bf16 %v2409
    %v2466 = vunpack.c.l.s8.bf16 %v2410
    %v2467 = vunpack.c.l.s8.bf16 %v2411
    %v2468 = vunpack.c.l.s8.bf16 %v2412
    %v2469 = vunpack.c.l.s8.bf16 %v2413
    %v2470 = vunpack.c.h.s8.bf16 %v2406
    %v2471 = vunpack.c.h.s8.bf16 %v2407
    %v2472 = vunpack.c.h.s8.bf16 %v2408
    %v2473 = vunpack.c.h.s8.bf16 %v2409
    %v2474 = vunpack.c.h.s8.bf16 %v2410
    %v2475 = vunpack.c.h.s8.bf16 %v2411
    %v2476 = vunpack.c.h.s8.bf16 %v2412
    %v2477 = vunpack.c.h.s8.bf16 %v2413
    %v2478 = vrot.slane %v672, 7
    %v2479 = vrot.slane %v673, 6
    %v2480 = vsel %vm675, %v2479, %v2478
    %v2481 = vpack.c.b16 %v2480, %v2480
    %2483 = vmatprep.subr.bf16.mxu0 %v2415
    %2484 = vmatpush1.bf16.msra.mxu0 %v2414
    %2485 = vmatprep.subr.bf16.mxu0 %v2423
    %2486 = vmatpush1.bf16.msra.mxu0 %v2422
    %2487 = vmatprep.subr.bf16.mxu0 %v2431
    %2488 = vmatpush1.bf16.msra.mxu0 %v2430
    %2489 = vmatprep.subr.bf16.mxu0 %v2439
    %2490 = vmatpush1.bf16.msra.mxu0 %v2438
    %2491 = vmatprep.subr.bf16.mxu0 %v2447
    %2492 = vmatpush1.bf16.msra.mxu0 %v2446
    %2493 = vmatprep.subr.bf16.mxu0 %v2455
    %2494 = vmatpush1.bf16.msra.mxu0 %v2454
    %2495 = vmatprep.subr.bf16.mxu0 %v2463
    %2496 = vmatpush1.bf16.msra.mxu0 %v2462
    %2497 = vmatprep.subr.bf16.mxu0 %v2471
    %2498 = vmatpush1.bf16.msra.mxu0 %v2470
    %2499 = vmatprep.subr.bf16.mxu0 0
    %2500 = vmatpush1.bf16.msra.mxu0 0
    %2501 = vmatprep.subr.bf16.mxu0 0
    %2502 = vmatpush1.bf16.msra.mxu0 0
    %2503 = vmatprep.subr.bf16.mxu0 0
    %2504 = vmatpush1.bf16.msra.mxu0 0
    %2505 = vmatprep.subr.bf16.mxu0 0
    %2506 = vmatpush1.bf16.msra.mxu0 0
    %2507 = vmatprep.subr.bf16.mxu0 0
    %2508 = vmatpush1.bf16.msra.mxu0 0
    %2509 = vmatprep.subr.bf16.mxu0 0
    %2510 = vmatpush1.bf16.msra.mxu0 0
    %2511 = vmatprep.subr.bf16.mxu0 0
    %2512 = vmatpush1.bf16.msra.mxu0 0
    %2513 = vmatprep.subr.bf16.mxu0 0
    %2514 = vmatpush1.bf16.msra.mxu0 0
    %2515 = vmatprep.mubr.bf16.mxu0 0
    %2516 = vmatmul.mubr.bf16.gmra.mrb[0].mxu0 %v2481
    %v2517 = vpop.f32.mrb[0].mxu0
    %v2518 = vadd.f32 0.0, %v2517
    %v2519 = vpop.f32.mrb[0].mxu0
    %v2520 = vadd.f32 0.0, %v2519
    %v2521 = vpop.f32.mrb[0].mxu0
    %v2522 = vpop.f32.mrb[0].mxu0
    %2523 = vdwg.mxu0
    %2524 = vmatprep.subr.bf16.mxu0 %v2417
    %2525 = vmatpush1.bf16.msra.mxu0 %v2416
    %2526 = vmatprep.subr.bf16.mxu0 %v2425
    %2527 = vmatpush1.bf16.msra.mxu0 %v2424
    %2528 = vmatprep.subr.bf16.mxu0 %v2433
    %2529 = vmatpush1.bf16.msra.mxu0 %v2432
    %2530 = vmatprep.subr.bf16.mxu0 %v2441
    %2531 = vmatpush1.bf16.msra.mxu0 %v2440
    %2532 = vmatprep.subr.bf16.mxu0 %v2449
    %2533 = vmatpush1.bf16.msra.mxu0 %v2448
    %2534 = vmatprep.subr.bf16.mxu0 %v2457
    %2535 = vmatpush1.bf16.msra.mxu0 %v2456
    %2536 = vmatprep.subr.bf16.mxu0 %v2465
    %2537 = vmatpush1.bf16.msra.mxu0 %v2464
    %2538 = vmatprep.subr.bf16.mxu0 %v2473
    %2539 = vmatpush1.bf16.msra.mxu0 %v2472
    %2540 = vmatprep.subr.bf16.mxu0 0
    %2541 = vmatpush1.bf16.msra.mxu0 0
    %2542 = vmatprep.subr.bf16.mxu0 0
    %2543 = vmatpush1.bf16.msra.mxu0 0
    %2544 = vmatprep.subr.bf16.mxu0 0
    %2545 = vmatpush1.bf16.msra.mxu0 0
    %2546 = vmatprep.subr.bf16.mxu0 0
    %2547 = vmatpush1.bf16.msra.mxu0 0
    %2548 = vmatprep.subr.bf16.mxu0 0
    %2549 = vmatpush1.bf16.msra.mxu0 0
    %2550 = vmatprep.subr.bf16.mxu0 0
    %2551 = vmatpush1.bf16.msra.mxu0 0
    %2552 = vmatprep.subr.bf16.mxu0 0
    %2553 = vmatpush1.bf16.msra.mxu0 0
    %2554 = vmatprep.subr.bf16.mxu0 0
    %2555 = vmatpush1.bf16.msra.mxu0 0
    %2556 = vmatprep.mubr.bf16.mxu0 0
    %2557 = vmatmul.mubr.bf16.gmra.mrb[0].mxu0 %v2481
    %v2558 = vpop.f32.mrb[0].mxu0
    %v2559 = vadd.f32 0.0, %v2558
    %v2560 = vpop.f32.mrb[0].mxu0
    %v2561 = vadd.f32 0.0, %v2560
    %v2562 = vpop.f32.mrb[0].mxu0
    %v2563 = vpop.f32.mrb[0].mxu0
    %2564 = vdwg.mxu0
    %2565 = vmatprep.subr.bf16.mxu0 %v2419
    %2566 = vmatpush1.bf16.msra.mxu0 %v2418
    %2567 = vmatprep.subr.bf16.mxu0 %v2427
    %2568 = vmatpush1.bf16.msra.mxu0 %v2426
    %2569 = vmatprep.subr.bf16.mxu0 %v2435
    %2570 = vmatpush1.bf16.msra.mxu0 %v2434
    %2571 = vmatprep.subr.bf16.mxu0 %v2443
    %2572 = vmatpush1.bf16.msra.mxu0 %v2442
    %2573 = vmatprep.subr.bf16.mxu0 %v2451
    %2574 = vmatpush1.bf16.msra.mxu0 %v2450
    %2575 = vmatprep.subr.bf16.mxu0 %v2459
    %2576 = vmatpush1.bf16.msra.mxu0 %v2458
    %2577 = vmatprep.subr.bf16.mxu0 %v2467
    %2578 = vmatpush1.bf16.msra.mxu0 %v2466
    %2579 = vmatprep.subr.bf16.mxu0 %v2475
    %2580 = vmatpush1.bf16.msra.mxu0 %v2474
    %2581 = vmatprep.subr.bf16.mxu0 0
    %2582 = vmatpush1.bf16.msra.mxu0 0
    %2583 = vmatprep.subr.bf16.mxu0 0
    %2584 = vmatpush1.bf16.msra.mxu0 0
    %2585 = vmatprep.subr.bf16.mxu0 0
    %2586 = vmatpush1.bf16.msra.mxu0 0
    %2587 = vmatprep.subr.bf16.mxu0 0
    %2588 = vmatpush1.bf16.msra.mxu0 0
    %2589 = vmatprep.subr.bf16.mxu0 0
    %2590 = vmatpush1.bf16.msra.mxu0 0
    %2591 = vmatprep.subr.bf16.mxu0 0
    %2592 = vmatpush1.bf16.msra.mxu0 0
    %2593 = vmatprep.subr.bf16.mxu0 0
    %2594 = vmatpush1.bf16.msra.mxu0 0
    %2595 = vmatprep.subr.bf16.mxu0 0
    %2596 = vmatpush1.bf16.msra.mxu0 0
    %2597 = vmatprep.mubr.bf16.mxu0 0
    %2598 = vmatmul.mubr.bf16.gmra.mrb[0].mxu0 %v2481
    %v2599 = vpop.f32.mrb[0].mxu0
    %v2600 = vadd.f32 0.0, %v2599
    %v2601 = vpop.f32.mrb[0].mxu0
    %v2602 = vadd.f32 0.0, %v2601
    %v2603 = vpop.f32.mrb[0].mxu0
    %v2604 = vpop.f32.mrb[0].mxu0
    %2605 = vdwg.mxu0
    %2606 = vmatprep.subr.bf16.mxu0 %v2421
    %2607 = vmatpush1.bf16.msra.mxu0 %v2420
    %2608 = vmatprep.subr.bf16.mxu0 %v2429
    %2609 = vmatpush1.bf16.msra.mxu0 %v2428
    %2610 = vmatprep.subr.bf16.mxu0 %v2437
    %2611 = vmatpush1.bf16.msra.mxu0 %v2436
    %2612 = vmatprep.subr.bf16.mxu0 %v2445
    %2613 = vmatpush1.bf16.msra.mxu0 %v2444
    %2614 = vmatprep.subr.bf16.mxu0 %v2453
    %2615 = vmatpush1.bf16.msra.mxu0 %v2452
    %2616 = vmatprep.subr.bf16.mxu0 %v2461
    %2617 = vmatpush1.bf16.msra.mxu0 %v2460
    %2618 = vmatprep.subr.bf16.mxu0 %v2469
    %2619 = vmatpush1.bf16.msra.mxu0 %v2468
    %2620 = vmatprep.subr.bf16.mxu0 %v2477
    %2621 = vmatpush1.bf16.msra.mxu0 %v2476
    %2622 = vmatprep.subr.bf16.mxu0 0
    %2623 = vmatpush1.bf16.msra.mxu0 0
    %2624 = vmatprep.subr.bf16.mxu0 0
    %2625 = vmatpush1.bf16.msra.mxu0 0
    %2626 = vmatprep.subr.bf16.mxu0 0
    %2627 = vmatpush1.bf16.msra.mxu0 0
    %2628 = vmatprep.subr.bf16.mxu0 0
    %2629 = vmatpush1.bf16.msra.mxu0 0
    %2630 = vmatprep.subr.bf16.mxu0 0
    %2631 = vmatpush1.bf16.msra.mxu0 0
    %2632 = vmatprep.subr.bf16.mxu0 0
    %2633 = vmatpush1.bf16.msra.mxu0 0
    %2634 = vmatprep.subr.bf16.mxu0 0
    %2635 = vmatpush1.bf16.msra.mxu0 0
    %2636 = vmatprep.subr.bf16.mxu0 0
    %2637 = vmatpush1.bf16.msra.mxu0 0
    %2638 = vmatprep.mubr.bf16.mxu0 0
    %2639 = vmatmul.mubr.bf16.gmra.mrb[0].mxu0 %v2481
    %v2640 = vpop.f32.mrb[0].mxu0
    %v2641 = vadd.f32 0.0, %v2640
    %v2642 = vpop.f32.mrb[0].mxu0
    %v2643 = vadd.f32 0.0, %v2642
    %v2644 = vpop.f32.mrb[0].mxu0
    %v2645 = vpop.f32.mrb[0].mxu0
    %2646 = vdwg.mxu0
    %v2647 = vadd.f32 %v2373, %v2518
    %v2648 = vadd.f32 %v2374, %v2520
    %v2649 = vadd.f32 %v2375, %v2559
    %v2650 = vadd.f32 %v2376, %v2561
    %v2651 = vadd.f32 %v2377, %v2600
    %v2652 = vadd.f32 %v2378, %v2602
    %v2653 = vadd.f32 %v2379, %v2641
    %v2654 = vadd.f32 %v2380, %v2643
    %s2655 = scalar_lea.vmem [#allocation8], 2048
    %v2656 = vld [vmem:[%s2655] sm:$0xff]
    %v2657 = vld [vmem:[%s2655 + $0x8] sm:$0xff]
    %v2658 = vld [vmem:[%s2655 + $0x10] sm:$0xff]
    %v2659 = vld [vmem:[%s2655 + $0x18] sm:$0xff]
    %v2660 = vld [vmem:[%s2655 + $0x20] sm:$0xff]
    %v2661 = vld [vmem:[%s2655 + $0x28] sm:$0xff]
    %v2662 = vld [vmem:[%s2655 + $0x30] sm:$0xff]
    %v2663 = vld [vmem:[%s2655 + $0x38] sm:$0xff]
    %v2664 = vld [vmem:[%s2655 + $0x40] sm:$0xff]
    %v2665 = vld [vmem:[%s2655 + $0x48] sm:$0xff]
    %v2666 = vld [vmem:[%s2655 + $0x50] sm:$0xff]
    %v2667 = vld [vmem:[%s2655 + $0x58] sm:$0xff]
    %v2668 = vld [vmem:[%s2655 + $0x60] sm:$0xff]
    %v2669 = vld [vmem:[%s2655 + $0x68] sm:$0xff]
    %v2670 = vld [vmem:[%s2655 + $0x70] sm:$0xff]
    %v2671 = vld [vmem:[%s2655 + $0x78] sm:$0xff]
    %v2672 = vld [vmem:[%s2655 + $0x80] sm:$0xff]
    %v2673 = vld [vmem:[%s2655 + $0x88] sm:$0xff]
    %v2674 = vld [vmem:[%s2655 + $0x90] sm:$0xff]
    %v2675 = vld [vmem:[%s2655 + $0x98] sm:$0xff]
    %v2676 = vld [vmem:[%s2655 + $0xa0] sm:$0xff]
    %v2677 = vld [vmem:[%s2655 + $0xa8] sm:$0xff]
    %v2678 = vld [vmem:[%s2655 + $0xb0] sm:$0xff]
    %v2679 = vld [vmem:[%s2655 + $0xb8] sm:$0xff]
    %v2680 = vld [vmem:[%s2655 + $0xc0] sm:$0xff]
    %v2681 = vld [vmem:[%s2655 + $0xc8] sm:$0xff]
    %v2682 = vld [vmem:[%s2655 + $0xd0] sm:$0xff]
    %v2683 = vld [vmem:[%s2655 + $0xd8] sm:$0xff]
    %v2684 = vld [vmem:[%s2655 + $0xe0] sm:$0xff]
    %v2685 = vld [vmem:[%s2655 + $0xe8] sm:$0xff]
    %v2686 = vld [vmem:[%s2655 + $0xf0] sm:$0xff]
    %v2687 = vld [vmem:[%s2655 + $0xf8] sm:$0xff]
    %v2688 = vunpack.c.l.s8.bf16 %v2656
    %v2689 = vunpack.c.l.s8.bf16 %v2657
    %v2690 = vunpack.c.l.s8.bf16 %v2658
    %v2691 = vunpack.c.l.s8.bf16 %v2659
    %v2692 = vunpack.c.l.s8.bf16 %v2660
    %v2693 = vunpack.c.l.s8.bf16 %v2661
    %v2694 = vunpack.c.l.s8.bf16 %v2662
    %v2695 = vunpack.c.l.s8.bf16 %v2663
    %v2696 = vunpack.c.h.s8.bf16 %v2656
    %v2697 = vunpack.c.h.s8.bf16 %v2657
    %v2698 = vunpack.c.h.s8.bf16 %v2658
    %v2699 = vunpack.c.h.s8.bf16 %v2659
    %v2700 = vunpack.c.h.s8.bf16 %v2660
    %v2701 = vunpack.c.h.s8.bf16 %v2661
    %v2702 = vunpack.c.h.s8.bf16 %v2662
    %v2703 = vunpack.c.h.s8.bf16 %v2663
    %v2704 = vunpack.c.l.s8.bf16 %v2664
    %v2705 = vunpack.c.l.s8.bf16 %v2665
    %v2706 = vunpack.c.l.s8.bf16 %v2666
    %v2707 = vunpack.c.l.s8.bf16 %v2667
    %v2708 = vunpack.c.l.s8.bf16 %v2668
    %v2709 = vunpack.c.l.s8.bf16 %v2669
    %v2710 = vunpack.c.l.s8.bf16 %v2670
    %v2711 = vunpack.c.l.s8.bf16 %v2671
    %v2712 = vunpack.c.h.s8.bf16 %v2664
    %v2713 = vunpack.c.h.s8.bf16 %v2665
    %v2714 = vunpack.c.h.s8.bf16 %v2666
    %v2715 = vunpack.c.h.s8.bf16 %v2667
    %v2716 = vunpack.c.h.s8.bf16 %v2668
    %v2717 = vunpack.c.h.s8.bf16 %v2669
    %v2718 = vunpack.c.h.s8.bf16 %v2670
    %v2719 = vunpack.c.h.s8.bf16 %v2671
    %v2720 = vunpack.c.l.s8.bf16 %v2672
    %v2721 = vunpack.c.l.s8.bf16 %v2673
    %v2722 = vunpack.c.l.s8.bf16 %v2674
    %v2723 = vunpack.c.l.s8.bf16 %v2675
    %v2724 = vunpack.c.l.s8.bf16 %v2676
    %v2725 = vunpack.c.l.s8.bf16 %v2677
    %v2726 = vunpack.c.l.s8.bf16 %v2678
    %v2727 = vunpack.c.l.s8.bf16 %v2679
    %v2728 = vunpack.c.h.s8.bf16 %v2672
    %v2729 = vunpack.c.h.s8.bf16 %v2673
    %v2730 = vunpack.c.h.s8.bf16 %v2674
    %v2731 = vunpack.c.h.s8.bf16 %v2675
    %v2732 = vunpack.c.h.s8.bf16 %v2676
    %v2733 = vunpack.c.h.s8.bf16 %v2677
    %v2734 = vunpack.c.h.s8.bf16 %v2678
    %v2735 = vunpack.c.h.s8.bf16 %v2679
    %v2736 = vunpack.c.l.s8.bf16 %v2680
    %v2737 = vunpack.c.l.s8.bf16 %v2681
    %v2738 = vunpack.c.l.s8.bf16 %v2682
    %v2739 = vunpack.c.l.s8.bf16 %v2683
    %v2740 = vunpack.c.l.s8.bf16 %v2684
    %v2741 = vunpack.c.l.s8.bf16 %v2685
    %v2742 = vunpack.c.l.s8.bf16 %v2686
    %v2743 = vunpack.c.l.s8.bf16 %v2687
    %v2744 = vunpack.c.h.s8.bf16 %v2680
    %v2745 = vunpack.c.h.s8.bf16 %v2681
    %v2746 = vunpack.c.h.s8.bf16 %v2682
    %v2747 = vunpack.c.h.s8.bf16 %v2683
    %v2748 = vunpack.c.h.s8.bf16 %v2684
    %v2749 = vunpack.c.h.s8.bf16 %v2685
    %v2750 = vunpack.c.h.s8.bf16 %v2686
    %v2751 = vunpack.c.h.s8.bf16 %v2687
    %v2752 = vpack.c.bf16 %v311, %v311
    %v2753 = vpack.c.bf16 %v474, %v474
    %v2756 = vunpack.c.l.b16 %v2752
    %v2757 = vunpack.c.l.b16 %v2753
    %v2758 = vrot.slane %v2757, 7
    %v2759 = vsel %vm675, %v2758, %v2756
    %v2760 = vpack.c.b16 %v2759, %v2759
    %2762 = vmatprep.subr.bf16.mxu0 %v2689
    %2763 = vmatpush1.bf16.msra.mxu0 %v2688
    %2764 = vmatprep.subr.bf16.mxu0 %v2697
    %2765 = vmatpush1.bf16.msra.mxu0 %v2696
    %2766 = vmatprep.subr.bf16.mxu0 %v2705
    %2767 = vmatpush1.bf16.msra.mxu0 %v2704
    %2768 = vmatprep.subr.bf16.mxu0 %v2713
    %2769 = vmatpush1.bf16.msra.mxu0 %v2712
    %2770 = vmatprep.subr.bf16.mxu0 %v2721
    %2771 = vmatpush1.bf16.msra.mxu0 %v2720
    %2772 = vmatprep.subr.bf16.mxu0 %v2729
    %2773 = vmatpush1.bf16.msra.mxu0 %v2728
    %2774 = vmatprep.subr.bf16.mxu0 %v2737
    %2775 = vmatpush1.bf16.msra.mxu0 %v2736
    %2776 = vmatprep.subr.bf16.mxu0 %v2745
    %2777 = vmatpush1.bf16.msra.mxu0 %v2744
    %2778 = vmatprep.subr.bf16.mxu0 0
    %2779 = vmatpush1.bf16.msra.mxu0 0
    %2780 = vmatprep.subr.bf16.mxu0 0
    %2781 = vmatpush1.bf16.msra.mxu0 0
    %2782 = vmatprep.subr.bf16.mxu0 0
    %2783 = vmatpush1.bf16.msra.mxu0 0
    %2784 = vmatprep.subr.bf16.mxu0 0
    %2785 = vmatpush1.bf16.msra.mxu0 0
    %2786 = vmatprep.subr.bf16.mxu0 0
    %2787 = vmatpush1.bf16.msra.mxu0 0
    %2788 = vmatprep.subr.bf16.mxu0 0
    %2789 = vmatpush1.bf16.msra.mxu0 0
    %2790 = vmatprep.subr.bf16.mxu0 0
    %2791 = vmatpush1.bf16.msra.mxu0 0
    %2792 = vmatprep.subr.bf16.mxu0 0
    %2793 = vmatpush1.bf16.msra.mxu0 0
    %2794 = vmatprep.mubr.bf16.mxu0 0
    %2795 = vmatmul.mubr.bf16.gmra.mrb[0].mxu0 %v2760
    %v2796 = vpop.f32.mrb[0].mxu0
    %v2797 = vadd.f32 0.0, %v2796
    %v2798 = vpop.f32.mrb[0].mxu0
    %v2799 = vadd.f32 0.0, %v2798
    %v2800 = vpop.f32.mrb[0].mxu0
    %v2801 = vpop.f32.mrb[0].mxu0
    %2802 = vdwg.mxu0
    %2803 = vmatprep.subr.bf16.mxu0 %v2691
    %2804 = vmatpush1.bf16.msra.mxu0 %v2690
    %2805 = vmatprep.subr.bf16.mxu0 %v2699
    %2806 = vmatpush1.bf16.msra.mxu0 %v2698
    %2807 = vmatprep.subr.bf16.mxu0 %v2707
    %2808 = vmatpush1.bf16.msra.mxu0 %v2706
    %2809 = vmatprep.subr.bf16.mxu0 %v2715
    %2810 = vmatpush1.bf16.msra.mxu0 %v2714
    %2811 = vmatprep.subr.bf16.mxu0 %v2723
    %2812 = vmatpush1.bf16.msra.mxu0 %v2722
    %2813 = vmatprep.subr.bf16.mxu0 %v2731
    %2814 = vmatpush1.bf16.msra.mxu0 %v2730
    %2815 = vmatprep.subr.bf16.mxu0 %v2739
    %2816 = vmatpush1.bf16.msra.mxu0 %v2738
    %2817 = vmatprep.subr.bf16.mxu0 %v2747
    %2818 = vmatpush1.bf16.msra.mxu0 %v2746
    %2819 = vmatprep.subr.bf16.mxu0 0
    %2820 = vmatpush1.bf16.msra.mxu0 0
    %2821 = vmatprep.subr.bf16.mxu0 0
    %2822 = vmatpush1.bf16.msra.mxu0 0
    %2823 = vmatprep.subr.bf16.mxu0 0
    %2824 = vmatpush1.bf16.msra.mxu0 0
    %2825 = vmatprep.subr.bf16.mxu0 0
    %2826 = vmatpush1.bf16.msra.mxu0 0
    %2827 = vmatprep.subr.bf16.mxu0 0
    %2828 = vmatpush1.bf16.msra.mxu0 0
    %2829 = vmatprep.subr.bf16.mxu0 0
    %2830 = vmatpush1.bf16.msra.mxu0 0
    %2831 = vmatprep.subr.bf16.mxu0 0
    %2832 = vmatpush1.bf16.msra.mxu0 0
    %2833 = vmatprep.subr.bf16.mxu0 0
    %2834 = vmatpush1.bf16.msra.mxu0 0
    %2835 = vmatprep.mubr.bf16.mxu0 0
    %2836 = vmatmul.mubr.bf16.gmra.mrb[0].mxu0 %v2760
    %v2837 = vpop.f32.mrb[0].mxu0
    %v2838 = vadd.f32 0.0, %v2837
    %v2839 = vpop.f32.mrb[0].mxu0
    %v2840 = vadd.f32 0.0, %v2839
    %v2841 = vpop.f32.mrb[0].mxu0
    %v2842 = vpop.f32.mrb[0].mxu0
    %2843 = vdwg.mxu0
    %2844 = vmatprep.subr.bf16.mxu0 %v2693
    %2845 = vmatpush1.bf16.msra.mxu0 %v2692
    %2846 = vmatprep.subr.bf16.mxu0 %v2701
    %2847 = vmatpush1.bf16.msra.mxu0 %v2700
    %2848 = vmatprep.subr.bf16.mxu0 %v2709
    %2849 = vmatpush1.bf16.msra.mxu0 %v2708
    %2850 = vmatprep.subr.bf16.mxu0 %v2717
    %2851 = vmatpush1.bf16.msra.mxu0 %v2716
    %2852 = vmatprep.subr.bf16.mxu0 %v2725
    %2853 = vmatpush1.bf16.msra.mxu0 %v2724
    %2854 = vmatprep.subr.bf16.mxu0 %v2733
    %2855 = vmatpush1.bf16.msra.mxu0 %v2732
    %2856 = vmatprep.subr.bf16.mxu0 %v2741
    %2857 = vmatpush1.bf16.msra.mxu0 %v2740
    %2858 = vmatprep.subr.bf16.mxu0 %v2749
    %2859 = vmatpush1.bf16.msra.mxu0 %v2748
    %2860 = vmatprep.subr.bf16.mxu0 0
    %2861 = vmatpush1.bf16.msra.mxu0 0
    %2862 = vmatprep.subr.bf16.mxu0 0
    %2863 = vmatpush1.bf16.msra.mxu0 0
    %2864 = vmatprep.subr.bf16.mxu0 0
    %2865 = vmatpush1.bf16.msra.mxu0 0
    %2866 = vmatprep.subr.bf16.mxu0 0
    %2867 = vmatpush1.bf16.msra.mxu0 0
    %2868 = vmatprep.subr.bf16.mxu0 0
    %2869 = vmatpush1.bf16.msra.mxu0 0
    %2870 = vmatprep.subr.bf16.mxu0 0
    %2871 = vmatpush1.bf16.msra.mxu0 0
    %2872 = vmatprep.subr.bf16.mxu0 0
    %2873 = vmatpush1.bf16.msra.mxu0 0
    %2874 = vmatprep.subr.bf16.mxu0 0
    %2875 = vmatpush1.bf16.msra.mxu0 0
    %2876 = vmatprep.mubr.bf16.mxu0 0
    %2877 = vmatmul.mubr.bf16.gmra.mrb[0].mxu0 %v2760
    %v2878 = vpop.f32.mrb[0].mxu0
    %v2879 = vadd.f32 0.0, %v2878
    %v2880 = vpop.f32.mrb[0].mxu0
    %v2881 = vadd.f32 0.0, %v2880
    %v2882 = vpop.f32.mrb[0].mxu0
    %v2883 = vpop.f32.mrb[0].mxu0
    %2884 = vdwg.mxu0
    %2885 = vmatprep.subr.bf16.mxu0 %v2695
    %2886 = vmatpush1.bf16.msra.mxu0 %v2694
    %2887 = vmatprep.subr.bf16.mxu0 %v2703
    %2888 = vmatpush1.bf16.msra.mxu0 %v2702
    %2889 = vmatprep.subr.bf16.mxu0 %v2711
    %2890 = vmatpush1.bf16.msra.mxu0 %v2710
    %2891 = vmatprep.subr.bf16.mxu0 %v2719
    %2892 = vmatpush1.bf16.msra.mxu0 %v2718
    %2893 = vmatprep.subr.bf16.mxu0 %v2727
    %2894 = vmatpush1.bf16.msra.mxu0 %v2726
    %2895 = vmatprep.subr.bf16.mxu0 %v2735
    %2896 = vmatpush1.bf16.msra.mxu0 %v2734
    %2897 = vmatprep.subr.bf16.mxu0 %v2743
    %2898 = vmatpush1.bf16.msra.mxu0 %v2742
    %2899 = vmatprep.subr.bf16.mxu0 %v2751
    %2900 = vmatpush1.bf16.msra.mxu0 %v2750
    %2901 = vmatprep.subr.bf16.mxu0 0
    %2902 = vmatpush1.bf16.msra.mxu0 0
    %2903 = vmatprep.subr.bf16.mxu0 0
    %2904 = vmatpush1.bf16.msra.mxu0 0
    %2905 = vmatprep.subr.bf16.mxu0 0
    %2906 = vmatpush1.bf16.msra.mxu0 0
    %2907 = vmatprep.subr.bf16.mxu0 0
    %2908 = vmatpush1.bf16.msra.mxu0 0
    %2909 = vmatprep.subr.bf16.mxu0 0
    %2910 = vmatpush1.bf16.msra.mxu0 0
    %2911 = vmatprep.subr.bf16.mxu0 0
    %2912 = vmatpush1.bf16.msra.mxu0 0
    %2913 = vmatprep.subr.bf16.mxu0 0
    %2914 = vmatpush1.bf16.msra.mxu0 0
    %2915 = vmatprep.subr.bf16.mxu0 0
    %2916 = vmatpush1.bf16.msra.mxu0 0
    %2917 = vmatprep.mubr.bf16.mxu0 0
    %2918 = vmatmul.mubr.bf16.gmra.mrb[0].mxu0 %v2760
    %v2919 = vpop.f32.mrb[0].mxu0
    %v2920 = vadd.f32 0.0, %v2919
    %v2921 = vpop.f32.mrb[0].mxu0
    %v2922 = vadd.f32 0.0, %v2921
    %v2923 = vpop.f32.mrb[0].mxu0
    %v2924 = vpop.f32.mrb[0].mxu0
    %2925 = vdwg.mxu0
    %v2926 = vadd.f32 %v2647, %v2797
    %v2927 = vadd.f32 %v2648, %v2799
    %v2928 = vadd.f32 %v2649, %v2838
    %v2929 = vadd.f32 %v2650, %v2840
    %v2930 = vadd.f32 %v2651, %v2879
    %v2931 = vadd.f32 %v2652, %v2881
    %v2932 = vadd.f32 %v2653, %v2920
    %v2933 = vadd.f32 %v2654, %v2922
    %s2934 = scalar_lea.vmem [#allocation8], 2304
    %v2935 = vld [vmem:[%s2934] sm:$0xff]
    %v2936 = vld [vmem:[%s2934 + $0x8] sm:$0xff]
    %v2937 = vld [vmem:[%s2934 + $0x10] sm:$0xff]
    %v2938 = vld [vmem:[%s2934 + $0x18] sm:$0xff]
    %v2939 = vld [vmem:[%s2934 + $0x20] sm:$0xff]
    %v2940 = vld [vmem:[%s2934 + $0x28] sm:$0xff]
    %v2941 = vld [vmem:[%s2934 + $0x30] sm:$0xff]
    %v2942 = vld [vmem:[%s2934 + $0x38] sm:$0xff]
    %v2943 = vld [vmem:[%s2934 + $0x40] sm:$0xff]
    %v2944 = vld [vmem:[%s2934 + $0x48] sm:$0xff]
    %v2945 = vld [vmem:[%s2934 + $0x50] sm:$0xff]
    %v2946 = vld [vmem:[%s2934 + $0x58] sm:$0xff]
    %v2947 = vld [vmem:[%s2934 + $0x60] sm:$0xff]
    %v2948 = vld [vmem:[%s2934 + $0x68] sm:$0xff]
    %v2949 = vld [vmem:[%s2934 + $0x70] sm:$0xff]
    %v2950 = vld [vmem:[%s2934 + $0x78] sm:$0xff]
    %v2951 = vld [vmem:[%s2934 + $0x80] sm:$0xff]
    %v2952 = vld [vmem:[%s2934 + $0x88] sm:$0xff]
    %v2953 = vld [vmem:[%s2934 + $0x90] sm:$0xff]
    %v2954 = vld [vmem:[%s2934 + $0x98] sm:$0xff]
    %v2955 = vld [vmem:[%s2934 + $0xa0] sm:$0xff]
    %v2956 = vld [vmem:[%s2934 + $0xa8] sm:$0xff]
    %v2957 = vld [vmem:[%s2934 + $0xb0] sm:$0xff]
    %v2958 = vld [vmem:[%s2934 + $0xb8] sm:$0xff]
    %v2959 = vld [vmem:[%s2934 + $0xc0] sm:$0xff]
    %v2960 = vld [vmem:[%s2934 + $0xc8] sm:$0xff]
    %v2961 = vld [vmem:[%s2934 + $0xd0] sm:$0xff]
    %v2962 = vld [vmem:[%s2934 + $0xd8] sm:$0xff]
    %v2963 = vld [vmem:[%s2934 + $0xe0] sm:$0xff]
    %v2964 = vld [vmem:[%s2934 + $0xe8] sm:$0xff]
    %v2965 = vld [vmem:[%s2934 + $0xf0] sm:$0xff]
    %v2966 = vld [vmem:[%s2934 + $0xf8] sm:$0xff]
    %v2967 = vunpack.c.l.s8.bf16 %v2935
    %v2968 = vunpack.c.l.s8.bf16 %v2936
    %v2969 = vunpack.c.l.s8.bf16 %v2937
    %v2970 = vunpack.c.l.s8.bf16 %v2938
    %v2971 = vunpack.c.l.s8.bf16 %v2939
    %v2972 = vunpack.c.l.s8.bf16 %v2940
    %v2973 = vunpack.c.l.s8.bf16 %v2941
    %v2974 = vunpack.c.l.s8.bf16 %v2942
    %v2975 = vunpack.c.h.s8.bf16 %v2935
    %v2976 = vunpack.c.h.s8.bf16 %v2936
    %v2977 = vunpack.c.h.s8.bf16 %v2937
    %v2978 = vunpack.c.h.s8.bf16 %v2938
    %v2979 = vunpack.c.h.s8.bf16 %v2939
    %v2980 = vunpack.c.h.s8.bf16 %v2940
    %v2981 = vunpack.c.h.s8.bf16 %v2941
    %v2982 = vunpack.c.h.s8.bf16 %v2942
    %v2983 = vunpack.c.l.s8.bf16 %v2943
    %v2984 = vunpack.c.l.s8.bf16 %v2944
    %v2985 = vunpack.c.l.s8.bf16 %v2945
    %v2986 = vunpack.c.l.s8.bf16 %v2946
    %v2987 = vunpack.c.l.s8.bf16 %v2947
    %v2988 = vunpack.c.l.s8.bf16 %v2948
    %v2989 = vunpack.c.l.s8.bf16 %v2949
    %v2990 = vunpack.c.l.s8.bf16 %v2950
    %v2991 = vunpack.c.h.s8.bf16 %v2943
    %v2992 = vunpack.c.h.s8.bf16 %v2944
    %v2993 = vunpack.c.h.s8.bf16 %v2945
    %v2994 = vunpack.c.h.s8.bf16 %v2946
    %v2995 = vunpack.c.h.s8.bf16 %v2947
    %v2996 = vunpack.c.h.s8.bf16 %v2948
    %v2997 = vunpack.c.h.s8.bf16 %v2949
    %v2998 = vunpack.c.h.s8.bf16 %v2950
    %v2999 = vunpack.c.l.s8.bf16 %v2951
    %v3000 = vunpack.c.l.s8.bf16 %v2952
    %v3001 = vunpack.c.l.s8.bf16 %v2953
    %v3002 = vunpack.c.l.s8.bf16 %v2954
    %v3003 = vunpack.c.l.s8.bf16 %v2955
    %v3004 = vunpack.c.l.s8.bf16 %v2956
    %v3005 = vunpack.c.l.s8.bf16 %v2957
    %v3006 = vunpack.c.l.s8.bf16 %v2958
    %v3007 = vunpack.c.h.s8.bf16 %v2951
    %v3008 = vunpack.c.h.s8.bf16 %v2952
    %v3009 = vunpack.c.h.s8.bf16 %v2953
    %v3010 = vunpack.c.h.s8.bf16 %v2954
    %v3011 = vunpack.c.h.s8.bf16 %v2955
    %v3012 = vunpack.c.h.s8.bf16 %v2956
    %v3013 = vunpack.c.h.s8.bf16 %v2957
    %v3014 = vunpack.c.h.s8.bf16 %v2958
    %v3015 = vunpack.c.l.s8.bf16 %v2959
    %v3016 = vunpack.c.l.s8.bf16 %v2960
    %v3017 = vunpack.c.l.s8.bf16 %v2961
    %v3018 = vunpack.c.l.s8.bf16 %v2962
    %v3019 = vunpack.c.l.s8.bf16 %v2963
    %v3020 = vunpack.c.l.s8.bf16 %v2964
    %v3021 = vunpack.c.l.s8.bf16 %v2965
    %v3022 = vunpack.c.l.s8.bf16 %v2966
    %v3023 = vunpack.c.h.s8.bf16 %v2959
    %v3024 = vunpack.c.h.s8.bf16 %v2960
    %v3025 = vunpack.c.h.s8.bf16 %v2961
    %v3026 = vunpack.c.h.s8.bf16 %v2962
    %v3027 = vunpack.c.h.s8.bf16 %v2963
    %v3028 = vunpack.c.h.s8.bf16 %v2964
    %v3029 = vunpack.c.h.s8.bf16 %v2965
    %v3030 = vunpack.c.h.s8.bf16 %v2966
    %v3031 = vrot.slane %v2756, 1
    %v3032 = vsel %vm675, %v2757, %v3031
    %v3033 = vpack.c.b16 %v3032, %v3032
    %3035 = vmatprep.subr.bf16.mxu0 %v2968
    %3036 = vmatpush1.bf16.msra.mxu0 %v2967
    %3037 = vmatprep.subr.bf16.mxu0 %v2976
    %3038 = vmatpush1.bf16.msra.mxu0 %v2975
    %3039 = vmatprep.subr.bf16.mxu0 %v2984
    %3040 = vmatpush1.bf16.msra.mxu0 %v2983
    %3041 = vmatprep.subr.bf16.mxu0 %v2992
    %3042 = vmatpush1.bf16.msra.mxu0 %v2991
    %3043 = vmatprep.subr.bf16.mxu0 %v3000
    %3044 = vmatpush1.bf16.msra.mxu0 %v2999
    %3045 = vmatprep.subr.bf16.mxu0 %v3008
    %3046 = vmatpush1.bf16.msra.mxu0 %v3007
    %3047 = vmatprep.subr.bf16.mxu0 %v3016
    %3048 = vmatpush1.bf16.msra.mxu0 %v3015
    %3049 = vmatprep.subr.bf16.mxu0 %v3024
    %3050 = vmatpush1.bf16.msra.mxu0 %v3023
    %3051 = vmatprep.subr.bf16.mxu0 0
    %3052 = vmatpush1.bf16.msra.mxu0 0
    %3053 = vmatprep.subr.bf16.mxu0 0
    %3054 = vmatpush1.bf16.msra.mxu0 0
    %3055 = vmatprep.subr.bf16.mxu0 0
    %3056 = vmatpush1.bf16.msra.mxu0 0
    %3057 = vmatprep.subr.bf16.mxu0 0
    %3058 = vmatpush1.bf16.msra.mxu0 0
    %3059 = vmatprep.subr.bf16.mxu0 0
    %3060 = vmatpush1.bf16.msra.mxu0 0
    %3061 = vmatprep.subr.bf16.mxu0 0
    %3062 = vmatpush1.bf16.msra.mxu0 0
    %3063 = vmatprep.subr.bf16.mxu0 0
    %3064 = vmatpush1.bf16.msra.mxu0 0
    %3065 = vmatprep.subr.bf16.mxu0 0
    %3066 = vmatpush1.bf16.msra.mxu0 0
    %3067 = vmatprep.mubr.bf16.mxu0 0
    %3068 = vmatmul.mubr.bf16.gmra.mrb[0].mxu0 %v3033
    %v3069 = vpop.f32.mrb[0].mxu0
    %v3070 = vadd.f32 0.0, %v3069
    %v3071 = vpop.f32.mrb[0].mxu0
    %v3072 = vadd.f32 0.0, %v3071
    %v3073 = vpop.f32.mrb[0].mxu0
    %v3074 = vpop.f32.mrb[0].mxu0
    %3075 = vdwg.mxu0
    %3076 = vmatprep.subr.bf16.mxu0 %v2970
    %3077 = vmatpush1.bf16.msra.mxu0 %v2969
    %3078 = vmatprep.subr.bf16.mxu0 %v2978
    %3079 = vmatpush1.bf16.msra.mxu0 %v2977
    %3080 = vmatprep.subr.bf16.mxu0 %v2986
    %3081 = vmatpush1.bf16.msra.mxu0 %v2985
    %3082 = vmatprep.subr.bf16.mxu0 %v2994
    %3083 = vmatpush1.bf16.msra.mxu0 %v2993
    %3084 = vmatprep.subr.bf16.mxu0 %v3002
    %3085 = vmatpush1.bf16.msra.mxu0 %v3001
    %3086 = vmatprep.subr.bf16.mxu0 %v3010
    %3087 = vmatpush1.bf16.msra.mxu0 %v3009
    %3088 = vmatprep.subr.bf16.mxu0 %v3018
    %3089 = vmatpush1.bf16.msra.mxu0 %v3017
    %3090 = vmatprep.subr.bf16.mxu0 %v3026
    %3091 = vmatpush1.bf16.msra.mxu0 %v3025
    %3092 = vmatprep.subr.bf16.mxu0 0
    %3093 = vmatpush1.bf16.msra.mxu0 0
    %3094 = vmatprep.subr.bf16.mxu0 0
    %3095 = vmatpush1.bf16.msra.mxu0 0
    %3096 = vmatprep.subr.bf16.mxu0 0
    %3097 = vmatpush1.bf16.msra.mxu0 0
    %3098 = vmatprep.subr.bf16.mxu0 0
    %3099 = vmatpush1.bf16.msra.mxu0 0
    %3100 = vmatprep.subr.bf16.mxu0 0
    %3101 = vmatpush1.bf16.msra.mxu0 0
    %3102 = vmatprep.subr.bf16.mxu0 0
    %3103 = vmatpush1.bf16.msra.mxu0 0
    %3104 = vmatprep.subr.bf16.mxu0 0
    %3105 = vmatpush1.bf16.msra.mxu0 0
    %3106 = vmatprep.subr.bf16.mxu0 0
    %3107 = vmatpush1.bf16.msra.mxu0 0
    %3108 = vmatprep.mubr.bf16.mxu0 0
    %3109 = vmatmul.mubr.bf16.gmra.mrb[0].mxu0 %v3033
    %v3110 = vpop.f32.mrb[0].mxu0
    %v3111 = vadd.f32 0.0, %v3110
    %v3112 = vpop.f32.mrb[0].mxu0
    %v3113 = vadd.f32 0.0, %v3112
    %v3114 = vpop.f32.mrb[0].mxu0
    %v3115 = vpop.f32.mrb[0].mxu0
    %3116 = vdwg.mxu0
    %3117 = vmatprep.subr.bf16.mxu0 %v2972
    %3118 = vmatpush1.bf16.msra.mxu0 %v2971
    %3119 = vmatprep.subr.bf16.mxu0 %v2980
    %3120 = vmatpush1.bf16.msra.mxu0 %v2979
    %3121 = vmatprep.subr.bf16.mxu0 %v2988
    %3122 = vmatpush1.bf16.msra.mxu0 %v2987
    %3123 = vmatprep.subr.bf16.mxu0 %v2996
    %3124 = vmatpush1.bf16.msra.mxu0 %v2995
    %3125 = vmatprep.subr.bf16.mxu0 %v3004
    %3126 = vmatpush1.bf16.msra.mxu0 %v3003
    %3127 = vmatprep.subr.bf16.mxu0 %v3012
    %3128 = vmatpush1.bf16.msra.mxu0 %v3011
    %3129 = vmatprep.subr.bf16.mxu0 %v3020
    %3130 = vmatpush1.bf16.msra.mxu0 %v3019
    %3131 = vmatprep.subr.bf16.mxu0 %v3028
    %3132 = vmatpush1.bf16.msra.mxu0 %v3027
    %3133 = vmatprep.subr.bf16.mxu0 0
    %3134 = vmatpush1.bf16.msra.mxu0 0
    %3135 = vmatprep.subr.bf16.mxu0 0
    %3136 = vmatpush1.bf16.msra.mxu0 0
    %3137 = vmatprep.subr.bf16.mxu0 0
    %3138 = vmatpush1.bf16.msra.mxu0 0
    %3139 = vmatprep.subr.bf16.mxu0 0
    %3140 = vmatpush1.bf16.msra.mxu0 0
    %3141 = vmatprep.subr.bf16.mxu0 0
    %3142 = vmatpush1.bf16.msra.mxu0 0
    %3143 = vmatprep.subr.bf16.mxu0 0
    %3144 = vmatpush1.bf16.msra.mxu0 0
    %3145 = vmatprep.subr.bf16.mxu0 0
    %3146 = vmatpush1.bf16.msra.mxu0 0
    %3147 = vmatprep.subr.bf16.mxu0 0
    %3148 = vmatpush1.bf16.msra.mxu0 0
    %3149 = vmatprep.mubr.bf16.mxu0 0
    %3150 = vmatmul.mubr.bf16.gmra.mrb[0].mxu0 %v3033
    %v3151 = vpop.f32.mrb[0].mxu0
    %v3152 = vadd.f32 0.0, %v3151
    %v3153 = vpop.f32.mrb[0].mxu0
    %v3154 = vadd.f32 0.0, %v3153
    %v3155 = vpop.f32.mrb[0].mxu0
    %v3156 = vpop.f32.mrb[0].mxu0
    %3157 = vdwg.mxu0
    %3158 = vmatprep.subr.bf16.mxu0 %v2974
    %3159 = vmatpush1.bf16.msra.mxu0 %v2973
    %3160 = vmatprep.subr.bf16.mxu0 %v2982
    %3161 = vmatpush1.bf16.msra.mxu0 %v2981
    %3162 = vmatprep.subr.bf16.mxu0 %v2990
    %3163 = vmatpush1.bf16.msra.mxu0 %v2989
    %3164 = vmatprep.subr.bf16.mxu0 %v2998
    %3165 = vmatpush1.bf16.msra.mxu0 %v2997
    %3166 = vmatprep.subr.bf16.mxu0 %v3006
    %3167 = vmatpush1.bf16.msra.mxu0 %v3005
    %3168 = vmatprep.subr.bf16.mxu0 %v3014
    %3169 = vmatpush1.bf16.msra.mxu0 %v3013
    %3170 = vmatprep.subr.bf16.mxu0 %v3022
    %3171 = vmatpush1.bf16.msra.mxu0 %v3021
    %3172 = vmatprep.subr.bf16.mxu0 %v3030
    %3173 = vmatpush1.bf16.msra.mxu0 %v3029
    %3174 = vmatprep.subr.bf16.mxu0 0
    %3175 = vmatpush1.bf16.msra.mxu0 0
    %3176 = vmatprep.subr.bf16.mxu0 0
    %3177 = vmatpush1.bf16.msra.mxu0 0
    %3178 = vmatprep.subr.bf16.mxu0 0
    %3179 = vmatpush1.bf16.msra.mxu0 0
    %3180 = vmatprep.subr.bf16.mxu0 0
    %3181 = vmatpush1.bf16.msra.mxu0 0
    %3182 = vmatprep.subr.bf16.mxu0 0
    %3183 = vmatpush1.bf16.msra.mxu0 0
    %3184 = vmatprep.subr.bf16.mxu0 0
    %3185 = vmatpush1.bf16.msra.mxu0 0
    %3186 = vmatprep.subr.bf16.mxu0 0
    %3187 = vmatpush1.bf16.msra.mxu0 0
    %3188 = vmatprep.subr.bf16.mxu0 0
    %3189 = vmatpush1.bf16.msra.mxu0 0
    %3190 = vmatprep.mubr.bf16.mxu0 0
    %3191 = vmatmul.mubr.bf16.gmra.mrb[0].mxu0 %v3033
    %v3192 = vpop.f32.mrb[0].mxu0
    %v3193 = vadd.f32 0.0, %v3192
    %v3194 = vpop.f32.mrb[0].mxu0
    %v3195 = vadd.f32 0.0, %v3194
    %v3196 = vpop.f32.mrb[0].mxu0
    %v3197 = vpop.f32.mrb[0].mxu0
    %3198 = vdwg.mxu0
    %v3199 = vadd.f32 %v2926, %v3070
    %v3200 = vadd.f32 %v2927, %v3072
    %v3201 = vadd.f32 %v2928, %v3111
    %v3202 = vadd.f32 %v2929, %v3113
    %v3203 = vadd.f32 %v2930, %v3152
    %v3204 = vadd.f32 %v2931, %v3154
    %v3205 = vadd.f32 %v2932, %v3193
    %v3206 = vadd.f32 %v2933, %v3195
    %s3207 = scalar_lea.vmem [#allocation8], 2560
    %v3208 = vld [vmem:[%s3207] sm:$0xff]
    %v3209 = vld [vmem:[%s3207 + $0x8] sm:$0xff]
    %v3210 = vld [vmem:[%s3207 + $0x10] sm:$0xff]
    %v3211 = vld [vmem:[%s3207 + $0x18] sm:$0xff]
    %v3212 = vld [vmem:[%s3207 + $0x20] sm:$0xff]
    %v3213 = vld [vmem:[%s3207 + $0x28] sm:$0xff]
    %v3214 = vld [vmem:[%s3207 + $0x30] sm:$0xff]
    %v3215 = vld [vmem:[%s3207 + $0x38] sm:$0xff]
    %v3216 = vld [vmem:[%s3207 + $0x40] sm:$0xff]
    %v3217 = vld [vmem:[%s3207 + $0x48] sm:$0xff]
    %v3218 = vld [vmem:[%s3207 + $0x50] sm:$0xff]
    %v3219 = vld [vmem:[%s3207 + $0x58] sm:$0xff]
    %v3220 = vld [vmem:[%s3207 + $0x60] sm:$0xff]
    %v3221 = vld [vmem:[%s3207 + $0x68] sm:$0xff]
    %v3222 = vld [vmem:[%s3207 + $0x70] sm:$0xff]
    %v3223 = vld [vmem:[%s3207 + $0x78] sm:$0xff]
    %v3224 = vld [vmem:[%s3207 + $0x80] sm:$0xff]
    %v3225 = vld [vmem:[%s3207 + $0x88] sm:$0xff]
    %v3226 = vld [vmem:[%s3207 + $0x90] sm:$0xff]
    %v3227 = vld [vmem:[%s3207 + $0x98] sm:$0xff]
    %v3228 = vld [vmem:[%s3207 + $0xa0] sm:$0xff]
    %v3229 = vld [vmem:[%s3207 + $0xa8] sm:$0xff]
    %v3230 = vld [vmem:[%s3207 + $0xb0] sm:$0xff]
    %v3231 = vld [vmem:[%s3207 + $0xb8] sm:$0xff]
    %v3232 = vld [vmem:[%s3207 + $0xc0] sm:$0xff]
    %v3233 = vld [vmem:[%s3207 + $0xc8] sm:$0xff]
    %v3234 = vld [vmem:[%s3207 + $0xd0] sm:$0xff]
    %v3235 = vld [vmem:[%s3207 + $0xd8] sm:$0xff]
    %v3236 = vld [vmem:[%s3207 + $0xe0] sm:$0xff]
    %v3237 = vld [vmem:[%s3207 + $0xe8] sm:$0xff]
    %v3238 = vld [vmem:[%s3207 + $0xf0] sm:$0xff]
    %v3239 = vld [vmem:[%s3207 + $0xf8] sm:$0xff]
    %v3240 = vunpack.c.l.s8.bf16 %v3208
    %v3241 = vunpack.c.l.s8.bf16 %v3209
    %v3242 = vunpack.c.l.s8.bf16 %v3210
    %v3243 = vunpack.c.l.s8.bf16 %v3211
    %v3244 = vunpack.c.l.s8.bf16 %v3212
    %v3245 = vunpack.c.l.s8.bf16 %v3213
    %v3246 = vunpack.c.l.s8.bf16 %v3214
    %v3247 = vunpack.c.l.s8.bf16 %v3215
    %v3248 = vunpack.c.h.s8.bf16 %v3208
    %v3249 = vunpack.c.h.s8.bf16 %v3209
    %v3250 = vunpack.c.h.s8.bf16 %v3210
    %v3251 = vunpack.c.h.s8.bf16 %v3211
    %v3252 = vunpack.c.h.s8.bf16 %v3212
    %v3253 = vunpack.c.h.s8.bf16 %v3213
    %v3254 = vunpack.c.h.s8.bf16 %v3214
    %v3255 = vunpack.c.h.s8.bf16 %v3215
    %v3256 = vunpack.c.l.s8.bf16 %v3216
    %v3257 = vunpack.c.l.s8.bf16 %v3217
    %v3258 = vunpack.c.l.s8.bf16 %v3218
    %v3259 = vunpack.c.l.s8.bf16 %v3219
    %v3260 = vunpack.c.l.s8.bf16 %v3220
    %v3261 = vunpack.c.l.s8.bf16 %v3221
    %v3262 = vunpack.c.l.s8.bf16 %v3222
    %v3263 = vunpack.c.l.s8.bf16 %v3223
    %v3264 = vunpack.c.h.s8.bf16 %v3216
    %v3265 = vunpack.c.h.s8.bf16 %v3217
    %v3266 = vunpack.c.h.s8.bf16 %v3218
    %v3267 = vunpack.c.h.s8.bf16 %v3219
    %v3268 = vunpack.c.h.s8.bf16 %v3220
    %v3269 = vunpack.c.h.s8.bf16 %v3221
    %v3270 = vunpack.c.h.s8.bf16 %v3222
    %v3271 = vunpack.c.h.s8.bf16 %v3223
    %v3272 = vunpack.c.l.s8.bf16 %v3224
    %v3273 = vunpack.c.l.s8.bf16 %v3225
    %v3274 = vunpack.c.l.s8.bf16 %v3226
    %v3275 = vunpack.c.l.s8.bf16 %v3227
    %v3276 = vunpack.c.l.s8.bf16 %v3228
    %v3277 = vunpack.c.l.s8.bf16 %v3229
    %v3278 = vunpack.c.l.s8.bf16 %v3230
    %v3279 = vunpack.c.l.s8.bf16 %v3231
    %v3280 = vunpack.c.h.s8.bf16 %v3224
    %v3281 = vunpack.c.h.s8.bf16 %v3225
    %v3282 = vunpack.c.h.s8.bf16 %v3226
    %v3283 = vunpack.c.h.s8.bf16 %v3227
    %v3284 = vunpack.c.h.s8.bf16 %v3228
    %v3285 = vunpack.c.h.s8.bf16 %v3229
    %v3286 = vunpack.c.h.s8.bf16 %v3230
    %v3287 = vunpack.c.h.s8.bf16 %v3231
    %v3288 = vunpack.c.l.s8.bf16 %v3232
    %v3289 = vunpack.c.l.s8.bf16 %v3233
    %v3290 = vunpack.c.l.s8.bf16 %v3234
    %v3291 = vunpack.c.l.s8.bf16 %v3235
    %v3292 = vunpack.c.l.s8.bf16 %v3236
    %v3293 = vunpack.c.l.s8.bf16 %v3237
    %v3294 = vunpack.c.l.s8.bf16 %v3238
    %v3295 = vunpack.c.l.s8.bf16 %v3239
    %v3296 = vunpack.c.h.s8.bf16 %v3232
    %v3297 = vunpack.c.h.s8.bf16 %v3233
    %v3298 = vunpack.c.h.s8.bf16 %v3234
    %v3299 = vunpack.c.h.s8.bf16 %v3235
    %v3300 = vunpack.c.h.s8.bf16 %v3236
    %v3301 = vunpack.c.h.s8.bf16 %v3237
    %v3302 = vunpack.c.h.s8.bf16 %v3238
    %v3303 = vunpack.c.h.s8.bf16 %v3239
    %v3304 = vrot.slane %v2756, 2
    %v3305 = vrot.slane %v2757, 1
    %v3306 = vsel %vm675, %v3305, %v3304
    %v3307 = vpack.c.b16 %v3306, %v3306
    %3309 = vmatprep.subr.bf16.mxu0 %v3241
    %3310 = vmatpush1.bf16.msra.mxu0 %v3240
    %3311 = vmatprep.subr.bf16.mxu0 %v3249
    %3312 = vmatpush1.bf16.msra.mxu0 %v3248
    %3313 = vmatprep.subr.bf16.mxu0 %v3257
    %3314 = vmatpush1.bf16.msra.mxu0 %v3256
    %3315 = vmatprep.subr.bf16.mxu0 %v3265
    %3316 = vmatpush1.bf16.msra.mxu0 %v3264
    %3317 = vmatprep.subr.bf16.mxu0 %v3273
    %3318 = vmatpush1.bf16.msra.mxu0 %v3272
    %3319 = vmatprep.subr.bf16.mxu0 %v3281
    %3320 = vmatpush1.bf16.msra.mxu0 %v3280
    %3321 = vmatprep.subr.bf16.mxu0 %v3289
    %3322 = vmatpush1.bf16.msra.mxu0 %v3288
    %3323 = vmatprep.subr.bf16.mxu0 %v3297
    %3324 = vmatpush1.bf16.msra.mxu0 %v3296
    %3325 = vmatprep.subr.bf16.mxu0 0
    %3326 = vmatpush1.bf16.msra.mxu0 0
    %3327 = vmatprep.subr.bf16.mxu0 0
    %3328 = vmatpush1.bf16.msra.mxu0 0
    %3329 = vmatprep.subr.bf16.mxu0 0
    %3330 = vmatpush1.bf16.msra.mxu0 0
    %3331 = vmatprep.subr.bf16.mxu0 0
    %3332 = vmatpush1.bf16.msra.mxu0 0
    %3333 = vmatprep.subr.bf16.mxu0 0
    %3334 = vmatpush1.bf16.msra.mxu0 0
    %3335 = vmatprep.subr.bf16.mxu0 0
    %3336 = vmatpush1.bf16.msra.mxu0 0
    %3337 = vmatprep.subr.bf16.mxu0 0
    %3338 = vmatpush1.bf16.msra.mxu0 0
    %3339 = vmatprep.subr.bf16.mxu0 0
    %3340 = vmatpush1.bf16.msra.mxu0 0
    %3341 = vmatprep.mubr.bf16.mxu0 0
    %3342 = vmatmul.mubr.bf16.gmra.mrb[0].mxu0 %v3307
    %v3343 = vpop.f32.mrb[0].mxu0
    %v3344 = vadd.f32 0.0, %v3343
    %v3345 = vpop.f32.mrb[0].mxu0
    %v3346 = vadd.f32 0.0, %v3345
    %v3347 = vpop.f32.mrb[0].mxu0
    %v3348 = vpop.f32.mrb[0].mxu0
    %3349 = vdwg.mxu0
    %3350 = vmatprep.subr.bf16.mxu0 %v3243
    %3351 = vmatpush1.bf16.msra.mxu0 %v3242
    %3352 = vmatprep.subr.bf16.mxu0 %v3251
    %3353 = vmatpush1.bf16.msra.mxu0 %v3250
    %3354 = vmatprep.subr.bf16.mxu0 %v3259
    %3355 = vmatpush1.bf16.msra.mxu0 %v3258
    %3356 = vmatprep.subr.bf16.mxu0 %v3267
    %3357 = vmatpush1.bf16.msra.mxu0 %v3266
    %3358 = vmatprep.subr.bf16.mxu0 %v3275
    %3359 = vmatpush1.bf16.msra.mxu0 %v3274
    %3360 = vmatprep.subr.bf16.mxu0 %v3283
    %3361 = vmatpush1.bf16.msra.mxu0 %v3282
    %3362 = vmatprep.subr.bf16.mxu0 %v3291
    %3363 = vmatpush1.bf16.msra.mxu0 %v3290
    %3364 = vmatprep.subr.bf16.mxu0 %v3299
    %3365 = vmatpush1.bf16.msra.mxu0 %v3298
    %3366 = vmatprep.subr.bf16.mxu0 0
    %3367 = vmatpush1.bf16.msra.mxu0 0
    %3368 = vmatprep.subr.bf16.mxu0 0
    %3369 = vmatpush1.bf16.msra.mxu0 0
    %3370 = vmatprep.subr.bf16.mxu0 0
    %3371 = vmatpush1.bf16.msra.mxu0 0
    %3372 = vmatprep.subr.bf16.mxu0 0
    %3373 = vmatpush1.bf16.msra.mxu0 0
    %3374 = vmatprep.subr.bf16.mxu0 0
    %3375 = vmatpush1.bf16.msra.mxu0 0
    %3376 = vmatprep.subr.bf16.mxu0 0
    %3377 = vmatpush1.bf16.msra.mxu0 0
    %3378 = vmatprep.subr.bf16.mxu0 0
    %3379 = vmatpush1.bf16.msra.mxu0 0
    %3380 = vmatprep.subr.bf16.mxu0 0
    %3381 = vmatpush1.bf16.msra.mxu0 0
    %3382 = vmatprep.mubr.bf16.mxu0 0
    %3383 = vmatmul.mubr.bf16.gmra.mrb[0].mxu0 %v3307
    %v3384 = vpop.f32.mrb[0].mxu0
    %v3385 = vadd.f32 0.0, %v3384
    %v3386 = vpop.f32.mrb[0].mxu0
    %v3387 = vadd.f32 0.0, %v3386
    %v3388 = vpop.f32.mrb[0].mxu0
    %v3389 = vpop.f32.mrb[0].mxu0
    %3390 = vdwg.mxu0
    %3391 = vmatprep.subr.bf16.mxu0 %v3245
    %3392 = vmatpush1.bf16.msra.mxu0 %v3244
    %3393 = vmatprep.subr.bf16.mxu0 %v3253
    %3394 = vmatpush1.bf16.msra.mxu0 %v3252
    %3395 = vmatprep.subr.bf16.mxu0 %v3261
    %3396 = vmatpush1.bf16.msra.mxu0 %v3260
    %3397 = vmatprep.subr.bf16.mxu0 %v3269
    %3398 = vmatpush1.bf16.msra.mxu0 %v3268
    %3399 = vmatprep.subr.bf16.mxu0 %v3277
    %3400 = vmatpush1.bf16.msra.mxu0 %v3276
    %3401 = vmatprep.subr.bf16.mxu0 %v3285
    %3402 = vmatpush1.bf16.msra.mxu0 %v3284
    %3403 = vmatprep.subr.bf16.mxu0 %v3293
    %3404 = vmatpush1.bf16.msra.mxu0 %v3292
    %3405 = vmatprep.subr.bf16.mxu0 %v3301
    %3406 = vmatpush1.bf16.msra.mxu0 %v3300
    %3407 = vmatprep.subr.bf16.mxu0 0
    %3408 = vmatpush1.bf16.msra.mxu0 0
    %3409 = vmatprep.subr.bf16.mxu0 0
    %3410 = vmatpush1.bf16.msra.mxu0 0
    %3411 = vmatprep.subr.bf16.mxu0 0
    %3412 = vmatpush1.bf16.msra.mxu0 0
    %3413 = vmatprep.subr.bf16.mxu0 0
    %3414 = vmatpush1.bf16.msra.mxu0 0
    %3415 = vmatprep.subr.bf16.mxu0 0
    %3416 = vmatpush1.bf16.msra.mxu0 0
    %3417 = vmatprep.subr.bf16.mxu0 0
    %3418 = vmatpush1.bf16.msra.mxu0 0
    %3419 = vmatprep.subr.bf16.mxu0 0
    %3420 = vmatpush1.bf16.msra.mxu0 0
    %3421 = vmatprep.subr.bf16.mxu0 0
    %3422 = vmatpush1.bf16.msra.mxu0 0
    %3423 = vmatprep.mubr.bf16.mxu0 0
    %3424 = vmatmul.mubr.bf16.gmra.mrb[0].mxu0 %v3307
    %v3425 = vpop.f32.mrb[0].mxu0
    %v3426 = vadd.f32 0.0, %v3425
    %v3427 = vpop.f32.mrb[0].mxu0
    %v3428 = vadd.f32 0.0, %v3427
    %v3429 = vpop.f32.mrb[0].mxu0
    %v3430 = vpop.f32.mrb[0].mxu0
    %3431 = vdwg.mxu0
    %3432 = vmatprep.subr.bf16.mxu0 %v3247
    %3433 = vmatpush1.bf16.msra.mxu0 %v3246
    %3434 = vmatprep.subr.bf16.mxu0 %v3255
    %3435 = vmatpush1.bf16.msra.mxu0 %v3254
    %3436 = vmatprep.subr.bf16.mxu0 %v3263
    %3437 = vmatpush1.bf16.msra.mxu0 %v3262
    %3438 = vmatprep.subr.bf16.mxu0 %v3271
    %3439 = vmatpush1.bf16.msra.mxu0 %v3270
    %3440 = vmatprep.subr.bf16.mxu0 %v3279
    %3441 = vmatpush1.bf16.msra.mxu0 %v3278
    %3442 = vmatprep.subr.bf16.mxu0 %v3287
    %3443 = vmatpush1.bf16.msra.mxu0 %v3286
    %3444 = vmatprep.subr.bf16.mxu0 %v3295
    %3445 = vmatpush1.bf16.msra.mxu0 %v3294
    %3446 = vmatprep.subr.bf16.mxu0 %v3303
    %3447 = vmatpush1.bf16.msra.mxu0 %v3302
    %3448 = vmatprep.subr.bf16.mxu0 0
    %3449 = vmatpush1.bf16.msra.mxu0 0
    %3450 = vmatprep.subr.bf16.mxu0 0
    %3451 = vmatpush1.bf16.msra.mxu0 0
    %3452 = vmatprep.subr.bf16.mxu0 0
    %3453 = vmatpush1.bf16.msra.mxu0 0
    %3454 = vmatprep.subr.bf16.mxu0 0
    %3455 = vmatpush1.bf16.msra.mxu0 0
    %3456 = vmatprep.subr.bf16.mxu0 0
    %3457 = vmatpush1.bf16.msra.mxu0 0
    %3458 = vmatprep.subr.bf16.mxu0 0
    %3459 = vmatpush1.bf16.msra.mxu0 0
    %3460 = vmatprep.subr.bf16.mxu0 0
    %3461 = vmatpush1.bf16.msra.mxu0 0
    %3462 = vmatprep.subr.bf16.mxu0 0
    %3463 = vmatpush1.bf16.msra.mxu0 0
    %3464 = vmatprep.mubr.bf16.mxu0 0
    %3465 = vmatmul.mubr.bf16.gmra.mrb[0].mxu0 %v3307
    %v3466 = vpop.f32.mrb[0].mxu0
    %v3467 = vadd.f32 0.0, %v3466
    %v3468 = vpop.f32.mrb[0].mxu0
    %v3469 = vadd.f32 0.0, %v3468
    %v3470 = vpop.f32.mrb[0].mxu0
    %v3471 = vpop.f32.mrb[0].mxu0
    %3472 = vdwg.mxu0
    %v3473 = vadd.f32 %v3199, %v3344
    %v3474 = vadd.f32 %v3200, %v3346
    %v3475 = vadd.f32 %v3201, %v3385
    %v3476 = vadd.f32 %v3202, %v3387
    %v3477 = vadd.f32 %v3203, %v3426
    %v3478 = vadd.f32 %v3204, %v3428
    %v3479 = vadd.f32 %v3205, %v3467
    %v3480 = vadd.f32 %v3206, %v3469
    %s3481 = scalar_lea.vmem [#allocation8], 2816
    %v3482 = vld [vmem:[%s3481] sm:$0xff]
    %v3483 = vld [vmem:[%s3481 + $0x8] sm:$0xff]
    %v3484 = vld [vmem:[%s3481 + $0x10] sm:$0xff]
    %v3485 = vld [vmem:[%s3481 + $0x18] sm:$0xff]
    %v3486 = vld [vmem:[%s3481 + $0x20] sm:$0xff]
    %v3487 = vld [vmem:[%s3481 + $0x28] sm:$0xff]
    %v3488 = vld [vmem:[%s3481 + $0x30] sm:$0xff]
    %v3489 = vld [vmem:[%s3481 + $0x38] sm:$0xff]
    %v3490 = vld [vmem:[%s3481 + $0x40] sm:$0xff]
    %v3491 = vld [vmem:[%s3481 + $0x48] sm:$0xff]
    %v3492 = vld [vmem:[%s3481 + $0x50] sm:$0xff]
    %v3493 = vld [vmem:[%s3481 + $0x58] sm:$0xff]
    %v3494 = vld [vmem:[%s3481 + $0x60] sm:$0xff]
    %v3495 = vld [vmem:[%s3481 + $0x68] sm:$0xff]
    %v3496 = vld [vmem:[%s3481 + $0x70] sm:$0xff]
    %v3497 = vld [vmem:[%s3481 + $0x78] sm:$0xff]
    %v3498 = vld [vmem:[%s3481 + $0x80] sm:$0xff]
    %v3499 = vld [vmem:[%s3481 + $0x88] sm:$0xff]
    %v3500 = vld [vmem:[%s3481 + $0x90] sm:$0xff]
    %v3501 = vld [vmem:[%s3481 + $0x98] sm:$0xff]
    %v3502 = vld [vmem:[%s3481 + $0xa0] sm:$0xff]
    %v3503 = vld [vmem:[%s3481 + $0xa8] sm:$0xff]
    %v3504 = vld [vmem:[%s3481 + $0xb0] sm:$0xff]
    %v3505 = vld [vmem:[%s3481 + $0xb8] sm:$0xff]
    %v3506 = vld [vmem:[%s3481 + $0xc0] sm:$0xff]
    %v3507 = vld [vmem:[%s3481 + $0xc8] sm:$0xff]
    %v3508 = vld [vmem:[%s3481 + $0xd0] sm:$0xff]
    %v3509 = vld [vmem:[%s3481 + $0xd8] sm:$0xff]
    %v3510 = vld [vmem:[%s3481 + $0xe0] sm:$0xff]
    %v3511 = vld [vmem:[%s3481 + $0xe8] sm:$0xff]
    %v3512 = vld [vmem:[%s3481 + $0xf0] sm:$0xff]
    %v3513 = vld [vmem:[%s3481 + $0xf8] sm:$0xff]
    %v3514 = vunpack.c.l.s8.bf16 %v3482
    %v3515 = vunpack.c.l.s8.bf16 %v3483
    %v3516 = vunpack.c.l.s8.bf16 %v3484
    %v3517 = vunpack.c.l.s8.bf16 %v3485
    %v3518 = vunpack.c.l.s8.bf16 %v3486
    %v3519 = vunpack.c.l.s8.bf16 %v3487
    %v3520 = vunpack.c.l.s8.bf16 %v3488
    %v3521 = vunpack.c.l.s8.bf16 %v3489
    %v3522 = vunpack.c.h.s8.bf16 %v3482
    %v3523 = vunpack.c.h.s8.bf16 %v3483
    %v3524 = vunpack.c.h.s8.bf16 %v3484
    %v3525 = vunpack.c.h.s8.bf16 %v3485
    %v3526 = vunpack.c.h.s8.bf16 %v3486
    %v3527 = vunpack.c.h.s8.bf16 %v3487
    %v3528 = vunpack.c.h.s8.bf16 %v3488
    %v3529 = vunpack.c.h.s8.bf16 %v3489
    %v3530 = vunpack.c.l.s8.bf16 %v3490
    %v3531 = vunpack.c.l.s8.bf16 %v3491
    %v3532 = vunpack.c.l.s8.bf16 %v3492
    %v3533 = vunpack.c.l.s8.bf16 %v3493
    %v3534 = vunpack.c.l.s8.bf16 %v3494
    %v3535 = vunpack.c.l.s8.bf16 %v3495
    %v3536 = vunpack.c.l.s8.bf16 %v3496
    %v3537 = vunpack.c.l.s8.bf16 %v3497
    %v3538 = vunpack.c.h.s8.bf16 %v3490
    %v3539 = vunpack.c.h.s8.bf16 %v3491
    %v3540 = vunpack.c.h.s8.bf16 %v3492
    %v3541 = vunpack.c.h.s8.bf16 %v3493
    %v3542 = vunpack.c.h.s8.bf16 %v3494
    %v3543 = vunpack.c.h.s8.bf16 %v3495
    %v3544 = vunpack.c.h.s8.bf16 %v3496
    %v3545 = vunpack.c.h.s8.bf16 %v3497
    %v3546 = vunpack.c.l.s8.bf16 %v3498
    %v3547 = vunpack.c.l.s8.bf16 %v3499
    %v3548 = vunpack.c.l.s8.bf16 %v3500
    %v3549 = vunpack.c.l.s8.bf16 %v3501
    %v3550 = vunpack.c.l.s8.bf16 %v3502
    %v3551 = vunpack.c.l.s8.bf16 %v3503
    %v3552 = vunpack.c.l.s8.bf16 %v3504
    %v3553 = vunpack.c.l.s8.bf16 %v3505
    %v3554 = vunpack.c.h.s8.bf16 %v3498
    %v3555 = vunpack.c.h.s8.bf16 %v3499
    %v3556 = vunpack.c.h.s8.bf16 %v3500
    %v3557 = vunpack.c.h.s8.bf16 %v3501
    %v3558 = vunpack.c.h.s8.bf16 %v3502
    %v3559 = vunpack.c.h.s8.bf16 %v3503
    %v3560 = vunpack.c.h.s8.bf16 %v3504
    %v3561 = vunpack.c.h.s8.bf16 %v3505
    %v3562 = vunpack.c.l.s8.bf16 %v3506
    %v3563 = vunpack.c.l.s8.bf16 %v3507
    %v3564 = vunpack.c.l.s8.bf16 %v3508
    %v3565 = vunpack.c.l.s8.bf16 %v3509
    %v3566 = vunpack.c.l.s8.bf16 %v3510
    %v3567 = vunpack.c.l.s8.bf16 %v3511
    %v3568 = vunpack.c.l.s8.bf16 %v3512
    %v3569 = vunpack.c.l.s8.bf16 %v3513
    %v3570 = vunpack.c.h.s8.bf16 %v3506
    %v3571 = vunpack.c.h.s8.bf16 %v3507
    %v3572 = vunpack.c.h.s8.bf16 %v3508
    %v3573 = vunpack.c.h.s8.bf16 %v3509
    %v3574 = vunpack.c.h.s8.bf16 %v3510
    %v3575 = vunpack.c.h.s8.bf16 %v3511
    %v3576 = vunpack.c.h.s8.bf16 %v3512
    %v3577 = vunpack.c.h.s8.bf16 %v3513
    %v3578 = vrot.slane %v2756, 3
    %v3579 = vrot.slane %v2757, 2
    %v3580 = vsel %vm675, %v3579, %v3578
    %v3581 = vpack.c.b16 %v3580, %v3580
    %3583 = vmatprep.subr.bf16.mxu0 %v3515
    %3584 = vmatpush1.bf16.msra.mxu0 %v3514
    %3585 = vmatprep.subr.bf16.mxu0 %v3523
    %3586 = vmatpush1.bf16.msra.mxu0 %v3522
    %3587 = vmatprep.subr.bf16.mxu0 %v3531
    %3588 = vmatpush1.bf16.msra.mxu0 %v3530
    %3589 = vmatprep.subr.bf16.mxu0 %v3539
    %3590 = vmatpush1.bf16.msra.mxu0 %v3538
    %3591 = vmatprep.subr.bf16.mxu0 %v3547
    %3592 = vmatpush1.bf16.msra.mxu0 %v3546
    %3593 = vmatprep.subr.bf16.mxu0 %v3555
    %3594 = vmatpush1.bf16.msra.mxu0 %v3554
    %3595 = vmatprep.subr.bf16.mxu0 %v3563
    %3596 = vmatpush1.bf16.msra.mxu0 %v3562
    %3597 = vmatprep.subr.bf16.mxu0 %v3571
    %3598 = vmatpush1.bf16.msra.mxu0 %v3570
    %3599 = vmatprep.subr.bf16.mxu0 0
    %3600 = vmatpush1.bf16.msra.mxu0 0
    %3601 = vmatprep.subr.bf16.mxu0 0
    %3602 = vmatpush1.bf16.msra.mxu0 0
    %3603 = vmatprep.subr.bf16.mxu0 0
    %3604 = vmatpush1.bf16.msra.mxu0 0
    %3605 = vmatprep.subr.bf16.mxu0 0
    %3606 = vmatpush1.bf16.msra.mxu0 0
    %3607 = vmatprep.subr.bf16.mxu0 0
    %3608 = vmatpush1.bf16.msra.mxu0 0
    %3609 = vmatprep.subr.bf16.mxu0 0
    %3610 = vmatpush1.bf16.msra.mxu0 0
    %3611 = vmatprep.subr.bf16.mxu0 0
    %3612 = vmatpush1.bf16.msra.mxu0 0
    %3613 = vmatprep.subr.bf16.mxu0 0
    %3614 = vmatpush1.bf16.msra.mxu0 0
    %3615 = vmatprep.mubr.bf16.mxu0 0
    %3616 = vmatmul.mubr.bf16.gmra.mrb[0].mxu0 %v3581
    %v3617 = vpop.f32.mrb[0].mxu0
    %v3618 = vadd.f32 0.0, %v3617
    %v3619 = vpop.f32.mrb[0].mxu0
    %v3620 = vadd.f32 0.0, %v3619
    %v3621 = vpop.f32.mrb[0].mxu0
    %v3622 = vpop.f32.mrb[0].mxu0
    %3623 = vdwg.mxu0
    %3624 = vmatprep.subr.bf16.mxu0 %v3517
    %3625 = vmatpush1.bf16.msra.mxu0 %v3516
    %3626 = vmatprep.subr.bf16.mxu0 %v3525
    %3627 = vmatpush1.bf16.msra.mxu0 %v3524
    %3628 = vmatprep.subr.bf16.mxu0 %v3533
    %3629 = vmatpush1.bf16.msra.mxu0 %v3532
    %3630 = vmatprep.subr.bf16.mxu0 %v3541
    %3631 = vmatpush1.bf16.msra.mxu0 %v3540
    %3632 = vmatprep.subr.bf16.mxu0 %v3549
    %3633 = vmatpush1.bf16.msra.mxu0 %v3548
    %3634 = vmatprep.subr.bf16.mxu0 %v3557
    %3635 = vmatpush1.bf16.msra.mxu0 %v3556
    %3636 = vmatprep.subr.bf16.mxu0 %v3565
    %3637 = vmatpush1.bf16.msra.mxu0 %v3564
    %3638 = vmatprep.subr.bf16.mxu0 %v3573
    %3639 = vmatpush1.bf16.msra.mxu0 %v3572
    %3640 = vmatprep.subr.bf16.mxu0 0
    %3641 = vmatpush1.bf16.msra.mxu0 0
    %3642 = vmatprep.subr.bf16.mxu0 0
    %3643 = vmatpush1.bf16.msra.mxu0 0
    %3644 = vmatprep.subr.bf16.mxu0 0
    %3645 = vmatpush1.bf16.msra.mxu0 0
    %3646 = vmatprep.subr.bf16.mxu0 0
    %3647 = vmatpush1.bf16.msra.mxu0 0
    %3648 = vmatprep.subr.bf16.mxu0 0
    %3649 = vmatpush1.bf16.msra.mxu0 0
    %3650 = vmatprep.subr.bf16.mxu0 0
    %3651 = vmatpush1.bf16.msra.mxu0 0
    %3652 = vmatprep.subr.bf16.mxu0 0
    %3653 = vmatpush1.bf16.msra.mxu0 0
    %3654 = vmatprep.subr.bf16.mxu0 0
    %3655 = vmatpush1.bf16.msra.mxu0 0
    %3656 = vmatprep.mubr.bf16.mxu0 0
    %3657 = vmatmul.mubr.bf16.gmra.mrb[0].mxu0 %v3581
    %v3658 = vpop.f32.mrb[0].mxu0
    %v3659 = vadd.f32 0.0, %v3658
    %v3660 = vpop.f32.mrb[0].mxu0
    %v3661 = vadd.f32 0.0, %v3660
    %v3662 = vpop.f32.mrb[0].mxu0
    %v3663 = vpop.f32.mrb[0].mxu0
    %3664 = vdwg.mxu0
    %3665 = vmatprep.subr.bf16.mxu0 %v3519
    %3666 = vmatpush1.bf16.msra.mxu0 %v3518
    %3667 = vmatprep.subr.bf16.mxu0 %v3527
    %3668 = vmatpush1.bf16.msra.mxu0 %v3526
    %3669 = vmatprep.subr.bf16.mxu0 %v3535
    %3670 = vmatpush1.bf16.msra.mxu0 %v3534
    %3671 = vmatprep.subr.bf16.mxu0 %v3543
    %3672 = vmatpush1.bf16.msra.mxu0 %v3542
    %3673 = vmatprep.subr.bf16.mxu0 %v3551
    %3674 = vmatpush1.bf16.msra.mxu0 %v3550
    %3675 = vmatprep.subr.bf16.mxu0 %v3559
    %3676 = vmatpush1.bf16.msra.mxu0 %v3558
    %3677 = vmatprep.subr.bf16.mxu0 %v3567
    %3678 = vmatpush1.bf16.msra.mxu0 %v3566
    %3679 = vmatprep.subr.bf16.mxu0 %v3575
    %3680 = vmatpush1.bf16.msra.mxu0 %v3574
    %3681 = vmatprep.subr.bf16.mxu0 0
    %3682 = vmatpush1.bf16.msra.mxu0 0
    %3683 = vmatprep.subr.bf16.mxu0 0
    %3684 = vmatpush1.bf16.msra.mxu0 0
    %3685 = vmatprep.subr.bf16.mxu0 0
    %3686 = vmatpush1.bf16.msra.mxu0 0
    %3687 = vmatprep.subr.bf16.mxu0 0
    %3688 = vmatpush1.bf16.msra.mxu0 0
    %3689 = vmatprep.subr.bf16.mxu0 0
    %3690 = vmatpush1.bf16.msra.mxu0 0
    %3691 = vmatprep.subr.bf16.mxu0 0
    %3692 = vmatpush1.bf16.msra.mxu0 0
    %3693 = vmatprep.subr.bf16.mxu0 0
    %3694 = vmatpush1.bf16.msra.mxu0 0
    %3695 = vmatprep.subr.bf16.mxu0 0
    %3696 = vmatpush1.bf16.msra.mxu0 0
    %3697 = vmatprep.mubr.bf16.mxu0 0
    %3698 = vmatmul.mubr.bf16.gmra.mrb[0].mxu0 %v3581
    %v3699 = vpop.f32.mrb[0].mxu0
    %v3700 = vadd.f32 0.0, %v3699
    %v3701 = vpop.f32.mrb[0].mxu0
    %v3702 = vadd.f32 0.0, %v3701
    %v3703 = vpop.f32.mrb[0].mxu0
    %v3704 = vpop.f32.mrb[0].mxu0
    %3705 = vdwg.mxu0
    %3706 = vmatprep.subr.bf16.mxu0 %v3521
    %3707 = vmatpush1.bf16.msra.mxu0 %v3520
    %3708 = vmatprep.subr.bf16.mxu0 %v3529
    %3709 = vmatpush1.bf16.msra.mxu0 %v3528
    %3710 = vmatprep.subr.bf16.mxu0 %v3537
    %3711 = vmatpush1.bf16.msra.mxu0 %v3536
    %3712 = vmatprep.subr.bf16.mxu0 %v3545
    %3713 = vmatpush1.bf16.msra.mxu0 %v3544
    %3714 = vmatprep.subr.bf16.mxu0 %v3553
    %3715 = vmatpush1.bf16.msra.mxu0 %v3552
    %3716 = vmatprep.subr.bf16.mxu0 %v3561
    %3717 = vmatpush1.bf16.msra.mxu0 %v3560
    %3718 = vmatprep.subr.bf16.mxu0 %v3569
    %3719 = vmatpush1.bf16.msra.mxu0 %v3568
    %3720 = vmatprep.subr.bf16.mxu0 %v3577
    %3721 = vmatpush1.bf16.msra.mxu0 %v3576
    %3722 = vmatprep.subr.bf16.mxu0 0
    %3723 = vmatpush1.bf16.msra.mxu0 0
    %3724 = vmatprep.subr.bf16.mxu0 0
    %3725 = vmatpush1.bf16.msra.mxu0 0
    %3726 = vmatprep.subr.bf16.mxu0 0
    %3727 = vmatpush1.bf16.msra.mxu0 0
    %3728 = vmatprep.subr.bf16.mxu0 0
    %3729 = vmatpush1.bf16.msra.mxu0 0
    %3730 = vmatprep.subr.bf16.mxu0 0
    %3731 = vmatpush1.bf16.msra.mxu0 0
    %3732 = vmatprep.subr.bf16.mxu0 0
    %3733 = vmatpush1.bf16.msra.mxu0 0
    %3734 = vmatprep.subr.bf16.mxu0 0
    %3735 = vmatpush1.bf16.msra.mxu0 0
    %3736 = vmatprep.subr.bf16.mxu0 0
    %3737 = vmatpush1.bf16.msra.mxu0 0
    %3738 = vmatprep.mubr.bf16.mxu0 0
    %3739 = vmatmul.mubr.bf16.gmra.mrb[0].mxu0 %v3581
    %v3740 = vpop.f32.mrb[0].mxu0
    %v3741 = vadd.f32 0.0, %v3740
    %v3742 = vpop.f32.mrb[0].mxu0
    %v3743 = vadd.f32 0.0, %v3742
    %v3744 = vpop.f32.mrb[0].mxu0
    %v3745 = vpop.f32.mrb[0].mxu0
    %3746 = vdwg.mxu0
    %v3747 = vadd.f32 %v3473, %v3618
    %v3748 = vadd.f32 %v3474, %v3620
    %v3749 = vadd.f32 %v3475, %v3659
    %v3750 = vadd.f32 %v3476, %v3661
    %v3751 = vadd.f32 %v3477, %v3700
    %v3752 = vadd.f32 %v3478, %v3702
    %v3753 = vadd.f32 %v3479, %v3741
    %v3754 = vadd.f32 %v3480, %v3743
    %s3755 = scalar_lea.vmem [#allocation8], 3072
    %v3756 = vld [vmem:[%s3755] sm:$0xff]
    %v3757 = vld [vmem:[%s3755 + $0x8] sm:$0xff]
    %v3758 = vld [vmem:[%s3755 + $0x10] sm:$0xff]
    %v3759 = vld [vmem:[%s3755 + $0x18] sm:$0xff]
    %v3760 = vld [vmem:[%s3755 + $0x20] sm:$0xff]
    %v3761 = vld [vmem:[%s3755 + $0x28] sm:$0xff]
    %v3762 = vld [vmem:[%s3755 + $0x30] sm:$0xff]
    %v3763 = vld [vmem:[%s3755 + $0x38] sm:$0xff]
    %v3764 = vld [vmem:[%s3755 + $0x40] sm:$0xff]
    %v3765 = vld [vmem:[%s3755 + $0x48] sm:$0xff]
    %v3766 = vld [vmem:[%s3755 + $0x50] sm:$0xff]
    %v3767 = vld [vmem:[%s3755 + $0x58] sm:$0xff]
    %v3768 = vld [vmem:[%s3755 + $0x60] sm:$0xff]
    %v3769 = vld [vmem:[%s3755 + $0x68] sm:$0xff]
    %v3770 = vld [vmem:[%s3755 + $0x70] sm:$0xff]
    %v3771 = vld [vmem:[%s3755 + $0x78] sm:$0xff]
    %v3772 = vld [vmem:[%s3755 + $0x80] sm:$0xff]
    %v3773 = vld [vmem:[%s3755 + $0x88] sm:$0xff]
    %v3774 = vld [vmem:[%s3755 + $0x90] sm:$0xff]
    %v3775 = vld [vmem:[%s3755 + $0x98] sm:$0xff]
    %v3776 = vld [vmem:[%s3755 + $0xa0] sm:$0xff]
    %v3777 = vld [vmem:[%s3755 + $0xa8] sm:$0xff]
    %v3778 = vld [vmem:[%s3755 + $0xb0] sm:$0xff]
    %v3779 = vld [vmem:[%s3755 + $0xb8] sm:$0xff]
    %v3780 = vld [vmem:[%s3755 + $0xc0] sm:$0xff]
    %v3781 = vld [vmem:[%s3755 + $0xc8] sm:$0xff]
    %v3782 = vld [vmem:[%s3755 + $0xd0] sm:$0xff]
    %v3783 = vld [vmem:[%s3755 + $0xd8] sm:$0xff]
    %v3784 = vld [vmem:[%s3755 + $0xe0] sm:$0xff]
    %v3785 = vld [vmem:[%s3755 + $0xe8] sm:$0xff]
    %v3786 = vld [vmem:[%s3755 + $0xf0] sm:$0xff]
    %v3787 = vld [vmem:[%s3755 + $0xf8] sm:$0xff]
    %v3788 = vunpack.c.l.s8.bf16 %v3756
    %v3789 = vunpack.c.l.s8.bf16 %v3757
    %v3790 = vunpack.c.l.s8.bf16 %v3758
    %v3791 = vunpack.c.l.s8.bf16 %v3759
    %v3792 = vunpack.c.l.s8.bf16 %v3760
    %v3793 = vunpack.c.l.s8.bf16 %v3761
    %v3794 = vunpack.c.l.s8.bf16 %v3762
    %v3795 = vunpack.c.l.s8.bf16 %v3763
    %v3796 = vunpack.c.h.s8.bf16 %v3756
    %v3797 = vunpack.c.h.s8.bf16 %v3757
    %v3798 = vunpack.c.h.s8.bf16 %v3758
    %v3799 = vunpack.c.h.s8.bf16 %v3759
    %v3800 = vunpack.c.h.s8.bf16 %v3760
    %v3801 = vunpack.c.h.s8.bf16 %v3761
    %v3802 = vunpack.c.h.s8.bf16 %v3762
    %v3803 = vunpack.c.h.s8.bf16 %v3763
    %v3804 = vunpack.c.l.s8.bf16 %v3764
    %v3805 = vunpack.c.l.s8.bf16 %v3765
    %v3806 = vunpack.c.l.s8.bf16 %v3766
    %v3807 = vunpack.c.l.s8.bf16 %v3767
    %v3808 = vunpack.c.l.s8.bf16 %v3768
    %v3809 = vunpack.c.l.s8.bf16 %v3769
    %v3810 = vunpack.c.l.s8.bf16 %v3770
    %v3811 = vunpack.c.l.s8.bf16 %v3771
    %v3812 = vunpack.c.h.s8.bf16 %v3764
    %v3813 = vunpack.c.h.s8.bf16 %v3765
    %v3814 = vunpack.c.h.s8.bf16 %v3766
    %v3815 = vunpack.c.h.s8.bf16 %v3767
    %v3816 = vunpack.c.h.s8.bf16 %v3768
    %v3817 = vunpack.c.h.s8.bf16 %v3769
    %v3818 = vunpack.c.h.s8.bf16 %v3770
    %v3819 = vunpack.c.h.s8.bf16 %v3771
    %v3820 = vunpack.c.l.s8.bf16 %v3772
    %v3821 = vunpack.c.l.s8.bf16 %v3773
    %v3822 = vunpack.c.l.s8.bf16 %v3774
    %v3823 = vunpack.c.l.s8.bf16 %v3775
    %v3824 = vunpack.c.l.s8.bf16 %v3776
    %v3825 = vunpack.c.l.s8.bf16 %v3777
    %v3826 = vunpack.c.l.s8.bf16 %v3778
    %v3827 = vunpack.c.l.s8.bf16 %v3779
    %v3828 = vunpack.c.h.s8.bf16 %v3772
    %v3829 = vunpack.c.h.s8.bf16 %v3773
    %v3830 = vunpack.c.h.s8.bf16 %v3774
    %v3831 = vunpack.c.h.s8.bf16 %v3775
    %v3832 = vunpack.c.h.s8.bf16 %v3776
    %v3833 = vunpack.c.h.s8.bf16 %v3777
    %v3834 = vunpack.c.h.s8.bf16 %v3778
    %v3835 = vunpack.c.h.s8.bf16 %v3779
    %v3836 = vunpack.c.l.s8.bf16 %v3780
    %v3837 = vunpack.c.l.s8.bf16 %v3781
    %v3838 = vunpack.c.l.s8.bf16 %v3782
    %v3839 = vunpack.c.l.s8.bf16 %v3783
    %v3840 = vunpack.c.l.s8.bf16 %v3784
    %v3841 = vunpack.c.l.s8.bf16 %v3785
    %v3842 = vunpack.c.l.s8.bf16 %v3786
    %v3843 = vunpack.c.l.s8.bf16 %v3787
    %v3844 = vunpack.c.h.s8.bf16 %v3780
    %v3845 = vunpack.c.h.s8.bf16 %v3781
    %v3846 = vunpack.c.h.s8.bf16 %v3782
    %v3847 = vunpack.c.h.s8.bf16 %v3783
    %v3848 = vunpack.c.h.s8.bf16 %v3784
    %v3849 = vunpack.c.h.s8.bf16 %v3785
    %v3850 = vunpack.c.h.s8.bf16 %v3786
    %v3851 = vunpack.c.h.s8.bf16 %v3787
    %v3852 = vrot.slane %v2756, 4
    %v3853 = vrot.slane %v2757, 3
    %v3854 = vsel %vm675, %v3853, %v3852
    %v3855 = vpack.c.b16 %v3854, %v3854
    %3857 = vmatprep.subr.bf16.mxu0 %v3789
    %3858 = vmatpush1.bf16.msra.mxu0 %v3788
    %3859 = vmatprep.subr.bf16.mxu0 %v3797
    %3860 = vmatpush1.bf16.msra.mxu0 %v3796
    %3861 = vmatprep.subr.bf16.mxu0 %v3805
    %3862 = vmatpush1.bf16.msra.mxu0 %v3804
    %3863 = vmatprep.subr.bf16.mxu0 %v3813
    %3864 = vmatpush1.bf16.msra.mxu0 %v3812
    %3865 = vmatprep.subr.bf16.mxu0 %v3821
    %3866 = vmatpush1.bf16.msra.mxu0 %v3820
    %3867 = vmatprep.subr.bf16.mxu0 %v3829
    %3868 = vmatpush1.bf16.msra.mxu0 %v3828
    %3869 = vmatprep.subr.bf16.mxu0 %v3837
    %3870 = vmatpush1.bf16.msra.mxu0 %v3836
    %3871 = vmatprep.subr.bf16.mxu0 %v3845
    %3872 = vmatpush1.bf16.msra.mxu0 %v3844
    %3873 = vmatprep.subr.bf16.mxu0 0
    %3874 = vmatpush1.bf16.msra.mxu0 0
    %3875 = vmatprep.subr.bf16.mxu0 0
    %3876 = vmatpush1.bf16.msra.mxu0 0
    %3877 = vmatprep.subr.bf16.mxu0 0
    %3878 = vmatpush1.bf16.msra.mxu0 0
    %3879 = vmatprep.subr.bf16.mxu0 0
    %3880 = vmatpush1.bf16.msra.mxu0 0
    %3881 = vmatprep.subr.bf16.mxu0 0
    %3882 = vmatpush1.bf16.msra.mxu0 0
    %3883 = vmatprep.subr.bf16.mxu0 0
    %3884 = vmatpush1.bf16.msra.mxu0 0
    %3885 = vmatprep.subr.bf16.mxu0 0
    %3886 = vmatpush1.bf16.msra.mxu0 0
    %3887 = vmatprep.subr.bf16.mxu0 0
    %3888 = vmatpush1.bf16.msra.mxu0 0
    %3889 = vmatprep.mubr.bf16.mxu0 0
    %3890 = vmatmul.mubr.bf16.gmra.mrb[0].mxu0 %v3855
    %v3891 = vpop.f32.mrb[0].mxu0
    %v3892 = vadd.f32 0.0, %v3891
    %v3893 = vpop.f32.mrb[0].mxu0
    %v3894 = vadd.f32 0.0, %v3893
    %v3895 = vpop.f32.mrb[0].mxu0
    %v3896 = vpop.f32.mrb[0].mxu0
    %3897 = vdwg.mxu0
    %3898 = vmatprep.subr.bf16.mxu0 %v3791
    %3899 = vmatpush1.bf16.msra.mxu0 %v3790
    %3900 = vmatprep.subr.bf16.mxu0 %v3799
    %3901 = vmatpush1.bf16.msra.mxu0 %v3798
    %3902 = vmatprep.subr.bf16.mxu0 %v3807
    %3903 = vmatpush1.bf16.msra.mxu0 %v3806
    %3904 = vmatprep.subr.bf16.mxu0 %v3815
    %3905 = vmatpush1.bf16.msra.mxu0 %v3814
    %3906 = vmatprep.subr.bf16.mxu0 %v3823
    %3907 = vmatpush1.bf16.msra.mxu0 %v3822
    %3908 = vmatprep.subr.bf16.mxu0 %v3831
    %3909 = vmatpush1.bf16.msra.mxu0 %v3830
    %3910 = vmatprep.subr.bf16.mxu0 %v3839
    %3911 = vmatpush1.bf16.msra.mxu0 %v3838
    %3912 = vmatprep.subr.bf16.mxu0 %v3847
    %3913 = vmatpush1.bf16.msra.mxu0 %v3846
    %3914 = vmatprep.subr.bf16.mxu0 0
    %3915 = vmatpush1.bf16.msra.mxu0 0
    %3916 = vmatprep.subr.bf16.mxu0 0
    %3917 = vmatpush1.bf16.msra.mxu0 0
    %3918 = vmatprep.subr.bf16.mxu0 0
    %3919 = vmatpush1.bf16.msra.mxu0 0
    %3920 = vmatprep.subr.bf16.mxu0 0
    %3921 = vmatpush1.bf16.msra.mxu0 0
    %3922 = vmatprep.subr.bf16.mxu0 0
    %3923 = vmatpush1.bf16.msra.mxu0 0
    %3924 = vmatprep.subr.bf16.mxu0 0
    %3925 = vmatpush1.bf16.msra.mxu0 0
    %3926 = vmatprep.subr.bf16.mxu0 0
    %3927 = vmatpush1.bf16.msra.mxu0 0
    %3928 = vmatprep.subr.bf16.mxu0 0
    %3929 = vmatpush1.bf16.msra.mxu0 0
    %3930 = vmatprep.mubr.bf16.mxu0 0
    %3931 = vmatmul.mubr.bf16.gmra.mrb[0].mxu0 %v3855
    %v3932 = vpop.f32.mrb[0].mxu0
    %v3933 = vadd.f32 0.0, %v3932
    %v3934 = vpop.f32.mrb[0].mxu0
    %v3935 = vadd.f32 0.0, %v3934
    %v3936 = vpop.f32.mrb[0].mxu0
    %v3937 = vpop.f32.mrb[0].mxu0
    %3938 = vdwg.mxu0
    %3939 = vmatprep.subr.bf16.mxu0 %v3793
    %3940 = vmatpush1.bf16.msra.mxu0 %v3792
    %3941 = vmatprep.subr.bf16.mxu0 %v3801
    %3942 = vmatpush1.bf16.msra.mxu0 %v3800
    %3943 = vmatprep.subr.bf16.mxu0 %v3809
    %3944 = vmatpush1.bf16.msra.mxu0 %v3808
    %3945 = vmatprep.subr.bf16.mxu0 %v3817
    %3946 = vmatpush1.bf16.msra.mxu0 %v3816
    %3947 = vmatprep.subr.bf16.mxu0 %v3825
    %3948 = vmatpush1.bf16.msra.mxu0 %v3824
    %3949 = vmatprep.subr.bf16.mxu0 %v3833
    %3950 = vmatpush1.bf16.msra.mxu0 %v3832
    %3951 = vmatprep.subr.bf16.mxu0 %v3841
    %3952 = vmatpush1.bf16.msra.mxu0 %v3840
    %3953 = vmatprep.subr.bf16.mxu0 %v3849
    %3954 = vmatpush1.bf16.msra.mxu0 %v3848
    %3955 = vmatprep.subr.bf16.mxu0 0
    %3956 = vmatpush1.bf16.msra.mxu0 0
    %3957 = vmatprep.subr.bf16.mxu0 0
    %3958 = vmatpush1.bf16.msra.mxu0 0
    %3959 = vmatprep.subr.bf16.mxu0 0
    %3960 = vmatpush1.bf16.msra.mxu0 0
    %3961 = vmatprep.subr.bf16.mxu0 0
    %3962 = vmatpush1.bf16.msra.mxu0 0
    %3963 = vmatprep.subr.bf16.mxu0 0
    %3964 = vmatpush1.bf16.msra.mxu0 0
    %3965 = vmatprep.subr.bf16.mxu0 0
    %3966 = vmatpush1.bf16.msra.mxu0 0
    %3967 = vmatprep.subr.bf16.mxu0 0
    %3968 = vmatpush1.bf16.msra.mxu0 0
    %3969 = vmatprep.subr.bf16.mxu0 0
    %3970 = vmatpush1.bf16.msra.mxu0 0
    %3971 = vmatprep.mubr.bf16.mxu0 0
    %3972 = vmatmul.mubr.bf16.gmra.mrb[0].mxu0 %v3855
    %v3973 = vpop.f32.mrb[0].mxu0
    %v3974 = vadd.f32 0.0, %v3973
    %v3975 = vpop.f32.mrb[0].mxu0
    %v3976 = vadd.f32 0.0, %v3975
    %v3977 = vpop.f32.mrb[0].mxu0
    %v3978 = vpop.f32.mrb[0].mxu0
    %3979 = vdwg.mxu0
    %3980 = vmatprep.subr.bf16.mxu0 %v3795
    %3981 = vmatpush1.bf16.msra.mxu0 %v3794
    %3982 = vmatprep.subr.bf16.mxu0 %v3803
    %3983 = vmatpush1.bf16.msra.mxu0 %v3802
    %3984 = vmatprep.subr.bf16.mxu0 %v3811
    %3985 = vmatpush1.bf16.msra.mxu0 %v3810
    %3986 = vmatprep.subr.bf16.mxu0 %v3819
    %3987 = vmatpush1.bf16.msra.mxu0 %v3818
    %3988 = vmatprep.subr.bf16.mxu0 %v3827
    %3989 = vmatpush1.bf16.msra.mxu0 %v3826
    %3990 = vmatprep.subr.bf16.mxu0 %v3835
    %3991 = vmatpush1.bf16.msra.mxu0 %v3834
    %3992 = vmatprep.subr.bf16.mxu0 %v3843
    %3993 = vmatpush1.bf16.msra.mxu0 %v3842
    %3994 = vmatprep.subr.bf16.mxu0 %v3851
    %3995 = vmatpush1.bf16.msra.mxu0 %v3850
    %3996 = vmatprep.subr.bf16.mxu0 0
    %3997 = vmatpush1.bf16.msra.mxu0 0
    %3998 = vmatprep.subr.bf16.mxu0 0
    %3999 = vmatpush1.bf16.msra.mxu0 0
    %4000 = vmatprep.subr.bf16.mxu0 0
    %4001 = vmatpush1.bf16.msra.mxu0 0
    %4002 = vmatprep.subr.bf16.mxu0 0
    %4003 = vmatpush1.bf16.msra.mxu0 0
    %4004 = vmatprep.subr.bf16.mxu0 0
    %4005 = vmatpush1.bf16.msra.mxu0 0
    %4006 = vmatprep.subr.bf16.mxu0 0
    %4007 = vmatpush1.bf16.msra.mxu0 0
    %4008 = vmatprep.subr.bf16.mxu0 0
    %4009 = vmatpush1.bf16.msra.mxu0 0
    %4010 = vmatprep.subr.bf16.mxu0 0
    %4011 = vmatpush1.bf16.msra.mxu0 0
    %4012 = vmatprep.mubr.bf16.mxu0 0
    %4013 = vmatmul.mubr.bf16.gmra.mrb[0].mxu0 %v3855
    %v4014 = vpop.f32.mrb[0].mxu0
    %v4015 = vadd.f32 0.0, %v4014
    %v4016 = vpop.f32.mrb[0].mxu0
    %v4017 = vadd.f32 0.0, %v4016
    %v4018 = vpop.f32.mrb[0].mxu0
    %v4019 = vpop.f32.mrb[0].mxu0
    %4020 = vdwg.mxu0
    %v4021 = vadd.f32 %v3747, %v3892
    %v4022 = vadd.f32 %v3748, %v3894
    %v4023 = vadd.f32 %v3749, %v3933
    %v4024 = vadd.f32 %v3750, %v3935
    %v4025 = vadd.f32 %v3751, %v3974
    %v4026 = vadd.f32 %v3752, %v3976
    %v4027 = vadd.f32 %v3753, %v4015
    %v4028 = vadd.f32 %v3754, %v4017
    %s4029 = scalar_lea.vmem [#allocation8], 3328
    %v4030 = vld [vmem:[%s4029] sm:$0xff]
    %v4031 = vld [vmem:[%s4029 + $0x8] sm:$0xff]
    %v4032 = vld [vmem:[%s4029 + $0x10] sm:$0xff]
    %v4033 = vld [vmem:[%s4029 + $0x18] sm:$0xff]
    %v4034 = vld [vmem:[%s4029 + $0x20] sm:$0xff]
    %v4035 = vld [vmem:[%s4029 + $0x28] sm:$0xff]
    %v4036 = vld [vmem:[%s4029 + $0x30] sm:$0xff]
    %v4037 = vld [vmem:[%s4029 + $0x38] sm:$0xff]
    %v4038 = vld [vmem:[%s4029 + $0x40] sm:$0xff]
    %v4039 = vld [vmem:[%s4029 + $0x48] sm:$0xff]
    %v4040 = vld [vmem:[%s4029 + $0x50] sm:$0xff]
    %v4041 = vld [vmem:[%s4029 + $0x58] sm:$0xff]
    %v4042 = vld [vmem:[%s4029 + $0x60] sm:$0xff]
    %v4043 = vld [vmem:[%s4029 + $0x68] sm:$0xff]
    %v4044 = vld [vmem:[%s4029 + $0x70] sm:$0xff]
    %v4045 = vld [vmem:[%s4029 + $0x78] sm:$0xff]
    %v4046 = vld [vmem:[%s4029 + $0x80] sm:$0xff]
    %v4047 = vld [vmem:[%s4029 + $0x88] sm:$0xff]
    %v4048 = vld [vmem:[%s4029 + $0x90] sm:$0xff]
    %v4049 = vld [vmem:[%s4029 + $0x98] sm:$0xff]
    %v4050 = vld [vmem:[%s4029 + $0xa0] sm:$0xff]
    %v4051 = vld [vmem:[%s4029 + $0xa8] sm:$0xff]
    %v4052 = vld [vmem:[%s4029 + $0xb0] sm:$0xff]
    %v4053 = vld [vmem:[%s4029 + $0xb8] sm:$0xff]
    %v4054 = vld [vmem:[%s4029 + $0xc0] sm:$0xff]
    %v4055 = vld [vmem:[%s4029 + $0xc8] sm:$0xff]
    %v4056 = vld [vmem:[%s4029 + $0xd0] sm:$0xff]
    %v4057 = vld [vmem:[%s4029 + $0xd8] sm:$0xff]
    %v4058 = vld [vmem:[%s4029 + $0xe0] sm:$0xff]
    %v4059 = vld [vmem:[%s4029 + $0xe8] sm:$0xff]
    %v4060 = vld [vmem:[%s4029 + $0xf0] sm:$0xff]
    %v4061 = vld [vmem:[%s4029 + $0xf8] sm:$0xff]
    %v4062 = vunpack.c.l.s8.bf16 %v4030
    %v4063 = vunpack.c.l.s8.bf16 %v4031
    %v4064 = vunpack.c.l.s8.bf16 %v4032
    %v4065 = vunpack.c.l.s8.bf16 %v4033
    %v4066 = vunpack.c.l.s8.bf16 %v4034
    %v4067 = vunpack.c.l.s8.bf16 %v4035
    %v4068 = vunpack.c.l.s8.bf16 %v4036
    %v4069 = vunpack.c.l.s8.bf16 %v4037
    %v4070 = vunpack.c.h.s8.bf16 %v4030
    %v4071 = vunpack.c.h.s8.bf16 %v4031
    %v4072 = vunpack.c.h.s8.bf16 %v4032
    %v4073 = vunpack.c.h.s8.bf16 %v4033
    %v4074 = vunpack.c.h.s8.bf16 %v4034
    %v4075 = vunpack.c.h.s8.bf16 %v4035
    %v4076 = vunpack.c.h.s8.bf16 %v4036
    %v4077 = vunpack.c.h.s8.bf16 %v4037
    %v4078 = vunpack.c.l.s8.bf16 %v4038
    %v4079 = vunpack.c.l.s8.bf16 %v4039
    %v4080 = vunpack.c.l.s8.bf16 %v4040
    %v4081 = vunpack.c.l.s8.bf16 %v4041
    %v4082 = vunpack.c.l.s8.bf16 %v4042
    %v4083 = vunpack.c.l.s8.bf16 %v4043
    %v4084 = vunpack.c.l.s8.bf16 %v4044
    %v4085 = vunpack.c.l.s8.bf16 %v4045
    %v4086 = vunpack.c.h.s8.bf16 %v4038
    %v4087 = vunpack.c.h.s8.bf16 %v4039
    %v4088 = vunpack.c.h.s8.bf16 %v4040
    %v4089 = vunpack.c.h.s8.bf16 %v4041
    %v4090 = vunpack.c.h.s8.bf16 %v4042
    %v4091 = vunpack.c.h.s8.bf16 %v4043
    %v4092 = vunpack.c.h.s8.bf16 %v4044
    %v4093 = vunpack.c.h.s8.bf16 %v4045
    %v4094 = vunpack.c.l.s8.bf16 %v4046
    %v4095 = vunpack.c.l.s8.bf16 %v4047
    %v4096 = vunpack.c.l.s8.bf16 %v4048
    %v4097 = vunpack.c.l.s8.bf16 %v4049
    %v4098 = vunpack.c.l.s8.bf16 %v4050
    %v4099 = vunpack.c.l.s8.bf16 %v4051
    %v4100 = vunpack.c.l.s8.bf16 %v4052
    %v4101 = vunpack.c.l.s8.bf16 %v4053
    %v4102 = vunpack.c.h.s8.bf16 %v4046
    %v4103 = vunpack.c.h.s8.bf16 %v4047
    %v4104 = vunpack.c.h.s8.bf16 %v4048
    %v4105 = vunpack.c.h.s8.bf16 %v4049
    %v4106 = vunpack.c.h.s8.bf16 %v4050
    %v4107 = vunpack.c.h.s8.bf16 %v4051
    %v4108 = vunpack.c.h.s8.bf16 %v4052
    %v4109 = vunpack.c.h.s8.bf16 %v4053
    %v4110 = vunpack.c.l.s8.bf16 %v4054
    %v4111 = vunpack.c.l.s8.bf16 %v4055
    %v4112 = vunpack.c.l.s8.bf16 %v4056
    %v4113 = vunpack.c.l.s8.bf16 %v4057
    %v4114 = vunpack.c.l.s8.bf16 %v4058
    %v4115 = vunpack.c.l.s8.bf16 %v4059
    %v4116 = vunpack.c.l.s8.bf16 %v4060
    %v4117 = vunpack.c.l.s8.bf16 %v4061
    %v4118 = vunpack.c.h.s8.bf16 %v4054
    %v4119 = vunpack.c.h.s8.bf16 %v4055
    %v4120 = vunpack.c.h.s8.bf16 %v4056
    %v4121 = vunpack.c.h.s8.bf16 %v4057
    %v4122 = vunpack.c.h.s8.bf16 %v4058
    %v4123 = vunpack.c.h.s8.bf16 %v4059
    %v4124 = vunpack.c.h.s8.bf16 %v4060
    %v4125 = vunpack.c.h.s8.bf16 %v4061
    %v4126 = vrot.slane %v2756, 5
    %v4127 = vrot.slane %v2757, 4
    %v4128 = vsel %vm675, %v4127, %v4126
    %v4129 = vpack.c.b16 %v4128, %v4128
    %4131 = vmatprep.subr.bf16.mxu0 %v4063
    %4132 = vmatpush1.bf16.msra.mxu0 %v4062
    %4133 = vmatprep.subr.bf16.mxu0 %v4071
    %4134 = vmatpush1.bf16.msra.mxu0 %v4070
    %4135 = vmatprep.subr.bf16.mxu0 %v4079
    %4136 = vmatpush1.bf16.msra.mxu0 %v4078
    %4137 = vmatprep.subr.bf16.mxu0 %v4087
    %4138 = vmatpush1.bf16.msra.mxu0 %v4086
    %4139 = vmatprep.subr.bf16.mxu0 %v4095
    %4140 = vmatpush1.bf16.msra.mxu0 %v4094
    %4141 = vmatprep.subr.bf16.mxu0 %v4103
    %4142 = vmatpush1.bf16.msra.mxu0 %v4102
    %4143 = vmatprep.subr.bf16.mxu0 %v4111
    %4144 = vmatpush1.bf16.msra.mxu0 %v4110
    %4145 = vmatprep.subr.bf16.mxu0 %v4119
    %4146 = vmatpush1.bf16.msra.mxu0 %v4118
    %4147 = vmatprep.subr.bf16.mxu0 0
    %4148 = vmatpush1.bf16.msra.mxu0 0
    %4149 = vmatprep.subr.bf16.mxu0 0
    %4150 = vmatpush1.bf16.msra.mxu0 0
    %4151 = vmatprep.subr.bf16.mxu0 0
    %4152 = vmatpush1.bf16.msra.mxu0 0
    %4153 = vmatprep.subr.bf16.mxu0 0
    %4154 = vmatpush1.bf16.msra.mxu0 0
    %4155 = vmatprep.subr.bf16.mxu0 0
    %4156 = vmatpush1.bf16.msra.mxu0 0
    %4157 = vmatprep.subr.bf16.mxu0 0
    %4158 = vmatpush1.bf16.msra.mxu0 0
    %4159 = vmatprep.subr.bf16.mxu0 0
    %4160 = vmatpush1.bf16.msra.mxu0 0
    %4161 = vmatprep.subr.bf16.mxu0 0
    %4162 = vmatpush1.bf16.msra.mxu0 0
    %4163 = vmatprep.mubr.bf16.mxu0 0
    %4164 = vmatmul.mubr.bf16.gmra.mrb[0].mxu0 %v4129
    %v4165 = vpop.f32.mrb[0].mxu0
    %v4166 = vadd.f32 0.0, %v4165
    %v4167 = vpop.f32.mrb[0].mxu0
    %v4168 = vadd.f32 0.0, %v4167
    %v4169 = vpop.f32.mrb[0].mxu0
    %v4170 = vpop.f32.mrb[0].mxu0
    %4171 = vdwg.mxu0
    %4172 = vmatprep.subr.bf16.mxu0 %v4065
    %4173 = vmatpush1.bf16.msra.mxu0 %v4064
    %4174 = vmatprep.subr.bf16.mxu0 %v4073
    %4175 = vmatpush1.bf16.msra.mxu0 %v4072
    %4176 = vmatprep.subr.bf16.mxu0 %v4081
    %4177 = vmatpush1.bf16.msra.mxu0 %v4080
    %4178 = vmatprep.subr.bf16.mxu0 %v4089
    %4179 = vmatpush1.bf16.msra.mxu0 %v4088
    %4180 = vmatprep.subr.bf16.mxu0 %v4097
    %4181 = vmatpush1.bf16.msra.mxu0 %v4096
    %4182 = vmatprep.subr.bf16.mxu0 %v4105
    %4183 = vmatpush1.bf16.msra.mxu0 %v4104
    %4184 = vmatprep.subr.bf16.mxu0 %v4113
    %4185 = vmatpush1.bf16.msra.mxu0 %v4112
    %4186 = vmatprep.subr.bf16.mxu0 %v4121
    %4187 = vmatpush1.bf16.msra.mxu0 %v4120
    %4188 = vmatprep.subr.bf16.mxu0 0
    %4189 = vmatpush1.bf16.msra.mxu0 0
    %4190 = vmatprep.subr.bf16.mxu0 0
    %4191 = vmatpush1.bf16.msra.mxu0 0
    %4192 = vmatprep.subr.bf16.mxu0 0
    %4193 = vmatpush1.bf16.msra.mxu0 0
    %4194 = vmatprep.subr.bf16.mxu0 0
    %4195 = vmatpush1.bf16.msra.mxu0 0
    %4196 = vmatprep.subr.bf16.mxu0 0
    %4197 = vmatpush1.bf16.msra.mxu0 0
    %4198 = vmatprep.subr.bf16.mxu0 0
    %4199 = vmatpush1.bf16.msra.mxu0 0
    %4200 = vmatprep.subr.bf16.mxu0 0
    %4201 = vmatpush1.bf16.msra.mxu0 0
    %4202 = vmatprep.subr.bf16.mxu0 0
    %4203 = vmatpush1.bf16.msra.mxu0 0
    %4204 = vmatprep.mubr.bf16.mxu0 0
    %4205 = vmatmul.mubr.bf16.gmra.mrb[0].mxu0 %v4129
    %v4206 = vpop.f32.mrb[0].mxu0
    %v4207 = vadd.f32 0.0, %v4206
    %v4208 = vpop.f32.mrb[0].mxu0
    %v4209 = vadd.f32 0.0, %v4208
    %v4210 = vpop.f32.mrb[0].mxu0
    %v4211 = vpop.f32.mrb[0].mxu0
    %4212 = vdwg.mxu0
    %4213 = vmatprep.subr.bf16.mxu0 %v4067
    %4214 = vmatpush1.bf16.msra.mxu0 %v4066
    %4215 = vmatprep.subr.bf16.mxu0 %v4075
    %4216 = vmatpush1.bf16.msra.mxu0 %v4074
    %4217 = vmatprep.subr.bf16.mxu0 %v4083
    %4218 = vmatpush1.bf16.msra.mxu0 %v4082
    %4219 = vmatprep.subr.bf16.mxu0 %v4091
    %4220 = vmatpush1.bf16.msra.mxu0 %v4090
    %4221 = vmatprep.subr.bf16.mxu0 %v4099
    %4222 = vmatpush1.bf16.msra.mxu0 %v4098
    %4223 = vmatprep.subr.bf16.mxu0 %v4107
    %4224 = vmatpush1.bf16.msra.mxu0 %v4106
    %4225 = vmatprep.subr.bf16.mxu0 %v4115
    %4226 = vmatpush1.bf16.msra.mxu0 %v4114
    %4227 = vmatprep.subr.bf16.mxu0 %v4123
    %4228 = vmatpush1.bf16.msra.mxu0 %v4122
    %4229 = vmatprep.subr.bf16.mxu0 0
    %4230 = vmatpush1.bf16.msra.mxu0 0
    %4231 = vmatprep.subr.bf16.mxu0 0
    %4232 = vmatpush1.bf16.msra.mxu0 0
    %4233 = vmatprep.subr.bf16.mxu0 0
    %4234 = vmatpush1.bf16.msra.mxu0 0
    %4235 = vmatprep.subr.bf16.mxu0 0
    %4236 = vmatpush1.bf16.msra.mxu0 0
    %4237 = vmatprep.subr.bf16.mxu0 0
    %4238 = vmatpush1.bf16.msra.mxu0 0
    %4239 = vmatprep.subr.bf16.mxu0 0
    %4240 = vmatpush1.bf16.msra.mxu0 0
    %4241 = vmatprep.subr.bf16.mxu0 0
    %4242 = vmatpush1.bf16.msra.mxu0 0
    %4243 = vmatprep.subr.bf16.mxu0 0
    %4244 = vmatpush1.bf16.msra.mxu0 0
    %4245 = vmatprep.mubr.bf16.mxu0 0
    %4246 = vmatmul.mubr.bf16.gmra.mrb[0].mxu0 %v4129
    %v4247 = vpop.f32.mrb[0].mxu0
    %v4248 = vadd.f32 0.0, %v4247
    %v4249 = vpop.f32.mrb[0].mxu0
    %v4250 = vadd.f32 0.0, %v4249
    %v4251 = vpop.f32.mrb[0].mxu0
    %v4252 = vpop.f32.mrb[0].mxu0
    %4253 = vdwg.mxu0
    %4254 = vmatprep.subr.bf16.mxu0 %v4069
    %4255 = vmatpush1.bf16.msra.mxu0 %v4068
    %4256 = vmatprep.subr.bf16.mxu0 %v4077
    %4257 = vmatpush1.bf16.msra.mxu0 %v4076
    %4258 = vmatprep.subr.bf16.mxu0 %v4085
    %4259 = vmatpush1.bf16.msra.mxu0 %v4084
    %4260 = vmatprep.subr.bf16.mxu0 %v4093
    %4261 = vmatpush1.bf16.msra.mxu0 %v4092
    %4262 = vmatprep.subr.bf16.mxu0 %v4101
    %4263 = vmatpush1.bf16.msra.mxu0 %v4100
    %4264 = vmatprep.subr.bf16.mxu0 %v4109
    %4265 = vmatpush1.bf16.msra.mxu0 %v4108
    %4266 = vmatprep.subr.bf16.mxu0 %v4117
    %4267 = vmatpush1.bf16.msra.mxu0 %v4116
    %4268 = vmatprep.subr.bf16.mxu0 %v4125
    %4269 = vmatpush1.bf16.msra.mxu0 %v4124
    %4270 = vmatprep.subr.bf16.mxu0 0
    %4271 = vmatpush1.bf16.msra.mxu0 0
    %4272 = vmatprep.subr.bf16.mxu0 0
    %4273 = vmatpush1.bf16.msra.mxu0 0
    %4274 = vmatprep.subr.bf16.mxu0 0
    %4275 = vmatpush1.bf16.msra.mxu0 0
    %4276 = vmatprep.subr.bf16.mxu0 0
    %4277 = vmatpush1.bf16.msra.mxu0 0
    %4278 = vmatprep.subr.bf16.mxu0 0
    %4279 = vmatpush1.bf16.msra.mxu0 0
    %4280 = vmatprep.subr.bf16.mxu0 0
    %4281 = vmatpush1.bf16.msra.mxu0 0
    %4282 = vmatprep.subr.bf16.mxu0 0
    %4283 = vmatpush1.bf16.msra.mxu0 0
    %4284 = vmatprep.subr.bf16.mxu0 0
    %4285 = vmatpush1.bf16.msra.mxu0 0
    %4286 = vmatprep.mubr.bf16.mxu0 0
    %4287 = vmatmul.mubr.bf16.gmra.mrb[0].mxu0 %v4129
    %v4288 = vpop.f32.mrb[0].mxu0
    %v4289 = vadd.f32 0.0, %v4288
    %v4290 = vpop.f32.mrb[0].mxu0
    %v4291 = vadd.f32 0.0, %v4290
    %v4292 = vpop.f32.mrb[0].mxu0
    %v4293 = vpop.f32.mrb[0].mxu0
    %4294 = vdwg.mxu0
    %v4295 = vadd.f32 %v4021, %v4166
    %v4296 = vadd.f32 %v4022, %v4168
    %v4297 = vadd.f32 %v4023, %v4207
    %v4298 = vadd.f32 %v4024, %v4209
    %v4299 = vadd.f32 %v4025, %v4248
    %v4300 = vadd.f32 %v4026, %v4250
    %v4301 = vadd.f32 %v4027, %v4289
    %v4302 = vadd.f32 %v4028, %v4291
    %s4303 = scalar_lea.vmem [#allocation8], 3584
    %v4304 = vld [vmem:[%s4303] sm:$0xff]
    %v4305 = vld [vmem:[%s4303 + $0x8] sm:$0xff]
    %v4306 = vld [vmem:[%s4303 + $0x10] sm:$0xff]
    %v4307 = vld [vmem:[%s4303 + $0x18] sm:$0xff]
    %v4308 = vld [vmem:[%s4303 + $0x20] sm:$0xff]
    %v4309 = vld [vmem:[%s4303 + $0x28] sm:$0xff]
    %v4310 = vld [vmem:[%s4303 + $0x30] sm:$0xff]
    %v4311 = vld [vmem:[%s4303 + $0x38] sm:$0xff]
    %v4312 = vld [vmem:[%s4303 + $0x40] sm:$0xff]
    %v4313 = vld [vmem:[%s4303 + $0x48] sm:$0xff]
    %v4314 = vld [vmem:[%s4303 + $0x50] sm:$0xff]
    %v4315 = vld [vmem:[%s4303 + $0x58] sm:$0xff]
    %v4316 = vld [vmem:[%s4303 + $0x60] sm:$0xff]
    %v4317 = vld [vmem:[%s4303 + $0x68] sm:$0xff]
    %v4318 = vld [vmem:[%s4303 + $0x70] sm:$0xff]
    %v4319 = vld [vmem:[%s4303 + $0x78] sm:$0xff]
    %v4320 = vld [vmem:[%s4303 + $0x80] sm:$0xff]
    %v4321 = vld [vmem:[%s4303 + $0x88] sm:$0xff]
    %v4322 = vld [vmem:[%s4303 + $0x90] sm:$0xff]
    %v4323 = vld [vmem:[%s4303 + $0x98] sm:$0xff]
    %v4324 = vld [vmem:[%s4303 + $0xa0] sm:$0xff]
    %v4325 = vld [vmem:[%s4303 + $0xa8] sm:$0xff]
    %v4326 = vld [vmem:[%s4303 + $0xb0] sm:$0xff]
    %v4327 = vld [vmem:[%s4303 + $0xb8] sm:$0xff]
    %v4328 = vld [vmem:[%s4303 + $0xc0] sm:$0xff]
    %v4329 = vld [vmem:[%s4303 + $0xc8] sm:$0xff]
    %v4330 = vld [vmem:[%s4303 + $0xd0] sm:$0xff]
    %v4331 = vld [vmem:[%s4303 + $0xd8] sm:$0xff]
    %v4332 = vld [vmem:[%s4303 + $0xe0] sm:$0xff]
    %v4333 = vld [vmem:[%s4303 + $0xe8] sm:$0xff]
    %v4334 = vld [vmem:[%s4303 + $0xf0] sm:$0xff]
    %v4335 = vld [vmem:[%s4303 + $0xf8] sm:$0xff]
    %v4336 = vunpack.c.l.s8.bf16 %v4304
    %v4337 = vunpack.c.l.s8.bf16 %v4305
    %v4338 = vunpack.c.l.s8.bf16 %v4306
    %v4339 = vunpack.c.l.s8.bf16 %v4307
    %v4340 = vunpack.c.l.s8.bf16 %v4308
    %v4341 = vunpack.c.l.s8.bf16 %v4309
    %v4342 = vunpack.c.l.s8.bf16 %v4310
    %v4343 = vunpack.c.l.s8.bf16 %v4311
    %v4344 = vunpack.c.h.s8.bf16 %v4304
    %v4345 = vunpack.c.h.s8.bf16 %v4305
    %v4346 = vunpack.c.h.s8.bf16 %v4306
    %v4347 = vunpack.c.h.s8.bf16 %v4307
    %v4348 = vunpack.c.h.s8.bf16 %v4308
    %v4349 = vunpack.c.h.s8.bf16 %v4309
    %v4350 = vunpack.c.h.s8.bf16 %v4310
    %v4351 = vunpack.c.h.s8.bf16 %v4311
    %v4352 = vunpack.c.l.s8.bf16 %v4312
    %v4353 = vunpack.c.l.s8.bf16 %v4313
    %v4354 = vunpack.c.l.s8.bf16 %v4314
    %v4355 = vunpack.c.l.s8.bf16 %v4315
    %v4356 = vunpack.c.l.s8.bf16 %v4316
    %v4357 = vunpack.c.l.s8.bf16 %v4317
    %v4358 = vunpack.c.l.s8.bf16 %v4318
    %v4359 = vunpack.c.l.s8.bf16 %v4319
    %v4360 = vunpack.c.h.s8.bf16 %v4312
    %v4361 = vunpack.c.h.s8.bf16 %v4313
    %v4362 = vunpack.c.h.s8.bf16 %v4314
    %v4363 = vunpack.c.h.s8.bf16 %v4315
    %v4364 = vunpack.c.h.s8.bf16 %v4316
    %v4365 = vunpack.c.h.s8.bf16 %v4317
    %v4366 = vunpack.c.h.s8.bf16 %v4318
    %v4367 = vunpack.c.h.s8.bf16 %v4319
    %v4368 = vunpack.c.l.s8.bf16 %v4320
    %v4369 = vunpack.c.l.s8.bf16 %v4321
    %v4370 = vunpack.c.l.s8.bf16 %v4322
    %v4371 = vunpack.c.l.s8.bf16 %v4323
    %v4372 = vunpack.c.l.s8.bf16 %v4324
    %v4373 = vunpack.c.l.s8.bf16 %v4325
    %v4374 = vunpack.c.l.s8.bf16 %v4326
    %v4375 = vunpack.c.l.s8.bf16 %v4327
    %v4376 = vunpack.c.h.s8.bf16 %v4320
    %v4377 = vunpack.c.h.s8.bf16 %v4321
    %v4378 = vunpack.c.h.s8.bf16 %v4322
    %v4379 = vunpack.c.h.s8.bf16 %v4323
    %v4380 = vunpack.c.h.s8.bf16 %v4324
    %v4381 = vunpack.c.h.s8.bf16 %v4325
    %v4382 = vunpack.c.h.s8.bf16 %v4326
    %v4383 = vunpack.c.h.s8.bf16 %v4327
    %v4384 = vunpack.c.l.s8.bf16 %v4328
    %v4385 = vunpack.c.l.s8.bf16 %v4329
    %v4386 = vunpack.c.l.s8.bf16 %v4330
    %v4387 = vunpack.c.l.s8.bf16 %v4331
    %v4388 = vunpack.c.l.s8.bf16 %v4332
    %v4389 = vunpack.c.l.s8.bf16 %v4333
    %v4390 = vunpack.c.l.s8.bf16 %v4334
    %v4391 = vunpack.c.l.s8.bf16 %v4335
    %v4392 = vunpack.c.h.s8.bf16 %v4328
    %v4393 = vunpack.c.h.s8.bf16 %v4329
    %v4394 = vunpack.c.h.s8.bf16 %v4330
    %v4395 = vunpack.c.h.s8.bf16 %v4331
    %v4396 = vunpack.c.h.s8.bf16 %v4332
    %v4397 = vunpack.c.h.s8.bf16 %v4333
    %v4398 = vunpack.c.h.s8.bf16 %v4334
    %v4399 = vunpack.c.h.s8.bf16 %v4335
    %v4400 = vrot.slane %v2756, 6
    %v4401 = vrot.slane %v2757, 5
    %v4402 = vsel %vm675, %v4401, %v4400
    %v4403 = vpack.c.b16 %v4402, %v4402
    %4405 = vmatprep.subr.bf16.mxu0 %v4337
    %4406 = vmatpush1.bf16.msra.mxu0 %v4336
    %4407 = vmatprep.subr.bf16.mxu0 %v4345
    %4408 = vmatpush1.bf16.msra.mxu0 %v4344
    %4409 = vmatprep.subr.bf16.mxu0 %v4353
    %4410 = vmatpush1.bf16.msra.mxu0 %v4352
    %4411 = vmatprep.subr.bf16.mxu0 %v4361
    %4412 = vmatpush1.bf16.msra.mxu0 %v4360
    %4413 = vmatprep.subr.bf16.mxu0 %v4369
    %4414 = vmatpush1.bf16.msra.mxu0 %v4368
    %4415 = vmatprep.subr.bf16.mxu0 %v4377
    %4416 = vmatpush1.bf16.msra.mxu0 %v4376
    %4417 = vmatprep.subr.bf16.mxu0 %v4385
    %4418 = vmatpush1.bf16.msra.mxu0 %v4384
    %4419 = vmatprep.subr.bf16.mxu0 %v4393
    %4420 = vmatpush1.bf16.msra.mxu0 %v4392
    %4421 = vmatprep.subr.bf16.mxu0 0
    %4422 = vmatpush1.bf16.msra.mxu0 0
    %4423 = vmatprep.subr.bf16.mxu0 0
    %4424 = vmatpush1.bf16.msra.mxu0 0
    %4425 = vmatprep.subr.bf16.mxu0 0
    %4426 = vmatpush1.bf16.msra.mxu0 0
    %4427 = vmatprep.subr.bf16.mxu0 0
    %4428 = vmatpush1.bf16.msra.mxu0 0
    %4429 = vmatprep.subr.bf16.mxu0 0
    %4430 = vmatpush1.bf16.msra.mxu0 0
    %4431 = vmatprep.subr.bf16.mxu0 0
    %4432 = vmatpush1.bf16.msra.mxu0 0
    %4433 = vmatprep.subr.bf16.mxu0 0
    %4434 = vmatpush1.bf16.msra.mxu0 0
    %4435 = vmatprep.subr.bf16.mxu0 0
    %4436 = vmatpush1.bf16.msra.mxu0 0
    %4437 = vmatprep.mubr.bf16.mxu0 0
    %4438 = vmatmul.mubr.bf16.gmra.mrb[0].mxu0 %v4403
    %v4439 = vpop.f32.mrb[0].mxu0
    %v4440 = vadd.f32 0.0, %v4439
    %v4441 = vpop.f32.mrb[0].mxu0
    %v4442 = vadd.f32 0.0, %v4441
    %v4443 = vpop.f32.mrb[0].mxu0
    %v4444 = vpop.f32.mrb[0].mxu0
    %4445 = vdwg.mxu0
    %4446 = vmatprep.subr.bf16.mxu0 %v4339
    %4447 = vmatpush1.bf16.msra.mxu0 %v4338
    %4448 = vmatprep.subr.bf16.mxu0 %v4347
    %4449 = vmatpush1.bf16.msra.mxu0 %v4346
    %4450 = vmatprep.subr.bf16.mxu0 %v4355
    %4451 = vmatpush1.bf16.msra.mxu0 %v4354
    %4452 = vmatprep.subr.bf16.mxu0 %v4363
    %4453 = vmatpush1.bf16.msra.mxu0 %v4362
    %4454 = vmatprep.subr.bf16.mxu0 %v4371
    %4455 = vmatpush1.bf16.msra.mxu0 %v4370
    %4456 = vmatprep.subr.bf16.mxu0 %v4379
    %4457 = vmatpush1.bf16.msra.mxu0 %v4378
    %4458 = vmatprep.subr.bf16.mxu0 %v4387
    %4459 = vmatpush1.bf16.msra.mxu0 %v4386
    %4460 = vmatprep.subr.bf16.mxu0 %v4395
    %4461 = vmatpush1.bf16.msra.mxu0 %v4394
    %4462 = vmatprep.subr.bf16.mxu0 0
    %4463 = vmatpush1.bf16.msra.mxu0 0
    %4464 = vmatprep.subr.bf16.mxu0 0
    %4465 = vmatpush1.bf16.msra.mxu0 0
    %4466 = vmatprep.subr.bf16.mxu0 0
    %4467 = vmatpush1.bf16.msra.mxu0 0
    %4468 = vmatprep.subr.bf16.mxu0 0
    %4469 = vmatpush1.bf16.msra.mxu0 0
    %4470 = vmatprep.subr.bf16.mxu0 0
    %4471 = vmatpush1.bf16.msra.mxu0 0
    %4472 = vmatprep.subr.bf16.mxu0 0
    %4473 = vmatpush1.bf16.msra.mxu0 0
    %4474 = vmatprep.subr.bf16.mxu0 0
    %4475 = vmatpush1.bf16.msra.mxu0 0
    %4476 = vmatprep.subr.bf16.mxu0 0
    %4477 = vmatpush1.bf16.msra.mxu0 0
    %4478 = vmatprep.mubr.bf16.mxu0 0
    %4479 = vmatmul.mubr.bf16.gmra.mrb[0].mxu0 %v4403
    %v4480 = vpop.f32.mrb[0].mxu0
    %v4481 = vadd.f32 0.0, %v4480
    %v4482 = vpop.f32.mrb[0].mxu0
    %v4483 = vadd.f32 0.0, %v4482
    %v4484 = vpop.f32.mrb[0].mxu0
    %v4485 = vpop.f32.mrb[0].mxu0
    %4486 = vdwg.mxu0
    %4487 = vmatprep.subr.bf16.mxu0 %v4341
    %4488 = vmatpush1.bf16.msra.mxu0 %v4340
    %4489 = vmatprep.subr.bf16.mxu0 %v4349
    %4490 = vmatpush1.bf16.msra.mxu0 %v4348
    %4491 = vmatprep.subr.bf16.mxu0 %v4357
    %4492 = vmatpush1.bf16.msra.mxu0 %v4356
    %4493 = vmatprep.subr.bf16.mxu0 %v4365
    %4494 = vmatpush1.bf16.msra.mxu0 %v4364
    %4495 = vmatprep.subr.bf16.mxu0 %v4373
    %4496 = vmatpush1.bf16.msra.mxu0 %v4372
    %4497 = vmatprep.subr.bf16.mxu0 %v4381
    %4498 = vmatpush1.bf16.msra.mxu0 %v4380
    %4499 = vmatprep.subr.bf16.mxu0 %v4389
    %4500 = vmatpush1.bf16.msra.mxu0 %v4388
    %4501 = vmatprep.subr.bf16.mxu0 %v4397
    %4502 = vmatpush1.bf16.msra.mxu0 %v4396
    %4503 = vmatprep.subr.bf16.mxu0 0
    %4504 = vmatpush1.bf16.msra.mxu0 0
    %4505 = vmatprep.subr.bf16.mxu0 0
    %4506 = vmatpush1.bf16.msra.mxu0 0
    %4507 = vmatprep.subr.bf16.mxu0 0
    %4508 = vmatpush1.bf16.msra.mxu0 0
    %4509 = vmatprep.subr.bf16.mxu0 0
    %4510 = vmatpush1.bf16.msra.mxu0 0
    %4511 = vmatprep.subr.bf16.mxu0 0
    %4512 = vmatpush1.bf16.msra.mxu0 0
    %4513 = vmatprep.subr.bf16.mxu0 0
    %4514 = vmatpush1.bf16.msra.mxu0 0
    %4515 = vmatprep.subr.bf16.mxu0 0
    %4516 = vmatpush1.bf16.msra.mxu0 0
    %4517 = vmatprep.subr.bf16.mxu0 0
    %4518 = vmatpush1.bf16.msra.mxu0 0
    %4519 = vmatprep.mubr.bf16.mxu0 0
    %4520 = vmatmul.mubr.bf16.gmra.mrb[0].mxu0 %v4403
    %v4521 = vpop.f32.mrb[0].mxu0
    %v4522 = vadd.f32 0.0, %v4521
    %v4523 = vpop.f32.mrb[0].mxu0
    %v4524 = vadd.f32 0.0, %v4523
    %v4525 = vpop.f32.mrb[0].mxu0
    %v4526 = vpop.f32.mrb[0].mxu0
    %4527 = vdwg.mxu0
    %4528 = vmatprep.subr.bf16.mxu0 %v4343
    %4529 = vmatpush1.bf16.msra.mxu0 %v4342
    %4530 = vmatprep.subr.bf16.mxu0 %v4351
    %4531 = vmatpush1.bf16.msra.mxu0 %v4350
    %4532 = vmatprep.subr.bf16.mxu0 %v4359
    %4533 = vmatpush1.bf16.msra.mxu0 %v4358
    %4534 = vmatprep.subr.bf16.mxu0 %v4367
    %4535 = vmatpush1.bf16.msra.mxu0 %v4366
    %4536 = vmatprep.subr.bf16.mxu0 %v4375
    %4537 = vmatpush1.bf16.msra.mxu0 %v4374
    %4538 = vmatprep.subr.bf16.mxu0 %v4383
    %4539 = vmatpush1.bf16.msra.mxu0 %v4382
    %4540 = vmatprep.subr.bf16.mxu0 %v4391
    %4541 = vmatpush1.bf16.msra.mxu0 %v4390
    %4542 = vmatprep.subr.bf16.mxu0 %v4399
    %4543 = vmatpush1.bf16.msra.mxu0 %v4398
    %4544 = vmatprep.subr.bf16.mxu0 0
    %4545 = vmatpush1.bf16.msra.mxu0 0
    %4546 = vmatprep.subr.bf16.mxu0 0
    %4547 = vmatpush1.bf16.msra.mxu0 0
    %4548 = vmatprep.subr.bf16.mxu0 0
    %4549 = vmatpush1.bf16.msra.mxu0 0
    %4550 = vmatprep.subr.bf16.mxu0 0
    %4551 = vmatpush1.bf16.msra.mxu0 0
    %4552 = vmatprep.subr.bf16.mxu0 0
    %4553 = vmatpush1.bf16.msra.mxu0 0
    %4554 = vmatprep.subr.bf16.mxu0 0
    %4555 = vmatpush1.bf16.msra.mxu0 0
    %4556 = vmatprep.subr.bf16.mxu0 0
    %4557 = vmatpush1.bf16.msra.mxu0 0
    %4558 = vmatprep.subr.bf16.mxu0 0
    %4559 = vmatpush1.bf16.msra.mxu0 0
    %4560 = vmatprep.mubr.bf16.mxu0 0
    %4561 = vmatmul.mubr.bf16.gmra.mrb[0].mxu0 %v4403
    %v4562 = vpop.f32.mrb[0].mxu0
    %v4563 = vadd.f32 0.0, %v4562
    %v4564 = vpop.f32.mrb[0].mxu0
    %v4565 = vadd.f32 0.0, %v4564
    %v4566 = vpop.f32.mrb[0].mxu0
    %v4567 = vpop.f32.mrb[0].mxu0
    %4568 = vdwg.mxu0
    %v4569 = vadd.f32 %v4295, %v4440
    %v4570 = vadd.f32 %v4296, %v4442
    %v4571 = vadd.f32 %v4297, %v4481
    %v4572 = vadd.f32 %v4298, %v4483
    %v4573 = vadd.f32 %v4299, %v4522
    %v4574 = vadd.f32 %v4300, %v4524
    %v4575 = vadd.f32 %v4301, %v4563
    %v4576 = vadd.f32 %v4302, %v4565
    %s4577 = scalar_lea.vmem [#allocation8], 3840
    %v4578 = vld [vmem:[%s4577] sm:$0xff]
    %v4579 = vld [vmem:[%s4577 + $0x8] sm:$0xff]
    %v4580 = vld [vmem:[%s4577 + $0x10] sm:$0xff]
    %v4581 = vld [vmem:[%s4577 + $0x18] sm:$0xff]
    %v4582 = vld [vmem:[%s4577 + $0x20] sm:$0xff]
    %v4583 = vld [vmem:[%s4577 + $0x28] sm:$0xff]
    %v4584 = vld [vmem:[%s4577 + $0x30] sm:$0xff]
    %v4585 = vld [vmem:[%s4577 + $0x38] sm:$0xff]
    %v4586 = vld [vmem:[%s4577 + $0x40] sm:$0xff]
    %v4587 = vld [vmem:[%s4577 + $0x48] sm:$0xff]
    %v4588 = vld [vmem:[%s4577 + $0x50] sm:$0xff]
    %v4589 = vld [vmem:[%s4577 + $0x58] sm:$0xff]
    %v4590 = vld [vmem:[%s4577 + $0x60] sm:$0xff]
    %v4591 = vld [vmem:[%s4577 + $0x68] sm:$0xff]
    %v4592 = vld [vmem:[%s4577 + $0x70] sm:$0xff]
    %v4593 = vld [vmem:[%s4577 + $0x78] sm:$0xff]
    %v4594 = vld [vmem:[%s4577 + $0x80] sm:$0xff]
    %v4595 = vld [vmem:[%s4577 + $0x88] sm:$0xff]
    %v4596 = vld [vmem:[%s4577 + $0x90] sm:$0xff]
    %v4597 = vld [vmem:[%s4577 + $0x98] sm:$0xff]
    %v4598 = vld [vmem:[%s4577 + $0xa0] sm:$0xff]
    %v4599 = vld [vmem:[%s4577 + $0xa8] sm:$0xff]
    %v4600 = vld [vmem:[%s4577 + $0xb0] sm:$0xff]
    %v4601 = vld [vmem:[%s4577 + $0xb8] sm:$0xff]
    %v4602 = vld [vmem:[%s4577 + $0xc0] sm:$0xff]
    %v4603 = vld [vmem:[%s4577 + $0xc8] sm:$0xff]
    %v4604 = vld [vmem:[%s4577 + $0xd0] sm:$0xff]
    %v4605 = vld [vmem:[%s4577 + $0xd8] sm:$0xff]
    %v4606 = vld [vmem:[%s4577 + $0xe0] sm:$0xff]
    %v4607 = vld [vmem:[%s4577 + $0xe8] sm:$0xff]
    %v4608 = vld [vmem:[%s4577 + $0xf0] sm:$0xff]
    %v4609 = vld [vmem:[%s4577 + $0xf8] sm:$0xff]
    %v4610 = vunpack.c.l.s8.bf16 %v4578
    %v4611 = vunpack.c.l.s8.bf16 %v4579
    %v4612 = vunpack.c.l.s8.bf16 %v4580
    %v4613 = vunpack.c.l.s8.bf16 %v4581
    %v4614 = vunpack.c.l.s8.bf16 %v4582
    %v4615 = vunpack.c.l.s8.bf16 %v4583
    %v4616 = vunpack.c.l.s8.bf16 %v4584
    %v4617 = vunpack.c.l.s8.bf16 %v4585
    %v4618 = vunpack.c.h.s8.bf16 %v4578
    %v4619 = vunpack.c.h.s8.bf16 %v4579
    %v4620 = vunpack.c.h.s8.bf16 %v4580
    %v4621 = vunpack.c.h.s8.bf16 %v4581
    %v4622 = vunpack.c.h.s8.bf16 %v4582
    %v4623 = vunpack.c.h.s8.bf16 %v4583
    %v4624 = vunpack.c.h.s8.bf16 %v4584
    %v4625 = vunpack.c.h.s8.bf16 %v4585
    %v4626 = vunpack.c.l.s8.bf16 %v4586
    %v4627 = vunpack.c.l.s8.bf16 %v4587
    %v4628 = vunpack.c.l.s8.bf16 %v4588
    %v4629 = vunpack.c.l.s8.bf16 %v4589
    %v4630 = vunpack.c.l.s8.bf16 %v4590
    %v4631 = vunpack.c.l.s8.bf16 %v4591
    %v4632 = vunpack.c.l.s8.bf16 %v4592
    %v4633 = vunpack.c.l.s8.bf16 %v4593
    %v4634 = vunpack.c.h.s8.bf16 %v4586
    %v4635 = vunpack.c.h.s8.bf16 %v4587
    %v4636 = vunpack.c.h.s8.bf16 %v4588
    %v4637 = vunpack.c.h.s8.bf16 %v4589
    %v4638 = vunpack.c.h.s8.bf16 %v4590
    %v4639 = vunpack.c.h.s8.bf16 %v4591
    %v4640 = vunpack.c.h.s8.bf16 %v4592
    %v4641 = vunpack.c.h.s8.bf16 %v4593
    %v4642 = vunpack.c.l.s8.bf16 %v4594
    %v4643 = vunpack.c.l.s8.bf16 %v4595
    %v4644 = vunpack.c.l.s8.bf16 %v4596
    %v4645 = vunpack.c.l.s8.bf16 %v4597
    %v4646 = vunpack.c.l.s8.bf16 %v4598
    %v4647 = vunpack.c.l.s8.bf16 %v4599
    %v4648 = vunpack.c.l.s8.bf16 %v4600
    %v4649 = vunpack.c.l.s8.bf16 %v4601
    %v4650 = vunpack.c.h.s8.bf16 %v4594
    %v4651 = vunpack.c.h.s8.bf16 %v4595
    %v4652 = vunpack.c.h.s8.bf16 %v4596
    %v4653 = vunpack.c.h.s8.bf16 %v4597
    %v4654 = vunpack.c.h.s8.bf16 %v4598
    %v4655 = vunpack.c.h.s8.bf16 %v4599
    %v4656 = vunpack.c.h.s8.bf16 %v4600
    %v4657 = vunpack.c.h.s8.bf16 %v4601
    %v4658 = vunpack.c.l.s8.bf16 %v4602
    %v4659 = vunpack.c.l.s8.bf16 %v4603
    %v4660 = vunpack.c.l.s8.bf16 %v4604
    %v4661 = vunpack.c.l.s8.bf16 %v4605
    %v4662 = vunpack.c.l.s8.bf16 %v4606
    %v4663 = vunpack.c.l.s8.bf16 %v4607
    %v4664 = vunpack.c.l.s8.bf16 %v4608
    %v4665 = vunpack.c.l.s8.bf16 %v4609
    %v4666 = vunpack.c.h.s8.bf16 %v4602
    %v4667 = vunpack.c.h.s8.bf16 %v4603
    %v4668 = vunpack.c.h.s8.bf16 %v4604
    %v4669 = vunpack.c.h.s8.bf16 %v4605
    %v4670 = vunpack.c.h.s8.bf16 %v4606
    %v4671 = vunpack.c.h.s8.bf16 %v4607
    %v4672 = vunpack.c.h.s8.bf16 %v4608
    %v4673 = vunpack.c.h.s8.bf16 %v4609
    %v4674 = vrot.slane %v2756, 7
    %v4675 = vrot.slane %v2757, 6
    %v4676 = vsel %vm675, %v4675, %v4674
    %v4677 = vpack.c.b16 %v4676, %v4676
    %4679 = vmatprep.subr.bf16.mxu0 %v4611
    %4680 = vmatpush1.bf16.msra.mxu0 %v4610
    %4681 = vmatprep.subr.bf16.mxu0 %v4619
    %4682 = vmatpush1.bf16.msra.mxu0 %v4618
    %4683 = vmatprep.subr.bf16.mxu0 %v4627
    %4684 = vmatpush1.bf16.msra.mxu0 %v4626
    %4685 = vmatprep.subr.bf16.mxu0 %v4635
    %4686 = vmatpush1.bf16.msra.mxu0 %v4634
    %4687 = vmatprep.subr.bf16.mxu0 %v4643
    %4688 = vmatpush1.bf16.msra.mxu0 %v4642
    %4689 = vmatprep.subr.bf16.mxu0 %v4651
    %4690 = vmatpush1.bf16.msra.mxu0 %v4650
    %4691 = vmatprep.subr.bf16.mxu0 %v4659
    %4692 = vmatpush1.bf16.msra.mxu0 %v4658
    %4693 = vmatprep.subr.bf16.mxu0 %v4667
    %4694 = vmatpush1.bf16.msra.mxu0 %v4666
    %4695 = vmatprep.subr.bf16.mxu0 0
    %4696 = vmatpush1.bf16.msra.mxu0 0
    %4697 = vmatprep.subr.bf16.mxu0 0
    %4698 = vmatpush1.bf16.msra.mxu0 0
    %4699 = vmatprep.subr.bf16.mxu0 0
    %4700 = vmatpush1.bf16.msra.mxu0 0
    %4701 = vmatprep.subr.bf16.mxu0 0
    %4702 = vmatpush1.bf16.msra.mxu0 0
    %4703 = vmatprep.subr.bf16.mxu0 0
    %4704 = vmatpush1.bf16.msra.mxu0 0
    %4705 = vmatprep.subr.bf16.mxu0 0
    %4706 = vmatpush1.bf16.msra.mxu0 0
    %4707 = vmatprep.subr.bf16.mxu0 0
    %4708 = vmatpush1.bf16.msra.mxu0 0
    %4709 = vmatprep.subr.bf16.mxu0 0
    %4710 = vmatpush1.bf16.msra.mxu0 0
    %4711 = vmatprep.mubr.bf16.mxu0 0
    %4712 = vmatmul.mubr.bf16.gmra.mrb[0].mxu0 %v4677
    %v4713 = vpop.f32.mrb[0].mxu0
    %v4714 = vadd.f32 0.0, %v4713
    %v4715 = vpop.f32.mrb[0].mxu0
    %v4716 = vadd.f32 0.0, %v4715
    %v4717 = vpop.f32.mrb[0].mxu0
    %v4718 = vpop.f32.mrb[0].mxu0
    %4719 = vdwg.mxu0
    %4720 = vmatprep.subr.bf16.mxu0 %v4613
    %4721 = vmatpush1.bf16.msra.mxu0 %v4612
    %4722 = vmatprep.subr.bf16.mxu0 %v4621
    %4723 = vmatpush1.bf16.msra.mxu0 %v4620
    %4724 = vmatprep.subr.bf16.mxu0 %v4629
    %4725 = vmatpush1.bf16.msra.mxu0 %v4628
    %4726 = vmatprep.subr.bf16.mxu0 %v4637
    %4727 = vmatpush1.bf16.msra.mxu0 %v4636
    %4728 = vmatprep.subr.bf16.mxu0 %v4645
    %4729 = vmatpush1.bf16.msra.mxu0 %v4644
    %4730 = vmatprep.subr.bf16.mxu0 %v4653
    %4731 = vmatpush1.bf16.msra.mxu0 %v4652
    %4732 = vmatprep.subr.bf16.mxu0 %v4661
    %4733 = vmatpush1.bf16.msra.mxu0 %v4660
    %4734 = vmatprep.subr.bf16.mxu0 %v4669
    %4735 = vmatpush1.bf16.msra.mxu0 %v4668
    %4736 = vmatprep.subr.bf16.mxu0 0
    %4737 = vmatpush1.bf16.msra.mxu0 0
    %4738 = vmatprep.subr.bf16.mxu0 0
    %4739 = vmatpush1.bf16.msra.mxu0 0
    %4740 = vmatprep.subr.bf16.mxu0 0
    %4741 = vmatpush1.bf16.msra.mxu0 0
    %4742 = vmatprep.subr.bf16.mxu0 0
    %4743 = vmatpush1.bf16.msra.mxu0 0
    %4744 = vmatprep.subr.bf16.mxu0 0
    %4745 = vmatpush1.bf16.msra.mxu0 0
    %4746 = vmatprep.subr.bf16.mxu0 0
    %4747 = vmatpush1.bf16.msra.mxu0 0
    %4748 = vmatprep.subr.bf16.mxu0 0
    %4749 = vmatpush1.bf16.msra.mxu0 0
    %4750 = vmatprep.subr.bf16.mxu0 0
    %4751 = vmatpush1.bf16.msra.mxu0 0
    %4752 = vmatprep.mubr.bf16.mxu0 0
    %4753 = vmatmul.mubr.bf16.gmra.mrb[0].mxu0 %v4677
    %v4754 = vpop.f32.mrb[0].mxu0
    %v4755 = vadd.f32 0.0, %v4754
    %v4756 = vpop.f32.mrb[0].mxu0
    %v4757 = vadd.f32 0.0, %v4756
    %v4758 = vpop.f32.mrb[0].mxu0
    %v4759 = vpop.f32.mrb[0].mxu0
    %4760 = vdwg.mxu0
    %4761 = vmatprep.subr.bf16.mxu0 %v4615
    %4762 = vmatpush1.bf16.msra.mxu0 %v4614
    %4763 = vmatprep.subr.bf16.mxu0 %v4623
    %4764 = vmatpush1.bf16.msra.mxu0 %v4622
    %4765 = vmatprep.subr.bf16.mxu0 %v4631
    %4766 = vmatpush1.bf16.msra.mxu0 %v4630
    %4767 = vmatprep.subr.bf16.mxu0 %v4639
    %4768 = vmatpush1.bf16.msra.mxu0 %v4638
    %4769 = vmatprep.subr.bf16.mxu0 %v4647
    %4770 = vmatpush1.bf16.msra.mxu0 %v4646
    %4771 = vmatprep.subr.bf16.mxu0 %v4655
    %4772 = vmatpush1.bf16.msra.mxu0 %v4654
    %4773 = vmatprep.subr.bf16.mxu0 %v4663
    %4774 = vmatpush1.bf16.msra.mxu0 %v4662
    %4775 = vmatprep.subr.bf16.mxu0 %v4671
    %4776 = vmatpush1.bf16.msra.mxu0 %v4670
    %4777 = vmatprep.subr.bf16.mxu0 0
    %4778 = vmatpush1.bf16.msra.mxu0 0
    %4779 = vmatprep.subr.bf16.mxu0 0
    %4780 = vmatpush1.bf16.msra.mxu0 0
    %4781 = vmatprep.subr.bf16.mxu0 0
    %4782 = vmatpush1.bf16.msra.mxu0 0
    %4783 = vmatprep.subr.bf16.mxu0 0
    %4784 = vmatpush1.bf16.msra.mxu0 0
    %4785 = vmatprep.subr.bf16.mxu0 0
    %4786 = vmatpush1.bf16.msra.mxu0 0
    %4787 = vmatprep.subr.bf16.mxu0 0
    %4788 = vmatpush1.bf16.msra.mxu0 0
    %4789 = vmatprep.subr.bf16.mxu0 0
    %4790 = vmatpush1.bf16.msra.mxu0 0
    %4791 = vmatprep.subr.bf16.mxu0 0
    %4792 = vmatpush1.bf16.msra.mxu0 0
    %4793 = vmatprep.mubr.bf16.mxu0 0
    %4794 = vmatmul.mubr.bf16.gmra.mrb[0].mxu0 %v4677
    %v4795 = vpop.f32.mrb[0].mxu0
    %v4796 = vadd.f32 0.0, %v4795
    %v4797 = vpop.f32.mrb[0].mxu0
    %v4798 = vadd.f32 0.0, %v4797
    %v4799 = vpop.f32.mrb[0].mxu0
    %v4800 = vpop.f32.mrb[0].mxu0
    %4801 = vdwg.mxu0
    %4802 = vmatprep.subr.bf16.mxu0 %v4617
    %4803 = vmatpush1.bf16.msra.mxu0 %v4616
    %4804 = vmatprep.subr.bf16.mxu0 %v4625
    %4805 = vmatpush1.bf16.msra.mxu0 %v4624
    %4806 = vmatprep.subr.bf16.mxu0 %v4633
    %4807 = vmatpush1.bf16.msra.mxu0 %v4632
    %4808 = vmatprep.subr.bf16.mxu0 %v4641
    %4809 = vmatpush1.bf16.msra.mxu0 %v4640
    %4810 = vmatprep.subr.bf16.mxu0 %v4649
    %4811 = vmatpush1.bf16.msra.mxu0 %v4648
    %4812 = vmatprep.subr.bf16.mxu0 %v4657
    %4813 = vmatpush1.bf16.msra.mxu0 %v4656
    %4814 = vmatprep.subr.bf16.mxu0 %v4665
    %4815 = vmatpush1.bf16.msra.mxu0 %v4664
    %4816 = vmatprep.subr.bf16.mxu0 %v4673
    %4817 = vmatpush1.bf16.msra.mxu0 %v4672
    %4818 = vmatprep.subr.bf16.mxu0 0
    %4819 = vmatpush1.bf16.msra.mxu0 0
    %4820 = vmatprep.subr.bf16.mxu0 0
    %4821 = vmatpush1.bf16.msra.mxu0 0
    %4822 = vmatprep.subr.bf16.mxu0 0
    %4823 = vmatpush1.bf16.msra.mxu0 0
    %4824 = vmatprep.subr.bf16.mxu0 0
    %4825 = vmatpush1.bf16.msra.mxu0 0
    %4826 = vmatprep.subr.bf16.mxu0 0
    %4827 = vmatpush1.bf16.msra.mxu0 0
    %4828 = vmatprep.subr.bf16.mxu0 0
    %4829 = vmatpush1.bf16.msra.mxu0 0
    %4830 = vmatprep.subr.bf16.mxu0 0
    %4831 = vmatpush1.bf16.msra.mxu0 0
    %4832 = vmatprep.subr.bf16.mxu0 0
    %4833 = vmatpush1.bf16.msra.mxu0 0
    %4834 = vmatprep.mubr.bf16.mxu0 0
    %4835 = vmatmul.mubr.bf16.gmra.mrb[0].mxu0 %v4677
    %v4836 = vpop.f32.mrb[0].mxu0
    %v4837 = vadd.f32 0.0, %v4836
    %v4838 = vpop.f32.mrb[0].mxu0
    %v4839 = vadd.f32 0.0, %v4838
    %v4840 = vpop.f32.mrb[0].mxu0
    %v4841 = vpop.f32.mrb[0].mxu0
    %4842 = vdwg.mxu0
    %v4843 = vadd.f32 %v4569, %v4714
    %v4844 = vadd.f32 %v4570, %v4716
    %v4845 = vadd.f32 %v4571, %v4755
    %v4846 = vadd.f32 %v4572, %v4757
    %v4847 = vadd.f32 %v4573, %v4796
    %v4848 = vadd.f32 %v4574, %v4798
    %v4849 = vadd.f32 %v4575, %v4837
    %v4850 = vadd.f32 %v4576, %v4839
    %v4851 = vld [vmem:[#allocation10] sm:$0xff]
    %v4853 = vlaneseq
    %v4854 = vshrl.u32 %v4853, 7
    %v4855 = vsub.s32 0, %v4854
    %v4856 = vrot.slane %v4851, %v4855
    %v4857 = vlaneseq
    %v4858 = vshrl.u32 %v4857, 7
    %v4859 = vsub.s32 1, %v4858
    %v4860 = vrot.slane %v4851, %v4859
    %v4861 = vlaneseq
    %v4862 = vshrl.u32 %v4861, 7
    %v4863 = vsub.s32 2, %v4862
    %v4864 = vrot.slane %v4851, %v4863
    %v4865 = vlaneseq
    %v4866 = vshrl.u32 %v4865, 7
    %v4867 = vsub.s32 3, %v4866
    %v4868 = vrot.slane %v4851, %v4867
    %v4869 = vlaneseq
    %v4870 = vshrl.u32 %v4869, 7
    %v4871 = vsub.s32 4, %v4870
    %v4872 = vrot.slane %v4851, %v4871
    %v4873 = vlaneseq
    %v4874 = vshrl.u32 %v4873, 7
    %v4875 = vsub.s32 5, %v4874
    %v4876 = vrot.slane %v4851, %v4875
    %v4877 = vlaneseq
    %v4878 = vshrl.u32 %v4877, 7
    %v4879 = vsub.s32 6, %v4878
    %v4880 = vrot.slane %v4851, %v4879
    %v4881 = vlaneseq
    %v4882 = vshrl.u32 %v4881, 7
    %v4883 = vsub.s32 7, %v4882
    %v4884 = vrot.slane %v4851, %v4883
    %v4893 = vmul.f32 %v4843, %v4856
    %v4894 = vmul.f32 %v4844, %v4860
    %v4895 = vmul.f32 %v4845, %v4864
    %v4896 = vmul.f32 %v4846, %v4868
    %v4897 = vmul.f32 %v4847, %v4872
    %v4898 = vmul.f32 %v4848, %v4876
    %v4899 = vmul.f32 %v4849, %v4880
    %v4900 = vmul.f32 %v4850, %v4884
    %v4901 = vld [vmem:[#allocation11] sm:$0xff]
    %v4903 = vlaneseq
    %v4904 = vshrl.u32 %v4903, 7
    %v4905 = vsub.s32 0, %v4904
    %v4906 = vrot.slane %v4901, %v4905
    %v4907 = vlaneseq
    %v4908 = vshrl.u32 %v4907, 7
    %v4909 = vsub.s32 1, %v4908
    %v4910 = vrot.slane %v4901, %v4909
    %v4911 = vlaneseq
    %v4912 = vshrl.u32 %v4911, 7
    %v4913 = vsub.s32 2, %v4912
    %v4914 = vrot.slane %v4901, %v4913
    %v4915 = vlaneseq
    %v4916 = vshrl.u32 %v4915, 7
    %v4917 = vsub.s32 3, %v4916
    %v4918 = vrot.slane %v4901, %v4917
    %v4919 = vlaneseq
    %v4920 = vshrl.u32 %v4919, 7
    %v4921 = vsub.s32 4, %v4920
    %v4922 = vrot.slane %v4901, %v4921
    %v4923 = vlaneseq
    %v4924 = vshrl.u32 %v4923, 7
    %v4925 = vsub.s32 5, %v4924
    %v4926 = vrot.slane %v4901, %v4925
    %v4927 = vlaneseq
    %v4928 = vshrl.u32 %v4927, 7
    %v4929 = vsub.s32 6, %v4928
    %v4930 = vrot.slane %v4901, %v4929
    %v4931 = vlaneseq
    %v4932 = vshrl.u32 %v4931, 7
    %v4933 = vsub.s32 7, %v4932
    %v4934 = vrot.slane %v4901, %v4933
    %v4943 = vadd.f32 %v4893, %v4906
    %v4944 = vadd.f32 %v4894, %v4910
    %v4945 = vadd.f32 %v4895, %v4914
    %v4946 = vadd.f32 %v4896, %v4918
    %v4947 = vadd.f32 %v4897, %v4922
    %v4948 = vadd.f32 %v4898, %v4926
    %v4949 = vadd.f32 %v4899, %v4930
    %v4950 = vadd.f32 %v4900, %v4934
    %v4951 = vmax.f32 %v4943, 0.0
    %v4952 = vmax.f32 %v4944, 0.0
    %v4953 = vmax.f32 %v4945, 0.0
    %v4954 = vmax.f32 %v4946, 0.0
    %v4955 = vmax.f32 %v4947, 0.0
    %v4956 = vmax.f32 %v4948, 0.0
    %v4957 = vmax.f32 %v4949, 0.0
    %v4958 = vmax.f32 %v4950, 0.0
    %v4959 = vpack.c.bf16 %v4951, %v4951
    %v4960 = vpack.c.bf16 %v4952, %v4952
    %v4961 = vpack.c.bf16 %v4953, %v4953
    %v4962 = vpack.c.bf16 %v4954, %v4954
    %v4963 = vpack.c.bf16 %v4955, %v4955
    %v4964 = vpack.c.bf16 %v4956, %v4956
    %v4965 = vpack.c.bf16 %v4957, %v4957
    %v4966 = vpack.c.bf16 %v4958, %v4958
    %v4967 = vld [vmem:[#allocation13] sm:$0xf]
    %v4968 = vld [vmem:[#allocation13 + $0x4] sm:$0xf]
    %v4969 = vld [vmem:[#allocation13 + $0x8] sm:$0xf]
    %v4970 = vld [vmem:[#allocation13 + $0xc] sm:$0xf]
    %v4971 = vld [vmem:[#allocation13 + $0x10] sm:$0xf]
    %v4972 = vld [vmem:[#allocation13 + $0x14] sm:$0xf]
    %v4973 = vld [vmem:[#allocation13 + $0x18] sm:$0xf]
    %v4974 = vld [vmem:[#allocation13 + $0x1c] sm:$0xf]
    %v4975 = vld [vmem:[#allocation13 + $0x20] sm:$0xf]
    %v4976 = vld [vmem:[#allocation13 + $0x24] sm:$0xf]
    %v4977 = vld [vmem:[#allocation13 + $0x28] sm:$0xf]
    %v4978 = vld [vmem:[#allocation13 + $0x2c] sm:$0xf]
    %v4979 = vld [vmem:[#allocation13 + $0x30] sm:$0xf]
    %v4980 = vld [vmem:[#allocation13 + $0x34] sm:$0xf]
    %v4981 = vld [vmem:[#allocation13 + $0x38] sm:$0xf]
    %v4982 = vld [vmem:[#allocation13 + $0x3c] sm:$0xf]
    %v4983 = vld [vmem:[#allocation13 + $0x40] sm:$0xf]
    %v4984 = vld [vmem:[#allocation13 + $0x44] sm:$0xf]
    %v4985 = vld [vmem:[#allocation13 + $0x48] sm:$0xf]
    %v4986 = vld [vmem:[#allocation13 + $0x4c] sm:$0xf]
    %v4987 = vld [vmem:[#allocation13 + $0x50] sm:$0xf]
    %v4988 = vld [vmem:[#allocation13 + $0x54] sm:$0xf]
    %v4989 = vld [vmem:[#allocation13 + $0x58] sm:$0xf]
    %v4990 = vld [vmem:[#allocation13 + $0x5c] sm:$0xf]
    %v4991 = vld [vmem:[#allocation13 + $0x60] sm:$0xf]
    %v4992 = vld [vmem:[#allocation13 + $0x64] sm:$0xf]
    %v4993 = vld [vmem:[#allocation13 + $0x68] sm:$0xf]
    %v4994 = vld [vmem:[#allocation13 + $0x6c] sm:$0xf]
    %v4995 = vld [vmem:[#allocation13 + $0x70] sm:$0xf]
    %v4996 = vld [vmem:[#allocation13 + $0x74] sm:$0xf]
    %v4997 = vld [vmem:[#allocation13 + $0x78] sm:$0xf]
    %v4998 = vld [vmem:[#allocation13 + $0x7c] sm:$0xf]
    %v4999 = vld [vmem:[#allocation13 + $0x80] sm:$0xf]
    %v5000 = vld [vmem:[#allocation13 + $0x84] sm:$0xf]
    %v5001 = vld [vmem:[#allocation13 + $0x88] sm:$0xf]
    %v5002 = vld [vmem:[#allocation13 + $0x8c] sm:$0xf]
    %v5003 = vld [vmem:[#allocation13 + $0x90] sm:$0xf]
    %v5004 = vld [vmem:[#allocation13 + $0x94] sm:$0xf]
    %v5005 = vld [vmem:[#allocation13 + $0x98] sm:$0xf]
    %v5006 = vld [vmem:[#allocation13 + $0x9c] sm:$0xf]
    %v5007 = vld [vmem:[#allocation13 + $0xa0] sm:$0xf]
    %v5008 = vld [vmem:[#allocation13 + $0xa4] sm:$0xf]
    %v5009 = vld [vmem:[#allocation13 + $0xa8] sm:$0xf]
    %v5010 = vld [vmem:[#allocation13 + $0xac] sm:$0xf]
    %v5011 = vld [vmem:[#allocation13 + $0xb0] sm:$0xf]
    %v5012 = vld [vmem:[#allocation13 + $0xb4] sm:$0xf]
    %v5013 = vld [vmem:[#allocation13 + $0xb8] sm:$0xf]
    %v5014 = vld [vmem:[#allocation13 + $0xbc] sm:$0xf]
    %v5015 = vld [vmem:[#allocation13 + $0xc0] sm:$0xf]
    %v5016 = vld [vmem:[#allocation13 + $0xc4] sm:$0xf]
    %v5017 = vld [vmem:[#allocation13 + $0xc8] sm:$0xf]
    %v5018 = vld [vmem:[#allocation13 + $0xcc] sm:$0xf]
    %v5019 = vld [vmem:[#allocation13 + $0xd0] sm:$0xf]
    %v5020 = vld [vmem:[#allocation13 + $0xd4] sm:$0xf]
    %v5021 = vld [vmem:[#allocation13 + $0xd8] sm:$0xf]
    %v5022 = vld [vmem:[#allocation13 + $0xdc] sm:$0xf]
    %v5023 = vld [vmem:[#allocation13 + $0xe0] sm:$0xf]
    %v5024 = vld [vmem:[#allocation13 + $0xe4] sm:$0xf]
    %v5025 = vld [vmem:[#allocation13 + $0xe8] sm:$0xf]
    %v5026 = vld [vmem:[#allocation13 + $0xec] sm:$0xf]
    %v5027 = vld [vmem:[#allocation13 + $0xf0] sm:$0xf]
    %v5028 = vld [vmem:[#allocation13 + $0xf4] sm:$0xf]
    %v5029 = vld [vmem:[#allocation13 + $0xf8] sm:$0xf]
    %v5030 = vld [vmem:[#allocation13 + $0xfc] sm:$0xf]
    %v5031 = vld [vmem:[#allocation13 + $0x100] sm:$0xf]
    %v5032 = vld [vmem:[#allocation13 + $0x104] sm:$0xf]
    %v5033 = vld [vmem:[#allocation13 + $0x108] sm:$0xf]
    %v5034 = vld [vmem:[#allocation13 + $0x10c] sm:$0xf]
    %v5035 = vld [vmem:[#allocation13 + $0x110] sm:$0xf]
    %v5036 = vld [vmem:[#allocation13 + $0x114] sm:$0xf]
    %v5037 = vld [vmem:[#allocation13 + $0x118] sm:$0xf]
    %v5038 = vld [vmem:[#allocation13 + $0x11c] sm:$0xf]
    %v5039 = vld [vmem:[#allocation13 + $0x120] sm:$0xf]
    %v5040 = vld [vmem:[#allocation13 + $0x124] sm:$0xf]
    %v5041 = vld [vmem:[#allocation13 + $0x128] sm:$0xf]
    %v5042 = vld [vmem:[#allocation13 + $0x12c] sm:$0xf]
    %v5043 = vld [vmem:[#allocation13 + $0x130] sm:$0xf]
    %v5044 = vld [vmem:[#allocation13 + $0x134] sm:$0xf]
    %v5045 = vld [vmem:[#allocation13 + $0x138] sm:$0xf]
    %v5046 = vld [vmem:[#allocation13 + $0x13c] sm:$0xf]
    %v5047 = vld [vmem:[#allocation13 + $0x140] sm:$0xf]
    %v5048 = vld [vmem:[#allocation13 + $0x144] sm:$0xf]
    %v5049 = vld [vmem:[#allocation13 + $0x148] sm:$0xf]
    %v5050 = vld [vmem:[#allocation13 + $0x14c] sm:$0xf]
    %v5051 = vld [vmem:[#allocation13 + $0x150] sm:$0xf]
    %v5052 = vld [vmem:[#allocation13 + $0x154] sm:$0xf]
    %v5053 = vld [vmem:[#allocation13 + $0x158] sm:$0xf]
    %v5054 = vld [vmem:[#allocation13 + $0x15c] sm:$0xf]
    %v5055 = vld [vmem:[#allocation13 + $0x160] sm:$0xf]
    %v5056 = vld [vmem:[#allocation13 + $0x164] sm:$0xf]
    %v5057 = vld [vmem:[#allocation13 + $0x168] sm:$0xf]
    %v5058 = vld [vmem:[#allocation13 + $0x16c] sm:$0xf]
    %v5059 = vld [vmem:[#allocation13 + $0x170] sm:$0xf]
    %v5060 = vld [vmem:[#allocation13 + $0x174] sm:$0xf]
    %v5061 = vld [vmem:[#allocation13 + $0x178] sm:$0xf]
    %v5062 = vld [vmem:[#allocation13 + $0x17c] sm:$0xf]
    %v5063 = vld [vmem:[#allocation13 + $0x180] sm:$0xf]
    %v5064 = vld [vmem:[#allocation13 + $0x184] sm:$0xf]
    %v5065 = vld [vmem:[#allocation13 + $0x188] sm:$0xf]
    %v5066 = vld [vmem:[#allocation13 + $0x18c] sm:$0xf]
    %v5067 = vld [vmem:[#allocation13 + $0x190] sm:$0xf]
    %v5068 = vld [vmem:[#allocation13 + $0x194] sm:$0xf]
    %v5069 = vld [vmem:[#allocation13 + $0x198] sm:$0xf]
    %v5070 = vld [vmem:[#allocation13 + $0x19c] sm:$0xf]
    %v5071 = vld [vmem:[#allocation13 + $0x1a0] sm:$0xf]
    %v5072 = vld [vmem:[#allocation13 + $0x1a4] sm:$0xf]
    %v5073 = vld [vmem:[#allocation13 + $0x1a8] sm:$0xf]
    %v5074 = vld [vmem:[#allocation13 + $0x1ac] sm:$0xf]
    %v5075 = vld [vmem:[#allocation13 + $0x1b0] sm:$0xf]
    %v5076 = vld [vmem:[#allocation13 + $0x1b4] sm:$0xf]
    %v5077 = vld [vmem:[#allocation13 + $0x1b8] sm:$0xf]
    %v5078 = vld [vmem:[#allocation13 + $0x1bc] sm:$0xf]
    %v5079 = vld [vmem:[#allocation13 + $0x1c0] sm:$0xf]
    %v5080 = vld [vmem:[#allocation13 + $0x1c4] sm:$0xf]
    %v5081 = vld [vmem:[#allocation13 + $0x1c8] sm:$0xf]
    %v5082 = vld [vmem:[#allocation13 + $0x1cc] sm:$0xf]
    %v5083 = vld [vmem:[#allocation13 + $0x1d0] sm:$0xf]
    %v5084 = vld [vmem:[#allocation13 + $0x1d4] sm:$0xf]
    %v5085 = vld [vmem:[#allocation13 + $0x1d8] sm:$0xf]
    %v5086 = vld [vmem:[#allocation13 + $0x1dc] sm:$0xf]
    %v5087 = vld [vmem:[#allocation13 + $0x1e0] sm:$0xf]
    %v5088 = vld [vmem:[#allocation13 + $0x1e4] sm:$0xf]
    %v5089 = vld [vmem:[#allocation13 + $0x1e8] sm:$0xf]
    %v5090 = vld [vmem:[#allocation13 + $0x1ec] sm:$0xf]
    %v5091 = vld [vmem:[#allocation13 + $0x1f0] sm:$0xf]
    %v5092 = vld [vmem:[#allocation13 + $0x1f4] sm:$0xf]
    %v5093 = vld [vmem:[#allocation13 + $0x1f8] sm:$0xf]
    %v5094 = vld [vmem:[#allocation13 + $0x1fc] sm:$0xf]
    %v5095 = vld [vmem:[#allocation14] sm:$0x1]
    %v5097 = vlaneseq
    %v5098 = vshrl.u32 %v5097, 7
    %v5099 = vsub.s32 0, %v5098
    %v5100 = vrot.slane %v5095, %v5099
    %v5230 = vunpack.c.l.b16 %v4967
    %v5231 = vunpack.c.l.b16 %v4968
    %v5232 = vunpack.c.l.b16 %v4969
    %v5233 = vunpack.c.l.b16 %v4970
    %v5234 = vunpack.c.l.b16 %v4971
    %v5235 = vunpack.c.l.b16 %v4972
    %v5236 = vunpack.c.l.b16 %v4973
    %v5237 = vunpack.c.l.b16 %v4974
    %v5238 = vunpack.c.l.b16 %v4975
    %v5239 = vunpack.c.l.b16 %v4976
    %v5240 = vunpack.c.l.b16 %v4977
    %v5241 = vunpack.c.l.b16 %v4978
    %v5242 = vunpack.c.l.b16 %v4979
    %v5243 = vunpack.c.l.b16 %v4980
    %v5244 = vunpack.c.l.b16 %v4981
    %v5245 = vunpack.c.l.b16 %v4982
    %v5246 = vunpack.c.l.b16 %v4983
    %v5247 = vunpack.c.l.b16 %v4984
    %v5248 = vunpack.c.l.b16 %v4985
    %v5249 = vunpack.c.l.b16 %v4986
    %v5250 = vunpack.c.l.b16 %v4987
    %v5251 = vunpack.c.l.b16 %v4988
    %v5252 = vunpack.c.l.b16 %v4989
    %v5253 = vunpack.c.l.b16 %v4990
    %v5254 = vunpack.c.l.b16 %v4991
    %v5255 = vunpack.c.l.b16 %v4992
    %v5256 = vunpack.c.l.b16 %v4993
    %v5257 = vunpack.c.l.b16 %v4994
    %v5258 = vunpack.c.l.b16 %v4995
    %v5259 = vunpack.c.l.b16 %v4996
    %v5260 = vunpack.c.l.b16 %v4997
    %v5261 = vunpack.c.l.b16 %v4998
    %v5262 = vunpack.c.l.b16 %v4999
    %v5263 = vunpack.c.l.b16 %v5000
    %v5264 = vunpack.c.l.b16 %v5001
    %v5265 = vunpack.c.l.b16 %v5002
    %v5266 = vunpack.c.l.b16 %v5003
    %v5267 = vunpack.c.l.b16 %v5004
    %v5268 = vunpack.c.l.b16 %v5005
    %v5269 = vunpack.c.l.b16 %v5006
    %v5270 = vunpack.c.l.b16 %v5007
    %v5271 = vunpack.c.l.b16 %v5008
    %v5272 = vunpack.c.l.b16 %v5009
    %v5273 = vunpack.c.l.b16 %v5010
    %v5274 = vunpack.c.l.b16 %v5011
    %v5275 = vunpack.c.l.b16 %v5012
    %v5276 = vunpack.c.l.b16 %v5013
    %v5277 = vunpack.c.l.b16 %v5014
    %v5278 = vunpack.c.l.b16 %v5015
    %v5279 = vunpack.c.l.b16 %v5016
    %v5280 = vunpack.c.l.b16 %v5017
    %v5281 = vunpack.c.l.b16 %v5018
    %v5282 = vunpack.c.l.b16 %v5019
    %v5283 = vunpack.c.l.b16 %v5020
    %v5284 = vunpack.c.l.b16 %v5021
    %v5285 = vunpack.c.l.b16 %v5022
    %v5286 = vunpack.c.l.b16 %v5023
    %v5287 = vunpack.c.l.b16 %v5024
    %v5288 = vunpack.c.l.b16 %v5025
    %v5289 = vunpack.c.l.b16 %v5026
    %v5290 = vunpack.c.l.b16 %v5027
    %v5291 = vunpack.c.l.b16 %v5028
    %v5292 = vunpack.c.l.b16 %v5029
    %v5293 = vunpack.c.l.b16 %v5030
    %v5294 = vunpack.c.l.b16 %v5031
    %v5295 = vunpack.c.l.b16 %v5032
    %v5296 = vunpack.c.l.b16 %v5033
    %v5297 = vunpack.c.l.b16 %v5034
    %v5298 = vunpack.c.l.b16 %v5035
    %v5299 = vunpack.c.l.b16 %v5036
    %v5300 = vunpack.c.l.b16 %v5037
    %v5301 = vunpack.c.l.b16 %v5038
    %v5302 = vunpack.c.l.b16 %v5039
    %v5303 = vunpack.c.l.b16 %v5040
    %v5304 = vunpack.c.l.b16 %v5041
    %v5305 = vunpack.c.l.b16 %v5042
    %v5306 = vunpack.c.l.b16 %v5043
    %v5307 = vunpack.c.l.b16 %v5044
    %v5308 = vunpack.c.l.b16 %v5045
    %v5309 = vunpack.c.l.b16 %v5046
    %v5310 = vunpack.c.l.b16 %v5047
    %v5311 = vunpack.c.l.b16 %v5048
    %v5312 = vunpack.c.l.b16 %v5049
    %v5313 = vunpack.c.l.b16 %v5050
    %v5314 = vunpack.c.l.b16 %v5051
    %v5315 = vunpack.c.l.b16 %v5052
    %v5316 = vunpack.c.l.b16 %v5053
    %v5317 = vunpack.c.l.b16 %v5054
    %v5318 = vunpack.c.l.b16 %v5055
    %v5319 = vunpack.c.l.b16 %v5056
    %v5320 = vunpack.c.l.b16 %v5057
    %v5321 = vunpack.c.l.b16 %v5058
    %v5322 = vunpack.c.l.b16 %v5059
    %v5323 = vunpack.c.l.b16 %v5060
    %v5324 = vunpack.c.l.b16 %v5061
    %v5325 = vunpack.c.l.b16 %v5062
    %v5326 = vunpack.c.l.b16 %v5063
    %v5327 = vunpack.c.l.b16 %v5064
    %v5328 = vunpack.c.l.b16 %v5065
    %v5329 = vunpack.c.l.b16 %v5066
    %v5330 = vunpack.c.l.b16 %v5067
    %v5331 = vunpack.c.l.b16 %v5068
    %v5332 = vunpack.c.l.b16 %v5069
    %v5333 = vunpack.c.l.b16 %v5070
    %v5334 = vunpack.c.l.b16 %v5071
    %v5335 = vunpack.c.l.b16 %v5072
    %v5336 = vunpack.c.l.b16 %v5073
    %v5337 = vunpack.c.l.b16 %v5074
    %v5338 = vunpack.c.l.b16 %v5075
    %v5339 = vunpack.c.l.b16 %v5076
    %v5340 = vunpack.c.l.b16 %v5077
    %v5341 = vunpack.c.l.b16 %v5078
    %v5342 = vunpack.c.l.b16 %v5079
    %v5343 = vunpack.c.l.b16 %v5080
    %v5344 = vunpack.c.l.b16 %v5081
    %v5345 = vunpack.c.l.b16 %v5082
    %v5346 = vunpack.c.l.b16 %v5083
    %v5347 = vunpack.c.l.b16 %v5084
    %v5348 = vunpack.c.l.b16 %v5085
    %v5349 = vunpack.c.l.b16 %v5086
    %v5350 = vunpack.c.l.b16 %v5087
    %v5351 = vunpack.c.l.b16 %v5088
    %v5352 = vunpack.c.l.b16 %v5089
    %v5353 = vunpack.c.l.b16 %v5090
    %v5354 = vunpack.c.l.b16 %v5091
    %v5355 = vunpack.c.l.b16 %v5092
    %v5356 = vunpack.c.l.b16 %v5093
    %v5357 = vunpack.c.l.b16 %v5094
    %v5358 = vpack.c.b16 %v5231, %v5230
    %v5359 = vpack.c.b16 %v5233, %v5232
    %v5360 = vpack.c.b16 %v5235, %v5234
    %v5361 = vpack.c.b16 %v5237, %v5236
    %v5362 = vpack.c.b16 %v5239, %v5238
    %v5363 = vpack.c.b16 %v5241, %v5240
    %v5364 = vpack.c.b16 %v5243, %v5242
    %v5365 = vpack.c.b16 %v5245, %v5244
    %v5366 = vpack.c.b16 %v5247, %v5246
    %v5367 = vpack.c.b16 %v5249, %v5248
    %v5368 = vpack.c.b16 %v5251, %v5250
    %v5369 = vpack.c.b16 %v5253, %v5252
    %v5370 = vpack.c.b16 %v5255, %v5254
    %v5371 = vpack.c.b16 %v5257, %v5256
    %v5372 = vpack.c.b16 %v5259, %v5258
    %v5373 = vpack.c.b16 %v5261, %v5260
    %v5374 = vpack.c.b16 %v5263, %v5262
    %v5375 = vpack.c.b16 %v5265, %v5264
    %v5376 = vpack.c.b16 %v5267, %v5266
    %v5377 = vpack.c.b16 %v5269, %v5268
    %v5378 = vpack.c.b16 %v5271, %v5270
    %v5379 = vpack.c.b16 %v5273, %v5272
    %v5380 = vpack.c.b16 %v5275, %v5274
    %v5381 = vpack.c.b16 %v5277, %v5276
    %v5382 = vpack.c.b16 %v5279, %v5278
    %v5383 = vpack.c.b16 %v5281, %v5280
    %v5384 = vpack.c.b16 %v5283, %v5282
    %v5385 = vpack.c.b16 %v5285, %v5284
    %v5386 = vpack.c.b16 %v5287, %v5286
    %v5387 = vpack.c.b16 %v5289, %v5288
    %v5388 = vpack.c.b16 %v5291, %v5290
    %v5389 = vpack.c.b16 %v5293, %v5292
    %v5390 = vpack.c.b16 %v5295, %v5294
    %v5391 = vpack.c.b16 %v5297, %v5296
    %v5392 = vpack.c.b16 %v5299, %v5298
    %v5393 = vpack.c.b16 %v5301, %v5300
    %v5394 = vpack.c.b16 %v5303, %v5302
    %v5395 = vpack.c.b16 %v5305, %v5304
    %v5396 = vpack.c.b16 %v5307, %v5306
    %v5397 = vpack.c.b16 %v5309, %v5308
    %v5398 = vpack.c.b16 %v5311, %v5310
    %v5399 = vpack.c.b16 %v5313, %v5312
    %v5400 = vpack.c.b16 %v5315, %v5314
    %v5401 = vpack.c.b16 %v5317, %v5316
    %v5402 = vpack.c.b16 %v5319, %v5318
    %v5403 = vpack.c.b16 %v5321, %v5320
    %v5404 = vpack.c.b16 %v5323, %v5322
    %v5405 = vpack.c.b16 %v5325, %v5324
    %v5406 = vpack.c.b16 %v5327, %v5326
    %v5407 = vpack.c.b16 %v5329, %v5328
    %v5408 = vpack.c.b16 %v5331, %v5330
    %v5409 = vpack.c.b16 %v5333, %v5332
    %v5410 = vpack.c.b16 %v5335, %v5334
    %v5411 = vpack.c.b16 %v5337, %v5336
    %v5412 = vpack.c.b16 %v5339, %v5338
    %v5413 = vpack.c.b16 %v5341, %v5340
    %v5414 = vpack.c.b16 %v5343, %v5342
    %v5415 = vpack.c.b16 %v5345, %v5344
    %v5416 = vpack.c.b16 %v5347, %v5346
    %v5417 = vpack.c.b16 %v5349, %v5348
    %v5418 = vpack.c.b16 %v5351, %v5350
    %v5419 = vpack.c.b16 %v5353, %v5352
    %v5420 = vpack.c.b16 %v5355, %v5354
    %v5421 = vpack.c.b16 %v5357, %v5356
    %5486 = vmatprep.subr.bf16.mxu0 0
    %5487 = vmatpush1.bf16.msra.mxu0 %v5358
    %5488 = vmatprep.subr.bf16.mxu0 0
    %5489 = vmatpush1.bf16.msra.mxu0 %v5359
    %5490 = vmatprep.subr.bf16.mxu0 0
    %5491 = vmatpush1.bf16.msra.mxu0 %v5360
    %5492 = vmatprep.subr.bf16.mxu0 0
    %5493 = vmatpush1.bf16.msra.mxu0 %v5361
    %5494 = vmatprep.subr.bf16.mxu0 0
    %5495 = vmatpush1.bf16.msra.mxu0 %v5362
    %5496 = vmatprep.subr.bf16.mxu0 0
    %5497 = vmatpush1.bf16.msra.mxu0 %v5363
    %5498 = vmatprep.subr.bf16.mxu0 0
    %5499 = vmatpush1.bf16.msra.mxu0 %v5364
    %5500 = vmatprep.subr.bf16.mxu0 0
    %5501 = vmatpush1.bf16.msra.mxu0 %v5365
    %5502 = vmatprep.subr.bf16.mxu0 0
    %5503 = vmatpush1.bf16.msra.mxu0 %v5366
    %5504 = vmatprep.subr.bf16.mxu0 0
    %5505 = vmatpush1.bf16.msra.mxu0 %v5367
    %5506 = vmatprep.subr.bf16.mxu0 0
    %5507 = vmatpush1.bf16.msra.mxu0 %v5368
    %5508 = vmatprep.subr.bf16.mxu0 0
    %5509 = vmatpush1.bf16.msra.mxu0 %v5369
    %5510 = vmatprep.subr.bf16.mxu0 0
    %5511 = vmatpush1.bf16.msra.mxu0 %v5370
    %5512 = vmatprep.subr.bf16.mxu0 0
    %5513 = vmatpush1.bf16.msra.mxu0 %v5371
    %5514 = vmatprep.subr.bf16.mxu0 0
    %5515 = vmatpush1.bf16.msra.mxu0 %v5372
    %5516 = vmatprep.subr.bf16.mxu0 0
    %5517 = vmatpush1.bf16.msra.mxu0 %v5373
    %5518 = vmatprep.mubr.bf16.mxu0 %v4960
    %5519 = vmatmul.mubr.bf16.gmra.mrb[0].mxu0 %v4959
    %v5520 = vpop.f32.mrb[0].mxu0
    %v5521 = vadd.f32 %v5100, %v5520
    %v5522 = vpop.f32.mrb[0].mxu0
    %v5523 = vpop.f32.mrb[0].mxu0
    %v5524 = vpop.f32.mrb[0].mxu0
    %5525 = vdwg.mxu0
    %5526 = vmatprep.subr.bf16.mxu0 0
    %5527 = vmatpush1.bf16.msra.mxu0 %v5374
    %5528 = vmatprep.subr.bf16.mxu0 0
    %5529 = vmatpush1.bf16.msra.mxu0 %v5375
    %5530 = vmatprep.subr.bf16.mxu0 0
    %5531 = vmatpush1.bf16.msra.mxu0 %v5376
    %5532 = vmatprep.subr.bf16.mxu0 0
    %5533 = vmatpush1.bf16.msra.mxu0 %v5377
    %5534 = vmatprep.subr.bf16.mxu0 0
    %5535 = vmatpush1.bf16.msra.mxu0 %v5378
    %5536 = vmatprep.subr.bf16.mxu0 0
    %5537 = vmatpush1.bf16.msra.mxu0 %v5379
    %5538 = vmatprep.subr.bf16.mxu0 0
    %5539 = vmatpush1.bf16.msra.mxu0 %v5380
    %5540 = vmatprep.subr.bf16.mxu0 0
    %5541 = vmatpush1.bf16.msra.mxu0 %v5381
    %5542 = vmatprep.subr.bf16.mxu0 0
    %5543 = vmatpush1.bf16.msra.mxu0 %v5382
    %5544 = vmatprep.subr.bf16.mxu0 0
    %5545 = vmatpush1.bf16.msra.mxu0 %v5383
    %5546 = vmatprep.subr.bf16.mxu0 0
    %5547 = vmatpush1.bf16.msra.mxu0 %v5384
    %5548 = vmatprep.subr.bf16.mxu0 0
    %5549 = vmatpush1.bf16.msra.mxu0 %v5385
    %5550 = vmatprep.subr.bf16.mxu0 0
    %5551 = vmatpush1.bf16.msra.mxu0 %v5386
    %5552 = vmatprep.subr.bf16.mxu0 0
    %5553 = vmatpush1.bf16.msra.mxu0 %v5387
    %5554 = vmatprep.subr.bf16.mxu0 0
    %5555 = vmatpush1.bf16.msra.mxu0 %v5388
    %5556 = vmatprep.subr.bf16.mxu0 0
    %5557 = vmatpush1.bf16.msra.mxu0 %v5389
    %5558 = vmatprep.mubr.bf16.mxu0 %v4962
    %5559 = vmatmul.mubr.bf16.gmra.mrb[0].mxu0 %v4961
    %v5560 = vpop.f32.mrb[0].mxu0
    %v5561 = vadd.f32 %v5521, %v5560
    %v5562 = vpop.f32.mrb[0].mxu0
    %v5563 = vpop.f32.mrb[0].mxu0
    %v5564 = vpop.f32.mrb[0].mxu0
    %5565 = vdwg.mxu0
    %5566 = vmatprep.subr.bf16.mxu0 0
    %5567 = vmatpush1.bf16.msra.mxu0 %v5390
    %5568 = vmatprep.subr.bf16.mxu0 0
    %5569 = vmatpush1.bf16.msra.mxu0 %v5391
    %5570 = vmatprep.subr.bf16.mxu0 0
    %5571 = vmatpush1.bf16.msra.mxu0 %v5392
    %5572 = vmatprep.subr.bf16.mxu0 0
    %5573 = vmatpush1.bf16.msra.mxu0 %v5393
    %5574 = vmatprep.subr.bf16.mxu0 0
    %5575 = vmatpush1.bf16.msra.mxu0 %v5394
    %5576 = vmatprep.subr.bf16.mxu0 0
    %5577 = vmatpush1.bf16.msra.mxu0 %v5395
    %5578 = vmatprep.subr.bf16.mxu0 0
    %5579 = vmatpush1.bf16.msra.mxu0 %v5396
    %5580 = vmatprep.subr.bf16.mxu0 0
    %5581 = vmatpush1.bf16.msra.mxu0 %v5397
    %5582 = vmatprep.subr.bf16.mxu0 0
    %5583 = vmatpush1.bf16.msra.mxu0 %v5398
    %5584 = vmatprep.subr.bf16.mxu0 0
    %5585 = vmatpush1.bf16.msra.mxu0 %v5399
    %5586 = vmatprep.subr.bf16.mxu0 0
    %5587 = vmatpush1.bf16.msra.mxu0 %v5400
    %5588 = vmatprep.subr.bf16.mxu0 0
    %5589 = vmatpush1.bf16.msra.mxu0 %v5401
    %5590 = vmatprep.subr.bf16.mxu0 0
    %5591 = vmatpush1.bf16.msra.mxu0 %v5402
    %5592 = vmatprep.subr.bf16.mxu0 0
    %5593 = vmatpush1.bf16.msra.mxu0 %v5403
    %5594 = vmatprep.subr.bf16.mxu0 0
    %5595 = vmatpush1.bf16.msra.mxu0 %v5404
    %5596 = vmatprep.subr.bf16.mxu0 0
    %5597 = vmatpush1.bf16.msra.mxu0 %v5405
    %5598 = vmatprep.mubr.bf16.mxu0 %v4964
    %5599 = vmatmul.mubr.bf16.gmra.mrb[0].mxu0 %v4963
    %v5600 = vpop.f32.mrb[0].mxu0
    %v5601 = vadd.f32 %v5561, %v5600
    %v5602 = vpop.f32.mrb[0].mxu0
    %v5603 = vpop.f32.mrb[0].mxu0
    %v5604 = vpop.f32.mrb[0].mxu0
    %5605 = vdwg.mxu0
    %5606 = vmatprep.subr.bf16.mxu0 0
    %5607 = vmatpush1.bf16.msra.mxu0 %v5406
    %5608 = vmatprep.subr.bf16.mxu0 0
    %5609 = vmatpush1.bf16.msra.mxu0 %v5407
    %5610 = vmatprep.subr.bf16.mxu0 0
    %5611 = vmatpush1.bf16.msra.mxu0 %v5408
    %5612 = vmatprep.subr.bf16.mxu0 0
    %5613 = vmatpush1.bf16.msra.mxu0 %v5409
    %5614 = vmatprep.subr.bf16.mxu0 0
    %5615 = vmatpush1.bf16.msra.mxu0 %v5410
    %5616 = vmatprep.subr.bf16.mxu0 0
    %5617 = vmatpush1.bf16.msra.mxu0 %v5411
    %5618 = vmatprep.subr.bf16.mxu0 0
    %5619 = vmatpush1.bf16.msra.mxu0 %v5412
    %5620 = vmatprep.subr.bf16.mxu0 0
    %5621 = vmatpush1.bf16.msra.mxu0 %v5413
    %5622 = vmatprep.subr.bf16.mxu0 0
    %5623 = vmatpush1.bf16.msra.mxu0 %v5414
    %5624 = vmatprep.subr.bf16.mxu0 0
    %5625 = vmatpush1.bf16.msra.mxu0 %v5415
    %5626 = vmatprep.subr.bf16.mxu0 0
    %5627 = vmatpush1.bf16.msra.mxu0 %v5416
    %5628 = vmatprep.subr.bf16.mxu0 0
    %5629 = vmatpush1.bf16.msra.mxu0 %v5417
    %5630 = vmatprep.subr.bf16.mxu0 0
    %5631 = vmatpush1.bf16.msra.mxu0 %v5418
    %5632 = vmatprep.subr.bf16.mxu0 0
    %5633 = vmatpush1.bf16.msra.mxu0 %v5419
    %5634 = vmatprep.subr.bf16.mxu0 0
    %5635 = vmatpush1.bf16.msra.mxu0 %v5420
    %5636 = vmatprep.subr.bf16.mxu0 0
    %5637 = vmatpush1.bf16.msra.mxu0 %v5421
    %5638 = vmatprep.mubr.bf16.mxu0 %v4966
    %5639 = vmatmul.mubr.bf16.gmra.mrb[0].mxu0 %v4965
    %v5640 = vpop.f32.mrb[0].mxu0
    %v5641 = vadd.f32 %v5601, %v5640
    %v5642 = vpop.f32.mrb[0].mxu0
    %v5643 = vpop.f32.mrb[0].mxu0
    %v5644 = vpop.f32.mrb[0].mxu0
    %5645 = vdwg.mxu0
    %5646 = vst [vmem:[#allocation16] sm:$0x3] %v5641
    // Predicated region
    $region70: #{aux_classifier_forward.1} parent=1 // pred_check
      _
    $region71: #{aux_classifier_forward.1} parent=1 // pred_check_branch
      %5648 = sbr.rel (0) target = $region73
    $region72: #{aux_classifier_forward.1} parent=1 // pred_region
      %s5650 = ssub.s32 32, 32
      %5651 = vsyncadd [#allocation4], %s5650
      %s5653 = sshll.u32 [#allocation16], 4
      %s5654 = int_to_ptr.vmem [resolvable:$true] %s5653
      %5656 = dma.vmem_to_hbm [thread:$0]  %s5654, 32, %s9, [#allocation4]
    $region73: #{aux_classifier_forward.1} parent=1 // pred_fallthru
      _
    // Predicated region
    $region74: #{aux_classifier_forward.1} parent=1 // pred_check
      _
    $region75: #{aux_classifier_forward.1} parent=1 // pred_check_branch
      %5658 = sbr.rel (0) target = $region77
    $region76: #{aux_classifier_forward.1} parent=1 // pred_region
      %5659 = dma.done [#allocation4], 32
    $region77: #{aux_classifier_forward.1} parent=1 // pred_fallthru
      _
    %5660 = vsyncpa [#allocation3], 1
    %5661 = vsyncpa [#allocation6], 1
    %5662 = vsyncpa [#allocation9], 1
    %5663 = vsyncpa [#allocation12], 1
    %5664 = vsyncpa [#allocation15], 1
    %5665 = vsyncpa [#allocation4], 1

</llo_original>
